<compile_context>
chip_gen: v7x
topology: tpu7x:2x2x1
jax: 0.10.0
libtpu: 0.0.40
codegen_flags: <defaults>
</compile_context>

<pallas_src>
import jax
import jax.numpy as jnp
from jax import lax
from jax.experimental import pallas as pl
from jax.experimental.pallas import tpu as pltpu


# ----------------------------------------------------------------------------
# Fused inception kernel (one batch element per grid step)
# ----------------------------------------------------------------------------
def _make_inception_kernel(H, W, Cin, C4, Cm2, Cm3):
    """Builds the fused kernel body with all sizes baked in as Python ints."""

    def kernel(x_ref, w1x1_ref, t1x1_ref, w3_ref, t3_ref, w5_ref, t5_ref,
               o_ref, y2p_ref, col3_ref, y3p_ref, col5_ref, xp_ref):
        # x_ref : (H, W, Cin)           input tile for one batch element
        # w1x1  : (Cin, C4+Cm2+Cm3)     folded [conv1 | conv2_1 | conv3_1]
        # w3    : (9*Cm2, C4), w5: (25*Cm3, C4)  folded, im2col-ordered
        # o_ref : (H, W, 4*C4)          channel-concatenated output
        x = x_ref[...].astype(jnp.float32)
        x_flat = x.reshape(H * W, Cin)

        # ---- fused entry 1x1 convs: one wide MXU matmul ----
        y_all = jnp.dot(x_flat, w1x1_ref[...],
                        preferred_element_type=jnp.float32)
        y_all = jnp.maximum(y_all + t1x1_ref[...], 0.0)

        br1 = y_all[:, :C4]                       # conv1(x)
        y2 = y_all[:, C4:C4 + Cm2]                # conv2_1(x)
        y3 = y_all[:, C4 + Cm2:]                  # conv3_1(x)
        o_ref[:, :, 0:C4] = br1.reshape(H, W, C4).astype(o_ref.dtype)

        # ---- branch 2: 3x3 conv (pad 1) on y2, fully in VMEM ----
        y2p_ref[...] = jnp.zeros((H + 2, W + 2, Cm2), jnp.float32)
        y2p_ref[1:1 + H, 1:1 + W, :] = y2.reshape(H, W, Cm2)
        for dy in range(3):
            for dx in range(3):
                off = (dy * 3 + dx) * Cm2
                col3_ref[:, off:off + Cm2] = (
                    y2p_ref[dy:dy + H, dx:dx + W, :].reshape(H * W, Cm2))
        acc3 = jnp.dot(col3_ref[...], w3_ref[...],
                       preferred_element_type=jnp.float32)
        br2 = jnp.maximum(acc3 + t3_ref[...], 0.0)
        o_ref[:, :, C4:2 * C4] = br2.reshape(H, W, C4).astype(o_ref.dtype)

        # ---- branch 3: 5x5 conv (pad 2) on y3, fully in VMEM ----
        y3p_ref[...] = jnp.zeros((H + 4, W + 4, Cm3), jnp.float32)
        y3p_ref[2:2 + H, 2:2 + W, :] = y3.reshape(H, W, Cm3)
        for dy in range(5):
            for dx in range(5):
                off = (dy * 5 + dx) * Cm3
                col5_ref[:, off:off + Cm3] = (
                    y3p_ref[dy:dy + H, dx:dx + W, :].reshape(H * W, Cm3))
        acc5 = jnp.dot(col5_ref[...], w5_ref[...],
                       preferred_element_type=jnp.float32)
        br3 = jnp.maximum(acc5 + t5_ref[...], 0.0)
        o_ref[:, :, 2 * C4:3 * C4] = br3.reshape(H, W, C4).astype(o_ref.dtype)

        # ---- branch 4: 3x3/s1/p1 maxpool, then shared conv1 (same body) ----
        xp_ref[...] = jnp.full((H + 2, W + 2, Cin), -jnp.inf, jnp.float32)
        xp_ref[1:1 + H, 1:1 + W, :] = x
        m = x                                     # center tap
        for dy in range(3):
            for dx in range(3):
                if dy == 1 and dx == 1:
                    continue
                m = jnp.maximum(m, xp_ref[dy:dy + H, dx:dx + W, :])
        accp = jnp.dot(m.reshape(H * W, Cin), w1x1_ref[:, :C4],
                       preferred_element_type=jnp.float32)
        br4 = jnp.maximum(accp + t1x1_ref[:, :C4], 0.0)
        o_ref[:, :, 3 * C4:4 * C4] = br4.reshape(H, W, C4).astype(o_ref.dtype)

    return kernel


# ----------------------------------------------------------------------------
# BN folding (inference mode): y = x (*) (w*s) + (b*s + beta - mean*s)
# ----------------------------------------------------------------------------
def _fold_bn(p, eps=1e-5):
    s = p['gamma'] / jnp.sqrt(p['var'] + eps)                 # (Cout,)
    w = (p['w'] * s).astype(jnp.float32)                      # HWIO, scale over Cout
    t = (p['b'] * s + p['beta'] - p['mean'] * s).reshape(1, -1).astype(jnp.float32)
    return w, t


# ----------------------------------------------------------------------------
# Inception block forward (Pallas)
# ----------------------------------------------------------------------------
def inception_block_v1b_forward(x_nchw, params, eps=1e-5):
    x = jnp.transpose(x_nchw, (0, 2, 3, 1)).astype(jnp.float32)   # NCHW -> NHWC
    N, H, W, Cin = x.shape

    w1, t1 = _fold_bn(params['conv1'], eps)       # (1,1,Cin,C4)
    w21, t21 = _fold_bn(params['conv2_1'], eps)   # (1,1,Cin,Cm2)
    w22, t22 = _fold_bn(params['conv2_2'], eps)   # (3,3,Cm2,C4)
    w31, t31 = _fold_bn(params['conv3_1'], eps)   # (1,1,Cin,Cm3)
    w32, t32 = _fold_bn(params['conv3_2'], eps)   # (5,5,Cm3,C4)

    C4 = w1.shape[-1]
    Cm2 = w21.shape[-1]
    Cm3 = w31.shape[-1]
    Ctot = 4 * C4
    C1x1 = C4 + Cm2 + Cm3

    # One wide weight matrix for the three entry 1x1 convs that all consume x.
    w1x1 = jnp.concatenate([w1.reshape(Cin, C4),
                            w21.reshape(Cin, Cm2),
                            w31.reshape(Cin, Cm3)], axis=-1)       # (Cin, C1x1)
    t1x1 = jnp.concatenate([t1, t21, t31], axis=-1)                # (1, C1x1)

    # KxK weights reshaped to match the in-kernel im2col column ordering.
    w3 = w22.reshape(3 * 3 * Cm2, C4)
    w5 = w32.reshape(5 * 5 * Cm3, C4)

    kernel = _make_inception_kernel(H, W, Cin, C4, Cm2, Cm3)

    out_nhwc = pl.pallas_call(
        kernel,
        out_shape=jax.ShapeDtypeStruct((N, H, W, Ctot), jnp.float32),
        grid=(N,),
        in_specs=[
            pl.BlockSpec((None, H, W, Cin), lambda n: (n, 0, 0, 0)),
            pl.BlockSpec((Cin, C1x1), lambda n: (0, 0)),
            pl.BlockSpec((1, C1x1), lambda n: (0, 0)),
            pl.BlockSpec((3 * 3 * Cm2, C4), lambda n: (0, 0)),
            pl.BlockSpec((1, C4), lambda n: (0, 0)),
            pl.BlockSpec((5 * 5 * Cm3, C4), lambda n: (0, 0)),
            pl.BlockSpec((1, C4), lambda n: (0, 0)),
        ],
        out_specs=pl.BlockSpec((None, H, W, Ctot), lambda n: (n, 0, 0, 0)),
        scratch_shapes=[
            pltpu.VMEM((H + 2, W + 2, Cm2), jnp.float32),    # zero-padded 1x1->3x3 intermediate
            pltpu.VMEM((H * W, 3 * 3 * Cm2), jnp.float32),   # im2col for 3x3
            pltpu.VMEM((H + 4, W + 4, Cm3), jnp.float32),    # zero-padded 1x1->5x5 intermediate
            pltpu.VMEM((H * W, 5 * 5 * Cm3), jnp.float32),   # im2col for 5x5
            pltpu.VMEM((H + 2, W + 2, Cin), jnp.float32),    # -inf-padded input for maxpool
        ],
        compiler_params=pltpu.CompilerParams(
            dimension_semantics=("parallel",),
            vmem_limit_bytes=32 * 1024 * 1024),
    )(x, w1x1, t1x1, w3, t22, w5, t32)

    return jnp.transpose(out_nhwc, (0, 3, 1, 2))  # NHWC -> NCHW (matches torch.cat(outputs, 1))


# ----------------------------------------------------------------------------
# Parameter init (deterministic, synthetic)
# ----------------------------------------------------------------------------
def init_nconv(key, in_c, out_c, k):
    k1, k2, k3, k4, k5 = jax.random.split(key, 5)
    return dict(
        w=0.1 * jax.random.normal(k1, (k, k, in_c, out_c), jnp.float32),  # HWIO
        b=0.05 * jax.random.normal(k2, (out_c,), jnp.float32),
        gamma=1.0 + 0.1 * jax.random.normal(k3, (out_c,), jnp.float32),
        beta=0.1 * jax.random.normal(k4, (out_c,), jnp.float32),
        mean=0.1 * jax.random.normal(k5, (out_c,), jnp.float32),
        var=jnp.ones((out_c,), jnp.float32),
    )


# ----------------------------------------------------------------------------
# Pure-JAX reference (for correctness check)
# ----------------------------------------------------------------------------
def reference_forward(x, params, eps=1e-5):
    def nconv(x, p, pad):
        y = lax.conv_general_dilated(
            x, p['w'], (1, 1), [(pad, pad), (pad, pad)],
            dimension_numbers=('NCHW', 'HWIO', 'NCHW'))
        y = y + p['b'].reshape(1, -1, 1, 1)
        s = p['gamma'] / jnp.sqrt(p['var'] + eps)
        t = p['beta'] - p['mean'] * s
        y = y * s.reshape(1, -1, 1, 1) + t.reshape(1, -1, 1, 1)
        return jnp.maximum(y, 0.0)

    br1 = nconv(x, params['conv1'], 0)
    br2 = nconv(nconv(x, params['conv2_1'], 0), params['conv2_2'], 1)
    br3 = nconv(nconv(x, params['conv3_1'], 0), params['conv3_2'], 2)
    pool = lax.reduce_window(x, -jnp.inf, lax.max, (1, 1, 3, 3), (1, 1, 1, 1),
                             [(0, 0), (0, 0), (1, 1), (1, 1)])
    br4 = nconv(pool, params['conv1'], 0)
    return jnp.concatenate([br1, br2, br3, br4], axis=1)


if __name__ == "__main__":
    key = jax.random.PRNGKey(0)
    kx, k1, k2, k3, k4, k5 = jax.random.split(key, 6)

    N, in_c, H, W = 2, 8, 16, 16
    out_c = 16
    x = jax.random.normal(kx, (N, in_c, H, W), jnp.float32)

    params = {
        'conv1':   init_nconv(k1, in_c, out_c // 4, 1),
        'conv2_1': init_nconv(k2, in_c, out_c // 8, 1),
        'conv2_2': init_nconv(k3, out_c // 8, out_c // 4, 3),
        'conv3_1': init_nconv(k4, in_c, out_c // 8, 1),
        'conv3_2': init_nconv(k5, out_c // 8, out_c // 4, 5),
    }

    out = inception_block_v1b_forward(x, params)
    out = jax.block_until_ready(out)

    ref = reference_forward(x, params)
    assert out.shape == (N, out_c, H, W), out.shape
    max_err = float(jnp.max(jnp.abs(out - ref)))
    assert jnp.allclose(out, ref, atol=1e-4, rtol=1e-4), max_err

    print("KERNEL_OK")
</pallas_src>

<mosaic_0001>
module attributes {stable_mosaic.version = 11 : i64} {
  func.func @kernel(%arg0: i32, %arg1: memref<1x16x16x8xf32, #tpu.memory_space<vmem>>, %arg2: memref<8x8xf32, #tpu.memory_space<vmem>>, %arg3: memref<1x8xf32, #tpu.memory_space<vmem>>, %arg4: memref<18x4xf32, #tpu.memory_space<vmem>>, %arg5: memref<1x4xf32, #tpu.memory_space<vmem>>, %arg6: memref<50x4xf32, #tpu.memory_space<vmem>>, %arg7: memref<1x4xf32, #tpu.memory_space<vmem>>, %arg8: memref<1x16x16x16xf32, #tpu.memory_space<vmem>>, %arg9: memref<18x18x2xf32, #tpu.memory_space<vmem>>, %arg10: memref<256x18xf32, #tpu.memory_space<vmem>>, %arg11: memref<20x20x2xf32, #tpu.memory_space<vmem>>, %arg12: memref<256x50xf32, #tpu.memory_space<vmem>>, %arg13: memref<18x18x8xf32, #tpu.memory_space<vmem>>) attributes {dimension_semantics = [#tpu.dimension_semantics<parallel>], iteration_bounds = array<i64: 2>, scalar_prefetch = 0 : i64, scratch_operands = 5 : i64, tpu.core_type = #tpu.core_type<tc>, window_params = [{transform_indices = @transform_0, window_bounds = array<i64: 1, 16, 16, 8>}, {pipeline_mode = #tpu.pipeline_mode<synchronous>, transform_indices = @transform_1, window_bounds = array<i64: 8, 8>}, {pipeline_mode = #tpu.pipeline_mode<synchronous>, transform_indices = @transform_2, window_bounds = array<i64: 1, 8>}, {pipeline_mode = #tpu.pipeline_mode<synchronous>, transform_indices = @transform_3, window_bounds = array<i64: 18, 4>}, {pipeline_mode = #tpu.pipeline_mode<synchronous>, transform_indices = @transform_4, window_bounds = array<i64: 1, 4>}, {pipeline_mode = #tpu.pipeline_mode<synchronous>, transform_indices = @transform_5, window_bounds = array<i64: 50, 4>}, {pipeline_mode = #tpu.pipeline_mode<synchronous>, transform_indices = @transform_6, window_bounds = array<i64: 1, 4>}, {transform_indices = @transform_7, window_bounds = array<i64: 1, 16, 16, 16>}]} {
    %c0 = arith.constant 0 : index
    %c0_0 = arith.constant 0 : index
    %c0_1 = arith.constant 0 : index
    %c0_2 = arith.constant 0 : index
    %0 = vector.load %arg1[%c0, %c0_0, %c0_1, %c0_2] : memref<1x16x16x8xf32, #tpu.memory_space<vmem>>, vector<1x16x16x8xf32>
    %1 = vector.shape_cast %0 : vector<1x16x16x8xf32> to vector<16x16x8xf32>
    %2 = vector.shape_cast %1 : vector<16x16x8xf32> to vector<256x8xf32>
    %c0_3 = arith.constant 0 : index
    %c0_4 = arith.constant 0 : index
    %3 = vector.load %arg2[%c0_3, %c0_4] : memref<8x8xf32, #tpu.memory_space<vmem>>, vector<8x8xf32>
    %cst = arith.constant dense<0.000000e+00> : vector<256x8xf32>
    %4 = tpu.matmul %2, %3, %cst {dimension_numbers = #tpu.dot_dimension_numbers<[1], [0], [0], [1], [0, 0, 1, 1], [], []>} : vector<256x8xf32>, vector<8x8xf32>, vector<256x8xf32> -> vector<256x8xf32>
    %c0_5 = arith.constant 0 : index
    %c0_6 = arith.constant 0 : index
    %5 = vector.load %arg3[%c0_5, %c0_6] : memref<1x8xf32, #tpu.memory_space<vmem>>, vector<1x8xf32>
    %6 = vector.broadcast %5 : vector<1x8xf32> to vector<256x8xf32>
    %7 = arith.addf %4, %6 : vector<256x8xf32>
    %cst_7 = arith.constant 0.000000e+00 : f32
    %8 = vector.broadcast %cst_7 : f32 to vector<256x8xf32>
    %9 = arith.maximumf %7, %8 : vector<256x8xf32>
    %10 = vector.extract_strided_slice %9 {offsets = [0, 0], sizes = [256, 4], strides = [1, 1]} : vector<256x8xf32> to vector<256x4xf32>
    %11 = vector.extract_strided_slice %9 {offsets = [0, 4], sizes = [256, 2], strides = [1, 1]} : vector<256x8xf32> to vector<256x2xf32>
    %12 = vector.extract_strided_slice %9 {offsets = [0, 6], sizes = [256, 2], strides = [1, 1]} : vector<256x8xf32> to vector<256x2xf32>
    %13 = vector.shape_cast %10 : vector<256x4xf32> to vector<16x16x4xf32>
    %c0_8 = arith.constant 0 : index
    %c0_9 = arith.constant 0 : index
    %c0_10 = arith.constant 0 : index
    %c0_11 = arith.constant 0 : index
    %14 = vector.load %arg8[%c0_8, %c0_9, %c0_10, %c0_11] : memref<1x16x16x16xf32, #tpu.memory_space<vmem>>, vector<1x16x16x4xf32>
    %15 = vector.shape_cast %14 : vector<1x16x16x4xf32> to vector<16x16x4xf32>
    %16 = vector.shape_cast %13 : vector<16x16x4xf32> to vector<1x16x16x4xf32>
    tpu.vector_store %arg8[%c0_8, %c0_9, %c0_10, %c0_11], %16 {strides = array<i32>} : memref<1x16x16x16xf32, #tpu.memory_space<vmem>>, vector<1x16x16x4xf32>,
    %cst_12 = arith.constant 0.000000e+00 : f32
    %17 = vector.broadcast %cst_12 : f32 to vector<18x18x2xf32>
    %c0_13 = arith.constant 0 : index
    %c0_14 = arith.constant 0 : index
    %c0_15 = arith.constant 0 : index
    %18 = vector.load %arg9[%c0_13, %c0_14, %c0_15] : memref<18x18x2xf32, #tpu.memory_space<vmem>>, vector<18x18x2xf32>
    tpu.vector_store %arg9[%c0_13, %c0_14, %c0_15], %17 {strides = array<i32>} : memref<18x18x2xf32, #tpu.memory_space<vmem>>, vector<18x18x2xf32>,
    %19 = vector.shape_cast %11 : vector<256x2xf32> to vector<16x16x2xf32>
    %c1 = arith.constant 1 : index
    %c1_16 = arith.constant 1 : index
    %c0_17 = arith.constant 0 : index
    %20 = vector.load %arg9[%c1, %c1_16, %c0_17] : memref<18x18x2xf32, #tpu.memory_space<vmem>>, vector<16x16x2xf32>
    tpu.vector_store %arg9[%c1, %c1_16, %c0_17], %19 {strides = array<i32>} : memref<18x18x2xf32, #tpu.memory_space<vmem>>, vector<16x16x2xf32>,
    %c0_18 = arith.constant 0 : index
    %c0_19 = arith.constant 0 : index
    %c0_20 = arith.constant 0 : index
    %21 = vector.load %arg9[%c0_18, %c0_19, %c0_20] : memref<18x18x2xf32, #tpu.memory_space<vmem>>, vector<16x16x2xf32>
    %22 = vector.shape_cast %21 : vector<16x16x2xf32> to vector<256x2xf32>
    %c0_21 = arith.constant 0 : index
    %c0_22 = arith.constant 0 : index
    %23 = vector.load %arg10[%c0_21, %c0_22] : memref<256x18xf32, #tpu.memory_space<vmem>>, vector<256x2xf32>
    tpu.vector_store %arg10[%c0_21, %c0_22], %22 {strides = array<i32>} : memref<256x18xf32, #tpu.memory_space<vmem>>, vector<256x2xf32>,
    %c0_23 = arith.constant 0 : index
    %c1_24 = arith.constant 1 : index
    %c0_25 = arith.constant 0 : index
    %24 = vector.load %arg9[%c0_23, %c1_24, %c0_25] : memref<18x18x2xf32, #tpu.memory_space<vmem>>, vector<16x16x2xf32>
    %25 = vector.shape_cast %24 : vector<16x16x2xf32> to vector<256x2xf32>
    %c0_26 = arith.constant 0 : index
    %c2 = arith.constant 2 : index
    %26 = vector.load %arg10[%c0_26, %c2] : memref<256x18xf32, #tpu.memory_space<vmem>>, vector<256x2xf32>
    tpu.vector_store %arg10[%c0_26, %c2], %25 {strides = array<i32>} : memref<256x18xf32, #tpu.memory_space<vmem>>, vector<256x2xf32>,
    %c0_27 = arith.constant 0 : index
    %c2_28 = arith.constant 2 : index
    %c0_29 = arith.constant 0 : index
    %27 = vector.load %arg9[%c0_27, %c2_28, %c0_29] : memref<18x18x2xf32, #tpu.memory_space<vmem>>, vector<16x16x2xf32>
    %28 = vector.shape_cast %27 : vector<16x16x2xf32> to vector<256x2xf32>
    %c0_30 = arith.constant 0 : index
    %c4 = arith.constant 4 : index
    %29 = vector.load %arg10[%c0_30, %c4] : memref<256x18xf32, #tpu.memory_space<vmem>>, vector<256x2xf32>
    tpu.vector_store %arg10[%c0_30, %c4], %28 {strides = array<i32>} : memref<256x18xf32, #tpu.memory_space<vmem>>, vector<256x2xf32>,
    %c1_31 = arith.constant 1 : index
    %c0_32 = arith.constant 0 : index
    %c0_33 = arith.constant 0 : index
    %30 = vector.load %arg9[%c1_31, %c0_32, %c0_33] : memref<18x18x2xf32, #tpu.memory_space<vmem>>, vector<16x16x2xf32>
    %31 = vector.shape_cast %30 : vector<16x16x2xf32> to vector<256x2xf32>
    %c0_34 = arith.constant 0 : index
    %c6 = arith.constant 6 : index
    %32 = vector.load %arg10[%c0_34, %c6] : memref<256x18xf32, #tpu.memory_space<vmem>>, vector<256x2xf32>
    tpu.vector_store %arg10[%c0_34, %c6], %31 {strides = array<i32>} : memref<256x18xf32, #tpu.memory_space<vmem>>, vector<256x2xf32>,
    %c1_35 = arith.constant 1 : index
    %c1_36 = arith.constant 1 : index
    %c0_37 = arith.constant 0 : index
    %33 = vector.load %arg9[%c1_35, %c1_36, %c0_37] : memref<18x18x2xf32, #tpu.memory_space<vmem>>, vector<16x16x2xf32>
    %34 = vector.shape_cast %33 : vector<16x16x2xf32> to vector<256x2xf32>
    %c0_38 = arith.constant 0 : index
    %c8 = arith.constant 8 : index
    %35 = vector.load %arg10[%c0_38, %c8] : memref<256x18xf32, #tpu.memory_space<vmem>>, vector<256x2xf32>
    tpu.vector_store %arg10[%c0_38, %c8], %34 {strides = array<i32>} : memref<256x18xf32, #tpu.memory_space<vmem>>, vector<256x2xf32>,
    %c1_39 = arith.constant 1 : index
    %c2_40 = arith.constant 2 : index
    %c0_41 = arith.constant 0 : index
    %36 = vector.load %arg9[%c1_39, %c2_40, %c0_41] : memref<18x18x2xf32, #tpu.memory_space<vmem>>, vector<16x16x2xf32>
    %37 = vector.shape_cast %36 : vector<16x16x2xf32> to vector<256x2xf32>
    %c0_42 = arith.constant 0 : index
    %c10 = arith.constant 10 : index
    %38 = vector.load %arg10[%c0_42, %c10] : memref<256x18xf32, #tpu.memory_space<vmem>>, vector<256x2xf32>
    tpu.vector_store %arg10[%c0_42, %c10], %37 {strides = array<i32>} : memref<256x18xf32, #tpu.memory_space<vmem>>, vector<256x2xf32>,
    %c2_43 = arith.constant 2 : index
    %c0_44 = arith.constant 0 : index
    %c0_45 = arith.constant 0 : index
    %39 = vector.load %arg9[%c2_43, %c0_44, %c0_45] : memref<18x18x2xf32, #tpu.memory_space<vmem>>, vector<16x16x2xf32>
    %40 = vector.shape_cast %39 : vector<16x16x2xf32> to vector<256x2xf32>
    %c0_46 = arith.constant 0 : index
    %c12 = arith.constant 12 : index
    %41 = vector.load %arg10[%c0_46, %c12] : memref<256x18xf32, #tpu.memory_space<vmem>>, vector<256x2xf32>
    tpu.vector_store %arg10[%c0_46, %c12], %40 {strides = array<i32>} : memref<256x18xf32, #tpu.memory_space<vmem>>, vector<256x2xf32>,
    %c2_47 = arith.constant 2 : index
    %c1_48 = arith.constant 1 : index
    %c0_49 = arith.constant 0 : index
    %42 = vector.load %arg9[%c2_47, %c1_48, %c0_49] : memref<18x18x2xf32, #tpu.memory_space<vmem>>, vector<16x16x2xf32>
    %43 = vector.shape_cast %42 : vector<16x16x2xf32> to vector<256x2xf32>
    %c0_50 = arith.constant 0 : index
    %c14 = arith.constant 14 : index
    %44 = vector.load %arg10[%c0_50, %c14] : memref<256x18xf32, #tpu.memory_space<vmem>>, vector<256x2xf32>
    tpu.vector_store %arg10[%c0_50, %c14], %43 {strides = array<i32>} : memref<256x18xf32, #tpu.memory_space<vmem>>, vector<256x2xf32>,
    %c2_51 = arith.constant 2 : index
    %c2_52 = arith.constant 2 : index
    %c0_53 = arith.constant 0 : index
    %45 = vector.load %arg9[%c2_51, %c2_52, %c0_53] : memref<18x18x2xf32, #tpu.memory_space<vmem>>, vector<16x16x2xf32>
    %46 = vector.shape_cast %45 : vector<16x16x2xf32> to vector<256x2xf32>
    %c0_54 = arith.constant 0 : index
    %c16 = arith.constant 16 : index
    %47 = vector.load %arg10[%c0_54, %c16] : memref<256x18xf32, #tpu.memory_space<vmem>>, vector<256x2xf32>
    tpu.vector_store %arg10[%c0_54, %c16], %46 {strides = array<i32>} : memref<256x18xf32, #tpu.memory_space<vmem>>, vector<256x2xf32>,
    %c0_55 = arith.constant 0 : index
    %c0_56 = arith.constant 0 : index
    %48 = vector.load %arg10[%c0_55, %c0_56] : memref<256x18xf32, #tpu.memory_space<vmem>>, vector<256x18xf32>
    %c0_57 = arith.constant 0 : index
    %c0_58 = arith.constant 0 : index
    %49 = vector.load %arg4[%c0_57, %c0_58] : memref<18x4xf32, #tpu.memory_space<vmem>>, vector<18x4xf32>
    %cst_59 = arith.constant dense<0.000000e+00> : vector<256x4xf32>
    %50 = tpu.matmul %48, %49, %cst_59 {dimension_numbers = #tpu.dot_dimension_numbers<[1], [0], [0], [1], [0, 0, 1, 1], [], []>} : vector<256x18xf32>, vector<18x4xf32>, vector<256x4xf32> -> vector<256x4xf32>
    %c0_60 = arith.constant 0 : index
    %c0_61 = arith.constant 0 : index
    %51 = vector.load %arg5[%c0_60, %c0_61] : memref<1x4xf32, #tpu.memory_space<vmem>>, vector<1x4xf32>
    %52 = vector.broadcast %51 : vector<1x4xf32> to vector<256x4xf32>
    %53 = arith.addf %50, %52 : vector<256x4xf32>
    %cst_62 = arith.constant 0.000000e+00 : f32
    %54 = vector.broadcast %cst_62 : f32 to vector<256x4xf32>
    %55 = arith.maximumf %53, %54 : vector<256x4xf32>
    %56 = vector.shape_cast %55 : vector<256x4xf32> to vector<16x16x4xf32>
    %c0_63 = arith.constant 0 : index
    %c0_64 = arith.constant 0 : index
    %c0_65 = arith.constant 0 : index
    %c4_66 = arith.constant 4 : index
    %57 = vector.load %arg8[%c0_63, %c0_64, %c0_65, %c4_66] : memref<1x16x16x16xf32, #tpu.memory_space<vmem>>, vector<1x16x16x4xf32>
    %58 = vector.shape_cast %57 : vector<1x16x16x4xf32> to vector<16x16x4xf32>
    %59 = vector.shape_cast %56 : vector<16x16x4xf32> to vector<1x16x16x4xf32>
    tpu.vector_store %arg8[%c0_63, %c0_64, %c0_65, %c4_66], %59 {strides = array<i32>} : memref<1x16x16x16xf32, #tpu.memory_space<vmem>>, vector<1x16x16x4xf32>,
    %cst_67 = arith.constant 0.000000e+00 : f32
    %60 = vector.broadcast %cst_67 : f32 to vector<20x20x2xf32>
    %c0_68 = arith.constant 0 : index
    %c0_69 = arith.constant 0 : index
    %c0_70 = arith.constant 0 : index
    %61 = vector.load %arg11[%c0_68, %c0_69, %c0_70] : memref<20x20x2xf32, #tpu.memory_space<vmem>>, vector<20x20x2xf32>
    tpu.vector_store %arg11[%c0_68, %c0_69, %c0_70], %60 {strides = array<i32>} : memref<20x20x2xf32, #tpu.memory_space<vmem>>, vector<20x20x2xf32>,
    %62 = vector.shape_cast %12 : vector<256x2xf32> to vector<16x16x2xf32>
    %c2_71 = arith.constant 2 : index
    %c2_72 = arith.constant 2 : index
    %c0_73 = arith.constant 0 : index
    %63 = vector.load %arg11[%c2_71, %c2_72, %c0_73] : memref<20x20x2xf32, #tpu.memory_space<vmem>>, vector<16x16x2xf32>
    tpu.vector_store %arg11[%c2_71, %c2_72, %c0_73], %62 {strides = array<i32>} : memref<20x20x2xf32, #tpu.memory_space<vmem>>, vector<16x16x2xf32>,
    %c0_74 = arith.constant 0 : index
    %c0_75 = arith.constant 0 : index
    %c0_76 = arith.constant 0 : index
    %64 = vector.load %arg11[%c0_74, %c0_75, %c0_76] : memref<20x20x2xf32, #tpu.memory_space<vmem>>, vector<16x16x2xf32>
    %65 = vector.shape_cast %64 : vector<16x16x2xf32> to vector<256x2xf32>
    %c0_77 = arith.constant 0 : index
    %c0_78 = arith.constant 0 : index
    %66 = vector.load %arg12[%c0_77, %c0_78] : memref<256x50xf32, #tpu.memory_space<vmem>>, vector<256x2xf32>
    tpu.vector_store %arg12[%c0_77, %c0_78], %65 {strides = array<i32>} : memref<256x50xf32, #tpu.memory_space<vmem>>, vector<256x2xf32>,
    %c0_79 = arith.constant 0 : index
    %c1_80 = arith.constant 1 : index
    %c0_81 = arith.constant 0 : index
    %67 = vector.load %arg11[%c0_79, %c1_80, %c0_81] : memref<20x20x2xf32, #tpu.memory_space<vmem>>, vector<16x16x2xf32>
    %68 = vector.shape_cast %67 : vector<16x16x2xf32> to vector<256x2xf32>
    %c0_82 = arith.constant 0 : index
    %c2_83 = arith.constant 2 : index
    %69 = vector.load %arg12[%c0_82, %c2_83] : memref<256x50xf32, #tpu.memory_space<vmem>>, vector<256x2xf32>
    tpu.vector_store %arg12[%c0_82, %c2_83], %68 {strides = array<i32>} : memref<256x50xf32, #tpu.memory_space<vmem>>, vector<256x2xf32>,
    %c0_84 = arith.constant 0 : index
    %c2_85 = arith.constant 2 : index
    %c0_86 = arith.constant 0 : index
    %70 = vector.load %arg11[%c0_84, %c2_85, %c0_86] : memref<20x20x2xf32, #tpu.memory_space<vmem>>, vector<16x16x2xf32>
    %71 = vector.shape_cast %70 : vector<16x16x2xf32> to vector<256x2xf32>
    %c0_87 = arith.constant 0 : index
    %c4_88 = arith.constant 4 : index
    %72 = vector.load %arg12[%c0_87, %c4_88] : memref<256x50xf32, #tpu.memory_space<vmem>>, vector<256x2xf32>
    tpu.vector_store %arg12[%c0_87, %c4_88], %71 {strides = array<i32>} : memref<256x50xf32, #tpu.memory_space<vmem>>, vector<256x2xf32>,
    %c0_89 = arith.constant 0 : index
    %c3 = arith.constant 3 : index
    %c0_90 = arith.constant 0 : index
    %73 = vector.load %arg11[%c0_89, %c3, %c0_90] : memref<20x20x2xf32, #tpu.memory_space<vmem>>, vector<16x16x2xf32>
    %74 = vector.shape_cast %73 : vector<16x16x2xf32> to vector<256x2xf32>
    %c0_91 = arith.constant 0 : index
    %c6_92 = arith.constant 6 : index
    %75 = vector.load %arg12[%c0_91, %c6_92] : memref<256x50xf32, #tpu.memory_space<vmem>>, vector<256x2xf32>
    tpu.vector_store %arg12[%c0_91, %c6_92], %74 {strides = array<i32>} : memref<256x50xf32, #tpu.memory_space<vmem>>, vector<256x2xf32>,
    %c0_93 = arith.constant 0 : index
    %c4_94 = arith.constant 4 : index
    %c0_95 = arith.constant 0 : index
    %76 = vector.load %arg11[%c0_93, %c4_94, %c0_95] : memref<20x20x2xf32, #tpu.memory_space<vmem>>, vector<16x16x2xf32>
    %77 = vector.shape_cast %76 : vector<16x16x2xf32> to vector<256x2xf32>
    %c0_96 = arith.constant 0 : index
    %c8_97 = arith.constant 8 : index
    %78 = vector.load %arg12[%c0_96, %c8_97] : memref<256x50xf32, #tpu.memory_space<vmem>>, vector<256x2xf32>
    tpu.vector_store %arg12[%c0_96, %c8_97], %77 {strides = array<i32>} : memref<256x50xf32, #tpu.memory_space<vmem>>, vector<256x2xf32>,
    %c1_98 = arith.constant 1 : index
    %c0_99 = arith.constant 0 : index
    %c0_100 = arith.constant 0 : index
    %79 = vector.load %arg11[%c1_98, %c0_99, %c0_100] : memref<20x20x2xf32, #tpu.memory_space<vmem>>, vector<16x16x2xf32>
    %80 = vector.shape_cast %79 : vector<16x16x2xf32> to vector<256x2xf32>
    %c0_101 = arith.constant 0 : index
    %c10_102 = arith.constant 10 : index
    %81 = vector.load %arg12[%c0_101, %c10_102] : memref<256x50xf32, #tpu.memory_space<vmem>>, vector<256x2xf32>
    tpu.vector_store %arg12[%c0_101, %c10_102], %80 {strides = array<i32>} : memref<256x50xf32, #tpu.memory_space<vmem>>, vector<256x2xf32>,
    %c1_103 = arith.constant 1 : index
    %c1_104 = arith.constant 1 : index
    %c0_105 = arith.constant 0 : index
    %82 = vector.load %arg11[%c1_103, %c1_104, %c0_105] : memref<20x20x2xf32, #tpu.memory_space<vmem>>, vector<16x16x2xf32>
    %83 = vector.shape_cast %82 : vector<16x16x2xf32> to vector<256x2xf32>
    %c0_106 = arith.constant 0 : index
    %c12_107 = arith.constant 12 : index
    %84 = vector.load %arg12[%c0_106, %c12_107] : memref<256x50xf32, #tpu.memory_space<vmem>>, vector<256x2xf32>
    tpu.vector_store %arg12[%c0_106, %c12_107], %83 {strides = array<i32>} : memref<256x50xf32, #tpu.memory_space<vmem>>, vector<256x2xf32>,
    %c1_108 = arith.constant 1 : index
    %c2_109 = arith.constant 2 : index
    %c0_110 = arith.constant 0 : index
    %85 = vector.load %arg11[%c1_108, %c2_109, %c0_110] : memref<20x20x2xf32, #tpu.memory_space<vmem>>, vector<16x16x2xf32>
    %86 = vector.shape_cast %85 : vector<16x16x2xf32> to vector<256x2xf32>
    %c0_111 = arith.constant 0 : index
    %c14_112 = arith.constant 14 : index
    %87 = vector.load %arg12[%c0_111, %c14_112] : memref<256x50xf32, #tpu.memory_space<vmem>>, vector<256x2xf32>
    tpu.vector_store %arg12[%c0_111, %c14_112], %86 {strides = array<i32>} : memref<256x50xf32, #tpu.memory_space<vmem>>, vector<256x2xf32>,
    %c1_113 = arith.constant 1 : index
    %c3_114 = arith.constant 3 : index
    %c0_115 = arith.constant 0 : index
    %88 = vector.load %arg11[%c1_113, %c3_114, %c0_115] : memref<20x20x2xf32, #tpu.memory_space<vmem>>, vector<16x16x2xf32>
    %89 = vector.shape_cast %88 : vector<16x16x2xf32> to vector<256x2xf32>
    %c0_116 = arith.constant 0 : index
    %c16_117 = arith.constant 16 : index
    %90 = vector.load %arg12[%c0_116, %c16_117] : memref<256x50xf32, #tpu.memory_space<vmem>>, vector<256x2xf32>
    tpu.vector_store %arg12[%c0_116, %c16_117], %89 {strides = array<i32>} : memref<256x50xf32, #tpu.memory_space<vmem>>, vector<256x2xf32>,
    %c1_118 = arith.constant 1 : index
    %c4_119 = arith.constant 4 : index
    %c0_120 = arith.constant 0 : index
    %91 = vector.load %arg11[%c1_118, %c4_119, %c0_120] : memref<20x20x2xf32, #tpu.memory_space<vmem>>, vector<16x16x2xf32>
    %92 = vector.shape_cast %91 : vector<16x16x2xf32> to vector<256x2xf32>
    %c0_121 = arith.constant 0 : index
    %c18 = arith.constant 18 : index
    %93 = vector.load %arg12[%c0_121, %c18] : memref<256x50xf32, #tpu.memory_space<vmem>>, vector<256x2xf32>
    tpu.vector_store %arg12[%c0_121, %c18], %92 {strides = array<i32>} : memref<256x50xf32, #tpu.memory_space<vmem>>, vector<256x2xf32>,
    %c2_122 = arith.constant 2 : index
    %c0_123 = arith.constant 0 : index
    %c0_124 = arith.constant 0 : index
    %94 = vector.load %arg11[%c2_122, %c0_123, %c0_124] : memref<20x20x2xf32, #tpu.memory_space<vmem>>, vector<16x16x2xf32>
    %95 = vector.shape_cast %94 : vector<16x16x2xf32> to vector<256x2xf32>
    %c0_125 = arith.constant 0 : index
    %c20 = arith.constant 20 : index
    %96 = vector.load %arg12[%c0_125, %c20] : memref<256x50xf32, #tpu.memory_space<vmem>>, vector<256x2xf32>
    tpu.vector_store %arg12[%c0_125, %c20], %95 {strides = array<i32>} : memref<256x50xf32, #tpu.memory_space<vmem>>, vector<256x2xf32>,
    %c2_126 = arith.constant 2 : index
    %c1_127 = arith.constant 1 : index
    %c0_128 = arith.constant 0 : index
    %97 = vector.load %arg11[%c2_126, %c1_127, %c0_128] : memref<20x20x2xf32, #tpu.memory_space<vmem>>, vector<16x16x2xf32>
    %98 = vector.shape_cast %97 : vector<16x16x2xf32> to vector<256x2xf32>
    %c0_129 = arith.constant 0 : index
    %c22 = arith.constant 22 : index
    %99 = vector.load %arg12[%c0_129, %c22] : memref<256x50xf32, #tpu.memory_space<vmem>>, vector<256x2xf32>
    tpu.vector_store %arg12[%c0_129, %c22], %98 {strides = array<i32>} : memref<256x50xf32, #tpu.memory_space<vmem>>, vector<256x2xf32>,
    %c2_130 = arith.constant 2 : index
    %c2_131 = arith.constant 2 : index
    %c0_132 = arith.constant 0 : index
    %100 = vector.load %arg11[%c2_130, %c2_131, %c0_132] : memref<20x20x2xf32, #tpu.memory_space<vmem>>, vector<16x16x2xf32>
    %101 = vector.shape_cast %100 : vector<16x16x2xf32> to vector<256x2xf32>
    %c0_133 = arith.constant 0 : index
    %c24 = arith.constant 24 : index
    %102 = vector.load %arg12[%c0_133, %c24] : memref<256x50xf32, #tpu.memory_space<vmem>>, vector<256x2xf32>
    tpu.vector_store %arg12[%c0_133, %c24], %101 {strides = array<i32>} : memref<256x50xf32, #tpu.memory_space<vmem>>, vector<256x2xf32>,
    %c2_134 = arith.constant 2 : index
    %c3_135 = arith.constant 3 : index
    %c0_136 = arith.constant 0 : index
    %103 = vector.load %arg11[%c2_134, %c3_135, %c0_136] : memref<20x20x2xf32, #tpu.memory_space<vmem>>, vector<16x16x2xf32>
    %104 = vector.shape_cast %103 : vector<16x16x2xf32> to vector<256x2xf32>
    %c0_137 = arith.constant 0 : index
    %c26 = arith.constant 26 : index
    %105 = vector.load %arg12[%c0_137, %c26] : memref<256x50xf32, #tpu.memory_space<vmem>>, vector<256x2xf32>
    tpu.vector_store %arg12[%c0_137, %c26], %104 {strides = array<i32>} : memref<256x50xf32, #tpu.memory_space<vmem>>, vector<256x2xf32>,
    %c2_138 = arith.constant 2 : index
    %c4_139 = arith.constant 4 : index
    %c0_140 = arith.constant 0 : index
    %106 = vector.load %arg11[%c2_138, %c4_139, %c0_140] : memref<20x20x2xf32, #tpu.memory_space<vmem>>, vector<16x16x2xf32>
    %107 = vector.shape_cast %106 : vector<16x16x2xf32> to vector<256x2xf32>
    %c0_141 = arith.constant 0 : index
    %c28 = arith.constant 28 : index
    %108 = vector.load %arg12[%c0_141, %c28] : memref<256x50xf32, #tpu.memory_space<vmem>>, vector<256x2xf32>
    tpu.vector_store %arg12[%c0_141, %c28], %107 {strides = array<i32>} : memref<256x50xf32, #tpu.memory_space<vmem>>, vector<256x2xf32>,
    %c3_142 = arith.constant 3 : index
    %c0_143 = arith.constant 0 : index
    %c0_144 = arith.constant 0 : index
    %109 = vector.load %arg11[%c3_142, %c0_143, %c0_144] : memref<20x20x2xf32, #tpu.memory_space<vmem>>, vector<16x16x2xf32>
    %110 = vector.shape_cast %109 : vector<16x16x2xf32> to vector<256x2xf32>
    %c0_145 = arith.constant 0 : index
    %c30 = arith.constant 30 : index
    %111 = vector.load %arg12[%c0_145, %c30] : memref<256x50xf32, #tpu.memory_space<vmem>>, vector<256x2xf32>
    tpu.vector_store %arg12[%c0_145, %c30], %110 {strides = array<i32>} : memref<256x50xf32, #tpu.memory_space<vmem>>, vector<256x2xf32>,
    %c3_146 = arith.constant 3 : index
    %c1_147 = arith.constant 1 : index
    %c0_148 = arith.constant 0 : index
    %112 = vector.load %arg11[%c3_146, %c1_147, %c0_148] : memref<20x20x2xf32, #tpu.memory_space<vmem>>, vector<16x16x2xf32>
    %113 = vector.shape_cast %112 : vector<16x16x2xf32> to vector<256x2xf32>
    %c0_149 = arith.constant 0 : index
    %c32 = arith.constant 32 : index
    %114 = vector.load %arg12[%c0_149, %c32] : memref<256x50xf32, #tpu.memory_space<vmem>>, vector<256x2xf32>
    tpu.vector_store %arg12[%c0_149, %c32], %113 {strides = array<i32>} : memref<256x50xf32, #tpu.memory_space<vmem>>, vector<256x2xf32>,
    %c3_150 = arith.constant 3 : index
    %c2_151 = arith.constant 2 : index
    %c0_152 = arith.constant 0 : index
    %115 = vector.load %arg11[%c3_150, %c2_151, %c0_152] : memref<20x20x2xf32, #tpu.memory_space<vmem>>, vector<16x16x2xf32>
    %116 = vector.shape_cast %115 : vector<16x16x2xf32> to vector<256x2xf32>
    %c0_153 = arith.constant 0 : index
    %c34 = arith.constant 34 : index
    %117 = vector.load %arg12[%c0_153, %c34] : memref<256x50xf32, #tpu.memory_space<vmem>>, vector<256x2xf32>
    tpu.vector_store %arg12[%c0_153, %c34], %116 {strides = array<i32>} : memref<256x50xf32, #tpu.memory_space<vmem>>, vector<256x2xf32>,
    %c3_154 = arith.constant 3 : index
    %c3_155 = arith.constant 3 : index
    %c0_156 = arith.constant 0 : index
    %118 = vector.load %arg11[%c3_154, %c3_155, %c0_156] : memref<20x20x2xf32, #tpu.memory_space<vmem>>, vector<16x16x2xf32>
    %119 = vector.shape_cast %118 : vector<16x16x2xf32> to vector<256x2xf32>
    %c0_157 = arith.constant 0 : index
    %c36 = arith.constant 36 : index
    %120 = vector.load %arg12[%c0_157, %c36] : memref<256x50xf32, #tpu.memory_space<vmem>>, vector<256x2xf32>
    tpu.vector_store %arg12[%c0_157, %c36], %119 {strides = array<i32>} : memref<256x50xf32, #tpu.memory_space<vmem>>, vector<256x2xf32>,
    %c3_158 = arith.constant 3 : index
    %c4_159 = arith.constant 4 : index
    %c0_160 = arith.constant 0 : index
    %121 = vector.load %arg11[%c3_158, %c4_159, %c0_160] : memref<20x20x2xf32, #tpu.memory_space<vmem>>, vector<16x16x2xf32>
    %122 = vector.shape_cast %121 : vector<16x16x2xf32> to vector<256x2xf32>
    %c0_161 = arith.constant 0 : index
    %c38 = arith.constant 38 : index
    %123 = vector.load %arg12[%c0_161, %c38] : memref<256x50xf32, #tpu.memory_space<vmem>>, vector<256x2xf32>
    tpu.vector_store %arg12[%c0_161, %c38], %122 {strides = array<i32>} : memref<256x50xf32, #tpu.memory_space<vmem>>, vector<256x2xf32>,
    %c4_162 = arith.constant 4 : index
    %c0_163 = arith.constant 0 : index
    %c0_164 = arith.constant 0 : index
    %124 = vector.load %arg11[%c4_162, %c0_163, %c0_164] : memref<20x20x2xf32, #tpu.memory_space<vmem>>, vector<16x16x2xf32>
    %125 = vector.shape_cast %124 : vector<16x16x2xf32> to vector<256x2xf32>
    %c0_165 = arith.constant 0 : index
    %c40 = arith.constant 40 : index
    %126 = vector.load %arg12[%c0_165, %c40] : memref<256x50xf32, #tpu.memory_space<vmem>>, vector<256x2xf32>
    tpu.vector_store %arg12[%c0_165, %c40], %125 {strides = array<i32>} : memref<256x50xf32, #tpu.memory_space<vmem>>, vector<256x2xf32>,
    %c4_166 = arith.constant 4 : index
    %c1_167 = arith.constant 1 : index
    %c0_168 = arith.constant 0 : index
    %127 = vector.load %arg11[%c4_166, %c1_167, %c0_168] : memref<20x20x2xf32, #tpu.memory_space<vmem>>, vector<16x16x2xf32>
    %128 = vector.shape_cast %127 : vector<16x16x2xf32> to vector<256x2xf32>
    %c0_169 = arith.constant 0 : index
    %c42 = arith.constant 42 : index
    %129 = vector.load %arg12[%c0_169, %c42] : memref<256x50xf32, #tpu.memory_space<vmem>>, vector<256x2xf32>
    tpu.vector_store %arg12[%c0_169, %c42], %128 {strides = array<i32>} : memref<256x50xf32, #tpu.memory_space<vmem>>, vector<256x2xf32>,
    %c4_170 = arith.constant 4 : index
    %c2_171 = arith.constant 2 : index
    %c0_172 = arith.constant 0 : index
    %130 = vector.load %arg11[%c4_170, %c2_171, %c0_172] : memref<20x20x2xf32, #tpu.memory_space<vmem>>, vector<16x16x2xf32>
    %131 = vector.shape_cast %130 : vector<16x16x2xf32> to vector<256x2xf32>
    %c0_173 = arith.constant 0 : index
    %c44 = arith.constant 44 : index
    %132 = vector.load %arg12[%c0_173, %c44] : memref<256x50xf32, #tpu.memory_space<vmem>>, vector<256x2xf32>
    tpu.vector_store %arg12[%c0_173, %c44], %131 {strides = array<i32>} : memref<256x50xf32, #tpu.memory_space<vmem>>, vector<256x2xf32>,
    %c4_174 = arith.constant 4 : index
    %c3_175 = arith.constant 3 : index
    %c0_176 = arith.constant 0 : index
    %133 = vector.load %arg11[%c4_174, %c3_175, %c0_176] : memref<20x20x2xf32, #tpu.memory_space<vmem>>, vector<16x16x2xf32>
    %134 = vector.shape_cast %133 : vector<16x16x2xf32> to vector<256x2xf32>
    %c0_177 = arith.constant 0 : index
    %c46 = arith.constant 46 : index
    %135 = vector.load %arg12[%c0_177, %c46] : memref<256x50xf32, #tpu.memory_space<vmem>>, vector<256x2xf32>
    tpu.vector_store %arg12[%c0_177, %c46], %134 {strides = array<i32>} : memref<256x50xf32, #tpu.memory_space<vmem>>, vector<256x2xf32>,
    %c4_178 = arith.constant 4 : index
    %c4_179 = arith.constant 4 : index
    %c0_180 = arith.constant 0 : index
    %136 = vector.load %arg11[%c4_178, %c4_179, %c0_180] : memref<20x20x2xf32, #tpu.memory_space<vmem>>, vector<16x16x2xf32>
    %137 = vector.shape_cast %136 : vector<16x16x2xf32> to vector<256x2xf32>
    %c0_181 = arith.constant 0 : index
    %c48 = arith.constant 48 : index
    %138 = vector.load %arg12[%c0_181, %c48] : memref<256x50xf32, #tpu.memory_space<vmem>>, vector<256x2xf32>
    tpu.vector_store %arg12[%c0_181, %c48], %137 {strides = array<i32>} : memref<256x50xf32, #tpu.memory_space<vmem>>, vector<256x2xf32>,
    %c0_182 = arith.constant 0 : index
    %c0_183 = arith.constant 0 : index
    %139 = vector.load %arg12[%c0_182, %c0_183] : memref<256x50xf32, #tpu.memory_space<vmem>>, vector<256x50xf32>
    %c0_184 = arith.constant 0 : index
    %c0_185 = arith.constant 0 : index
    %140 = vector.load %arg6[%c0_184, %c0_185] : memref<50x4xf32, #tpu.memory_space<vmem>>, vector<50x4xf32>
    %cst_186 = arith.constant dense<0.000000e+00> : vector<256x4xf32>
    %141 = tpu.matmul %139, %140, %cst_186 {dimension_numbers = #tpu.dot_dimension_numbers<[1], [0], [0], [1], [0, 0, 1, 1], [], []>} : vector<256x50xf32>, vector<50x4xf32>, vector<256x4xf32> -> vector<256x4xf32>
    %c0_187 = arith.constant 0 : index
    %c0_188 = arith.constant 0 : index
    %142 = vector.load %arg7[%c0_187, %c0_188] : memref<1x4xf32, #tpu.memory_space<vmem>>, vector<1x4xf32>
    %143 = vector.broadcast %142 : vector<1x4xf32> to vector<256x4xf32>
    %144 = arith.addf %141, %143 : vector<256x4xf32>
    %cst_189 = arith.constant 0.000000e+00 : f32
    %145 = vector.broadcast %cst_189 : f32 to vector<256x4xf32>
    %146 = arith.maximumf %144, %145 : vector<256x4xf32>
    %147 = vector.shape_cast %146 : vector<256x4xf32> to vector<16x16x4xf32>
    %c0_190 = arith.constant 0 : index
    %c0_191 = arith.constant 0 : index
    %c0_192 = arith.constant 0 : index
    %c8_193 = arith.constant 8 : index
    %148 = vector.load %arg8[%c0_190, %c0_191, %c0_192, %c8_193] : memref<1x16x16x16xf32, #tpu.memory_space<vmem>>, vector<1x16x16x4xf32>
    %149 = vector.shape_cast %148 : vector<1x16x16x4xf32> to vector<16x16x4xf32>
    %150 = vector.shape_cast %147 : vector<16x16x4xf32> to vector<1x16x16x4xf32>
    tpu.vector_store %arg8[%c0_190, %c0_191, %c0_192, %c8_193], %150 {strides = array<i32>} : memref<1x16x16x16xf32, #tpu.memory_space<vmem>>, vector<1x16x16x4xf32>,
    %cst_194 = arith.constant 0xFF800000 : f32
    %151 = vector.broadcast %cst_194 : f32 to vector<18x18x8xf32>
    %c0_195 = arith.constant 0 : index
    %c0_196 = arith.constant 0 : index
    %c0_197 = arith.constant 0 : index
    %152 = vector.load %arg13[%c0_195, %c0_196, %c0_197] : memref<18x18x8xf32, #tpu.memory_space<vmem>>, vector<18x18x8xf32>
    tpu.vector_store %arg13[%c0_195, %c0_196, %c0_197], %151 {strides = array<i32>} : memref<18x18x8xf32, #tpu.memory_space<vmem>>, vector<18x18x8xf32>,
    %c1_198 = arith.constant 1 : index
    %c1_199 = arith.constant 1 : index
    %c0_200 = arith.constant 0 : index
    %153 = vector.load %arg13[%c1_198, %c1_199, %c0_200] : memref<18x18x8xf32, #tpu.memory_space<vmem>>, vector<16x16x8xf32>
    tpu.vector_store %arg13[%c1_198, %c1_199, %c0_200], %1 {strides = array<i32>} : memref<18x18x8xf32, #tpu.memory_space<vmem>>, vector<16x16x8xf32>,
    %c0_201 = arith.constant 0 : index
    %c0_202 = arith.constant 0 : index
    %c0_203 = arith.constant 0 : index
    %154 = vector.load %arg13[%c0_201, %c0_202, %c0_203] : memref<18x18x8xf32, #tpu.memory_space<vmem>>, vector<16x16x8xf32>
    %155 = arith.maximumf %1, %154 : vector<16x16x8xf32>
    %c0_204 = arith.constant 0 : index
    %c1_205 = arith.constant 1 : index
    %c0_206 = arith.constant 0 : index
    %156 = vector.load %arg13[%c0_204, %c1_205, %c0_206] : memref<18x18x8xf32, #tpu.memory_space<vmem>>, vector<16x16x8xf32>
    %157 = arith.maximumf %155, %156 : vector<16x16x8xf32>
    %c0_207 = arith.constant 0 : index
    %c2_208 = arith.constant 2 : index
    %c0_209 = arith.constant 0 : index
    %158 = vector.load %arg13[%c0_207, %c2_208, %c0_209] : memref<18x18x8xf32, #tpu.memory_space<vmem>>, vector<16x16x8xf32>
    %159 = arith.maximumf %157, %158 : vector<16x16x8xf32>
    %c1_210 = arith.constant 1 : index
    %c0_211 = arith.constant 0 : index
    %c0_212 = arith.constant 0 : index
    %160 = vector.load %arg13[%c1_210, %c0_211, %c0_212] : memref<18x18x8xf32, #tpu.memory_space<vmem>>, vector<16x16x8xf32>
    %161 = arith.maximumf %159, %160 : vector<16x16x8xf32>
    %c1_213 = arith.constant 1 : index
    %c2_214 = arith.constant 2 : index
    %c0_215 = arith.constant 0 : index
    %162 = vector.load %arg13[%c1_213, %c2_214, %c0_215] : memref<18x18x8xf32, #tpu.memory_space<vmem>>, vector<16x16x8xf32>
    %163 = arith.maximumf %161, %162 : vector<16x16x8xf32>
    %c2_216 = arith.constant 2 : index
    %c0_217 = arith.constant 0 : index
    %c0_218 = arith.constant 0 : index
    %164 = vector.load %arg13[%c2_216, %c0_217, %c0_218] : memref<18x18x8xf32, #tpu.memory_space<vmem>>, vector<16x16x8xf32>
    %165 = arith.maximumf %163, %164 : vector<16x16x8xf32>
    %c2_219 = arith.constant 2 : index
    %c1_220 = arith.constant 1 : index
    %c0_221 = arith.constant 0 : index
    %166 = vector.load %arg13[%c2_219, %c1_220, %c0_221] : memref<18x18x8xf32, #tpu.memory_space<vmem>>, vector<16x16x8xf32>
    %167 = arith.maximumf %165, %166 : vector<16x16x8xf32>
    %c2_222 = arith.constant 2 : index
    %c2_223 = arith.constant 2 : index
    %c0_224 = arith.constant 0 : index
    %168 = vector.load %arg13[%c2_222, %c2_223, %c0_224] : memref<18x18x8xf32, #tpu.memory_space<vmem>>, vector<16x16x8xf32>
    %169 = arith.maximumf %167, %168 : vector<16x16x8xf32>
    %170 = vector.shape_cast %169 : vector<16x16x8xf32> to vector<256x8xf32>
    %c0_225 = arith.constant 0 : index
    %c0_226 = arith.constant 0 : index
    %171 = vector.load %arg2[%c0_225, %c0_226] : memref<8x8xf32, #tpu.memory_space<vmem>>, vector<8x4xf32>
    %cst_227 = arith.constant dense<0.000000e+00> : vector<256x4xf32>
    %172 = tpu.matmul %170, %171, %cst_227 {dimension_numbers = #tpu.dot_dimension_numbers<[1], [0], [0], [1], [0, 0, 1, 1], [], []>} : vector<256x8xf32>, vector<8x4xf32>, vector<256x4xf32> -> vector<256x4xf32>
    %c0_228 = arith.constant 0 : index
    %c0_229 = arith.constant 0 : index
    %173 = vector.load %arg3[%c0_228, %c0_229] : memref<1x8xf32, #tpu.memory_space<vmem>>, vector<1x4xf32>
    %174 = vector.broadcast %173 : vector<1x4xf32> to vector<256x4xf32>
    %175 = arith.addf %172, %174 : vector<256x4xf32>
    %cst_230 = arith.constant 0.000000e+00 : f32
    %176 = vector.broadcast %cst_230 : f32 to vector<256x4xf32>
    %177 = arith.maximumf %175, %176 : vector<256x4xf32>
    %178 = vector.shape_cast %177 : vector<256x4xf32> to vector<16x16x4xf32>
    %c0_231 = arith.constant 0 : index
    %c0_232 = arith.constant 0 : index
    %c0_233 = arith.constant 0 : index
    %c12_234 = arith.constant 12 : index
    %179 = vector.load %arg8[%c0_231, %c0_232, %c0_233, %c12_234] : memref<1x16x16x16xf32, #tpu.memory_space<vmem>>, vector<1x16x16x4xf32>
    %180 = vector.shape_cast %179 : vector<1x16x16x4xf32> to vector<16x16x4xf32>
    %181 = vector.shape_cast %178 : vector<16x16x4xf32> to vector<1x16x16x4xf32>
    tpu.vector_store %arg8[%c0_231, %c0_232, %c0_233, %c12_234], %181 {strides = array<i32>} : memref<1x16x16x16xf32, #tpu.memory_space<vmem>>, vector<1x16x16x4xf32>,
    return
  }
  func.func @transform_0(%arg0: i32) -> (i32, i32, i32, i32) {
    %c0_i32 = arith.constant 0 : i32
    %c0_i32_0 = arith.constant 0 : i32
    %c0_i32_1 = arith.constant 0 : i32
    %c0_i32_2 = arith.constant 0 : i32
    return %arg0, %c0_i32, %c0_i32_0, %c0_i32_1 : i32, i32, i32, i32
  }
  func.func @transform_1(%arg0: i32) -> (i32, i32) {
    %c0_i32 = arith.constant 0 : i32
    %c0_i32_0 = arith.constant 0 : i32
    %c0_i32_1 = arith.constant 0 : i32
    return %c0_i32, %c0_i32_0 : i32, i32
  }
  func.func @transform_2(%arg0: i32) -> (i32, i32) {
    %c0_i32 = arith.constant 0 : i32
    %c0_i32_0 = arith.constant 0 : i32
    %c0_i32_1 = arith.constant 0 : i32
    return %c0_i32, %c0_i32_0 : i32, i32
  }
  func.func @transform_3(%arg0: i32) -> (i32, i32) {
    %c0_i32 = arith.constant 0 : i32
    %c0_i32_0 = arith.constant 0 : i32
    %c0_i32_1 = arith.constant 0 : i32
    return %c0_i32, %c0_i32_0 : i32, i32
  }
  func.func @transform_4(%arg0: i32) -> (i32, i32) {
    %c0_i32 = arith.constant 0 : i32
    %c0_i32_0 = arith.constant 0 : i32
    %c0_i32_1 = arith.constant 0 : i32
    return %c0_i32, %c0_i32_0 : i32, i32
  }
  func.func @transform_5(%arg0: i32) -> (i32, i32) {
    %c0_i32 = arith.constant 0 : i32
    %c0_i32_0 = arith.constant 0 : i32
    %c0_i32_1 = arith.constant 0 : i32
    return %c0_i32, %c0_i32_0 : i32, i32
  }
  func.func @transform_6(%arg0: i32) -> (i32, i32) {
    %c0_i32 = arith.constant 0 : i32
    %c0_i32_0 = arith.constant 0 : i32
    %c0_i32_1 = arith.constant 0 : i32
    return %c0_i32, %c0_i32_0 : i32, i32
  }
  func.func @transform_7(%arg0: i32) -> (i32, i32, i32, i32) {
    %c0_i32 = arith.constant 0 : i32
    %c0_i32_0 = arith.constant 0 : i32
    %c0_i32_1 = arith.constant 0 : i32
    %c0_i32_2 = arith.constant 0 : i32
    return %arg0, %c0_i32, %c0_i32_0, %c0_i32_1 : i32, i32, i32, i32
  }
}

</mosaic_0001>

<llo_original>
// kernel: tpu_custom_call.1
$region0: #{tpu_custom_call.1}
  #allocation0 [shape = 'u32[]', space=smem, size = 0x4, offset = 0x4, fixed_abs, tag = 'smem constant byte address 0x4 - core index']
  #allocation1 [shape = 'u32[144,128]{1,0:T(1,128)}', space=vmem, size = 0x12000, scoped, tag = 'internal scratch']
  #allocation2 [shape = 'f32[18,18,2]{2,1,0:T(8,128)}', space=vmem, size = 0x36000, scoped, tag = 'scratch operand']
  #allocation3 [shape = 'f32[256,18]{1,0:T(8,128)}', space=vmem, size = 0x20000, scoped, tag = 'scratch operand']
  #allocation4 [shape = 'f32[20,20,2]{2,1,0:T(8,128)}', space=vmem, size = 0x3c000, scoped, tag = 'scratch operand']
  #allocation5 [shape = 'f32[256,50]{1,0:T(8,128)}', space=vmem, size = 0x20000, scoped, tag = 'scratch operand']
  #allocation6 [shape = 'f32[18,18,8]{2,1,0:T(8,128)}', space=vmem, size = 0x36000, scoped, tag = 'scratch operand']
  %s0 = inlined_call_operand.vmem [shape: f32[2,16,16,8], index: 0, kind: input, shape index: {}]
  %s1 = inlined_call_operand.vmem [shape: f32[8,8], index: 1, kind: input, shape index: {}]
  %s2 = inlined_call_operand.vmem [shape: f32[1,8], index: 2, kind: input, shape index: {}]
  %s3 = inlined_call_operand.vmem [shape: f32[18,4], index: 3, kind: input, shape index: {}]
  %s4 = inlined_call_operand.vmem [shape: f32[1,4], index: 4, kind: input, shape index: {}]
  %s5 = inlined_call_operand.vmem [shape: f32[50,4], index: 5, kind: input, shape index: {}]
  %s6 = inlined_call_operand.vmem [shape: f32[1,4], index: 6, kind: input, shape index: {}]
  %s7 = inlined_call_operand.hbm [shape: f32[2,16,16,16], index: 7, kind: output, shape index: {}]
  %s8 = sld [smem:[#allocation0]]
  $region61: #{tpu_custom_call.1} parent=0
    _
  %s10 = ssub.s32 1, %s8
  %s11 = scalar_select 0, %s10, %s8
  $region1: #{tpu_custom_call.1} parent=0
    #allocation7 [shape = 'u8[262144]{0}', space=vmem, size = 0x40000, scoped, tag = 'output window, operand 0']
    #allocation8 [shape = 's32[2]{0}', space=sflag, size = 0x8, scoped, tag = 'scoped memory for tpu_custom_call.1']
    %12 = vsyncpa [#allocation8], 0
    %s13 = scalar_lea.sflag [#allocation8], 1
    %14 = vsyncpa %s13, 0
    loop: start=0, step=1, limit=4
    $region2: #{tpu_custom_call.1} parent=1 // loop_pre_header
      _
    $region3: #{tpu_custom_call.1} parent=1 // loop_header
      %s16 = sphi 0, %s20
      %p17 = scmp.ge.s32.totalorder %s16, 4
      %s26 = sphi 0, %s28
      %s29 = sphi 0, %s26
      %s30 = sphi 0, %s29
      %s46 = sphi 0, %s30
      %s50 = sphi 0, %s50
      %s52 = sphi 0, %s50
      %s53 = sphi 0, %s52
      %s67 = sphi 0, %s53
      %s71 = sphi 0, %s71
      %s73 = sphi 0, %s71
      %s74 = sphi 0, %s73
      %s88 = sphi 0, %s74
      %s92 = sphi 0, %s92
      %s94 = sphi 0, %s92
      %s95 = sphi 0, %s94
      %s109 = sphi 0, %s95
      %s113 = sphi 0, %s113
      %s115 = sphi 0, %s113
      %s116 = sphi 0, %s115
      %s130 = sphi 0, %s116
      %s134 = sphi 0, %s134
      %s136 = sphi 0, %s134
      %s137 = sphi 0, %s136
      %s151 = sphi 0, %s137
      %s155 = sphi 0, %s155
      %s157 = sphi 0, %s155
      %s158 = sphi 0, %s157
      %s172 = sphi 0, %s158
      %s178 = sphi 0, %s180
      %s181 = sphi 0, %s178
      %s182 = sphi 0, %s181
      %s198 = sphi 0, %s182
    $region4: #{tpu_custom_call.1} parent=1 // loop_header_branch
      %19 = sbr.rel (%p17) target = $region8
    $region5: #{tpu_custom_call.1} parent=1 // loop_body
      %s21 = ssub.s32 %s16, 1
      %s22 = ssub.s32 %s16, 2
      %s23 = sadd.s32 %s16, 1
      %s24 = ssub.s32 %s16, %s23
      %p25 = scmp.eq.s32.totalorder %s24, 0
      %s27 = sadd.s32 %s26, 1
      %s28 = scalar_select %p25, %s26, %s27
      %p31 = pneg %p25
      %p32 = scmp.eq.s32.totalorder %s16, 1
      %p33 = por %p31, %p32
      %p34 = scmp.ne.s32.totalorder %s26, %s29
      %p35 = scmp.eq.s32.totalorder %s16, 0
      %p36 = por %p34, %p35
      %p37 = scmp.ne.s32.totalorder %s26, %s29
      %p38 = scmp.eq.s32.totalorder %s21, 1
      %p39 = por %p37, %p38
      %p40 = scmp.ne.s32.totalorder %s29, %s30
      %p41 = scmp.eq.s32.totalorder %s21, 0
      %p42 = por %p40, %p41
      %p43 = scmp.ne.s32.totalorder %s29, %s30
      %p44 = scmp.eq.s32.totalorder %s22, 1
      %p45 = por %p43, %p44
      %p47 = scmp.ne.s32.totalorder %s30, %s46
      %p48 = scmp.eq.s32.totalorder %s22, 0
      %p49 = por %p47, %p48
      %s51 = sadd.s32 %s50, 1
      %p54 = scmp.eq.s32.totalorder %s16, 1
      %p55 = scmp.ne.s32.totalorder %s50, %s52
      %p56 = scmp.eq.s32.totalorder %s16, 0
      %p57 = por %p55, %p56
      %p58 = scmp.ne.s32.totalorder %s50, %s52
      %p59 = scmp.eq.s32.totalorder %s21, 1
      %p60 = por %p58, %p59
      %p61 = scmp.ne.s32.totalorder %s52, %s53
      %p62 = scmp.eq.s32.totalorder %s21, 0
      %p63 = por %p61, %p62
      %p64 = scmp.ne.s32.totalorder %s52, %s53
      %p65 = scmp.eq.s32.totalorder %s22, 1
      %p66 = por %p64, %p65
      %p68 = scmp.ne.s32.totalorder %s53, %s67
      %p69 = scmp.eq.s32.totalorder %s22, 0
      %p70 = por %p68, %p69
      %s72 = sadd.s32 %s71, 1
      %p75 = scmp.eq.s32.totalorder %s16, 1
      %p76 = scmp.ne.s32.totalorder %s71, %s73
      %p77 = scmp.eq.s32.totalorder %s16, 0
      %p78 = por %p76, %p77
      %p79 = scmp.ne.s32.totalorder %s71, %s73
      %p80 = scmp.eq.s32.totalorder %s21, 1
      %p81 = por %p79, %p80
      %p82 = scmp.ne.s32.totalorder %s73, %s74
      %p83 = scmp.eq.s32.totalorder %s21, 0
      %p84 = por %p82, %p83
      %p85 = scmp.ne.s32.totalorder %s73, %s74
      %p86 = scmp.eq.s32.totalorder %s22, 1
      %p87 = por %p85, %p86
      %p89 = scmp.ne.s32.totalorder %s74, %s88
      %p90 = scmp.eq.s32.totalorder %s22, 0
      %p91 = por %p89, %p90
      %s93 = sadd.s32 %s92, 1
      %p96 = scmp.eq.s32.totalorder %s16, 1
      %p97 = scmp.ne.s32.totalorder %s92, %s94
      %p98 = scmp.eq.s32.totalorder %s16, 0
      %p99 = por %p97, %p98
      %p100 = scmp.ne.s32.totalorder %s92, %s94
      %p101 = scmp.eq.s32.totalorder %s21, 1
      %p102 = por %p100, %p101
      %p103 = scmp.ne.s32.totalorder %s94, %s95
      %p104 = scmp.eq.s32.totalorder %s21, 0
      %p105 = por %p103, %p104
      %p106 = scmp.ne.s32.totalorder %s94, %s95
      %p107 = scmp.eq.s32.totalorder %s22, 1
      %p108 = por %p106, %p107
      %p110 = scmp.ne.s32.totalorder %s95, %s109
      %p111 = scmp.eq.s32.totalorder %s22, 0
      %p112 = por %p110, %p111
      %s114 = sadd.s32 %s113, 1
      %p117 = scmp.eq.s32.totalorder %s16, 1
      %p118 = scmp.ne.s32.totalorder %s113, %s115
      %p119 = scmp.eq.s32.totalorder %s16, 0
      %p120 = por %p118, %p119
      %p121 = scmp.ne.s32.totalorder %s113, %s115
      %p122 = scmp.eq.s32.totalorder %s21, 1
      %p123 = por %p121, %p122
      %p124 = scmp.ne.s32.totalorder %s115, %s116
      %p125 = scmp.eq.s32.totalorder %s21, 0
      %p126 = por %p124, %p125
      %p127 = scmp.ne.s32.totalorder %s115, %s116
      %p128 = scmp.eq.s32.totalorder %s22, 1
      %p129 = por %p127, %p128
      %p131 = scmp.ne.s32.totalorder %s116, %s130
      %p132 = scmp.eq.s32.totalorder %s22, 0
      %p133 = por %p131, %p132
      %s135 = sadd.s32 %s134, 1
      %p138 = scmp.eq.s32.totalorder %s16, 1
      %p139 = scmp.ne.s32.totalorder %s134, %s136
      %p140 = scmp.eq.s32.totalorder %s16, 0
      %p141 = por %p139, %p140
      %p142 = scmp.ne.s32.totalorder %s134, %s136
      %p143 = scmp.eq.s32.totalorder %s21, 1
      %p144 = por %p142, %p143
      %p145 = scmp.ne.s32.totalorder %s136, %s137
      %p146 = scmp.eq.s32.totalorder %s21, 0
      %p147 = por %p145, %p146
      %p148 = scmp.ne.s32.totalorder %s136, %s137
      %p149 = scmp.eq.s32.totalorder %s22, 1
      %p150 = por %p148, %p149
      %p152 = scmp.ne.s32.totalorder %s137, %s151
      %p153 = scmp.eq.s32.totalorder %s22, 0
      %p154 = por %p152, %p153
      %s156 = sadd.s32 %s155, 1
      %p159 = scmp.eq.s32.totalorder %s16, 1
      %p160 = scmp.ne.s32.totalorder %s155, %s157
      %p161 = scmp.eq.s32.totalorder %s16, 0
      %p162 = por %p160, %p161
      %p163 = scmp.ne.s32.totalorder %s155, %s157
      %p164 = scmp.eq.s32.totalorder %s21, 1
      %p165 = por %p163, %p164
      %p166 = scmp.ne.s32.totalorder %s157, %s158
      %p167 = scmp.eq.s32.totalorder %s21, 0
      %p168 = por %p166, %p167
      %p169 = scmp.ne.s32.totalorder %s157, %s158
      %p170 = scmp.eq.s32.totalorder %s22, 1
      %p171 = por %p169, %p170
      %p173 = scmp.ne.s32.totalorder %s158, %s172
      %p174 = scmp.eq.s32.totalorder %s22, 0
      %p175 = por %p173, %p174
      %s176 = ssub.s32 %s16, %s23
      %p177 = scmp.eq.s32.totalorder %s176, 0
      %s179 = sadd.s32 %s178, 1
      %s180 = scalar_select %p177, %s178, %s179
      %p183 = pneg %p177
      %p184 = scmp.eq.s32.totalorder %s16, 1
      %p185 = por %p183, %p184
      %p186 = scmp.ne.s32.totalorder %s178, %s181
      %p187 = scmp.eq.s32.totalorder %s16, 0
      %p188 = por %p186, %p187
      %p189 = scmp.ne.s32.totalorder %s178, %s181
      %p190 = scmp.eq.s32.totalorder %s21, 1
      %p191 = por %p189, %p190
      %p192 = scmp.ne.s32.totalorder %s181, %s182
      %p193 = scmp.eq.s32.totalorder %s21, 0
      %p194 = por %p192, %p193
      %p195 = scmp.ne.s32.totalorder %s181, %s182
      %p196 = scmp.eq.s32.totalorder %s22, 1
      %p197 = por %p195, %p196
      %p199 = scmp.ne.s32.totalorder %s182, %s198
      %p200 = scmp.eq.s32.totalorder %s22, 0
      %p201 = por %p199, %p200
      %p202 = scmp.le.s32.totalorder 1, %s16
      %p203 = scmp.lt.s32.totalorder %s16, 3
      %p204 = pnand %p202, %p203
      %p205 = pneg %p204
      // Predicated region
      $region9: #{tpu_custom_call.1} parent=5 // pred_check
        _
      $region10: #{tpu_custom_call.1} parent=5 // pred_check_branch
        %207 = sbr.rel (%p204) target = $region12
      $region11: #{tpu_custom_call.1} parent=5 // pred_region
        %s208 = ssub.s32 %s16, 1
        // Predicated region
        $region13: #{tpu_custom_call.1} parent=11 // pred_check
          %p209 = pneg %p63
        $region14: #{tpu_custom_call.1} parent=11 // pred_check_branch
          %211 = sbr.rel (%p209) target = $region16
        $region15: #{tpu_custom_call.1} parent=11 // pred_region
          _
        $region16: #{tpu_custom_call.1} parent=11 // pred_fallthru
          _
        // Predicated region
        $region17: #{tpu_custom_call.1} parent=11 // pred_check
          %p212 = pneg %p84
        $region18: #{tpu_custom_call.1} parent=11 // pred_check_branch
          %214 = sbr.rel (%p212) target = $region20
        $region19: #{tpu_custom_call.1} parent=11 // pred_region
          _
        $region20: #{tpu_custom_call.1} parent=11 // pred_fallthru
          _
        // Predicated region
        $region21: #{tpu_custom_call.1} parent=11 // pred_check
          %p215 = pneg %p105
        $region22: #{tpu_custom_call.1} parent=11 // pred_check_branch
          %217 = sbr.rel (%p215) target = $region24
        $region23: #{tpu_custom_call.1} parent=11 // pred_region
          _
        $region24: #{tpu_custom_call.1} parent=11 // pred_fallthru
          _
        // Predicated region
        $region25: #{tpu_custom_call.1} parent=11 // pred_check
          %p218 = pneg %p126
        $region26: #{tpu_custom_call.1} parent=11 // pred_check_branch
          %220 = sbr.rel (%p218) target = $region28
        $region27: #{tpu_custom_call.1} parent=11 // pred_region
          _
        $region28: #{tpu_custom_call.1} parent=11 // pred_fallthru
          _
        // Predicated region
        $region29: #{tpu_custom_call.1} parent=11 // pred_check
          %p221 = pneg %p147
        $region30: #{tpu_custom_call.1} parent=11 // pred_check_branch
          %223 = sbr.rel (%p221) target = $region32
        $region31: #{tpu_custom_call.1} parent=11 // pred_region
          _
        $region32: #{tpu_custom_call.1} parent=11 // pred_fallthru
          _
        // Predicated region
        $region33: #{tpu_custom_call.1} parent=11 // pred_check
          %p224 = pneg %p168
        $region34: #{tpu_custom_call.1} parent=11 // pred_check_branch
          %226 = sbr.rel (%p224) target = $region36
        $region35: #{tpu_custom_call.1} parent=11 // pred_region
          _
        $region36: #{tpu_custom_call.1} parent=11 // pred_fallthru
          _
      $region12: #{tpu_custom_call.1} parent=5 // pred_fallthru
        _
      %p227 = scmp.lt.s32.totalorder %s16, 2
      // Predicated region
      $region37: #{tpu_custom_call.1} parent=5 // pred_check
        %p228 = pneg %p227
      $region38: #{tpu_custom_call.1} parent=5 // pred_check_branch
        %230 = sbr.rel (%p228) target = $region40
      $region39: #{tpu_custom_call.1} parent=5 // pred_region
        // Predicated region
        $region41: #{tpu_custom_call.1} parent=39 // pred_check
          %p231 = pneg %p36
        $region42: #{tpu_custom_call.1} parent=39 // pred_check_branch
          %233 = sbr.rel (%p231) target = $region44
        $region43: #{tpu_custom_call.1} parent=39 // pred_region
          %p234 = scmp.lt.s32.totalorder %s16, 1
          %s235 = scalar_select %p234, %s16, 1
          %s236 = smul.addr %s235, 32
          %s237 = smul.addr %s236, 8
          %s238 = scalar_lea.vmem %s0, %s237
        $region44: #{tpu_custom_call.1} parent=39 // pred_fallthru
          _
      $region40: #{tpu_custom_call.1} parent=5 // pred_fallthru
        _
      %p239 = scmp.le.s32.totalorder 1, %s16
      %p240 = scmp.lt.s32.totalorder %s16, 3
      %p241 = pnand %p239, %p240
      %p242 = pneg %p241
      // Predicated region
      $region45: #{tpu_custom_call.1} parent=5 // pred_check
        _
      $region46: #{tpu_custom_call.1} parent=5 // pred_check_branch
        %244 = sbr.rel (%p241) target = $region48
      $region47: #{tpu_custom_call.1} parent=5 // pred_region
        %s245 = ssub.s32 %s16, 1
        %p246 = scmp.lt.s32.totalorder %s21, 1
        %s247 = scalar_select %p246, %s21, 1
        %s248 = smul.addr %s247, 32
        %s249 = smul.addr %s248, 8
        %s250 = scalar_lea.vmem %s0, %s249
        %p251 = pneg %p42
        %p252 = pneg %p39
        %p253 = pneg %p63
        %p254 = pneg %p60
        %p255 = pneg %p84
        %p256 = pneg %p81
        %p257 = pneg %p105
        %p258 = pneg %p102
        %p259 = pneg %p126
        %p260 = pneg %p123
        %p261 = pneg %p147
        %p262 = pneg %p144
        %p263 = pneg %p168
        %p264 = pneg %p165
        %p265 = pneg %p194
        %p266 = pneg %p191
        %s267 = sand.u32 %s181, 1
        %s268 = scalar_lea.sflag [#allocation8], %s267
        %s269 = sand.u32 %s181, 1
        %s270 = smul.addr %s269, 256
        %s271 = scalar_lea.vmem [#allocation7], %s270
        %p272 = scmp.lt.s32.totalorder %s21, 1
        %s273 = scalar_select %p272, %s21, 1
        %s274 = smul.addr %s273, 32
        %s275 = smul.addr %s274, 8
        %s276 = scalar_lea.vmem %s0, %s275
        %v277 = vld [vmem:[%s276] sm:$0xff]
        %v278 = vld [vmem:[%s276 + $0x8] sm:$0xff]
        %v279 = vld [vmem:[%s276 + $0x10] sm:$0xff]
        %v280 = vld [vmem:[%s276 + $0x18] sm:$0xff]
        %v281 = vld [vmem:[%s276 + $0x20] sm:$0xff]
        %v282 = vld [vmem:[%s276 + $0x28] sm:$0xff]
        %v283 = vld [vmem:[%s276 + $0x30] sm:$0xff]
        %v284 = vld [vmem:[%s276 + $0x38] sm:$0xff]
        %v285 = vld [vmem:[%s276 + $0x40] sm:$0xff]
        %v286 = vld [vmem:[%s276 + $0x48] sm:$0xff]
        %v287 = vld [vmem:[%s276 + $0x50] sm:$0xff]
        %v288 = vld [vmem:[%s276 + $0x58] sm:$0xff]
        %v289 = vld [vmem:[%s276 + $0x60] sm:$0xff]
        %v290 = vld [vmem:[%s276 + $0x68] sm:$0xff]
        %v291 = vld [vmem:[%s276 + $0x70] sm:$0xff]
        %v292 = vld [vmem:[%s276 + $0x78] sm:$0xff]
        %v293 = vld [vmem:[%s276 + $0x80] sm:$0xff]
        %v294 = vld [vmem:[%s276 + $0x88] sm:$0xff]
        %v295 = vld [vmem:[%s276 + $0x90] sm:$0xff]
        %v296 = vld [vmem:[%s276 + $0x98] sm:$0xff]
        %v297 = vld [vmem:[%s276 + $0xa0] sm:$0xff]
        %v298 = vld [vmem:[%s276 + $0xa8] sm:$0xff]
        %v299 = vld [vmem:[%s276 + $0xb0] sm:$0xff]
        %v300 = vld [vmem:[%s276 + $0xb8] sm:$0xff]
        %v301 = vld [vmem:[%s276 + $0xc0] sm:$0xff]
        %v302 = vld [vmem:[%s276 + $0xc8] sm:$0xff]
        %v303 = vld [vmem:[%s276 + $0xd0] sm:$0xff]
        %v304 = vld [vmem:[%s276 + $0xd8] sm:$0xff]
        %v305 = vld [vmem:[%s276 + $0xe0] sm:$0xff]
        %v306 = vld [vmem:[%s276 + $0xe8] sm:$0xff]
        %v307 = vld [vmem:[%s276 + $0xf0] sm:$0xff]
        %v308 = vld [vmem:[%s276 + $0xf8] sm:$0xff]
        %v309 = vld [vmem:[%s1] sm:$0xff]
        %v310 = vld [vmem:[%s2] sm:$0x1]
        %v312 = vlaneseq
        %v313 = vshrl.u32 %v312, 7
        %v314 = vsub.s32 0, %v313
        %v315 = vrot.slane %v310, %v314
        %vm317 = vcmask 64512
        %v319 = vsel %vm317, %v277, 0
        %v322 = vsel %vm317, %v278, 0
        %v325 = vsel %vm317, %v279, 0
        %v328 = vsel %vm317, %v280, 0
        %v331 = vsel %vm317, %v281, 0
        %v334 = vsel %vm317, %v282, 0
        %v337 = vsel %vm317, %v283, 0
        %v340 = vsel %vm317, %v284, 0
        %v343 = vsel %vm317, %v285, 0
        %v346 = vsel %vm317, %v286, 0
        %v349 = vsel %vm317, %v287, 0
        %v352 = vsel %vm317, %v288, 0
        %v355 = vsel %vm317, %v289, 0
        %v358 = vsel %vm317, %v290, 0
        %v361 = vsel %vm317, %v291, 0
        %v364 = vsel %vm317, %v292, 0
        %v367 = vsel %vm317, %v293, 0
        %v370 = vsel %vm317, %v294, 0
        %v373 = vsel %vm317, %v295, 0
        %v376 = vsel %vm317, %v296, 0
        %v379 = vsel %vm317, %v297, 0
        %v382 = vsel %vm317, %v298, 0
        %v385 = vsel %vm317, %v299, 0
        %v388 = vsel %vm317, %v300, 0
        %v391 = vsel %vm317, %v301, 0
        %v394 = vsel %vm317, %v302, 0
        %v397 = vsel %vm317, %v303, 0
        %v400 = vsel %vm317, %v304, 0
        %v403 = vsel %vm317, %v305, 0
        %v406 = vsel %vm317, %v306, 0
        %v409 = vsel %vm317, %v307, 0
        %v412 = vsel %vm317, %v308, 0
        %414 = vmatprep.subr.mxu0 0.0
        %415 = vmatpush1.msra.mxu0 %v309
        %416 = vmatprep.subr.mxu0 0.0
        %417 = vmatpush1.msra.mxu0 0.0
        %418 = vmatprep.subr.mxu0 0.0
        %419 = vmatpush1.msra.mxu0 0.0
        %420 = vmatprep.subr.mxu0 0.0
        %421 = vmatpush1.msra.mxu0 0.0
        %422 = vmatprep.subr.mxu0 0.0
        %423 = vmatpush1.msra.mxu0 0.0
        %424 = vmatprep.subr.mxu0 0.0
        %425 = vmatpush1.msra.mxu0 0.0
        %426 = vmatprep.subr.mxu0 0.0
        %427 = vmatpush1.msra.mxu0 0.0
        %428 = vmatprep.subr.mxu0 0.0
        %429 = vmatpush1.msra.mxu0 0.0
        %430 = vmatprep.subr.mxu0 0.0
        %431 = vmatpush1.msra.mxu0 0.0
        %432 = vmatprep.subr.mxu0 0.0
        %433 = vmatpush1.msra.mxu0 0.0
        %434 = vmatprep.subr.mxu0 0.0
        %435 = vmatpush1.msra.mxu0 0.0
        %436 = vmatprep.subr.mxu0 0.0
        %437 = vmatpush1.msra.mxu0 0.0
        %438 = vmatprep.subr.mxu0 0.0
        %439 = vmatpush1.msra.mxu0 0.0
        %440 = vmatprep.subr.mxu0 0.0
        %441 = vmatpush1.msra.mxu0 0.0
        %442 = vmatprep.subr.mxu0 0.0
        %443 = vmatpush1.msra.mxu0 0.0
        %444 = vmatprep.subr.mxu0 0.0
        %445 = vmatpush1.msra.mxu0 0.0
        %446 = vmatprep.subr.mxu0 0.0
        %447 = vmatpush1.msra.mxu0 0.0
        %448 = vmatprep.subr.mxu0 0.0
        %449 = vmatpush1.msra.mxu0 0.0
        %450 = vmatprep.subr.mxu0 0.0
        %451 = vmatpush1.msra.mxu0 0.0
        %452 = vmatprep.subr.mxu0 0.0
        %453 = vmatpush1.msra.mxu0 0.0
        %454 = vmatprep.subr.mxu0 0.0
        %455 = vmatpush1.msra.mxu0 0.0
        %456 = vmatprep.subr.mxu0 0.0
        %457 = vmatpush1.msra.mxu0 0.0
        %458 = vmatprep.subr.mxu0 0.0
        %459 = vmatpush1.msra.mxu0 0.0
        %460 = vmatprep.subr.mxu0 0.0
        %461 = vmatpush1.msra.mxu0 0.0
        %462 = vmatprep.subr.mxu0 0.0
        %463 = vmatpush1.msra.mxu0 0.0
        %464 = vmatprep.subr.mxu0 0.0
        %465 = vmatpush1.msra.mxu0 0.0
        %466 = vmatprep.subr.mxu0 0.0
        %467 = vmatpush1.msra.mxu0 0.0
        %468 = vmatprep.subr.mxu0 0.0
        %469 = vmatpush1.msra.mxu0 0.0
        %470 = vmatprep.subr.mxu0 0.0
        %471 = vmatpush1.msra.mxu0 0.0
        %472 = vmatprep.subr.mxu0 0.0
        %473 = vmatpush1.msra.mxu0 0.0
        %474 = vmatprep.subr.mxu0 0.0
        %475 = vmatpush1.msra.mxu0 0.0
        %476 = vmatprep.subr.mxu0 0.0
        %477 = vmatpush1.msra.mxu0 0.0
        %478 = vmatprep.mubr.f32.mxu0 0.0
        %479 = vmatmul.mubr.f32.gmra.mrb[0].mxu0 %v319
        %v480 = vpop.f32.mrb[0].mxu0
        %v481 = vadd.f32 %v315, %v480
        %v482 = vpop.f32.mrb[0].mxu0
        %483 = vmatprep.mubr.f32.mxu0 0.0
        %484 = vmatmul.mubr.f32.gmra.mrb[0].mxu0 %v322
        %v485 = vpop.f32.mrb[0].mxu0
        %v486 = vadd.f32 %v315, %v485
        %v487 = vpop.f32.mrb[0].mxu0
        %488 = vmatprep.mubr.f32.mxu0 0.0
        %489 = vmatmul.mubr.f32.gmra.mrb[0].mxu0 %v325
        %v490 = vpop.f32.mrb[0].mxu0
        %v491 = vadd.f32 %v315, %v490
        %v492 = vpop.f32.mrb[0].mxu0
        %493 = vmatprep.mubr.f32.mxu0 0.0
        %494 = vmatmul.mubr.f32.gmra.mrb[0].mxu0 %v328
        %v495 = vpop.f32.mrb[0].mxu0
        %v496 = vadd.f32 %v315, %v495
        %v497 = vpop.f32.mrb[0].mxu0
        %498 = vmatprep.mubr.f32.mxu0 0.0
        %499 = vmatmul.mubr.f32.gmra.mrb[0].mxu0 %v331
        %v500 = vpop.f32.mrb[0].mxu0
        %v501 = vadd.f32 %v315, %v500
        %v502 = vpop.f32.mrb[0].mxu0
        %503 = vmatprep.mubr.f32.mxu0 0.0
        %504 = vmatmul.mubr.f32.gmra.mrb[0].mxu0 %v334
        %v505 = vpop.f32.mrb[0].mxu0
        %v506 = vadd.f32 %v315, %v505
        %v507 = vpop.f32.mrb[0].mxu0
        %508 = vmatprep.mubr.f32.mxu0 0.0
        %509 = vmatmul.mubr.f32.gmra.mrb[0].mxu0 %v337
        %v510 = vpop.f32.mrb[0].mxu0
        %v511 = vadd.f32 %v315, %v510
        %v512 = vpop.f32.mrb[0].mxu0
        %513 = vmatprep.mubr.f32.mxu0 0.0
        %514 = vmatmul.mubr.f32.gmra.mrb[0].mxu0 %v340
        %v515 = vpop.f32.mrb[0].mxu0
        %v516 = vadd.f32 %v315, %v515
        %v517 = vpop.f32.mrb[0].mxu0
        %518 = vmatprep.mubr.f32.mxu0 0.0
        %519 = vmatmul.mubr.f32.gmra.mrb[0].mxu0 %v343
        %v520 = vpop.f32.mrb[0].mxu0
        %v521 = vadd.f32 %v315, %v520
        %v522 = vpop.f32.mrb[0].mxu0
        %523 = vmatprep.mubr.f32.mxu0 0.0
        %524 = vmatmul.mubr.f32.gmra.mrb[0].mxu0 %v346
        %v525 = vpop.f32.mrb[0].mxu0
        %v526 = vadd.f32 %v315, %v525
        %v527 = vpop.f32.mrb[0].mxu0
        %528 = vmatprep.mubr.f32.mxu0 0.0
        %529 = vmatmul.mubr.f32.gmra.mrb[0].mxu0 %v349
        %v530 = vpop.f32.mrb[0].mxu0
        %v531 = vadd.f32 %v315, %v530
        %v532 = vpop.f32.mrb[0].mxu0
        %533 = vmatprep.mubr.f32.mxu0 0.0
        %534 = vmatmul.mubr.f32.gmra.mrb[0].mxu0 %v352
        %v535 = vpop.f32.mrb[0].mxu0
        %v536 = vadd.f32 %v315, %v535
        %v537 = vpop.f32.mrb[0].mxu0
        %538 = vmatprep.mubr.f32.mxu0 0.0
        %539 = vmatmul.mubr.f32.gmra.mrb[0].mxu0 %v355
        %v540 = vpop.f32.mrb[0].mxu0
        %v541 = vadd.f32 %v315, %v540
        %v542 = vpop.f32.mrb[0].mxu0
        %543 = vmatprep.mubr.f32.mxu0 0.0
        %544 = vmatmul.mubr.f32.gmra.mrb[0].mxu0 %v358
        %v545 = vpop.f32.mrb[0].mxu0
        %v546 = vadd.f32 %v315, %v545
        %v547 = vpop.f32.mrb[0].mxu0
        %548 = vmatprep.mubr.f32.mxu0 0.0
        %549 = vmatmul.mubr.f32.gmra.mrb[0].mxu0 %v361
        %v550 = vpop.f32.mrb[0].mxu0
        %v551 = vadd.f32 %v315, %v550
        %v552 = vpop.f32.mrb[0].mxu0
        %553 = vmatprep.mubr.f32.mxu0 0.0
        %554 = vmatmul.mubr.f32.gmra.mrb[0].mxu0 %v364
        %v555 = vpop.f32.mrb[0].mxu0
        %v556 = vadd.f32 %v315, %v555
        %v557 = vpop.f32.mrb[0].mxu0
        %558 = vmatprep.mubr.f32.mxu0 0.0
        %559 = vmatmul.mubr.f32.gmra.mrb[0].mxu0 %v367
        %v560 = vpop.f32.mrb[0].mxu0
        %v561 = vadd.f32 %v315, %v560
        %v562 = vpop.f32.mrb[0].mxu0
        %563 = vmatprep.mubr.f32.mxu0 0.0
        %564 = vmatmul.mubr.f32.gmra.mrb[0].mxu0 %v370
        %v565 = vpop.f32.mrb[0].mxu0
        %v566 = vadd.f32 %v315, %v565
        %v567 = vpop.f32.mrb[0].mxu0
        %568 = vmatprep.mubr.f32.mxu0 0.0
        %569 = vmatmul.mubr.f32.gmra.mrb[0].mxu0 %v373
        %v570 = vpop.f32.mrb[0].mxu0
        %v571 = vadd.f32 %v315, %v570
        %v572 = vpop.f32.mrb[0].mxu0
        %573 = vmatprep.mubr.f32.mxu0 0.0
        %574 = vmatmul.mubr.f32.gmra.mrb[0].mxu0 %v376
        %v575 = vpop.f32.mrb[0].mxu0
        %v576 = vadd.f32 %v315, %v575
        %v577 = vpop.f32.mrb[0].mxu0
        %578 = vmatprep.mubr.f32.mxu0 0.0
        %579 = vmatmul.mubr.f32.gmra.mrb[0].mxu0 %v379
        %v580 = vpop.f32.mrb[0].mxu0
        %v581 = vadd.f32 %v315, %v580
        %v582 = vpop.f32.mrb[0].mxu0
        %583 = vmatprep.mubr.f32.mxu0 0.0
        %584 = vmatmul.mubr.f32.gmra.mrb[0].mxu0 %v382
        %v585 = vpop.f32.mrb[0].mxu0
        %v586 = vadd.f32 %v315, %v585
        %v587 = vpop.f32.mrb[0].mxu0
        %588 = vmatprep.mubr.f32.mxu0 0.0
        %589 = vmatmul.mubr.f32.gmra.mrb[0].mxu0 %v385
        %v590 = vpop.f32.mrb[0].mxu0
        %v591 = vadd.f32 %v315, %v590
        %v592 = vpop.f32.mrb[0].mxu0
        %593 = vmatprep.mubr.f32.mxu0 0.0
        %594 = vmatmul.mubr.f32.gmra.mrb[0].mxu0 %v388
        %v595 = vpop.f32.mrb[0].mxu0
        %v596 = vadd.f32 %v315, %v595
        %v597 = vpop.f32.mrb[0].mxu0
        %598 = vmatprep.mubr.f32.mxu0 0.0
        %599 = vmatmul.mubr.f32.gmra.mrb[0].mxu0 %v391
        %v600 = vpop.f32.mrb[0].mxu0
        %v601 = vadd.f32 %v315, %v600
        %v602 = vpop.f32.mrb[0].mxu0
        %603 = vmatprep.mubr.f32.mxu0 0.0
        %604 = vmatmul.mubr.f32.gmra.mrb[0].mxu0 %v394
        %v605 = vpop.f32.mrb[0].mxu0
        %v606 = vadd.f32 %v315, %v605
        %v607 = vpop.f32.mrb[0].mxu0
        %608 = vmatprep.mubr.f32.mxu0 0.0
        %609 = vmatmul.mubr.f32.gmra.mrb[0].mxu0 %v397
        %v610 = vpop.f32.mrb[0].mxu0
        %v611 = vadd.f32 %v315, %v610
        %v612 = vpop.f32.mrb[0].mxu0
        %613 = vmatprep.mubr.f32.mxu0 0.0
        %614 = vmatmul.mubr.f32.gmra.mrb[0].mxu0 %v400
        %v615 = vpop.f32.mrb[0].mxu0
        %v616 = vadd.f32 %v315, %v615
        %v617 = vpop.f32.mrb[0].mxu0
        %618 = vmatprep.mubr.f32.mxu0 0.0
        %619 = vmatmul.mubr.f32.gmra.mrb[0].mxu0 %v403
        %v620 = vpop.f32.mrb[0].mxu0
        %v621 = vadd.f32 %v315, %v620
        %v622 = vpop.f32.mrb[0].mxu0
        %623 = vmatprep.mubr.f32.mxu0 0.0
        %624 = vmatmul.mubr.f32.gmra.mrb[0].mxu0 %v406
        %v625 = vpop.f32.mrb[0].mxu0
        %v626 = vadd.f32 %v315, %v625
        %v627 = vpop.f32.mrb[0].mxu0
        %628 = vmatprep.mubr.f32.mxu0 0.0
        %629 = vmatmul.mubr.f32.gmra.mrb[0].mxu0 %v409
        %v630 = vpop.f32.mrb[0].mxu0
        %v631 = vadd.f32 %v315, %v630
        %v632 = vpop.f32.mrb[0].mxu0
        %633 = vmatprep.mubr.f32.mxu0 0.0
        %634 = vmatmul.mubr.f32.gmra.mrb[0].mxu0 %v412
        %v635 = vpop.f32.mrb[0].mxu0
        %v636 = vadd.f32 %v315, %v635
        %v637 = vpop.f32.mrb[0].mxu0
        %638 = vdwg.mxu0
        %v639 = vmax.f32 %v481, 0.0
        %v640 = vmax.f32 %v486, 0.0
        %v641 = vmax.f32 %v491, 0.0
        %v642 = vmax.f32 %v496, 0.0
        %v643 = vmax.f32 %v501, 0.0
        %v644 = vmax.f32 %v506, 0.0
        %v645 = vmax.f32 %v511, 0.0
        %v646 = vmax.f32 %v516, 0.0
        %v647 = vmax.f32 %v521, 0.0
        %v648 = vmax.f32 %v526, 0.0
        %v649 = vmax.f32 %v531, 0.0
        %v650 = vmax.f32 %v536, 0.0
        %v651 = vmax.f32 %v541, 0.0
        %v652 = vmax.f32 %v546, 0.0
        %v653 = vmax.f32 %v551, 0.0
        %v654 = vmax.f32 %v556, 0.0
        %v655 = vmax.f32 %v561, 0.0
        %v656 = vmax.f32 %v566, 0.0
        %v657 = vmax.f32 %v571, 0.0
        %v658 = vmax.f32 %v576, 0.0
        %v659 = vmax.f32 %v581, 0.0
        %v660 = vmax.f32 %v586, 0.0
        %v661 = vmax.f32 %v591, 0.0
        %v662 = vmax.f32 %v596, 0.0
        %v663 = vmax.f32 %v601, 0.0
        %v664 = vmax.f32 %v606, 0.0
        %v665 = vmax.f32 %v611, 0.0
        %v666 = vmax.f32 %v616, 0.0
        %v667 = vmax.f32 %v621, 0.0
        %v668 = vmax.f32 %v626, 0.0
        %v669 = vmax.f32 %v631, 0.0
        %v670 = vmax.f32 %v636, 0.0
        %vm671 = vcmask 31744
        %672 = vst.msk [vmem:[%s271] sm:$0xff] %vm671, %v639
        %673 = vst.msk [vmem:[%s271 + $0x8] sm:$0xff] %vm671, %v640
        %674 = vst.msk [vmem:[%s271 + $0x10] sm:$0xff] %vm671, %v641
        %675 = vst.msk [vmem:[%s271 + $0x18] sm:$0xff] %vm671, %v642
        %676 = vst.msk [vmem:[%s271 + $0x20] sm:$0xff] %vm671, %v643
        %677 = vst.msk [vmem:[%s271 + $0x28] sm:$0xff] %vm671, %v644
        %678 = vst.msk [vmem:[%s271 + $0x30] sm:$0xff] %vm671, %v645
        %679 = vst.msk [vmem:[%s271 + $0x38] sm:$0xff] %vm671, %v646
        %680 = vst.msk [vmem:[%s271 + $0x40] sm:$0xff] %vm671, %v647
        %681 = vst.msk [vmem:[%s271 + $0x48] sm:$0xff] %vm671, %v648
        %682 = vst.msk [vmem:[%s271 + $0x50] sm:$0xff] %vm671, %v649
        %683 = vst.msk [vmem:[%s271 + $0x58] sm:$0xff] %vm671, %v650
        %684 = vst.msk [vmem:[%s271 + $0x60] sm:$0xff] %vm671, %v651
        %685 = vst.msk [vmem:[%s271 + $0x68] sm:$0xff] %vm671, %v652
        %686 = vst.msk [vmem:[%s271 + $0x70] sm:$0xff] %vm671, %v653
        %687 = vst.msk [vmem:[%s271 + $0x78] sm:$0xff] %vm671, %v654
        %688 = vst.msk [vmem:[%s271 + $0x80] sm:$0xff] %vm671, %v655
        %689 = vst.msk [vmem:[%s271 + $0x88] sm:$0xff] %vm671, %v656
        %690 = vst.msk [vmem:[%s271 + $0x90] sm:$0xff] %vm671, %v657
        %691 = vst.msk [vmem:[%s271 + $0x98] sm:$0xff] %vm671, %v658
        %692 = vst.msk [vmem:[%s271 + $0xa0] sm:$0xff] %vm671, %v659
        %693 = vst.msk [vmem:[%s271 + $0xa8] sm:$0xff] %vm671, %v660
        %694 = vst.msk [vmem:[%s271 + $0xb0] sm:$0xff] %vm671, %v661
        %695 = vst.msk [vmem:[%s271 + $0xb8] sm:$0xff] %vm671, %v662
        %696 = vst.msk [vmem:[%s271 + $0xc0] sm:$0xff] %vm671, %v663
        %697 = vst.msk [vmem:[%s271 + $0xc8] sm:$0xff] %vm671, %v664
        %698 = vst.msk [vmem:[%s271 + $0xd0] sm:$0xff] %vm671, %v665
        %699 = vst.msk [vmem:[%s271 + $0xd8] sm:$0xff] %vm671, %v666
        %700 = vst.msk [vmem:[%s271 + $0xe0] sm:$0xff] %vm671, %v667
        %701 = vst.msk [vmem:[%s271 + $0xe8] sm:$0xff] %vm671, %v668
        %702 = vst.msk [vmem:[%s271 + $0xf0] sm:$0xff] %vm671, %v669
        %703 = vst.msk [vmem:[%s271 + $0xf8] sm:$0xff] %vm671, %v670
        %vm704 = vcmask 15360
        %705 = vst.msk [vmem:[#allocation2] sm:$0xff] %vm704, 0.0
        %706 = vst.msk [vmem:[#allocation2 + $0x8] sm:$0xff] %vm704, 0.0
        %vm707 = vcmask 9216
        %708 = vst.msk [vmem:[#allocation2 + $0x10] sm:$0x3] %vm707, 0.0
        %709 = vst.msk [vmem:[#allocation2 + $0x18] sm:$0xff] %vm704, 0.0
        %710 = vst.msk [vmem:[#allocation2 + $0x20] sm:$0xff] %vm704, 0.0
        %711 = vst.msk [vmem:[#allocation2 + $0x28] sm:$0x3] %vm707, 0.0
        %712 = vst.msk [vmem:[#allocation2 + $0x30] sm:$0xff] %vm704, 0.0
        %713 = vst.msk [vmem:[#allocation2 + $0x38] sm:$0xff] %vm704, 0.0
        %714 = vst.msk [vmem:[#allocation2 + $0x40] sm:$0x3] %vm707, 0.0
        %715 = vst.msk [vmem:[#allocation2 + $0x48] sm:$0xff] %vm704, 0.0
        %716 = vst.msk [vmem:[#allocation2 + $0x50] sm:$0xff] %vm704, 0.0
        %717 = vst.msk [vmem:[#allocation2 + $0x58] sm:$0x3] %vm707, 0.0
        %718 = vst.msk [vmem:[#allocation2 + $0x60] sm:$0xff] %vm704, 0.0
        %719 = vst.msk [vmem:[#allocation2 + $0x68] sm:$0xff] %vm704, 0.0
        %720 = vst.msk [vmem:[#allocation2 + $0x70] sm:$0x3] %vm707, 0.0
        %721 = vst.msk [vmem:[#allocation2 + $0x78] sm:$0xff] %vm704, 0.0
        %722 = vst.msk [vmem:[#allocation2 + $0x80] sm:$0xff] %vm704, 0.0
        %723 = vst.msk [vmem:[#allocation2 + $0x88] sm:$0x3] %vm707, 0.0
        %724 = vst.msk [vmem:[#allocation2 + $0x90] sm:$0xff] %vm704, 0.0
        %725 = vst.msk [vmem:[#allocation2 + $0x98] sm:$0xff] %vm704, 0.0
        %726 = vst.msk [vmem:[#allocation2 + $0xa0] sm:$0x3] %vm707, 0.0
        %727 = vst.msk [vmem:[#allocation2 + $0xa8] sm:$0xff] %vm704, 0.0
        %728 = vst.msk [vmem:[#allocation2 + $0xb0] sm:$0xff] %vm704, 0.0
        %729 = vst.msk [vmem:[#allocation2 + $0xb8] sm:$0x3] %vm707, 0.0
        %730 = vst.msk [vmem:[#allocation2 + $0xc0] sm:$0xff] %vm704, 0.0
        %731 = vst.msk [vmem:[#allocation2 + $0xc8] sm:$0xff] %vm704, 0.0
        %732 = vst.msk [vmem:[#allocation2 + $0xd0] sm:$0x3] %vm707, 0.0
        %733 = vst.msk [vmem:[#allocation2 + $0xd8] sm:$0xff] %vm704, 0.0
        %734 = vst.msk [vmem:[#allocation2 + $0xe0] sm:$0xff] %vm704, 0.0
        %735 = vst.msk [vmem:[#allocation2 + $0xe8] sm:$0x3] %vm707, 0.0
        %736 = vst.msk [vmem:[#allocation2 + $0xf0] sm:$0xff] %vm704, 0.0
        %737 = vst.msk [vmem:[#allocation2 + $0xf8] sm:$0xff] %vm704, 0.0
        %738 = vst.msk [vmem:[#allocation2 + $0x100] sm:$0x3] %vm707, 0.0
        %739 = vst.msk [vmem:[#allocation2 + $0x108] sm:$0xff] %vm704, 0.0
        %740 = vst.msk [vmem:[#allocation2 + $0x110] sm:$0xff] %vm704, 0.0
        %741 = vst.msk [vmem:[#allocation2 + $0x118] sm:$0x3] %vm707, 0.0
        %742 = vst.msk [vmem:[#allocation2 + $0x120] sm:$0xff] %vm704, 0.0
        %743 = vst.msk [vmem:[#allocation2 + $0x128] sm:$0xff] %vm704, 0.0
        %744 = vst.msk [vmem:[#allocation2 + $0x130] sm:$0x3] %vm707, 0.0
        %745 = vst.msk [vmem:[#allocation2 + $0x138] sm:$0xff] %vm704, 0.0
        %746 = vst.msk [vmem:[#allocation2 + $0x140] sm:$0xff] %vm704, 0.0
        %747 = vst.msk [vmem:[#allocation2 + $0x148] sm:$0x3] %vm707, 0.0
        %748 = vst.msk [vmem:[#allocation2 + $0x150] sm:$0xff] %vm704, 0.0
        %749 = vst.msk [vmem:[#allocation2 + $0x158] sm:$0xff] %vm704, 0.0
        %750 = vst.msk [vmem:[#allocation2 + $0x160] sm:$0x3] %vm707, 0.0
        %751 = vst.msk [vmem:[#allocation2 + $0x168] sm:$0xff] %vm704, 0.0
        %752 = vst.msk [vmem:[#allocation2 + $0x170] sm:$0xff] %vm704, 0.0
        %753 = vst.msk [vmem:[#allocation2 + $0x178] sm:$0x3] %vm707, 0.0
        %754 = vst.msk [vmem:[#allocation2 + $0x180] sm:$0xff] %vm704, 0.0
        %755 = vst.msk [vmem:[#allocation2 + $0x188] sm:$0xff] %vm704, 0.0
        %756 = vst.msk [vmem:[#allocation2 + $0x190] sm:$0x3] %vm707, 0.0
        %757 = vst.msk [vmem:[#allocation2 + $0x198] sm:$0xff] %vm704, 0.0
        %758 = vst.msk [vmem:[#allocation2 + $0x1a0] sm:$0xff] %vm704, 0.0
        %759 = vst.msk [vmem:[#allocation2 + $0x1a8] sm:$0x3] %vm707, 0.0
        %792 = vrot.lane.b32.xlu0 %v639, 124
        %v793 = vpop.permute.xlu0 %792
        %794 = vrot.lane.b32.xlu0 %v640, 124
        %v795 = vpop.permute.xlu0 %794
        %796 = vrot.lane.b32.xlu0 %v641, 124
        %v797 = vpop.permute.xlu0 %796
        %798 = vrot.lane.b32.xlu0 %v642, 124
        %v799 = vpop.permute.xlu0 %798
        %800 = vrot.lane.b32.xlu0 %v643, 124
        %v801 = vpop.permute.xlu0 %800
        %802 = vrot.lane.b32.xlu0 %v644, 124
        %v803 = vpop.permute.xlu0 %802
        %804 = vrot.lane.b32.xlu0 %v645, 124
        %v805 = vpop.permute.xlu0 %804
        %806 = vrot.lane.b32.xlu0 %v646, 124
        %v807 = vpop.permute.xlu0 %806
        %808 = vrot.lane.b32.xlu0 %v647, 124
        %v809 = vpop.permute.xlu0 %808
        %810 = vrot.lane.b32.xlu0 %v648, 124
        %v811 = vpop.permute.xlu0 %810
        %812 = vrot.lane.b32.xlu0 %v649, 124
        %v813 = vpop.permute.xlu0 %812
        %814 = vrot.lane.b32.xlu0 %v650, 124
        %v815 = vpop.permute.xlu0 %814
        %816 = vrot.lane.b32.xlu0 %v651, 124
        %v817 = vpop.permute.xlu0 %816
        %818 = vrot.lane.b32.xlu0 %v652, 124
        %v819 = vpop.permute.xlu0 %818
        %820 = vrot.lane.b32.xlu0 %v653, 124
        %v821 = vpop.permute.xlu0 %820
        %822 = vrot.lane.b32.xlu0 %v654, 124
        %v823 = vpop.permute.xlu0 %822
        %824 = vrot.lane.b32.xlu0 %v655, 124
        %v825 = vpop.permute.xlu0 %824
        %826 = vrot.lane.b32.xlu0 %v656, 124
        %v827 = vpop.permute.xlu0 %826
        %828 = vrot.lane.b32.xlu0 %v657, 124
        %v829 = vpop.permute.xlu0 %828
        %830 = vrot.lane.b32.xlu0 %v658, 124
        %v831 = vpop.permute.xlu0 %830
        %832 = vrot.lane.b32.xlu0 %v659, 124
        %v833 = vpop.permute.xlu0 %832
        %834 = vrot.lane.b32.xlu0 %v660, 124
        %v835 = vpop.permute.xlu0 %834
        %836 = vrot.lane.b32.xlu0 %v661, 124
        %v837 = vpop.permute.xlu0 %836
        %838 = vrot.lane.b32.xlu0 %v662, 124
        %v839 = vpop.permute.xlu0 %838
        %840 = vrot.lane.b32.xlu0 %v663, 124
        %v841 = vpop.permute.xlu0 %840
        %842 = vrot.lane.b32.xlu0 %v664, 124
        %v843 = vpop.permute.xlu0 %842
        %844 = vrot.lane.b32.xlu0 %v665, 124
        %v845 = vpop.permute.xlu0 %844
        %846 = vrot.lane.b32.xlu0 %v666, 124
        %v847 = vpop.permute.xlu0 %846
        %848 = vrot.lane.b32.xlu0 %v667, 124
        %v849 = vpop.permute.xlu0 %848
        %850 = vrot.lane.b32.xlu0 %v668, 124
        %v851 = vpop.permute.xlu0 %850
        %852 = vrot.lane.b32.xlu0 %v669, 124
        %v853 = vpop.permute.xlu0 %852
        %854 = vrot.lane.b32.xlu0 %v670, 124
        %v855 = vpop.permute.xlu0 %854
        %s888 = scalar_lea.vmem [#allocation2], 24
        %889 = vst.msk [vmem:[%s888 + $0x1] sm:$0xff] %vm704, %v793
        %890 = vst.msk [vmem:[%s888 + $0x9] sm:$0xff] %vm704, %v795
        %891 = vst.msk [vmem:[%s888 + $0x19] sm:$0xff] %vm704, %v797
        %892 = vst.msk [vmem:[%s888 + $0x21] sm:$0xff] %vm704, %v799
        %893 = vst.msk [vmem:[%s888 + $0x31] sm:$0xff] %vm704, %v801
        %894 = vst.msk [vmem:[%s888 + $0x39] sm:$0xff] %vm704, %v803
        %895 = vst.msk [vmem:[%s888 + $0x49] sm:$0xff] %vm704, %v805
        %896 = vst.msk [vmem:[%s888 + $0x51] sm:$0xff] %vm704, %v807
        %897 = vst.msk [vmem:[%s888 + $0x61] sm:$0xff] %vm704, %v809
        %898 = vst.msk [vmem:[%s888 + $0x69] sm:$0xff] %vm704, %v811
        %899 = vst.msk [vmem:[%s888 + $0x79] sm:$0xff] %vm704, %v813
        %900 = vst.msk [vmem:[%s888 + $0x81] sm:$0xff] %vm704, %v815
        %901 = vst.msk [vmem:[%s888 + $0x91] sm:$0xff] %vm704, %v817
        %902 = vst.msk [vmem:[%s888 + $0x99] sm:$0xff] %vm704, %v819
        %903 = vst.msk [vmem:[%s888 + $0xa9] sm:$0xff] %vm704, %v821
        %904 = vst.msk [vmem:[%s888 + $0xb1] sm:$0xff] %vm704, %v823
        %905 = vst.msk [vmem:[%s888 + $0xc1] sm:$0xff] %vm704, %v825
        %906 = vst.msk [vmem:[%s888 + $0xc9] sm:$0xff] %vm704, %v827
        %907 = vst.msk [vmem:[%s888 + $0xd9] sm:$0xff] %vm704, %v829
        %908 = vst.msk [vmem:[%s888 + $0xe1] sm:$0xff] %vm704, %v831
        %909 = vst.msk [vmem:[%s888 + $0xf1] sm:$0xff] %vm704, %v833
        %910 = vst.msk [vmem:[%s888 + $0xf9] sm:$0xff] %vm704, %v835
        %911 = vst.msk [vmem:[%s888 + $0x109] sm:$0xff] %vm704, %v837
        %912 = vst.msk [vmem:[%s888 + $0x111] sm:$0xff] %vm704, %v839
        %913 = vst.msk [vmem:[%s888 + $0x121] sm:$0xff] %vm704, %v841
        %914 = vst.msk [vmem:[%s888 + $0x129] sm:$0xff] %vm704, %v843
        %915 = vst.msk [vmem:[%s888 + $0x139] sm:$0xff] %vm704, %v845
        %916 = vst.msk [vmem:[%s888 + $0x141] sm:$0xff] %vm704, %v847
        %917 = vst.msk [vmem:[%s888 + $0x151] sm:$0xff] %vm704, %v849
        %918 = vst.msk [vmem:[%s888 + $0x159] sm:$0xff] %vm704, %v851
        %919 = vst.msk [vmem:[%s888 + $0x169] sm:$0xff] %vm704, %v853
        %920 = vst.msk [vmem:[%s888 + $0x171] sm:$0xff] %vm704, %v855
        %v921 = vld [vmem:[#allocation2] sm:$0xff]
        %v922 = vld [vmem:[#allocation2 + $0x8] sm:$0xff]
        %v923 = vld [vmem:[#allocation2 + $0x18] sm:$0xff]
        %v924 = vld [vmem:[#allocation2 + $0x20] sm:$0xff]
        %v925 = vld [vmem:[#allocation2 + $0x30] sm:$0xff]
        %v926 = vld [vmem:[#allocation2 + $0x38] sm:$0xff]
        %v927 = vld [vmem:[#allocation2 + $0x48] sm:$0xff]
        %v928 = vld [vmem:[#allocation2 + $0x50] sm:$0xff]
        %v929 = vld [vmem:[#allocation2 + $0x60] sm:$0xff]
        %v930 = vld [vmem:[#allocation2 + $0x68] sm:$0xff]
        %v931 = vld [vmem:[#allocation2 + $0x78] sm:$0xff]
        %v932 = vld [vmem:[#allocation2 + $0x80] sm:$0xff]
        %v933 = vld [vmem:[#allocation2 + $0x90] sm:$0xff]
        %v934 = vld [vmem:[#allocation2 + $0x98] sm:$0xff]
        %v935 = vld [vmem:[#allocation2 + $0xa8] sm:$0xff]
        %v936 = vld [vmem:[#allocation2 + $0xb0] sm:$0xff]
        %v937 = vld [vmem:[#allocation2 + $0xc0] sm:$0xff]
        %v938 = vld [vmem:[#allocation2 + $0xc8] sm:$0xff]
        %v939 = vld [vmem:[#allocation2 + $0xd8] sm:$0xff]
        %v940 = vld [vmem:[#allocation2 + $0xe0] sm:$0xff]
        %v941 = vld [vmem:[#allocation2 + $0xf0] sm:$0xff]
        %v942 = vld [vmem:[#allocation2 + $0xf8] sm:$0xff]
        %v943 = vld [vmem:[#allocation2 + $0x108] sm:$0xff]
        %v944 = vld [vmem:[#allocation2 + $0x110] sm:$0xff]
        %v945 = vld [vmem:[#allocation2 + $0x120] sm:$0xff]
        %v946 = vld [vmem:[#allocation2 + $0x128] sm:$0xff]
        %v947 = vld [vmem:[#allocation2 + $0x138] sm:$0xff]
        %v948 = vld [vmem:[#allocation2 + $0x140] sm:$0xff]
        %v949 = vld [vmem:[#allocation2 + $0x150] sm:$0xff]
        %v950 = vld [vmem:[#allocation2 + $0x158] sm:$0xff]
        %v951 = vld [vmem:[#allocation2 + $0x168] sm:$0xff]
        %v952 = vld [vmem:[#allocation2 + $0x170] sm:$0xff]
        %953 = vst.msk [vmem:[#allocation3] sm:$0xff] %vm704, %v921
        %954 = vst.msk [vmem:[#allocation3 + $0x8] sm:$0xff] %vm704, %v922
        %955 = vst.msk [vmem:[#allocation3 + $0x10] sm:$0xff] %vm704, %v923
        %956 = vst.msk [vmem:[#allocation3 + $0x18] sm:$0xff] %vm704, %v924
        %957 = vst.msk [vmem:[#allocation3 + $0x20] sm:$0xff] %vm704, %v925
        %958 = vst.msk [vmem:[#allocation3 + $0x28] sm:$0xff] %vm704, %v926
        %959 = vst.msk [vmem:[#allocation3 + $0x30] sm:$0xff] %vm704, %v927
        %960 = vst.msk [vmem:[#allocation3 + $0x38] sm:$0xff] %vm704, %v928
        %961 = vst.msk [vmem:[#allocation3 + $0x40] sm:$0xff] %vm704, %v929
        %962 = vst.msk [vmem:[#allocation3 + $0x48] sm:$0xff] %vm704, %v930
        %963 = vst.msk [vmem:[#allocation3 + $0x50] sm:$0xff] %vm704, %v931
        %964 = vst.msk [vmem:[#allocation3 + $0x58] sm:$0xff] %vm704, %v932
        %965 = vst.msk [vmem:[#allocation3 + $0x60] sm:$0xff] %vm704, %v933
        %966 = vst.msk [vmem:[#allocation3 + $0x68] sm:$0xff] %vm704, %v934
        %967 = vst.msk [vmem:[#allocation3 + $0x70] sm:$0xff] %vm704, %v935
        %968 = vst.msk [vmem:[#allocation3 + $0x78] sm:$0xff] %vm704, %v936
        %969 = vst.msk [vmem:[#allocation3 + $0x80] sm:$0xff] %vm704, %v937
        %970 = vst.msk [vmem:[#allocation3 + $0x88] sm:$0xff] %vm704, %v938
        %971 = vst.msk [vmem:[#allocation3 + $0x90] sm:$0xff] %vm704, %v939
        %972 = vst.msk [vmem:[#allocation3 + $0x98] sm:$0xff] %vm704, %v940
        %973 = vst.msk [vmem:[#allocation3 + $0xa0] sm:$0xff] %vm704, %v941
        %974 = vst.msk [vmem:[#allocation3 + $0xa8] sm:$0xff] %vm704, %v942
        %975 = vst.msk [vmem:[#allocation3 + $0xb0] sm:$0xff] %vm704, %v943
        %976 = vst.msk [vmem:[#allocation3 + $0xb8] sm:$0xff] %vm704, %v944
        %977 = vst.msk [vmem:[#allocation3 + $0xc0] sm:$0xff] %vm704, %v945
        %978 = vst.msk [vmem:[#allocation3 + $0xc8] sm:$0xff] %vm704, %v946
        %979 = vst.msk [vmem:[#allocation3 + $0xd0] sm:$0xff] %vm704, %v947
        %980 = vst.msk [vmem:[#allocation3 + $0xd8] sm:$0xff] %vm704, %v948
        %981 = vst.msk [vmem:[#allocation3 + $0xe0] sm:$0xff] %vm704, %v949
        %982 = vst.msk [vmem:[#allocation3 + $0xe8] sm:$0xff] %vm704, %v950
        %983 = vst.msk [vmem:[#allocation3 + $0xf0] sm:$0xff] %vm704, %v951
        %984 = vst.msk [vmem:[#allocation3 + $0xf8] sm:$0xff] %vm704, %v952
        %v985 = vld [vmem:[#allocation2 + $0x1] sm:$0xff]
        %v986 = vld [vmem:[#allocation2 + $0x9] sm:$0xff]
        %v987 = vld [vmem:[#allocation2 + $0x19] sm:$0xff]
        %v988 = vld [vmem:[#allocation2 + $0x21] sm:$0xff]
        %v989 = vld [vmem:[#allocation2 + $0x31] sm:$0xff]
        %v990 = vld [vmem:[#allocation2 + $0x39] sm:$0xff]
        %v991 = vld [vmem:[#allocation2 + $0x49] sm:$0xff]
        %v992 = vld [vmem:[#allocation2 + $0x51] sm:$0xff]
        %v993 = vld [vmem:[#allocation2 + $0x61] sm:$0xff]
        %v994 = vld [vmem:[#allocation2 + $0x69] sm:$0xff]
        %v995 = vld [vmem:[#allocation2 + $0x79] sm:$0xff]
        %v996 = vld [vmem:[#allocation2 + $0x81] sm:$0xff]
        %v997 = vld [vmem:[#allocation2 + $0x91] sm:$0xff]
        %v998 = vld [vmem:[#allocation2 + $0x99] sm:$0xff]
        %v999 = vld [vmem:[#allocation2 + $0xa9] sm:$0xff]
        %v1000 = vld [vmem:[#allocation2 + $0xb1] sm:$0xff]
        %v1001 = vld [vmem:[#allocation2 + $0xc1] sm:$0xff]
        %v1002 = vld [vmem:[#allocation2 + $0xc9] sm:$0xff]
        %v1003 = vld [vmem:[#allocation2 + $0xd9] sm:$0xff]
        %v1004 = vld [vmem:[#allocation2 + $0xe1] sm:$0xff]
        %v1005 = vld [vmem:[#allocation2 + $0xf1] sm:$0xff]
        %v1006 = vld [vmem:[#allocation2 + $0xf9] sm:$0xff]
        %v1007 = vld [vmem:[#allocation2 + $0x109] sm:$0xff]
        %v1008 = vld [vmem:[#allocation2 + $0x111] sm:$0xff]
        %v1009 = vld [vmem:[#allocation2 + $0x121] sm:$0xff]
        %v1010 = vld [vmem:[#allocation2 + $0x129] sm:$0xff]
        %v1011 = vld [vmem:[#allocation2 + $0x139] sm:$0xff]
        %v1012 = vld [vmem:[#allocation2 + $0x141] sm:$0xff]
        %v1013 = vld [vmem:[#allocation2 + $0x151] sm:$0xff]
        %v1014 = vld [vmem:[#allocation2 + $0x159] sm:$0xff]
        %v1015 = vld [vmem:[#allocation2 + $0x169] sm:$0xff]
        %v1016 = vld [vmem:[#allocation2 + $0x171] sm:$0xff]
        %1049 = vrot.lane.b32.xlu0 %v985, 2
        %v1050 = vpop.permute.xlu0 %1049
        %1051 = vrot.lane.b32.xlu0 %v986, 2
        %v1052 = vpop.permute.xlu0 %1051
        %1053 = vrot.lane.b32.xlu0 %v987, 2
        %v1054 = vpop.permute.xlu0 %1053
        %1055 = vrot.lane.b32.xlu0 %v988, 2
        %v1056 = vpop.permute.xlu0 %1055
        %1057 = vrot.lane.b32.xlu0 %v989, 2
        %v1058 = vpop.permute.xlu0 %1057
        %1059 = vrot.lane.b32.xlu0 %v990, 2
        %v1060 = vpop.permute.xlu0 %1059
        %1061 = vrot.lane.b32.xlu0 %v991, 2
        %v1062 = vpop.permute.xlu0 %1061
        %1063 = vrot.lane.b32.xlu0 %v992, 2
        %v1064 = vpop.permute.xlu0 %1063
        %1065 = vrot.lane.b32.xlu0 %v993, 2
        %v1066 = vpop.permute.xlu0 %1065
        %1067 = vrot.lane.b32.xlu0 %v994, 2
        %v1068 = vpop.permute.xlu0 %1067
        %1069 = vrot.lane.b32.xlu0 %v995, 2
        %v1070 = vpop.permute.xlu0 %1069
        %1071 = vrot.lane.b32.xlu0 %v996, 2
        %v1072 = vpop.permute.xlu0 %1071
        %1073 = vrot.lane.b32.xlu0 %v997, 2
        %v1074 = vpop.permute.xlu0 %1073
        %1075 = vrot.lane.b32.xlu0 %v998, 2
        %v1076 = vpop.permute.xlu0 %1075
        %1077 = vrot.lane.b32.xlu0 %v999, 2
        %v1078 = vpop.permute.xlu0 %1077
        %1079 = vrot.lane.b32.xlu0 %v1000, 2
        %v1080 = vpop.permute.xlu0 %1079
        %1081 = vrot.lane.b32.xlu0 %v1001, 2
        %v1082 = vpop.permute.xlu0 %1081
        %1083 = vrot.lane.b32.xlu0 %v1002, 2
        %v1084 = vpop.permute.xlu0 %1083
        %1085 = vrot.lane.b32.xlu0 %v1003, 2
        %v1086 = vpop.permute.xlu0 %1085
        %1087 = vrot.lane.b32.xlu0 %v1004, 2
        %v1088 = vpop.permute.xlu0 %1087
        %1089 = vrot.lane.b32.xlu0 %v1005, 2
        %v1090 = vpop.permute.xlu0 %1089
        %1091 = vrot.lane.b32.xlu0 %v1006, 2
        %v1092 = vpop.permute.xlu0 %1091
        %1093 = vrot.lane.b32.xlu0 %v1007, 2
        %v1094 = vpop.permute.xlu0 %1093
        %1095 = vrot.lane.b32.xlu0 %v1008, 2
        %v1096 = vpop.permute.xlu0 %1095
        %1097 = vrot.lane.b32.xlu0 %v1009, 2
        %v1098 = vpop.permute.xlu0 %1097
        %1099 = vrot.lane.b32.xlu0 %v1010, 2
        %v1100 = vpop.permute.xlu0 %1099
        %1101 = vrot.lane.b32.xlu0 %v1011, 2
        %v1102 = vpop.permute.xlu0 %1101
        %1103 = vrot.lane.b32.xlu0 %v1012, 2
        %v1104 = vpop.permute.xlu0 %1103
        %1105 = vrot.lane.b32.xlu0 %v1013, 2
        %v1106 = vpop.permute.xlu0 %1105
        %1107 = vrot.lane.b32.xlu0 %v1014, 2
        %v1108 = vpop.permute.xlu0 %1107
        %1109 = vrot.lane.b32.xlu0 %v1015, 2
        %v1110 = vpop.permute.xlu0 %1109
        %1111 = vrot.lane.b32.xlu0 %v1016, 2
        %v1112 = vpop.permute.xlu0 %1111
        %vm1145 = vcmask 31760
        %1146 = vst.msk [vmem:[#allocation3] sm:$0xff] %vm1145, %v1050
        %1147 = vst.msk [vmem:[#allocation3 + $0x8] sm:$0xff] %vm1145, %v1052
        %1148 = vst.msk [vmem:[#allocation3 + $0x10] sm:$0xff] %vm1145, %v1054
        %1149 = vst.msk [vmem:[#allocation3 + $0x18] sm:$0xff] %vm1145, %v1056
        %1150 = vst.msk [vmem:[#allocation3 + $0x20] sm:$0xff] %vm1145, %v1058
        %1151 = vst.msk [vmem:[#allocation3 + $0x28] sm:$0xff] %vm1145, %v1060
        %1152 = vst.msk [vmem:[#allocation3 + $0x30] sm:$0xff] %vm1145, %v1062
        %1153 = vst.msk [vmem:[#allocation3 + $0x38] sm:$0xff] %vm1145, %v1064
        %1154 = vst.msk [vmem:[#allocation3 + $0x40] sm:$0xff] %vm1145, %v1066
        %1155 = vst.msk [vmem:[#allocation3 + $0x48] sm:$0xff] %vm1145, %v1068
        %1156 = vst.msk [vmem:[#allocation3 + $0x50] sm:$0xff] %vm1145, %v1070
        %1157 = vst.msk [vmem:[#allocation3 + $0x58] sm:$0xff] %vm1145, %v1072
        %1158 = vst.msk [vmem:[#allocation3 + $0x60] sm:$0xff] %vm1145, %v1074
        %1159 = vst.msk [vmem:[#allocation3 + $0x68] sm:$0xff] %vm1145, %v1076
        %1160 = vst.msk [vmem:[#allocation3 + $0x70] sm:$0xff] %vm1145, %v1078
        %1161 = vst.msk [vmem:[#allocation3 + $0x78] sm:$0xff] %vm1145, %v1080
        %1162 = vst.msk [vmem:[#allocation3 + $0x80] sm:$0xff] %vm1145, %v1082
        %1163 = vst.msk [vmem:[#allocation3 + $0x88] sm:$0xff] %vm1145, %v1084
        %1164 = vst.msk [vmem:[#allocation3 + $0x90] sm:$0xff] %vm1145, %v1086
        %1165 = vst.msk [vmem:[#allocation3 + $0x98] sm:$0xff] %vm1145, %v1088
        %1166 = vst.msk [vmem:[#allocation3 + $0xa0] sm:$0xff] %vm1145, %v1090
        %1167 = vst.msk [vmem:[#allocation3 + $0xa8] sm:$0xff] %vm1145, %v1092
        %1168 = vst.msk [vmem:[#allocation3 + $0xb0] sm:$0xff] %vm1145, %v1094
        %1169 = vst.msk [vmem:[#allocation3 + $0xb8] sm:$0xff] %vm1145, %v1096
        %1170 = vst.msk [vmem:[#allocation3 + $0xc0] sm:$0xff] %vm1145, %v1098
        %1171 = vst.msk [vmem:[#allocation3 + $0xc8] sm:$0xff] %vm1145, %v1100
        %1172 = vst.msk [vmem:[#allocation3 + $0xd0] sm:$0xff] %vm1145, %v1102
        %1173 = vst.msk [vmem:[#allocation3 + $0xd8] sm:$0xff] %vm1145, %v1104
        %1174 = vst.msk [vmem:[#allocation3 + $0xe0] sm:$0xff] %vm1145, %v1106
        %1175 = vst.msk [vmem:[#allocation3 + $0xe8] sm:$0xff] %vm1145, %v1108
        %1176 = vst.msk [vmem:[#allocation3 + $0xf0] sm:$0xff] %vm1145, %v1110
        %1177 = vst.msk [vmem:[#allocation3 + $0xf8] sm:$0xff] %vm1145, %v1112
        %v1178 = vld [vmem:[#allocation2 + $0x2] sm:$0xff]
        %v1179 = vld [vmem:[#allocation2 + $0xa] sm:$0xff]
        %v1180 = vld [vmem:[#allocation2 + $0x1a] sm:$0xff]
        %v1181 = vld [vmem:[#allocation2 + $0x22] sm:$0xff]
        %v1182 = vld [vmem:[#allocation2 + $0x32] sm:$0xff]
        %v1183 = vld [vmem:[#allocation2 + $0x3a] sm:$0xff]
        %v1184 = vld [vmem:[#allocation2 + $0x4a] sm:$0xff]
        %v1185 = vld [vmem:[#allocation2 + $0x52] sm:$0xff]
        %v1186 = vld [vmem:[#allocation2 + $0x62] sm:$0xff]
        %v1187 = vld [vmem:[#allocation2 + $0x6a] sm:$0xff]
        %v1188 = vld [vmem:[#allocation2 + $0x7a] sm:$0xff]
        %v1189 = vld [vmem:[#allocation2 + $0x82] sm:$0xff]
        %v1190 = vld [vmem:[#allocation2 + $0x92] sm:$0xff]
        %v1191 = vld [vmem:[#allocation2 + $0x9a] sm:$0xff]
        %v1192 = vld [vmem:[#allocation2 + $0xaa] sm:$0xff]
        %v1193 = vld [vmem:[#allocation2 + $0xb2] sm:$0xff]
        %v1194 = vld [vmem:[#allocation2 + $0xc2] sm:$0xff]
        %v1195 = vld [vmem:[#allocation2 + $0xca] sm:$0xff]
        %v1196 = vld [vmem:[#allocation2 + $0xda] sm:$0xff]
        %v1197 = vld [vmem:[#allocation2 + $0xe2] sm:$0xff]
        %v1198 = vld [vmem:[#allocation2 + $0xf2] sm:$0xff]
        %v1199 = vld [vmem:[#allocation2 + $0xfa] sm:$0xff]
        %v1200 = vld [vmem:[#allocation2 + $0x10a] sm:$0xff]
        %v1201 = vld [vmem:[#allocation2 + $0x112] sm:$0xff]
        %v1202 = vld [vmem:[#allocation2 + $0x122] sm:$0xff]
        %v1203 = vld [vmem:[#allocation2 + $0x12a] sm:$0xff]
        %v1204 = vld [vmem:[#allocation2 + $0x13a] sm:$0xff]
        %v1205 = vld [vmem:[#allocation2 + $0x142] sm:$0xff]
        %v1206 = vld [vmem:[#allocation2 + $0x152] sm:$0xff]
        %v1207 = vld [vmem:[#allocation2 + $0x15a] sm:$0xff]
        %v1208 = vld [vmem:[#allocation2 + $0x16a] sm:$0xff]
        %v1209 = vld [vmem:[#allocation2 + $0x172] sm:$0xff]
        %1242 = vrot.lane.b32.xlu0 %v1178, 4
        %v1243 = vpop.permute.xlu0 %1242
        %1244 = vrot.lane.b32.xlu0 %v1179, 4
        %v1245 = vpop.permute.xlu0 %1244
        %1246 = vrot.lane.b32.xlu0 %v1180, 4
        %v1247 = vpop.permute.xlu0 %1246
        %1248 = vrot.lane.b32.xlu0 %v1181, 4
        %v1249 = vpop.permute.xlu0 %1248
        %1250 = vrot.lane.b32.xlu0 %v1182, 4
        %v1251 = vpop.permute.xlu0 %1250
        %1252 = vrot.lane.b32.xlu0 %v1183, 4
        %v1253 = vpop.permute.xlu0 %1252
        %1254 = vrot.lane.b32.xlu0 %v1184, 4
        %v1255 = vpop.permute.xlu0 %1254
        %1256 = vrot.lane.b32.xlu0 %v1185, 4
        %v1257 = vpop.permute.xlu0 %1256
        %1258 = vrot.lane.b32.xlu0 %v1186, 4
        %v1259 = vpop.permute.xlu0 %1258
        %1260 = vrot.lane.b32.xlu0 %v1187, 4
        %v1261 = vpop.permute.xlu0 %1260
        %1262 = vrot.lane.b32.xlu0 %v1188, 4
        %v1263 = vpop.permute.xlu0 %1262
        %1264 = vrot.lane.b32.xlu0 %v1189, 4
        %v1265 = vpop.permute.xlu0 %1264
        %1266 = vrot.lane.b32.xlu0 %v1190, 4
        %v1267 = vpop.permute.xlu0 %1266
        %1268 = vrot.lane.b32.xlu0 %v1191, 4
        %v1269 = vpop.permute.xlu0 %1268
        %1270 = vrot.lane.b32.xlu0 %v1192, 4
        %v1271 = vpop.permute.xlu0 %1270
        %1272 = vrot.lane.b32.xlu0 %v1193, 4
        %v1273 = vpop.permute.xlu0 %1272
        %1274 = vrot.lane.b32.xlu0 %v1194, 4
        %v1275 = vpop.permute.xlu0 %1274
        %1276 = vrot.lane.b32.xlu0 %v1195, 4
        %v1277 = vpop.permute.xlu0 %1276
        %1278 = vrot.lane.b32.xlu0 %v1196, 4
        %v1279 = vpop.permute.xlu0 %1278
        %1280 = vrot.lane.b32.xlu0 %v1197, 4
        %v1281 = vpop.permute.xlu0 %1280
        %1282 = vrot.lane.b32.xlu0 %v1198, 4
        %v1283 = vpop.permute.xlu0 %1282
        %1284 = vrot.lane.b32.xlu0 %v1199, 4
        %v1285 = vpop.permute.xlu0 %1284
        %1286 = vrot.lane.b32.xlu0 %v1200, 4
        %v1287 = vpop.permute.xlu0 %1286
        %1288 = vrot.lane.b32.xlu0 %v1201, 4
        %v1289 = vpop.permute.xlu0 %1288
        %1290 = vrot.lane.b32.xlu0 %v1202, 4
        %v1291 = vpop.permute.xlu0 %1290
        %1292 = vrot.lane.b32.xlu0 %v1203, 4
        %v1293 = vpop.permute.xlu0 %1292
        %1294 = vrot.lane.b32.xlu0 %v1204, 4
        %v1295 = vpop.permute.xlu0 %1294
        %1296 = vrot.lane.b32.xlu0 %v1205, 4
        %v1297 = vpop.permute.xlu0 %1296
        %1298 = vrot.lane.b32.xlu0 %v1206, 4
        %v1299 = vpop.permute.xlu0 %1298
        %1300 = vrot.lane.b32.xlu0 %v1207, 4
        %v1301 = vpop.permute.xlu0 %1300
        %1302 = vrot.lane.b32.xlu0 %v1208, 4
        %v1303 = vpop.permute.xlu0 %1302
        %1304 = vrot.lane.b32.xlu0 %v1209, 4
        %v1305 = vpop.permute.xlu0 %1304
        %vm1338 = vcmask 48160
        %1339 = vst.msk [vmem:[#allocation3] sm:$0xff] %vm1338, %v1243
        %1340 = vst.msk [vmem:[#allocation3 + $0x8] sm:$0xff] %vm1338, %v1245
        %1341 = vst.msk [vmem:[#allocation3 + $0x10] sm:$0xff] %vm1338, %v1247
        %1342 = vst.msk [vmem:[#allocation3 + $0x18] sm:$0xff] %vm1338, %v1249
        %1343 = vst.msk [vmem:[#allocation3 + $0x20] sm:$0xff] %vm1338, %v1251
        %1344 = vst.msk [vmem:[#allocation3 + $0x28] sm:$0xff] %vm1338, %v1253
        %1345 = vst.msk [vmem:[#allocation3 + $0x30] sm:$0xff] %vm1338, %v1255
        %1346 = vst.msk [vmem:[#allocation3 + $0x38] sm:$0xff] %vm1338, %v1257
        %1347 = vst.msk [vmem:[#allocation3 + $0x40] sm:$0xff] %vm1338, %v1259
        %1348 = vst.msk [vmem:[#allocation3 + $0x48] sm:$0xff] %vm1338, %v1261
        %1349 = vst.msk [vmem:[#allocation3 + $0x50] sm:$0xff] %vm1338, %v1263
        %1350 = vst.msk [vmem:[#allocation3 + $0x58] sm:$0xff] %vm1338, %v1265
        %1351 = vst.msk [vmem:[#allocation3 + $0x60] sm:$0xff] %vm1338, %v1267
        %1352 = vst.msk [vmem:[#allocation3 + $0x68] sm:$0xff] %vm1338, %v1269
        %1353 = vst.msk [vmem:[#allocation3 + $0x70] sm:$0xff] %vm1338, %v1271
        %1354 = vst.msk [vmem:[#allocation3 + $0x78] sm:$0xff] %vm1338, %v1273
        %1355 = vst.msk [vmem:[#allocation3 + $0x80] sm:$0xff] %vm1338, %v1275
        %1356 = vst.msk [vmem:[#allocation3 + $0x88] sm:$0xff] %vm1338, %v1277
        %1357 = vst.msk [vmem:[#allocation3 + $0x90] sm:$0xff] %vm1338, %v1279
        %1358 = vst.msk [vmem:[#allocation3 + $0x98] sm:$0xff] %vm1338, %v1281
        %1359 = vst.msk [vmem:[#allocation3 + $0xa0] sm:$0xff] %vm1338, %v1283
        %1360 = vst.msk [vmem:[#allocation3 + $0xa8] sm:$0xff] %vm1338, %v1285
        %1361 = vst.msk [vmem:[#allocation3 + $0xb0] sm:$0xff] %vm1338, %v1287
        %1362 = vst.msk [vmem:[#allocation3 + $0xb8] sm:$0xff] %vm1338, %v1289
        %1363 = vst.msk [vmem:[#allocation3 + $0xc0] sm:$0xff] %vm1338, %v1291
        %1364 = vst.msk [vmem:[#allocation3 + $0xc8] sm:$0xff] %vm1338, %v1293
        %1365 = vst.msk [vmem:[#allocation3 + $0xd0] sm:$0xff] %vm1338, %v1295
        %1366 = vst.msk [vmem:[#allocation3 + $0xd8] sm:$0xff] %vm1338, %v1297
        %1367 = vst.msk [vmem:[#allocation3 + $0xe0] sm:$0xff] %vm1338, %v1299
        %1368 = vst.msk [vmem:[#allocation3 + $0xe8] sm:$0xff] %vm1338, %v1301
        %1369 = vst.msk [vmem:[#allocation3 + $0xf0] sm:$0xff] %vm1338, %v1303
        %1370 = vst.msk [vmem:[#allocation3 + $0xf8] sm:$0xff] %vm1338, %v1305
        %v1371 = vld [vmem:[%s888] sm:$0xff]
        %v1372 = vld [vmem:[%s888 + $0x8] sm:$0xff]
        %v1373 = vld [vmem:[%s888 + $0x18] sm:$0xff]
        %v1374 = vld [vmem:[%s888 + $0x20] sm:$0xff]
        %v1375 = vld [vmem:[%s888 + $0x30] sm:$0xff]
        %v1376 = vld [vmem:[%s888 + $0x38] sm:$0xff]
        %v1377 = vld [vmem:[%s888 + $0x48] sm:$0xff]
        %v1378 = vld [vmem:[%s888 + $0x50] sm:$0xff]
        %v1379 = vld [vmem:[%s888 + $0x60] sm:$0xff]
        %v1380 = vld [vmem:[%s888 + $0x68] sm:$0xff]
        %v1381 = vld [vmem:[%s888 + $0x78] sm:$0xff]
        %v1382 = vld [vmem:[%s888 + $0x80] sm:$0xff]
        %v1383 = vld [vmem:[%s888 + $0x90] sm:$0xff]
        %v1384 = vld [vmem:[%s888 + $0x98] sm:$0xff]
        %v1385 = vld [vmem:[%s888 + $0xa8] sm:$0xff]
        %v1386 = vld [vmem:[%s888 + $0xb0] sm:$0xff]
        %v1387 = vld [vmem:[%s888 + $0xc0] sm:$0xff]
        %v1388 = vld [vmem:[%s888 + $0xc8] sm:$0xff]
        %v1389 = vld [vmem:[%s888 + $0xd8] sm:$0xff]
        %v1390 = vld [vmem:[%s888 + $0xe0] sm:$0xff]
        %v1391 = vld [vmem:[%s888 + $0xf0] sm:$0xff]
        %v1392 = vld [vmem:[%s888 + $0xf8] sm:$0xff]
        %v1393 = vld [vmem:[%s888 + $0x108] sm:$0xff]
        %v1394 = vld [vmem:[%s888 + $0x110] sm:$0xff]
        %v1395 = vld [vmem:[%s888 + $0x120] sm:$0xff]
        %v1396 = vld [vmem:[%s888 + $0x128] sm:$0xff]
        %v1397 = vld [vmem:[%s888 + $0x138] sm:$0xff]
        %v1398 = vld [vmem:[%s888 + $0x140] sm:$0xff]
        %v1399 = vld [vmem:[%s888 + $0x150] sm:$0xff]
        %v1400 = vld [vmem:[%s888 + $0x158] sm:$0xff]
        %v1401 = vld [vmem:[%s888 + $0x168] sm:$0xff]
        %v1402 = vld [vmem:[%s888 + $0x170] sm:$0xff]
        %1435 = vrot.lane.b32.xlu0 %v1371, 6
        %v1436 = vpop.permute.xlu0 %1435
        %1437 = vrot.lane.b32.xlu0 %v1372, 6
        %v1438 = vpop.permute.xlu0 %1437
        %1439 = vrot.lane.b32.xlu0 %v1373, 6
        %v1440 = vpop.permute.xlu0 %1439
        %1441 = vrot.lane.b32.xlu0 %v1374, 6
        %v1442 = vpop.permute.xlu0 %1441
        %1443 = vrot.lane.b32.xlu0 %v1375, 6
        %v1444 = vpop.permute.xlu0 %1443
        %1445 = vrot.lane.b32.xlu0 %v1376, 6
        %v1446 = vpop.permute.xlu0 %1445
        %1447 = vrot.lane.b32.xlu0 %v1377, 6
        %v1448 = vpop.permute.xlu0 %1447
        %1449 = vrot.lane.b32.xlu0 %v1378, 6
        %v1450 = vpop.permute.xlu0 %1449
        %1451 = vrot.lane.b32.xlu0 %v1379, 6
        %v1452 = vpop.permute.xlu0 %1451
        %1453 = vrot.lane.b32.xlu0 %v1380, 6
        %v1454 = vpop.permute.xlu0 %1453
        %1455 = vrot.lane.b32.xlu0 %v1381, 6
        %v1456 = vpop.permute.xlu0 %1455
        %1457 = vrot.lane.b32.xlu0 %v1382, 6
        %v1458 = vpop.permute.xlu0 %1457
        %1459 = vrot.lane.b32.xlu0 %v1383, 6
        %v1460 = vpop.permute.xlu0 %1459
        %1461 = vrot.lane.b32.xlu0 %v1384, 6
        %v1462 = vpop.permute.xlu0 %1461
        %1463 = vrot.lane.b32.xlu0 %v1385, 6
        %v1464 = vpop.permute.xlu0 %1463
        %1465 = vrot.lane.b32.xlu0 %v1386, 6
        %v1466 = vpop.permute.xlu0 %1465
        %1467 = vrot.lane.b32.xlu0 %v1387, 6
        %v1468 = vpop.permute.xlu0 %1467
        %1469 = vrot.lane.b32.xlu0 %v1388, 6
        %v1470 = vpop.permute.xlu0 %1469
        %1471 = vrot.lane.b32.xlu0 %v1389, 6
        %v1472 = vpop.permute.xlu0 %1471
        %1473 = vrot.lane.b32.xlu0 %v1390, 6
        %v1474 = vpop.permute.xlu0 %1473
        %1475 = vrot.lane.b32.xlu0 %v1391, 6
        %v1476 = vpop.permute.xlu0 %1475
        %1477 = vrot.lane.b32.xlu0 %v1392, 6
        %v1478 = vpop.permute.xlu0 %1477
        %1479 = vrot.lane.b32.xlu0 %v1393, 6
        %v1480 = vpop.permute.xlu0 %1479
        %1481 = vrot.lane.b32.xlu0 %v1394, 6
        %v1482 = vpop.permute.xlu0 %1481
        %1483 = vrot.lane.b32.xlu0 %v1395, 6
        %v1484 = vpop.permute.xlu0 %1483
        %1485 = vrot.lane.b32.xlu0 %v1396, 6
        %v1486 = vpop.permute.xlu0 %1485
        %1487 = vrot.lane.b32.xlu0 %v1397, 6
        %v1488 = vpop.permute.xlu0 %1487
        %1489 = vrot.lane.b32.xlu0 %v1398, 6
        %v1490 = vpop.permute.xlu0 %1489
        %1491 = vrot.lane.b32.xlu0 %v1399, 6
        %v1492 = vpop.permute.xlu0 %1491
        %1493 = vrot.lane.b32.xlu0 %v1400, 6
        %v1494 = vpop.permute.xlu0 %1493
        %1495 = vrot.lane.b32.xlu0 %v1401, 6
        %v1496 = vpop.permute.xlu0 %1495
        %1497 = vrot.lane.b32.xlu0 %v1402, 6
        %v1498 = vpop.permute.xlu0 %1497
        %vm1531 = vcmask 64560
        %1532 = vst.msk [vmem:[#allocation3] sm:$0xff] %vm1531, %v1436
        %1533 = vst.msk [vmem:[#allocation3 + $0x8] sm:$0xff] %vm1531, %v1438
        %1534 = vst.msk [vmem:[#allocation3 + $0x10] sm:$0xff] %vm1531, %v1440
        %1535 = vst.msk [vmem:[#allocation3 + $0x18] sm:$0xff] %vm1531, %v1442
        %1536 = vst.msk [vmem:[#allocation3 + $0x20] sm:$0xff] %vm1531, %v1444
        %1537 = vst.msk [vmem:[#allocation3 + $0x28] sm:$0xff] %vm1531, %v1446
        %1538 = vst.msk [vmem:[#allocation3 + $0x30] sm:$0xff] %vm1531, %v1448
        %1539 = vst.msk [vmem:[#allocation3 + $0x38] sm:$0xff] %vm1531, %v1450
        %1540 = vst.msk [vmem:[#allocation3 + $0x40] sm:$0xff] %vm1531, %v1452
        %1541 = vst.msk [vmem:[#allocation3 + $0x48] sm:$0xff] %vm1531, %v1454
        %1542 = vst.msk [vmem:[#allocation3 + $0x50] sm:$0xff] %vm1531, %v1456
        %1543 = vst.msk [vmem:[#allocation3 + $0x58] sm:$0xff] %vm1531, %v1458
        %1544 = vst.msk [vmem:[#allocation3 + $0x60] sm:$0xff] %vm1531, %v1460
        %1545 = vst.msk [vmem:[#allocation3 + $0x68] sm:$0xff] %vm1531, %v1462
        %1546 = vst.msk [vmem:[#allocation3 + $0x70] sm:$0xff] %vm1531, %v1464
        %1547 = vst.msk [vmem:[#allocation3 + $0x78] sm:$0xff] %vm1531, %v1466
        %1548 = vst.msk [vmem:[#allocation3 + $0x80] sm:$0xff] %vm1531, %v1468
        %1549 = vst.msk [vmem:[#allocation3 + $0x88] sm:$0xff] %vm1531, %v1470
        %1550 = vst.msk [vmem:[#allocation3 + $0x90] sm:$0xff] %vm1531, %v1472
        %1551 = vst.msk [vmem:[#allocation3 + $0x98] sm:$0xff] %vm1531, %v1474
        %1552 = vst.msk [vmem:[#allocation3 + $0xa0] sm:$0xff] %vm1531, %v1476
        %1553 = vst.msk [vmem:[#allocation3 + $0xa8] sm:$0xff] %vm1531, %v1478
        %1554 = vst.msk [vmem:[#allocation3 + $0xb0] sm:$0xff] %vm1531, %v1480
        %1555 = vst.msk [vmem:[#allocation3 + $0xb8] sm:$0xff] %vm1531, %v1482
        %1556 = vst.msk [vmem:[#allocation3 + $0xc0] sm:$0xff] %vm1531, %v1484
        %1557 = vst.msk [vmem:[#allocation3 + $0xc8] sm:$0xff] %vm1531, %v1486
        %1558 = vst.msk [vmem:[#allocation3 + $0xd0] sm:$0xff] %vm1531, %v1488
        %1559 = vst.msk [vmem:[#allocation3 + $0xd8] sm:$0xff] %vm1531, %v1490
        %1560 = vst.msk [vmem:[#allocation3 + $0xe0] sm:$0xff] %vm1531, %v1492
        %1561 = vst.msk [vmem:[#allocation3 + $0xe8] sm:$0xff] %vm1531, %v1494
        %1562 = vst.msk [vmem:[#allocation3 + $0xf0] sm:$0xff] %vm1531, %v1496
        %1563 = vst.msk [vmem:[#allocation3 + $0xf8] sm:$0xff] %vm1531, %v1498
        %v1564 = vld [vmem:[%s888 + $0x1] sm:$0xff]
        %v1565 = vld [vmem:[%s888 + $0x9] sm:$0xff]
        %v1566 = vld [vmem:[%s888 + $0x19] sm:$0xff]
        %v1567 = vld [vmem:[%s888 + $0x21] sm:$0xff]
        %v1568 = vld [vmem:[%s888 + $0x31] sm:$0xff]
        %v1569 = vld [vmem:[%s888 + $0x39] sm:$0xff]
        %v1570 = vld [vmem:[%s888 + $0x49] sm:$0xff]
        %v1571 = vld [vmem:[%s888 + $0x51] sm:$0xff]
        %v1572 = vld [vmem:[%s888 + $0x61] sm:$0xff]
        %v1573 = vld [vmem:[%s888 + $0x69] sm:$0xff]
        %v1574 = vld [vmem:[%s888 + $0x79] sm:$0xff]
        %v1575 = vld [vmem:[%s888 + $0x81] sm:$0xff]
        %v1576 = vld [vmem:[%s888 + $0x91] sm:$0xff]
        %v1577 = vld [vmem:[%s888 + $0x99] sm:$0xff]
        %v1578 = vld [vmem:[%s888 + $0xa9] sm:$0xff]
        %v1579 = vld [vmem:[%s888 + $0xb1] sm:$0xff]
        %v1580 = vld [vmem:[%s888 + $0xc1] sm:$0xff]
        %v1581 = vld [vmem:[%s888 + $0xc9] sm:$0xff]
        %v1582 = vld [vmem:[%s888 + $0xd9] sm:$0xff]
        %v1583 = vld [vmem:[%s888 + $0xe1] sm:$0xff]
        %v1584 = vld [vmem:[%s888 + $0xf1] sm:$0xff]
        %v1585 = vld [vmem:[%s888 + $0xf9] sm:$0xff]
        %v1586 = vld [vmem:[%s888 + $0x109] sm:$0xff]
        %v1587 = vld [vmem:[%s888 + $0x111] sm:$0xff]
        %v1588 = vld [vmem:[%s888 + $0x121] sm:$0xff]
        %v1589 = vld [vmem:[%s888 + $0x129] sm:$0xff]
        %v1590 = vld [vmem:[%s888 + $0x139] sm:$0xff]
        %v1591 = vld [vmem:[%s888 + $0x141] sm:$0xff]
        %v1592 = vld [vmem:[%s888 + $0x151] sm:$0xff]
        %v1593 = vld [vmem:[%s888 + $0x159] sm:$0xff]
        %v1594 = vld [vmem:[%s888 + $0x169] sm:$0xff]
        %v1595 = vld [vmem:[%s888 + $0x171] sm:$0xff]
        %1628 = vrot.lane.b32.xlu0 %v1564, 8
        %v1629 = vpop.permute.xlu0 %1628
        %1630 = vrot.lane.b32.xlu0 %v1565, 8
        %v1631 = vpop.permute.xlu0 %1630
        %1632 = vrot.lane.b32.xlu0 %v1566, 8
        %v1633 = vpop.permute.xlu0 %1632
        %1634 = vrot.lane.b32.xlu0 %v1567, 8
        %v1635 = vpop.permute.xlu0 %1634
        %1636 = vrot.lane.b32.xlu0 %v1568, 8
        %v1637 = vpop.permute.xlu0 %1636
        %1638 = vrot.lane.b32.xlu0 %v1569, 8
        %v1639 = vpop.permute.xlu0 %1638
        %1640 = vrot.lane.b32.xlu0 %v1570, 8
        %v1641 = vpop.permute.xlu0 %1640
        %1642 = vrot.lane.b32.xlu0 %v1571, 8
        %v1643 = vpop.permute.xlu0 %1642
        %1644 = vrot.lane.b32.xlu0 %v1572, 8
        %v1645 = vpop.permute.xlu0 %1644
        %1646 = vrot.lane.b32.xlu0 %v1573, 8
        %v1647 = vpop.permute.xlu0 %1646
        %1648 = vrot.lane.b32.xlu0 %v1574, 8
        %v1649 = vpop.permute.xlu0 %1648
        %1650 = vrot.lane.b32.xlu0 %v1575, 8
        %v1651 = vpop.permute.xlu0 %1650
        %1652 = vrot.lane.b32.xlu0 %v1576, 8
        %v1653 = vpop.permute.xlu0 %1652
        %1654 = vrot.lane.b32.xlu0 %v1577, 8
        %v1655 = vpop.permute.xlu0 %1654
        %1656 = vrot.lane.b32.xlu0 %v1578, 8
        %v1657 = vpop.permute.xlu0 %1656
        %1658 = vrot.lane.b32.xlu0 %v1579, 8
        %v1659 = vpop.permute.xlu0 %1658
        %1660 = vrot.lane.b32.xlu0 %v1580, 8
        %v1661 = vpop.permute.xlu0 %1660
        %1662 = vrot.lane.b32.xlu0 %v1581, 8
        %v1663 = vpop.permute.xlu0 %1662
        %1664 = vrot.lane.b32.xlu0 %v1582, 8
        %v1665 = vpop.permute.xlu0 %1664
        %1666 = vrot.lane.b32.xlu0 %v1583, 8
        %v1667 = vpop.permute.xlu0 %1666
        %1668 = vrot.lane.b32.xlu0 %v1584, 8
        %v1669 = vpop.permute.xlu0 %1668
        %1670 = vrot.lane.b32.xlu0 %v1585, 8
        %v1671 = vpop.permute.xlu0 %1670
        %1672 = vrot.lane.b32.xlu0 %v1586, 8
        %v1673 = vpop.permute.xlu0 %1672
        %1674 = vrot.lane.b32.xlu0 %v1587, 8
        %v1675 = vpop.permute.xlu0 %1674
        %1676 = vrot.lane.b32.xlu0 %v1588, 8
        %v1677 = vpop.permute.xlu0 %1676
        %1678 = vrot.lane.b32.xlu0 %v1589, 8
        %v1679 = vpop.permute.xlu0 %1678
        %1680 = vrot.lane.b32.xlu0 %v1590, 8
        %v1681 = vpop.permute.xlu0 %1680
        %1682 = vrot.lane.b32.xlu0 %v1591, 8
        %v1683 = vpop.permute.xlu0 %1682
        %1684 = vrot.lane.b32.xlu0 %v1592, 8
        %v1685 = vpop.permute.xlu0 %1684
        %1686 = vrot.lane.b32.xlu0 %v1593, 8
        %v1687 = vpop.permute.xlu0 %1686
        %1688 = vrot.lane.b32.xlu0 %v1594, 8
        %v1689 = vpop.permute.xlu0 %1688
        %1690 = vrot.lane.b32.xlu0 %v1595, 8
        %v1691 = vpop.permute.xlu0 %1690
        %vm1724 = vcmask 80960
        %1725 = vst.msk [vmem:[#allocation3] sm:$0xff] %vm1724, %v1629
        %1726 = vst.msk [vmem:[#allocation3 + $0x8] sm:$0xff] %vm1724, %v1631
        %1727 = vst.msk [vmem:[#allocation3 + $0x10] sm:$0xff] %vm1724, %v1633
        %1728 = vst.msk [vmem:[#allocation3 + $0x18] sm:$0xff] %vm1724, %v1635
        %1729 = vst.msk [vmem:[#allocation3 + $0x20] sm:$0xff] %vm1724, %v1637
        %1730 = vst.msk [vmem:[#allocation3 + $0x28] sm:$0xff] %vm1724, %v1639
        %1731 = vst.msk [vmem:[#allocation3 + $0x30] sm:$0xff] %vm1724, %v1641
        %1732 = vst.msk [vmem:[#allocation3 + $0x38] sm:$0xff] %vm1724, %v1643
        %1733 = vst.msk [vmem:[#allocation3 + $0x40] sm:$0xff] %vm1724, %v1645
        %1734 = vst.msk [vmem:[#allocation3 + $0x48] sm:$0xff] %vm1724, %v1647
        %1735 = vst.msk [vmem:[#allocation3 + $0x50] sm:$0xff] %vm1724, %v1649
        %1736 = vst.msk [vmem:[#allocation3 + $0x58] sm:$0xff] %vm1724, %v1651
        %1737 = vst.msk [vmem:[#allocation3 + $0x60] sm:$0xff] %vm1724, %v1653
        %1738 = vst.msk [vmem:[#allocation3 + $0x68] sm:$0xff] %vm1724, %v1655
        %1739 = vst.msk [vmem:[#allocation3 + $0x70] sm:$0xff] %vm1724, %v1657
        %1740 = vst.msk [vmem:[#allocation3 + $0x78] sm:$0xff] %vm1724, %v1659
        %1741 = vst.msk [vmem:[#allocation3 + $0x80] sm:$0xff] %vm1724, %v1661
        %1742 = vst.msk [vmem:[#allocation3 + $0x88] sm:$0xff] %vm1724, %v1663
        %1743 = vst.msk [vmem:[#allocation3 + $0x90] sm:$0xff] %vm1724, %v1665
        %1744 = vst.msk [vmem:[#allocation3 + $0x98] sm:$0xff] %vm1724, %v1667
        %1745 = vst.msk [vmem:[#allocation3 + $0xa0] sm:$0xff] %vm1724, %v1669
        %1746 = vst.msk [vmem:[#allocation3 + $0xa8] sm:$0xff] %vm1724, %v1671
        %1747 = vst.msk [vmem:[#allocation3 + $0xb0] sm:$0xff] %vm1724, %v1673
        %1748 = vst.msk [vmem:[#allocation3 + $0xb8] sm:$0xff] %vm1724, %v1675
        %1749 = vst.msk [vmem:[#allocation3 + $0xc0] sm:$0xff] %vm1724, %v1677
        %1750 = vst.msk [vmem:[#allocation3 + $0xc8] sm:$0xff] %vm1724, %v1679
        %1751 = vst.msk [vmem:[#allocation3 + $0xd0] sm:$0xff] %vm1724, %v1681
        %1752 = vst.msk [vmem:[#allocation3 + $0xd8] sm:$0xff] %vm1724, %v1683
        %1753 = vst.msk [vmem:[#allocation3 + $0xe0] sm:$0xff] %vm1724, %v1685
        %1754 = vst.msk [vmem:[#allocation3 + $0xe8] sm:$0xff] %vm1724, %v1687
        %1755 = vst.msk [vmem:[#allocation3 + $0xf0] sm:$0xff] %vm1724, %v1689
        %1756 = vst.msk [vmem:[#allocation3 + $0xf8] sm:$0xff] %vm1724, %v1691
        %v1757 = vld [vmem:[%s888 + $0x2] sm:$0xff]
        %v1758 = vld [vmem:[%s888 + $0xa] sm:$0xff]
        %v1759 = vld [vmem:[%s888 + $0x1a] sm:$0xff]
        %v1760 = vld [vmem:[%s888 + $0x22] sm:$0xff]
        %v1761 = vld [vmem:[%s888 + $0x32] sm:$0xff]
        %v1762 = vld [vmem:[%s888 + $0x3a] sm:$0xff]
        %v1763 = vld [vmem:[%s888 + $0x4a] sm:$0xff]
        %v1764 = vld [vmem:[%s888 + $0x52] sm:$0xff]
        %v1765 = vld [vmem:[%s888 + $0x62] sm:$0xff]
        %v1766 = vld [vmem:[%s888 + $0x6a] sm:$0xff]
        %v1767 = vld [vmem:[%s888 + $0x7a] sm:$0xff]
        %v1768 = vld [vmem:[%s888 + $0x82] sm:$0xff]
        %v1769 = vld [vmem:[%s888 + $0x92] sm:$0xff]
        %v1770 = vld [vmem:[%s888 + $0x9a] sm:$0xff]
        %v1771 = vld [vmem:[%s888 + $0xaa] sm:$0xff]
        %v1772 = vld [vmem:[%s888 + $0xb2] sm:$0xff]
        %v1773 = vld [vmem:[%s888 + $0xc2] sm:$0xff]
        %v1774 = vld [vmem:[%s888 + $0xca] sm:$0xff]
        %v1775 = vld [vmem:[%s888 + $0xda] sm:$0xff]
        %v1776 = vld [vmem:[%s888 + $0xe2] sm:$0xff]
        %v1777 = vld [vmem:[%s888 + $0xf2] sm:$0xff]
        %v1778 = vld [vmem:[%s888 + $0xfa] sm:$0xff]
        %v1779 = vld [vmem:[%s888 + $0x10a] sm:$0xff]
        %v1780 = vld [vmem:[%s888 + $0x112] sm:$0xff]
        %v1781 = vld [vmem:[%s888 + $0x122] sm:$0xff]
        %v1782 = vld [vmem:[%s888 + $0x12a] sm:$0xff]
        %v1783 = vld [vmem:[%s888 + $0x13a] sm:$0xff]
        %v1784 = vld [vmem:[%s888 + $0x142] sm:$0xff]
        %v1785 = vld [vmem:[%s888 + $0x152] sm:$0xff]
        %v1786 = vld [vmem:[%s888 + $0x15a] sm:$0xff]
        %v1787 = vld [vmem:[%s888 + $0x16a] sm:$0xff]
        %v1788 = vld [vmem:[%s888 + $0x172] sm:$0xff]
        %1821 = vrot.lane.b32.xlu0 %v1757, 10
        %v1822 = vpop.permute.xlu0 %1821
        %1823 = vrot.lane.b32.xlu0 %v1758, 10
        %v1824 = vpop.permute.xlu0 %1823
        %1825 = vrot.lane.b32.xlu0 %v1759, 10
        %v1826 = vpop.permute.xlu0 %1825
        %1827 = vrot.lane.b32.xlu0 %v1760, 10
        %v1828 = vpop.permute.xlu0 %1827
        %1829 = vrot.lane.b32.xlu0 %v1761, 10
        %v1830 = vpop.permute.xlu0 %1829
        %1831 = vrot.lane.b32.xlu0 %v1762, 10
        %v1832 = vpop.permute.xlu0 %1831
        %1833 = vrot.lane.b32.xlu0 %v1763, 10
        %v1834 = vpop.permute.xlu0 %1833
        %1835 = vrot.lane.b32.xlu0 %v1764, 10
        %v1836 = vpop.permute.xlu0 %1835
        %1837 = vrot.lane.b32.xlu0 %v1765, 10
        %v1838 = vpop.permute.xlu0 %1837
        %1839 = vrot.lane.b32.xlu0 %v1766, 10
        %v1840 = vpop.permute.xlu0 %1839
        %1841 = vrot.lane.b32.xlu0 %v1767, 10
        %v1842 = vpop.permute.xlu0 %1841
        %1843 = vrot.lane.b32.xlu0 %v1768, 10
        %v1844 = vpop.permute.xlu0 %1843
        %1845 = vrot.lane.b32.xlu0 %v1769, 10
        %v1846 = vpop.permute.xlu0 %1845
        %1847 = vrot.lane.b32.xlu0 %v1770, 10
        %v1848 = vpop.permute.xlu0 %1847
        %1849 = vrot.lane.b32.xlu0 %v1771, 10
        %v1850 = vpop.permute.xlu0 %1849
        %1851 = vrot.lane.b32.xlu0 %v1772, 10
        %v1852 = vpop.permute.xlu0 %1851
        %1853 = vrot.lane.b32.xlu0 %v1773, 10
        %v1854 = vpop.permute.xlu0 %1853
        %1855 = vrot.lane.b32.xlu0 %v1774, 10
        %v1856 = vpop.permute.xlu0 %1855
        %1857 = vrot.lane.b32.xlu0 %v1775, 10
        %v1858 = vpop.permute.xlu0 %1857
        %1859 = vrot.lane.b32.xlu0 %v1776, 10
        %v1860 = vpop.permute.xlu0 %1859
        %1861 = vrot.lane.b32.xlu0 %v1777, 10
        %v1862 = vpop.permute.xlu0 %1861
        %1863 = vrot.lane.b32.xlu0 %v1778, 10
        %v1864 = vpop.permute.xlu0 %1863
        %1865 = vrot.lane.b32.xlu0 %v1779, 10
        %v1866 = vpop.permute.xlu0 %1865
        %1867 = vrot.lane.b32.xlu0 %v1780, 10
        %v1868 = vpop.permute.xlu0 %1867
        %1869 = vrot.lane.b32.xlu0 %v1781, 10
        %v1870 = vpop.permute.xlu0 %1869
        %1871 = vrot.lane.b32.xlu0 %v1782, 10
        %v1872 = vpop.permute.xlu0 %1871
        %1873 = vrot.lane.b32.xlu0 %v1783, 10
        %v1874 = vpop.permute.xlu0 %1873
        %1875 = vrot.lane.b32.xlu0 %v1784, 10
        %v1876 = vpop.permute.xlu0 %1875
        %1877 = vrot.lane.b32.xlu0 %v1785, 10
        %v1878 = vpop.permute.xlu0 %1877
        %1879 = vrot.lane.b32.xlu0 %v1786, 10
        %v1880 = vpop.permute.xlu0 %1879
        %1881 = vrot.lane.b32.xlu0 %v1787, 10
        %v1882 = vpop.permute.xlu0 %1881
        %1883 = vrot.lane.b32.xlu0 %v1788, 10
        %v1884 = vpop.permute.xlu0 %1883
        %vm1917 = vcmask 97360
        %1918 = vst.msk [vmem:[#allocation3] sm:$0xff] %vm1917, %v1822
        %1919 = vst.msk [vmem:[#allocation3 + $0x8] sm:$0xff] %vm1917, %v1824
        %1920 = vst.msk [vmem:[#allocation3 + $0x10] sm:$0xff] %vm1917, %v1826
        %1921 = vst.msk [vmem:[#allocation3 + $0x18] sm:$0xff] %vm1917, %v1828
        %1922 = vst.msk [vmem:[#allocation3 + $0x20] sm:$0xff] %vm1917, %v1830
        %1923 = vst.msk [vmem:[#allocation3 + $0x28] sm:$0xff] %vm1917, %v1832
        %1924 = vst.msk [vmem:[#allocation3 + $0x30] sm:$0xff] %vm1917, %v1834
        %1925 = vst.msk [vmem:[#allocation3 + $0x38] sm:$0xff] %vm1917, %v1836
        %1926 = vst.msk [vmem:[#allocation3 + $0x40] sm:$0xff] %vm1917, %v1838
        %1927 = vst.msk [vmem:[#allocation3 + $0x48] sm:$0xff] %vm1917, %v1840
        %1928 = vst.msk [vmem:[#allocation3 + $0x50] sm:$0xff] %vm1917, %v1842
        %1929 = vst.msk [vmem:[#allocation3 + $0x58] sm:$0xff] %vm1917, %v1844
        %1930 = vst.msk [vmem:[#allocation3 + $0x60] sm:$0xff] %vm1917, %v1846
        %1931 = vst.msk [vmem:[#allocation3 + $0x68] sm:$0xff] %vm1917, %v1848
        %1932 = vst.msk [vmem:[#allocation3 + $0x70] sm:$0xff] %vm1917, %v1850
        %1933 = vst.msk [vmem:[#allocation3 + $0x78] sm:$0xff] %vm1917, %v1852
        %1934 = vst.msk [vmem:[#allocation3 + $0x80] sm:$0xff] %vm1917, %v1854
        %1935 = vst.msk [vmem:[#allocation3 + $0x88] sm:$0xff] %vm1917, %v1856
        %1936 = vst.msk [vmem:[#allocation3 + $0x90] sm:$0xff] %vm1917, %v1858
        %1937 = vst.msk [vmem:[#allocation3 + $0x98] sm:$0xff] %vm1917, %v1860
        %1938 = vst.msk [vmem:[#allocation3 + $0xa0] sm:$0xff] %vm1917, %v1862
        %1939 = vst.msk [vmem:[#allocation3 + $0xa8] sm:$0xff] %vm1917, %v1864
        %1940 = vst.msk [vmem:[#allocation3 + $0xb0] sm:$0xff] %vm1917, %v1866
        %1941 = vst.msk [vmem:[#allocation3 + $0xb8] sm:$0xff] %vm1917, %v1868
        %1942 = vst.msk [vmem:[#allocation3 + $0xc0] sm:$0xff] %vm1917, %v1870
        %1943 = vst.msk [vmem:[#allocation3 + $0xc8] sm:$0xff] %vm1917, %v1872
        %1944 = vst.msk [vmem:[#allocation3 + $0xd0] sm:$0xff] %vm1917, %v1874
        %1945 = vst.msk [vmem:[#allocation3 + $0xd8] sm:$0xff] %vm1917, %v1876
        %1946 = vst.msk [vmem:[#allocation3 + $0xe0] sm:$0xff] %vm1917, %v1878
        %1947 = vst.msk [vmem:[#allocation3 + $0xe8] sm:$0xff] %vm1917, %v1880
        %1948 = vst.msk [vmem:[#allocation3 + $0xf0] sm:$0xff] %vm1917, %v1882
        %1949 = vst.msk [vmem:[#allocation3 + $0xf8] sm:$0xff] %vm1917, %v1884
        %s1950 = scalar_lea.vmem [#allocation2], 48
        %v1951 = vld [vmem:[%s1950] sm:$0xff]
        %v1952 = vld [vmem:[%s1950 + $0x8] sm:$0xff]
        %v1953 = vld [vmem:[%s1950 + $0x18] sm:$0xff]
        %v1954 = vld [vmem:[%s1950 + $0x20] sm:$0xff]
        %v1955 = vld [vmem:[%s1950 + $0x30] sm:$0xff]
        %v1956 = vld [vmem:[%s1950 + $0x38] sm:$0xff]
        %v1957 = vld [vmem:[%s1950 + $0x48] sm:$0xff]
        %v1958 = vld [vmem:[%s1950 + $0x50] sm:$0xff]
        %v1959 = vld [vmem:[%s1950 + $0x60] sm:$0xff]
        %v1960 = vld [vmem:[%s1950 + $0x68] sm:$0xff]
        %v1961 = vld [vmem:[%s1950 + $0x78] sm:$0xff]
        %v1962 = vld [vmem:[%s1950 + $0x80] sm:$0xff]
        %v1963 = vld [vmem:[%s1950 + $0x90] sm:$0xff]
        %v1964 = vld [vmem:[%s1950 + $0x98] sm:$0xff]
        %v1965 = vld [vmem:[%s1950 + $0xa8] sm:$0xff]
        %v1966 = vld [vmem:[%s1950 + $0xb0] sm:$0xff]
        %v1967 = vld [vmem:[%s1950 + $0xc0] sm:$0xff]
        %v1968 = vld [vmem:[%s1950 + $0xc8] sm:$0xff]
        %v1969 = vld [vmem:[%s1950 + $0xd8] sm:$0xff]
        %v1970 = vld [vmem:[%s1950 + $0xe0] sm:$0xff]
        %v1971 = vld [vmem:[%s1950 + $0xf0] sm:$0xff]
        %v1972 = vld [vmem:[%s1950 + $0xf8] sm:$0xff]
        %v1973 = vld [vmem:[%s1950 + $0x108] sm:$0xff]
        %v1974 = vld [vmem:[%s1950 + $0x110] sm:$0xff]
        %v1975 = vld [vmem:[%s1950 + $0x120] sm:$0xff]
        %v1976 = vld [vmem:[%s1950 + $0x128] sm:$0xff]
        %v1977 = vld [vmem:[%s1950 + $0x138] sm:$0xff]
        %v1978 = vld [vmem:[%s1950 + $0x140] sm:$0xff]
        %v1979 = vld [vmem:[%s1950 + $0x150] sm:$0xff]
        %v1980 = vld [vmem:[%s1950 + $0x158] sm:$0xff]
        %v1981 = vld [vmem:[%s1950 + $0x168] sm:$0xff]
        %v1982 = vld [vmem:[%s1950 + $0x170] sm:$0xff]
        %2015 = vrot.lane.b32.xlu0 %v1951, 12
        %v2016 = vpop.permute.xlu0 %2015
        %2017 = vrot.lane.b32.xlu0 %v1952, 12
        %v2018 = vpop.permute.xlu0 %2017
        %2019 = vrot.lane.b32.xlu0 %v1953, 12
        %v2020 = vpop.permute.xlu0 %2019
        %2021 = vrot.lane.b32.xlu0 %v1954, 12
        %v2022 = vpop.permute.xlu0 %2021
        %2023 = vrot.lane.b32.xlu0 %v1955, 12
        %v2024 = vpop.permute.xlu0 %2023
        %2025 = vrot.lane.b32.xlu0 %v1956, 12
        %v2026 = vpop.permute.xlu0 %2025
        %2027 = vrot.lane.b32.xlu0 %v1957, 12
        %v2028 = vpop.permute.xlu0 %2027
        %2029 = vrot.lane.b32.xlu0 %v1958, 12
        %v2030 = vpop.permute.xlu0 %2029
        %2031 = vrot.lane.b32.xlu0 %v1959, 12
        %v2032 = vpop.permute.xlu0 %2031
        %2033 = vrot.lane.b32.xlu0 %v1960, 12
        %v2034 = vpop.permute.xlu0 %2033
        %2035 = vrot.lane.b32.xlu0 %v1961, 12
        %v2036 = vpop.permute.xlu0 %2035
        %2037 = vrot.lane.b32.xlu0 %v1962, 12
        %v2038 = vpop.permute.xlu0 %2037
        %2039 = vrot.lane.b32.xlu0 %v1963, 12
        %v2040 = vpop.permute.xlu0 %2039
        %2041 = vrot.lane.b32.xlu0 %v1964, 12
        %v2042 = vpop.permute.xlu0 %2041
        %2043 = vrot.lane.b32.xlu0 %v1965, 12
        %v2044 = vpop.permute.xlu0 %2043
        %2045 = vrot.lane.b32.xlu0 %v1966, 12
        %v2046 = vpop.permute.xlu0 %2045
        %2047 = vrot.lane.b32.xlu0 %v1967, 12
        %v2048 = vpop.permute.xlu0 %2047
        %2049 = vrot.lane.b32.xlu0 %v1968, 12
        %v2050 = vpop.permute.xlu0 %2049
        %2051 = vrot.lane.b32.xlu0 %v1969, 12
        %v2052 = vpop.permute.xlu0 %2051
        %2053 = vrot.lane.b32.xlu0 %v1970, 12
        %v2054 = vpop.permute.xlu0 %2053
        %2055 = vrot.lane.b32.xlu0 %v1971, 12
        %v2056 = vpop.permute.xlu0 %2055
        %2057 = vrot.lane.b32.xlu0 %v1972, 12
        %v2058 = vpop.permute.xlu0 %2057
        %2059 = vrot.lane.b32.xlu0 %v1973, 12
        %v2060 = vpop.permute.xlu0 %2059
        %2061 = vrot.lane.b32.xlu0 %v1974, 12
        %v2062 = vpop.permute.xlu0 %2061
        %2063 = vrot.lane.b32.xlu0 %v1975, 12
        %v2064 = vpop.permute.xlu0 %2063
        %2065 = vrot.lane.b32.xlu0 %v1976, 12
        %v2066 = vpop.permute.xlu0 %2065
        %2067 = vrot.lane.b32.xlu0 %v1977, 12
        %v2068 = vpop.permute.xlu0 %2067
        %2069 = vrot.lane.b32.xlu0 %v1978, 12
        %v2070 = vpop.permute.xlu0 %2069
        %2071 = vrot.lane.b32.xlu0 %v1979, 12
        %v2072 = vpop.permute.xlu0 %2071
        %2073 = vrot.lane.b32.xlu0 %v1980, 12
        %v2074 = vpop.permute.xlu0 %2073
        %2075 = vrot.lane.b32.xlu0 %v1981, 12
        %v2076 = vpop.permute.xlu0 %2075
        %2077 = vrot.lane.b32.xlu0 %v1982, 12
        %v2078 = vpop.permute.xlu0 %2077
        %vm2111 = vcmask 113760
        %2112 = vst.msk [vmem:[#allocation3] sm:$0xff] %vm2111, %v2016
        %2113 = vst.msk [vmem:[#allocation3 + $0x8] sm:$0xff] %vm2111, %v2018
        %2114 = vst.msk [vmem:[#allocation3 + $0x10] sm:$0xff] %vm2111, %v2020
        %2115 = vst.msk [vmem:[#allocation3 + $0x18] sm:$0xff] %vm2111, %v2022
        %2116 = vst.msk [vmem:[#allocation3 + $0x20] sm:$0xff] %vm2111, %v2024
        %2117 = vst.msk [vmem:[#allocation3 + $0x28] sm:$0xff] %vm2111, %v2026
        %2118 = vst.msk [vmem:[#allocation3 + $0x30] sm:$0xff] %vm2111, %v2028
        %2119 = vst.msk [vmem:[#allocation3 + $0x38] sm:$0xff] %vm2111, %v2030
        %2120 = vst.msk [vmem:[#allocation3 + $0x40] sm:$0xff] %vm2111, %v2032
        %2121 = vst.msk [vmem:[#allocation3 + $0x48] sm:$0xff] %vm2111, %v2034
        %2122 = vst.msk [vmem:[#allocation3 + $0x50] sm:$0xff] %vm2111, %v2036
        %2123 = vst.msk [vmem:[#allocation3 + $0x58] sm:$0xff] %vm2111, %v2038
        %2124 = vst.msk [vmem:[#allocation3 + $0x60] sm:$0xff] %vm2111, %v2040
        %2125 = vst.msk [vmem:[#allocation3 + $0x68] sm:$0xff] %vm2111, %v2042
        %2126 = vst.msk [vmem:[#allocation3 + $0x70] sm:$0xff] %vm2111, %v2044
        %2127 = vst.msk [vmem:[#allocation3 + $0x78] sm:$0xff] %vm2111, %v2046
        %2128 = vst.msk [vmem:[#allocation3 + $0x80] sm:$0xff] %vm2111, %v2048
        %2129 = vst.msk [vmem:[#allocation3 + $0x88] sm:$0xff] %vm2111, %v2050
        %2130 = vst.msk [vmem:[#allocation3 + $0x90] sm:$0xff] %vm2111, %v2052
        %2131 = vst.msk [vmem:[#allocation3 + $0x98] sm:$0xff] %vm2111, %v2054
        %2132 = vst.msk [vmem:[#allocation3 + $0xa0] sm:$0xff] %vm2111, %v2056
        %2133 = vst.msk [vmem:[#allocation3 + $0xa8] sm:$0xff] %vm2111, %v2058
        %2134 = vst.msk [vmem:[#allocation3 + $0xb0] sm:$0xff] %vm2111, %v2060
        %2135 = vst.msk [vmem:[#allocation3 + $0xb8] sm:$0xff] %vm2111, %v2062
        %2136 = vst.msk [vmem:[#allocation3 + $0xc0] sm:$0xff] %vm2111, %v2064
        %2137 = vst.msk [vmem:[#allocation3 + $0xc8] sm:$0xff] %vm2111, %v2066
        %2138 = vst.msk [vmem:[#allocation3 + $0xd0] sm:$0xff] %vm2111, %v2068
        %2139 = vst.msk [vmem:[#allocation3 + $0xd8] sm:$0xff] %vm2111, %v2070
        %2140 = vst.msk [vmem:[#allocation3 + $0xe0] sm:$0xff] %vm2111, %v2072
        %2141 = vst.msk [vmem:[#allocation3 + $0xe8] sm:$0xff] %vm2111, %v2074
        %2142 = vst.msk [vmem:[#allocation3 + $0xf0] sm:$0xff] %vm2111, %v2076
        %2143 = vst.msk [vmem:[#allocation3 + $0xf8] sm:$0xff] %vm2111, %v2078
        %v2144 = vld [vmem:[%s1950 + $0x1] sm:$0xff]
        %v2145 = vld [vmem:[%s1950 + $0x9] sm:$0xff]
        %v2146 = vld [vmem:[%s1950 + $0x19] sm:$0xff]
        %v2147 = vld [vmem:[%s1950 + $0x21] sm:$0xff]
        %v2148 = vld [vmem:[%s1950 + $0x31] sm:$0xff]
        %v2149 = vld [vmem:[%s1950 + $0x39] sm:$0xff]
        %v2150 = vld [vmem:[%s1950 + $0x49] sm:$0xff]
        %v2151 = vld [vmem:[%s1950 + $0x51] sm:$0xff]
        %v2152 = vld [vmem:[%s1950 + $0x61] sm:$0xff]
        %v2153 = vld [vmem:[%s1950 + $0x69] sm:$0xff]
        %v2154 = vld [vmem:[%s1950 + $0x79] sm:$0xff]
        %v2155 = vld [vmem:[%s1950 + $0x81] sm:$0xff]
        %v2156 = vld [vmem:[%s1950 + $0x91] sm:$0xff]
        %v2157 = vld [vmem:[%s1950 + $0x99] sm:$0xff]
        %v2158 = vld [vmem:[%s1950 + $0xa9] sm:$0xff]
        %v2159 = vld [vmem:[%s1950 + $0xb1] sm:$0xff]
        %v2160 = vld [vmem:[%s1950 + $0xc1] sm:$0xff]
        %v2161 = vld [vmem:[%s1950 + $0xc9] sm:$0xff]
        %v2162 = vld [vmem:[%s1950 + $0xd9] sm:$0xff]
        %v2163 = vld [vmem:[%s1950 + $0xe1] sm:$0xff]
        %v2164 = vld [vmem:[%s1950 + $0xf1] sm:$0xff]
        %v2165 = vld [vmem:[%s1950 + $0xf9] sm:$0xff]
        %v2166 = vld [vmem:[%s1950 + $0x109] sm:$0xff]
        %v2167 = vld [vmem:[%s1950 + $0x111] sm:$0xff]
        %v2168 = vld [vmem:[%s1950 + $0x121] sm:$0xff]
        %v2169 = vld [vmem:[%s1950 + $0x129] sm:$0xff]
        %v2170 = vld [vmem:[%s1950 + $0x139] sm:$0xff]
        %v2171 = vld [vmem:[%s1950 + $0x141] sm:$0xff]
        %v2172 = vld [vmem:[%s1950 + $0x151] sm:$0xff]
        %v2173 = vld [vmem:[%s1950 + $0x159] sm:$0xff]
        %v2174 = vld [vmem:[%s1950 + $0x169] sm:$0xff]
        %v2175 = vld [vmem:[%s1950 + $0x171] sm:$0xff]
        %2208 = vrot.lane.b32.xlu0 %v2144, 14
        %v2209 = vpop.permute.xlu0 %2208
        %2210 = vrot.lane.b32.xlu0 %v2145, 14
        %v2211 = vpop.permute.xlu0 %2210
        %2212 = vrot.lane.b32.xlu0 %v2146, 14
        %v2213 = vpop.permute.xlu0 %2212
        %2214 = vrot.lane.b32.xlu0 %v2147, 14
        %v2215 = vpop.permute.xlu0 %2214
        %2216 = vrot.lane.b32.xlu0 %v2148, 14
        %v2217 = vpop.permute.xlu0 %2216
        %2218 = vrot.lane.b32.xlu0 %v2149, 14
        %v2219 = vpop.permute.xlu0 %2218
        %2220 = vrot.lane.b32.xlu0 %v2150, 14
        %v2221 = vpop.permute.xlu0 %2220
        %2222 = vrot.lane.b32.xlu0 %v2151, 14
        %v2223 = vpop.permute.xlu0 %2222
        %2224 = vrot.lane.b32.xlu0 %v2152, 14
        %v2225 = vpop.permute.xlu0 %2224
        %2226 = vrot.lane.b32.xlu0 %v2153, 14
        %v2227 = vpop.permute.xlu0 %2226
        %2228 = vrot.lane.b32.xlu0 %v2154, 14
        %v2229 = vpop.permute.xlu0 %2228
        %2230 = vrot.lane.b32.xlu0 %v2155, 14
        %v2231 = vpop.permute.xlu0 %2230
        %2232 = vrot.lane.b32.xlu0 %v2156, 14
        %v2233 = vpop.permute.xlu0 %2232
        %2234 = vrot.lane.b32.xlu0 %v2157, 14
        %v2235 = vpop.permute.xlu0 %2234
        %2236 = vrot.lane.b32.xlu0 %v2158, 14
        %v2237 = vpop.permute.xlu0 %2236
        %2238 = vrot.lane.b32.xlu0 %v2159, 14
        %v2239 = vpop.permute.xlu0 %2238
        %2240 = vrot.lane.b32.xlu0 %v2160, 14
        %v2241 = vpop.permute.xlu0 %2240
        %2242 = vrot.lane.b32.xlu0 %v2161, 14
        %v2243 = vpop.permute.xlu0 %2242
        %2244 = vrot.lane.b32.xlu0 %v2162, 14
        %v2245 = vpop.permute.xlu0 %2244
        %2246 = vrot.lane.b32.xlu0 %v2163, 14
        %v2247 = vpop.permute.xlu0 %2246
        %2248 = vrot.lane.b32.xlu0 %v2164, 14
        %v2249 = vpop.permute.xlu0 %2248
        %2250 = vrot.lane.b32.xlu0 %v2165, 14
        %v2251 = vpop.permute.xlu0 %2250
        %2252 = vrot.lane.b32.xlu0 %v2166, 14
        %v2253 = vpop.permute.xlu0 %2252
        %2254 = vrot.lane.b32.xlu0 %v2167, 14
        %v2255 = vpop.permute.xlu0 %2254
        %2256 = vrot.lane.b32.xlu0 %v2168, 14
        %v2257 = vpop.permute.xlu0 %2256
        %2258 = vrot.lane.b32.xlu0 %v2169, 14
        %v2259 = vpop.permute.xlu0 %2258
        %2260 = vrot.lane.b32.xlu0 %v2170, 14
        %v2261 = vpop.permute.xlu0 %2260
        %2262 = vrot.lane.b32.xlu0 %v2171, 14
        %v2263 = vpop.permute.xlu0 %2262
        %2264 = vrot.lane.b32.xlu0 %v2172, 14
        %v2265 = vpop.permute.xlu0 %2264
        %2266 = vrot.lane.b32.xlu0 %v2173, 14
        %v2267 = vpop.permute.xlu0 %2266
        %2268 = vrot.lane.b32.xlu0 %v2174, 14
        %v2269 = vpop.permute.xlu0 %2268
        %2270 = vrot.lane.b32.xlu0 %v2175, 14
        %v2271 = vpop.permute.xlu0 %2270
        %vm2304 = vcmask 130160
        %2305 = vst.msk [vmem:[#allocation3] sm:$0xff] %vm2304, %v2209
        %2306 = vst.msk [vmem:[#allocation3 + $0x8] sm:$0xff] %vm2304, %v2211
        %2307 = vst.msk [vmem:[#allocation3 + $0x10] sm:$0xff] %vm2304, %v2213
        %2308 = vst.msk [vmem:[#allocation3 + $0x18] sm:$0xff] %vm2304, %v2215
        %2309 = vst.msk [vmem:[#allocation3 + $0x20] sm:$0xff] %vm2304, %v2217
        %2310 = vst.msk [vmem:[#allocation3 + $0x28] sm:$0xff] %vm2304, %v2219
        %2311 = vst.msk [vmem:[#allocation3 + $0x30] sm:$0xff] %vm2304, %v2221
        %2312 = vst.msk [vmem:[#allocation3 + $0x38] sm:$0xff] %vm2304, %v2223
        %2313 = vst.msk [vmem:[#allocation3 + $0x40] sm:$0xff] %vm2304, %v2225
        %2314 = vst.msk [vmem:[#allocation3 + $0x48] sm:$0xff] %vm2304, %v2227
        %2315 = vst.msk [vmem:[#allocation3 + $0x50] sm:$0xff] %vm2304, %v2229
        %2316 = vst.msk [vmem:[#allocation3 + $0x58] sm:$0xff] %vm2304, %v2231
        %2317 = vst.msk [vmem:[#allocation3 + $0x60] sm:$0xff] %vm2304, %v2233
        %2318 = vst.msk [vmem:[#allocation3 + $0x68] sm:$0xff] %vm2304, %v2235
        %2319 = vst.msk [vmem:[#allocation3 + $0x70] sm:$0xff] %vm2304, %v2237
        %2320 = vst.msk [vmem:[#allocation3 + $0x78] sm:$0xff] %vm2304, %v2239
        %2321 = vst.msk [vmem:[#allocation3 + $0x80] sm:$0xff] %vm2304, %v2241
        %2322 = vst.msk [vmem:[#allocation3 + $0x88] sm:$0xff] %vm2304, %v2243
        %2323 = vst.msk [vmem:[#allocation3 + $0x90] sm:$0xff] %vm2304, %v2245
        %2324 = vst.msk [vmem:[#allocation3 + $0x98] sm:$0xff] %vm2304, %v2247
        %2325 = vst.msk [vmem:[#allocation3 + $0xa0] sm:$0xff] %vm2304, %v2249
        %2326 = vst.msk [vmem:[#allocation3 + $0xa8] sm:$0xff] %vm2304, %v2251
        %2327 = vst.msk [vmem:[#allocation3 + $0xb0] sm:$0xff] %vm2304, %v2253
        %2328 = vst.msk [vmem:[#allocation3 + $0xb8] sm:$0xff] %vm2304, %v2255
        %2329 = vst.msk [vmem:[#allocation3 + $0xc0] sm:$0xff] %vm2304, %v2257
        %2330 = vst.msk [vmem:[#allocation3 + $0xc8] sm:$0xff] %vm2304, %v2259
        %2331 = vst.msk [vmem:[#allocation3 + $0xd0] sm:$0xff] %vm2304, %v2261
        %2332 = vst.msk [vmem:[#allocation3 + $0xd8] sm:$0xff] %vm2304, %v2263
        %2333 = vst.msk [vmem:[#allocation3 + $0xe0] sm:$0xff] %vm2304, %v2265
        %2334 = vst.msk [vmem:[#allocation3 + $0xe8] sm:$0xff] %vm2304, %v2267
        %2335 = vst.msk [vmem:[#allocation3 + $0xf0] sm:$0xff] %vm2304, %v2269
        %2336 = vst.msk [vmem:[#allocation3 + $0xf8] sm:$0xff] %vm2304, %v2271
        %v2337 = vld [vmem:[%s1950 + $0x2] sm:$0xff]
        %v2338 = vld [vmem:[%s1950 + $0xa] sm:$0xff]
        %v2339 = vld [vmem:[%s1950 + $0x1a] sm:$0xff]
        %v2340 = vld [vmem:[%s1950 + $0x22] sm:$0xff]
        %v2341 = vld [vmem:[%s1950 + $0x32] sm:$0xff]
        %v2342 = vld [vmem:[%s1950 + $0x3a] sm:$0xff]
        %v2343 = vld [vmem:[%s1950 + $0x4a] sm:$0xff]
        %v2344 = vld [vmem:[%s1950 + $0x52] sm:$0xff]
        %v2345 = vld [vmem:[%s1950 + $0x62] sm:$0xff]
        %v2346 = vld [vmem:[%s1950 + $0x6a] sm:$0xff]
        %v2347 = vld [vmem:[%s1950 + $0x7a] sm:$0xff]
        %v2348 = vld [vmem:[%s1950 + $0x82] sm:$0xff]
        %v2349 = vld [vmem:[%s1950 + $0x92] sm:$0xff]
        %v2350 = vld [vmem:[%s1950 + $0x9a] sm:$0xff]
        %v2351 = vld [vmem:[%s1950 + $0xaa] sm:$0xff]
        %v2352 = vld [vmem:[%s1950 + $0xb2] sm:$0xff]
        %v2353 = vld [vmem:[%s1950 + $0xc2] sm:$0xff]
        %v2354 = vld [vmem:[%s1950 + $0xca] sm:$0xff]
        %v2355 = vld [vmem:[%s1950 + $0xda] sm:$0xff]
        %v2356 = vld [vmem:[%s1950 + $0xe2] sm:$0xff]
        %v2357 = vld [vmem:[%s1950 + $0xf2] sm:$0xff]
        %v2358 = vld [vmem:[%s1950 + $0xfa] sm:$0xff]
        %v2359 = vld [vmem:[%s1950 + $0x10a] sm:$0xff]
        %v2360 = vld [vmem:[%s1950 + $0x112] sm:$0xff]
        %v2361 = vld [vmem:[%s1950 + $0x122] sm:$0xff]
        %v2362 = vld [vmem:[%s1950 + $0x12a] sm:$0xff]
        %v2363 = vld [vmem:[%s1950 + $0x13a] sm:$0xff]
        %v2364 = vld [vmem:[%s1950 + $0x142] sm:$0xff]
        %v2365 = vld [vmem:[%s1950 + $0x152] sm:$0xff]
        %v2366 = vld [vmem:[%s1950 + $0x15a] sm:$0xff]
        %v2367 = vld [vmem:[%s1950 + $0x16a] sm:$0xff]
        %v2368 = vld [vmem:[%s1950 + $0x172] sm:$0xff]
        %2401 = vrot.lane.b32.xlu0 %v2337, 16
        %v2402 = vpop.permute.xlu0 %2401
        %2403 = vrot.lane.b32.xlu0 %v2338, 16
        %v2404 = vpop.permute.xlu0 %2403
        %2405 = vrot.lane.b32.xlu0 %v2339, 16
        %v2406 = vpop.permute.xlu0 %2405
        %2407 = vrot.lane.b32.xlu0 %v2340, 16
        %v2408 = vpop.permute.xlu0 %2407
        %2409 = vrot.lane.b32.xlu0 %v2341, 16
        %v2410 = vpop.permute.xlu0 %2409
        %2411 = vrot.lane.b32.xlu0 %v2342, 16
        %v2412 = vpop.permute.xlu0 %2411
        %2413 = vrot.lane.b32.xlu0 %v2343, 16
        %v2414 = vpop.permute.xlu0 %2413
        %2415 = vrot.lane.b32.xlu0 %v2344, 16
        %v2416 = vpop.permute.xlu0 %2415
        %2417 = vrot.lane.b32.xlu0 %v2345, 16
        %v2418 = vpop.permute.xlu0 %2417
        %2419 = vrot.lane.b32.xlu0 %v2346, 16
        %v2420 = vpop.permute.xlu0 %2419
        %2421 = vrot.lane.b32.xlu0 %v2347, 16
        %v2422 = vpop.permute.xlu0 %2421
        %2423 = vrot.lane.b32.xlu0 %v2348, 16
        %v2424 = vpop.permute.xlu0 %2423
        %2425 = vrot.lane.b32.xlu0 %v2349, 16
        %v2426 = vpop.permute.xlu0 %2425
        %2427 = vrot.lane.b32.xlu0 %v2350, 16
        %v2428 = vpop.permute.xlu0 %2427
        %2429 = vrot.lane.b32.xlu0 %v2351, 16
        %v2430 = vpop.permute.xlu0 %2429
        %2431 = vrot.lane.b32.xlu0 %v2352, 16
        %v2432 = vpop.permute.xlu0 %2431
        %2433 = vrot.lane.b32.xlu0 %v2353, 16
        %v2434 = vpop.permute.xlu0 %2433
        %2435 = vrot.lane.b32.xlu0 %v2354, 16
        %v2436 = vpop.permute.xlu0 %2435
        %2437 = vrot.lane.b32.xlu0 %v2355, 16
        %v2438 = vpop.permute.xlu0 %2437
        %2439 = vrot.lane.b32.xlu0 %v2356, 16
        %v2440 = vpop.permute.xlu0 %2439
        %2441 = vrot.lane.b32.xlu0 %v2357, 16
        %v2442 = vpop.permute.xlu0 %2441
        %2443 = vrot.lane.b32.xlu0 %v2358, 16
        %v2444 = vpop.permute.xlu0 %2443
        %2445 = vrot.lane.b32.xlu0 %v2359, 16
        %v2446 = vpop.permute.xlu0 %2445
        %2447 = vrot.lane.b32.xlu0 %v2360, 16
        %v2448 = vpop.permute.xlu0 %2447
        %2449 = vrot.lane.b32.xlu0 %v2361, 16
        %v2450 = vpop.permute.xlu0 %2449
        %2451 = vrot.lane.b32.xlu0 %v2362, 16
        %v2452 = vpop.permute.xlu0 %2451
        %2453 = vrot.lane.b32.xlu0 %v2363, 16
        %v2454 = vpop.permute.xlu0 %2453
        %2455 = vrot.lane.b32.xlu0 %v2364, 16
        %v2456 = vpop.permute.xlu0 %2455
        %2457 = vrot.lane.b32.xlu0 %v2365, 16
        %v2458 = vpop.permute.xlu0 %2457
        %2459 = vrot.lane.b32.xlu0 %v2366, 16
        %v2460 = vpop.permute.xlu0 %2459
        %2461 = vrot.lane.b32.xlu0 %v2367, 16
        %v2462 = vpop.permute.xlu0 %2461
        %2463 = vrot.lane.b32.xlu0 %v2368, 16
        %v2464 = vpop.permute.xlu0 %2463
        %vm2497 = vcmask 146560
        %2498 = vst.msk [vmem:[#allocation3] sm:$0xff] %vm2497, %v2402
        %2499 = vst.msk [vmem:[#allocation3 + $0x8] sm:$0xff] %vm2497, %v2404
        %2500 = vst.msk [vmem:[#allocation3 + $0x10] sm:$0xff] %vm2497, %v2406
        %2501 = vst.msk [vmem:[#allocation3 + $0x18] sm:$0xff] %vm2497, %v2408
        %2502 = vst.msk [vmem:[#allocation3 + $0x20] sm:$0xff] %vm2497, %v2410
        %2503 = vst.msk [vmem:[#allocation3 + $0x28] sm:$0xff] %vm2497, %v2412
        %2504 = vst.msk [vmem:[#allocation3 + $0x30] sm:$0xff] %vm2497, %v2414
        %2505 = vst.msk [vmem:[#allocation3 + $0x38] sm:$0xff] %vm2497, %v2416
        %2506 = vst.msk [vmem:[#allocation3 + $0x40] sm:$0xff] %vm2497, %v2418
        %2507 = vst.msk [vmem:[#allocation3 + $0x48] sm:$0xff] %vm2497, %v2420
        %2508 = vst.msk [vmem:[#allocation3 + $0x50] sm:$0xff] %vm2497, %v2422
        %2509 = vst.msk [vmem:[#allocation3 + $0x58] sm:$0xff] %vm2497, %v2424
        %2510 = vst.msk [vmem:[#allocation3 + $0x60] sm:$0xff] %vm2497, %v2426
        %2511 = vst.msk [vmem:[#allocation3 + $0x68] sm:$0xff] %vm2497, %v2428
        %2512 = vst.msk [vmem:[#allocation3 + $0x70] sm:$0xff] %vm2497, %v2430
        %2513 = vst.msk [vmem:[#allocation3 + $0x78] sm:$0xff] %vm2497, %v2432
        %2514 = vst.msk [vmem:[#allocation3 + $0x80] sm:$0xff] %vm2497, %v2434
        %2515 = vst.msk [vmem:[#allocation3 + $0x88] sm:$0xff] %vm2497, %v2436
        %2516 = vst.msk [vmem:[#allocation3 + $0x90] sm:$0xff] %vm2497, %v2438
        %2517 = vst.msk [vmem:[#allocation3 + $0x98] sm:$0xff] %vm2497, %v2440
        %2518 = vst.msk [vmem:[#allocation3 + $0xa0] sm:$0xff] %vm2497, %v2442
        %2519 = vst.msk [vmem:[#allocation3 + $0xa8] sm:$0xff] %vm2497, %v2444
        %2520 = vst.msk [vmem:[#allocation3 + $0xb0] sm:$0xff] %vm2497, %v2446
        %2521 = vst.msk [vmem:[#allocation3 + $0xb8] sm:$0xff] %vm2497, %v2448
        %2522 = vst.msk [vmem:[#allocation3 + $0xc0] sm:$0xff] %vm2497, %v2450
        %2523 = vst.msk [vmem:[#allocation3 + $0xc8] sm:$0xff] %vm2497, %v2452
        %2524 = vst.msk [vmem:[#allocation3 + $0xd0] sm:$0xff] %vm2497, %v2454
        %2525 = vst.msk [vmem:[#allocation3 + $0xd8] sm:$0xff] %vm2497, %v2456
        %2526 = vst.msk [vmem:[#allocation3 + $0xe0] sm:$0xff] %vm2497, %v2458
        %2527 = vst.msk [vmem:[#allocation3 + $0xe8] sm:$0xff] %vm2497, %v2460
        %2528 = vst.msk [vmem:[#allocation3 + $0xf0] sm:$0xff] %vm2497, %v2462
        %2529 = vst.msk [vmem:[#allocation3 + $0xf8] sm:$0xff] %vm2497, %v2464
        %v2530 = vld [vmem:[#allocation3] sm:$0xff]
        %v2531 = vld [vmem:[#allocation3 + $0x8] sm:$0xff]
        %v2532 = vld [vmem:[#allocation3 + $0x10] sm:$0xff]
        %v2533 = vld [vmem:[#allocation3 + $0x18] sm:$0xff]
        %v2534 = vld [vmem:[#allocation3 + $0x20] sm:$0xff]
        %v2535 = vld [vmem:[#allocation3 + $0x28] sm:$0xff]
        %v2536 = vld [vmem:[#allocation3 + $0x30] sm:$0xff]
        %v2537 = vld [vmem:[#allocation3 + $0x38] sm:$0xff]
        %v2538 = vld [vmem:[#allocation3 + $0x40] sm:$0xff]
        %v2539 = vld [vmem:[#allocation3 + $0x48] sm:$0xff]
        %v2540 = vld [vmem:[#allocation3 + $0x50] sm:$0xff]
        %v2541 = vld [vmem:[#allocation3 + $0x58] sm:$0xff]
        %v2542 = vld [vmem:[#allocation3 + $0x60] sm:$0xff]
        %v2543 = vld [vmem:[#allocation3 + $0x68] sm:$0xff]
        %v2544 = vld [vmem:[#allocation3 + $0x70] sm:$0xff]
        %v2545 = vld [vmem:[#allocation3 + $0x78] sm:$0xff]
        %v2546 = vld [vmem:[#allocation3 + $0x80] sm:$0xff]
        %v2547 = vld [vmem:[#allocation3 + $0x88] sm:$0xff]
        %v2548 = vld [vmem:[#allocation3 + $0x90] sm:$0xff]
        %v2549 = vld [vmem:[#allocation3 + $0x98] sm:$0xff]
        %v2550 = vld [vmem:[#allocation3 + $0xa0] sm:$0xff]
        %v2551 = vld [vmem:[#allocation3 + $0xa8] sm:$0xff]
        %v2552 = vld [vmem:[#allocation3 + $0xb0] sm:$0xff]
        %v2553 = vld [vmem:[#allocation3 + $0xb8] sm:$0xff]
        %v2554 = vld [vmem:[#allocation3 + $0xc0] sm:$0xff]
        %v2555 = vld [vmem:[#allocation3 + $0xc8] sm:$0xff]
        %v2556 = vld [vmem:[#allocation3 + $0xd0] sm:$0xff]
        %v2557 = vld [vmem:[#allocation3 + $0xd8] sm:$0xff]
        %v2558 = vld [vmem:[#allocation3 + $0xe0] sm:$0xff]
        %v2559 = vld [vmem:[#allocation3 + $0xe8] sm:$0xff]
        %v2560 = vld [vmem:[#allocation3 + $0xf0] sm:$0xff]
        %v2561 = vld [vmem:[#allocation3 + $0xf8] sm:$0xff]
        %v2562 = vld [vmem:[%s3] sm:$0xff]
        %v2563 = vld [vmem:[%s3 + $0x8] sm:$0xff]
        %v2564 = vld [vmem:[%s3 + $0x10] sm:$0x3]
        %v2565 = vld [vmem:[%s4] sm:$0x1]
        %v2567 = vlaneseq
        %v2568 = vshrl.u32 %v2567, 7
        %v2569 = vsub.s32 0, %v2568
        %v2570 = vrot.slane %v2565, %v2569
        %vm2572 = vcmask 146432
        %v2574 = vsel %vm2572, %v2530, 0
        %v2577 = vsel %vm2572, %v2531, 0
        %v2580 = vsel %vm2572, %v2532, 0
        %v2583 = vsel %vm2572, %v2533, 0
        %v2586 = vsel %vm2572, %v2534, 0
        %v2589 = vsel %vm2572, %v2535, 0
        %v2592 = vsel %vm2572, %v2536, 0
        %v2595 = vsel %vm2572, %v2537, 0
        %v2598 = vsel %vm2572, %v2538, 0
        %v2601 = vsel %vm2572, %v2539, 0
        %v2604 = vsel %vm2572, %v2540, 0
        %v2607 = vsel %vm2572, %v2541, 0
        %v2610 = vsel %vm2572, %v2542, 0
        %v2613 = vsel %vm2572, %v2543, 0
        %v2616 = vsel %vm2572, %v2544, 0
        %v2619 = vsel %vm2572, %v2545, 0
        %v2622 = vsel %vm2572, %v2546, 0
        %v2625 = vsel %vm2572, %v2547, 0
        %v2628 = vsel %vm2572, %v2548, 0
        %v2631 = vsel %vm2572, %v2549, 0
        %v2634 = vsel %vm2572, %v2550, 0
        %v2637 = vsel %vm2572, %v2551, 0
        %v2640 = vsel %vm2572, %v2552, 0
        %v2643 = vsel %vm2572, %v2553, 0
        %v2646 = vsel %vm2572, %v2554, 0
        %v2649 = vsel %vm2572, %v2555, 0
        %v2652 = vsel %vm2572, %v2556, 0
        %v2655 = vsel %vm2572, %v2557, 0
        %v2658 = vsel %vm2572, %v2558, 0
        %v2661 = vsel %vm2572, %v2559, 0
        %v2664 = vsel %vm2572, %v2560, 0
        %v2667 = vsel %vm2572, %v2561, 0
        %vm2669 = vcmask 1041408
        %v2671 = vsel %vm2669, %v2564, 0
        %2673 = vmatprep.subr.mxu0 0.0
        %2674 = vmatpush1.msra.mxu0 %v2562
        %2675 = vmatprep.subr.mxu0 0.0
        %2676 = vmatpush1.msra.mxu0 %v2563
        %2677 = vmatprep.subr.mxu0 0.0
        %2678 = vmatpush1.msra.mxu0 %v2671
        %2679 = vmatprep.subr.mxu0 0.0
        %2680 = vmatpush1.msra.mxu0 0.0
        %2681 = vmatprep.subr.mxu0 0.0
        %2682 = vmatpush1.msra.mxu0 0.0
        %2683 = vmatprep.subr.mxu0 0.0
        %2684 = vmatpush1.msra.mxu0 0.0
        %2685 = vmatprep.subr.mxu0 0.0
        %2686 = vmatpush1.msra.mxu0 0.0
        %2687 = vmatprep.subr.mxu0 0.0
        %2688 = vmatpush1.msra.mxu0 0.0
        %2689 = vmatprep.subr.mxu0 0.0
        %2690 = vmatpush1.msra.mxu0 0.0
        %2691 = vmatprep.subr.mxu0 0.0
        %2692 = vmatpush1.msra.mxu0 0.0
        %2693 = vmatprep.subr.mxu0 0.0
        %2694 = vmatpush1.msra.mxu0 0.0
        %2695 = vmatprep.subr.mxu0 0.0
        %2696 = vmatpush1.msra.mxu0 0.0
        %2697 = vmatprep.subr.mxu0 0.0
        %2698 = vmatpush1.msra.mxu0 0.0
        %2699 = vmatprep.subr.mxu0 0.0
        %2700 = vmatpush1.msra.mxu0 0.0
        %2701 = vmatprep.subr.mxu0 0.0
        %2702 = vmatpush1.msra.mxu0 0.0
        %2703 = vmatprep.subr.mxu0 0.0
        %2704 = vmatpush1.msra.mxu0 0.0
        %2705 = vmatprep.subr.mxu0 0.0
        %2706 = vmatpush1.msra.mxu0 0.0
        %2707 = vmatprep.subr.mxu0 0.0
        %2708 = vmatpush1.msra.mxu0 0.0
        %2709 = vmatprep.subr.mxu0 0.0
        %2710 = vmatpush1.msra.mxu0 0.0
        %2711 = vmatprep.subr.mxu0 0.0
        %2712 = vmatpush1.msra.mxu0 0.0
        %2713 = vmatprep.subr.mxu0 0.0
        %2714 = vmatpush1.msra.mxu0 0.0
        %2715 = vmatprep.subr.mxu0 0.0
        %2716 = vmatpush1.msra.mxu0 0.0
        %2717 = vmatprep.subr.mxu0 0.0
        %2718 = vmatpush1.msra.mxu0 0.0
        %2719 = vmatprep.subr.mxu0 0.0
        %2720 = vmatpush1.msra.mxu0 0.0
        %2721 = vmatprep.subr.mxu0 0.0
        %2722 = vmatpush1.msra.mxu0 0.0
        %2723 = vmatprep.subr.mxu0 0.0
        %2724 = vmatpush1.msra.mxu0 0.0
        %2725 = vmatprep.subr.mxu0 0.0
        %2726 = vmatpush1.msra.mxu0 0.0
        %2727 = vmatprep.subr.mxu0 0.0
        %2728 = vmatpush1.msra.mxu0 0.0
        %2729 = vmatprep.subr.mxu0 0.0
        %2730 = vmatpush1.msra.mxu0 0.0
        %2731 = vmatprep.subr.mxu0 0.0
        %2732 = vmatpush1.msra.mxu0 0.0
        %2733 = vmatprep.subr.mxu0 0.0
        %2734 = vmatpush1.msra.mxu0 0.0
        %2735 = vmatprep.subr.mxu0 0.0
        %2736 = vmatpush1.msra.mxu0 0.0
        %2737 = vmatprep.mubr.f32.mxu0 0.0
        %2738 = vmatmul.mubr.f32.gmra.mrb[0].mxu0 %v2574
        %v2739 = vpop.f32.mrb[0].mxu0
        %v2740 = vadd.f32 %v2570, %v2739
        %v2741 = vpop.f32.mrb[0].mxu0
        %2742 = vmatprep.mubr.f32.mxu0 0.0
        %2743 = vmatmul.mubr.f32.gmra.mrb[0].mxu0 %v2577
        %v2744 = vpop.f32.mrb[0].mxu0
        %v2745 = vadd.f32 %v2570, %v2744
        %v2746 = vpop.f32.mrb[0].mxu0
        %2747 = vmatprep.mubr.f32.mxu0 0.0
        %2748 = vmatmul.mubr.f32.gmra.mrb[0].mxu0 %v2580
        %v2749 = vpop.f32.mrb[0].mxu0
        %v2750 = vadd.f32 %v2570, %v2749
        %v2751 = vpop.f32.mrb[0].mxu0
        %2752 = vmatprep.mubr.f32.mxu0 0.0
        %2753 = vmatmul.mubr.f32.gmra.mrb[0].mxu0 %v2583
        %v2754 = vpop.f32.mrb[0].mxu0
        %v2755 = vadd.f32 %v2570, %v2754
        %v2756 = vpop.f32.mrb[0].mxu0
        %2757 = vmatprep.mubr.f32.mxu0 0.0
        %2758 = vmatmul.mubr.f32.gmra.mrb[0].mxu0 %v2586
        %v2759 = vpop.f32.mrb[0].mxu0
        %v2760 = vadd.f32 %v2570, %v2759
        %v2761 = vpop.f32.mrb[0].mxu0
        %2762 = vmatprep.mubr.f32.mxu0 0.0
        %2763 = vmatmul.mubr.f32.gmra.mrb[0].mxu0 %v2589
        %v2764 = vpop.f32.mrb[0].mxu0
        %v2765 = vadd.f32 %v2570, %v2764
        %v2766 = vpop.f32.mrb[0].mxu0
        %2767 = vmatprep.mubr.f32.mxu0 0.0
        %2768 = vmatmul.mubr.f32.gmra.mrb[0].mxu0 %v2592
        %v2769 = vpop.f32.mrb[0].mxu0
        %v2770 = vadd.f32 %v2570, %v2769
        %v2771 = vpop.f32.mrb[0].mxu0
        %2772 = vmatprep.mubr.f32.mxu0 0.0
        %2773 = vmatmul.mubr.f32.gmra.mrb[0].mxu0 %v2595
        %v2774 = vpop.f32.mrb[0].mxu0
        %v2775 = vadd.f32 %v2570, %v2774
        %v2776 = vpop.f32.mrb[0].mxu0
        %2777 = vmatprep.mubr.f32.mxu0 0.0
        %2778 = vmatmul.mubr.f32.gmra.mrb[0].mxu0 %v2598
        %v2779 = vpop.f32.mrb[0].mxu0
        %v2780 = vadd.f32 %v2570, %v2779
        %v2781 = vpop.f32.mrb[0].mxu0
        %2782 = vmatprep.mubr.f32.mxu0 0.0
        %2783 = vmatmul.mubr.f32.gmra.mrb[0].mxu0 %v2601
        %v2784 = vpop.f32.mrb[0].mxu0
        %v2785 = vadd.f32 %v2570, %v2784
        %v2786 = vpop.f32.mrb[0].mxu0
        %2787 = vmatprep.mubr.f32.mxu0 0.0
        %2788 = vmatmul.mubr.f32.gmra.mrb[0].mxu0 %v2604
        %v2789 = vpop.f32.mrb[0].mxu0
        %v2790 = vadd.f32 %v2570, %v2789
        %v2791 = vpop.f32.mrb[0].mxu0
        %2792 = vmatprep.mubr.f32.mxu0 0.0
        %2793 = vmatmul.mubr.f32.gmra.mrb[0].mxu0 %v2607
        %v2794 = vpop.f32.mrb[0].mxu0
        %v2795 = vadd.f32 %v2570, %v2794
        %v2796 = vpop.f32.mrb[0].mxu0
        %2797 = vmatprep.mubr.f32.mxu0 0.0
        %2798 = vmatmul.mubr.f32.gmra.mrb[0].mxu0 %v2610
        %v2799 = vpop.f32.mrb[0].mxu0
        %v2800 = vadd.f32 %v2570, %v2799
        %v2801 = vpop.f32.mrb[0].mxu0
        %2802 = vmatprep.mubr.f32.mxu0 0.0
        %2803 = vmatmul.mubr.f32.gmra.mrb[0].mxu0 %v2613
        %v2804 = vpop.f32.mrb[0].mxu0
        %v2805 = vadd.f32 %v2570, %v2804
        %v2806 = vpop.f32.mrb[0].mxu0
        %2807 = vmatprep.mubr.f32.mxu0 0.0
        %2808 = vmatmul.mubr.f32.gmra.mrb[0].mxu0 %v2616
        %v2809 = vpop.f32.mrb[0].mxu0
        %v2810 = vadd.f32 %v2570, %v2809
        %v2811 = vpop.f32.mrb[0].mxu0
        %2812 = vmatprep.mubr.f32.mxu0 0.0
        %2813 = vmatmul.mubr.f32.gmra.mrb[0].mxu0 %v2619
        %v2814 = vpop.f32.mrb[0].mxu0
        %v2815 = vadd.f32 %v2570, %v2814
        %v2816 = vpop.f32.mrb[0].mxu0
        %2817 = vmatprep.mubr.f32.mxu0 0.0
        %2818 = vmatmul.mubr.f32.gmra.mrb[0].mxu0 %v2622
        %v2819 = vpop.f32.mrb[0].mxu0
        %v2820 = vadd.f32 %v2570, %v2819
        %v2821 = vpop.f32.mrb[0].mxu0
        %2822 = vmatprep.mubr.f32.mxu0 0.0
        %2823 = vmatmul.mubr.f32.gmra.mrb[0].mxu0 %v2625
        %v2824 = vpop.f32.mrb[0].mxu0
        %v2825 = vadd.f32 %v2570, %v2824
        %v2826 = vpop.f32.mrb[0].mxu0
        %2827 = vmatprep.mubr.f32.mxu0 0.0
        %2828 = vmatmul.mubr.f32.gmra.mrb[0].mxu0 %v2628
        %v2829 = vpop.f32.mrb[0].mxu0
        %v2830 = vadd.f32 %v2570, %v2829
        %v2831 = vpop.f32.mrb[0].mxu0
        %2832 = vmatprep.mubr.f32.mxu0 0.0
        %2833 = vmatmul.mubr.f32.gmra.mrb[0].mxu0 %v2631
        %v2834 = vpop.f32.mrb[0].mxu0
        %v2835 = vadd.f32 %v2570, %v2834
        %v2836 = vpop.f32.mrb[0].mxu0
        %2837 = vmatprep.mubr.f32.mxu0 0.0
        %2838 = vmatmul.mubr.f32.gmra.mrb[0].mxu0 %v2634
        %v2839 = vpop.f32.mrb[0].mxu0
        %v2840 = vadd.f32 %v2570, %v2839
        %v2841 = vpop.f32.mrb[0].mxu0
        %2842 = vmatprep.mubr.f32.mxu0 0.0
        %2843 = vmatmul.mubr.f32.gmra.mrb[0].mxu0 %v2637
        %v2844 = vpop.f32.mrb[0].mxu0
        %v2845 = vadd.f32 %v2570, %v2844
        %v2846 = vpop.f32.mrb[0].mxu0
        %2847 = vmatprep.mubr.f32.mxu0 0.0
        %2848 = vmatmul.mubr.f32.gmra.mrb[0].mxu0 %v2640
        %v2849 = vpop.f32.mrb[0].mxu0
        %v2850 = vadd.f32 %v2570, %v2849
        %v2851 = vpop.f32.mrb[0].mxu0
        %2852 = vmatprep.mubr.f32.mxu0 0.0
        %2853 = vmatmul.mubr.f32.gmra.mrb[0].mxu0 %v2643
        %v2854 = vpop.f32.mrb[0].mxu0
        %v2855 = vadd.f32 %v2570, %v2854
        %v2856 = vpop.f32.mrb[0].mxu0
        %2857 = vmatprep.mubr.f32.mxu0 0.0
        %2858 = vmatmul.mubr.f32.gmra.mrb[0].mxu0 %v2646
        %v2859 = vpop.f32.mrb[0].mxu0
        %v2860 = vadd.f32 %v2570, %v2859
        %v2861 = vpop.f32.mrb[0].mxu0
        %2862 = vmatprep.mubr.f32.mxu0 0.0
        %2863 = vmatmul.mubr.f32.gmra.mrb[0].mxu0 %v2649
        %v2864 = vpop.f32.mrb[0].mxu0
        %v2865 = vadd.f32 %v2570, %v2864
        %v2866 = vpop.f32.mrb[0].mxu0
        %2867 = vmatprep.mubr.f32.mxu0 0.0
        %2868 = vmatmul.mubr.f32.gmra.mrb[0].mxu0 %v2652
        %v2869 = vpop.f32.mrb[0].mxu0
        %v2870 = vadd.f32 %v2570, %v2869
        %v2871 = vpop.f32.mrb[0].mxu0
        %2872 = vmatprep.mubr.f32.mxu0 0.0
        %2873 = vmatmul.mubr.f32.gmra.mrb[0].mxu0 %v2655
        %v2874 = vpop.f32.mrb[0].mxu0
        %v2875 = vadd.f32 %v2570, %v2874
        %v2876 = vpop.f32.mrb[0].mxu0
        %2877 = vmatprep.mubr.f32.mxu0 0.0
        %2878 = vmatmul.mubr.f32.gmra.mrb[0].mxu0 %v2658
        %v2879 = vpop.f32.mrb[0].mxu0
        %v2880 = vadd.f32 %v2570, %v2879
        %v2881 = vpop.f32.mrb[0].mxu0
        %2882 = vmatprep.mubr.f32.mxu0 0.0
        %2883 = vmatmul.mubr.f32.gmra.mrb[0].mxu0 %v2661
        %v2884 = vpop.f32.mrb[0].mxu0
        %v2885 = vadd.f32 %v2570, %v2884
        %v2886 = vpop.f32.mrb[0].mxu0
        %2887 = vmatprep.mubr.f32.mxu0 0.0
        %2888 = vmatmul.mubr.f32.gmra.mrb[0].mxu0 %v2664
        %v2889 = vpop.f32.mrb[0].mxu0
        %v2890 = vadd.f32 %v2570, %v2889
        %v2891 = vpop.f32.mrb[0].mxu0
        %2892 = vmatprep.mubr.f32.mxu0 0.0
        %2893 = vmatmul.mubr.f32.gmra.mrb[0].mxu0 %v2667
        %v2894 = vpop.f32.mrb[0].mxu0
        %v2895 = vadd.f32 %v2570, %v2894
        %v2896 = vpop.f32.mrb[0].mxu0
        %2897 = vdwg.mxu0
        %v2898 = vmax.f32 %v2740, 0.0
        %v2899 = vmax.f32 %v2745, 0.0
        %v2900 = vmax.f32 %v2750, 0.0
        %v2901 = vmax.f32 %v2755, 0.0
        %v2902 = vmax.f32 %v2760, 0.0
        %v2903 = vmax.f32 %v2765, 0.0
        %v2904 = vmax.f32 %v2770, 0.0
        %v2905 = vmax.f32 %v2775, 0.0
        %v2906 = vmax.f32 %v2780, 0.0
        %v2907 = vmax.f32 %v2785, 0.0
        %v2908 = vmax.f32 %v2790, 0.0
        %v2909 = vmax.f32 %v2795, 0.0
        %v2910 = vmax.f32 %v2800, 0.0
        %v2911 = vmax.f32 %v2805, 0.0
        %v2912 = vmax.f32 %v2810, 0.0
        %v2913 = vmax.f32 %v2815, 0.0
        %v2914 = vmax.f32 %v2820, 0.0
        %v2915 = vmax.f32 %v2825, 0.0
        %v2916 = vmax.f32 %v2830, 0.0
        %v2917 = vmax.f32 %v2835, 0.0
        %v2918 = vmax.f32 %v2840, 0.0
        %v2919 = vmax.f32 %v2845, 0.0
        %v2920 = vmax.f32 %v2850, 0.0
        %v2921 = vmax.f32 %v2855, 0.0
        %v2922 = vmax.f32 %v2860, 0.0
        %v2923 = vmax.f32 %v2865, 0.0
        %v2924 = vmax.f32 %v2870, 0.0
        %v2925 = vmax.f32 %v2875, 0.0
        %v2926 = vmax.f32 %v2880, 0.0
        %v2927 = vmax.f32 %v2885, 0.0
        %v2928 = vmax.f32 %v2890, 0.0
        %v2929 = vmax.f32 %v2895, 0.0
        %2962 = vrot.lane.b32.xlu0 %v2898, 4
        %v2963 = vpop.permute.xlu0 %2962
        %2964 = vrot.lane.b32.xlu0 %v2899, 4
        %v2965 = vpop.permute.xlu0 %2964
        %2966 = vrot.lane.b32.xlu0 %v2900, 4
        %v2967 = vpop.permute.xlu0 %2966
        %2968 = vrot.lane.b32.xlu0 %v2901, 4
        %v2969 = vpop.permute.xlu0 %2968
        %2970 = vrot.lane.b32.xlu0 %v2902, 4
        %v2971 = vpop.permute.xlu0 %2970
        %2972 = vrot.lane.b32.xlu0 %v2903, 4
        %v2973 = vpop.permute.xlu0 %2972
        %2974 = vrot.lane.b32.xlu0 %v2904, 4
        %v2975 = vpop.permute.xlu0 %2974
        %2976 = vrot.lane.b32.xlu0 %v2905, 4
        %v2977 = vpop.permute.xlu0 %2976
        %2978 = vrot.lane.b32.xlu0 %v2906, 4
        %v2979 = vpop.permute.xlu0 %2978
        %2980 = vrot.lane.b32.xlu0 %v2907, 4
        %v2981 = vpop.permute.xlu0 %2980
        %2982 = vrot.lane.b32.xlu0 %v2908, 4
        %v2983 = vpop.permute.xlu0 %2982
        %2984 = vrot.lane.b32.xlu0 %v2909, 4
        %v2985 = vpop.permute.xlu0 %2984
        %2986 = vrot.lane.b32.xlu0 %v2910, 4
        %v2987 = vpop.permute.xlu0 %2986
        %2988 = vrot.lane.b32.xlu0 %v2911, 4
        %v2989 = vpop.permute.xlu0 %2988
        %2990 = vrot.lane.b32.xlu0 %v2912, 4
        %v2991 = vpop.permute.xlu0 %2990
        %2992 = vrot.lane.b32.xlu0 %v2913, 4
        %v2993 = vpop.permute.xlu0 %2992
        %2994 = vrot.lane.b32.xlu0 %v2914, 4
        %v2995 = vpop.permute.xlu0 %2994
        %2996 = vrot.lane.b32.xlu0 %v2915, 4
        %v2997 = vpop.permute.xlu0 %2996
        %2998 = vrot.lane.b32.xlu0 %v2916, 4
        %v2999 = vpop.permute.xlu0 %2998
        %3000 = vrot.lane.b32.xlu0 %v2917, 4
        %v3001 = vpop.permute.xlu0 %3000
        %3002 = vrot.lane.b32.xlu0 %v2918, 4
        %v3003 = vpop.permute.xlu0 %3002
        %3004 = vrot.lane.b32.xlu0 %v2919, 4
        %v3005 = vpop.permute.xlu0 %3004
        %3006 = vrot.lane.b32.xlu0 %v2920, 4
        %v3007 = vpop.permute.xlu0 %3006
        %3008 = vrot.lane.b32.xlu0 %v2921, 4
        %v3009 = vpop.permute.xlu0 %3008
        %3010 = vrot.lane.b32.xlu0 %v2922, 4
        %v3011 = vpop.permute.xlu0 %3010
        %3012 = vrot.lane.b32.xlu0 %v2923, 4
        %v3013 = vpop.permute.xlu0 %3012
        %3014 = vrot.lane.b32.xlu0 %v2924, 4
        %v3015 = vpop.permute.xlu0 %3014
        %3016 = vrot.lane.b32.xlu0 %v2925, 4
        %v3017 = vpop.permute.xlu0 %3016
        %3018 = vrot.lane.b32.xlu0 %v2926, 4
        %v3019 = vpop.permute.xlu0 %3018
        %3020 = vrot.lane.b32.xlu0 %v2927, 4
        %v3021 = vpop.permute.xlu0 %3020
        %3022 = vrot.lane.b32.xlu0 %v2928, 4
        %v3023 = vpop.permute.xlu0 %3022
        %3024 = vrot.lane.b32.xlu0 %v2929, 4
        %v3025 = vpop.permute.xlu0 %3024
        %vm3058 = vcmask 64544
        %3059 = vst.msk [vmem:[%s271] sm:$0xff] %vm3058, %v2963
        %3060 = vst.msk [vmem:[%s271 + $0x8] sm:$0xff] %vm3058, %v2965
        %3061 = vst.msk [vmem:[%s271 + $0x10] sm:$0xff] %vm3058, %v2967
        %3062 = vst.msk [vmem:[%s271 + $0x18] sm:$0xff] %vm3058, %v2969
        %3063 = vst.msk [vmem:[%s271 + $0x20] sm:$0xff] %vm3058, %v2971
        %3064 = vst.msk [vmem:[%s271 + $0x28] sm:$0xff] %vm3058, %v2973
        %3065 = vst.msk [vmem:[%s271 + $0x30] sm:$0xff] %vm3058, %v2975
        %3066 = vst.msk [vmem:[%s271 + $0x38] sm:$0xff] %vm3058, %v2977
        %3067 = vst.msk [vmem:[%s271 + $0x40] sm:$0xff] %vm3058, %v2979
        %3068 = vst.msk [vmem:[%s271 + $0x48] sm:$0xff] %vm3058, %v2981
        %3069 = vst.msk [vmem:[%s271 + $0x50] sm:$0xff] %vm3058, %v2983
        %3070 = vst.msk [vmem:[%s271 + $0x58] sm:$0xff] %vm3058, %v2985
        %3071 = vst.msk [vmem:[%s271 + $0x60] sm:$0xff] %vm3058, %v2987
        %3072 = vst.msk [vmem:[%s271 + $0x68] sm:$0xff] %vm3058, %v2989
        %3073 = vst.msk [vmem:[%s271 + $0x70] sm:$0xff] %vm3058, %v2991
        %3074 = vst.msk [vmem:[%s271 + $0x78] sm:$0xff] %vm3058, %v2993
        %3075 = vst.msk [vmem:[%s271 + $0x80] sm:$0xff] %vm3058, %v2995
        %3076 = vst.msk [vmem:[%s271 + $0x88] sm:$0xff] %vm3058, %v2997
        %3077 = vst.msk [vmem:[%s271 + $0x90] sm:$0xff] %vm3058, %v2999
        %3078 = vst.msk [vmem:[%s271 + $0x98] sm:$0xff] %vm3058, %v3001
        %3079 = vst.msk [vmem:[%s271 + $0xa0] sm:$0xff] %vm3058, %v3003
        %3080 = vst.msk [vmem:[%s271 + $0xa8] sm:$0xff] %vm3058, %v3005
        %3081 = vst.msk [vmem:[%s271 + $0xb0] sm:$0xff] %vm3058, %v3007
        %3082 = vst.msk [vmem:[%s271 + $0xb8] sm:$0xff] %vm3058, %v3009
        %3083 = vst.msk [vmem:[%s271 + $0xc0] sm:$0xff] %vm3058, %v3011
        %3084 = vst.msk [vmem:[%s271 + $0xc8] sm:$0xff] %vm3058, %v3013
        %3085 = vst.msk [vmem:[%s271 + $0xd0] sm:$0xff] %vm3058, %v3015
        %3086 = vst.msk [vmem:[%s271 + $0xd8] sm:$0xff] %vm3058, %v3017
        %3087 = vst.msk [vmem:[%s271 + $0xe0] sm:$0xff] %vm3058, %v3019
        %3088 = vst.msk [vmem:[%s271 + $0xe8] sm:$0xff] %vm3058, %v3021
        %3089 = vst.msk [vmem:[%s271 + $0xf0] sm:$0xff] %vm3058, %v3023
        %3090 = vst.msk [vmem:[%s271 + $0xf8] sm:$0xff] %vm3058, %v3025
        %3091 = vst.msk [vmem:[#allocation4] sm:$0xff] %vm704, 0.0
        %3092 = vst.msk [vmem:[#allocation4 + $0x8] sm:$0xff] %vm704, 0.0
        %vm3093 = vcmask 11264
        %3094 = vst.msk [vmem:[#allocation4 + $0x10] sm:$0xf] %vm3093, 0.0
        %3095 = vst.msk [vmem:[#allocation4 + $0x18] sm:$0xff] %vm704, 0.0
        %3096 = vst.msk [vmem:[#allocation4 + $0x20] sm:$0xff] %vm704, 0.0
        %3097 = vst.msk [vmem:[#allocation4 + $0x28] sm:$0xf] %vm3093, 0.0
        %3098 = vst.msk [vmem:[#allocation4 + $0x30] sm:$0xff] %vm704, 0.0
        %3099 = vst.msk [vmem:[#allocation4 + $0x38] sm:$0xff] %vm704, 0.0
        %3100 = vst.msk [vmem:[#allocation4 + $0x40] sm:$0xf] %vm3093, 0.0
        %3101 = vst.msk [vmem:[#allocation4 + $0x48] sm:$0xff] %vm704, 0.0
        %3102 = vst.msk [vmem:[#allocation4 + $0x50] sm:$0xff] %vm704, 0.0
        %3103 = vst.msk [vmem:[#allocation4 + $0x58] sm:$0xf] %vm3093, 0.0
        %3104 = vst.msk [vmem:[#allocation4 + $0x60] sm:$0xff] %vm704, 0.0
        %3105 = vst.msk [vmem:[#allocation4 + $0x68] sm:$0xff] %vm704, 0.0
        %3106 = vst.msk [vmem:[#allocation4 + $0x70] sm:$0xf] %vm3093, 0.0
        %3107 = vst.msk [vmem:[#allocation4 + $0x78] sm:$0xff] %vm704, 0.0
        %3108 = vst.msk [vmem:[#allocation4 + $0x80] sm:$0xff] %vm704, 0.0
        %3109 = vst.msk [vmem:[#allocation4 + $0x88] sm:$0xf] %vm3093, 0.0
        %3110 = vst.msk [vmem:[#allocation4 + $0x90] sm:$0xff] %vm704, 0.0
        %3111 = vst.msk [vmem:[#allocation4 + $0x98] sm:$0xff] %vm704, 0.0
        %3112 = vst.msk [vmem:[#allocation4 + $0xa0] sm:$0xf] %vm3093, 0.0
        %3113 = vst.msk [vmem:[#allocation4 + $0xa8] sm:$0xff] %vm704, 0.0
        %3114 = vst.msk [vmem:[#allocation4 + $0xb0] sm:$0xff] %vm704, 0.0
        %3115 = vst.msk [vmem:[#allocation4 + $0xb8] sm:$0xf] %vm3093, 0.0
        %3116 = vst.msk [vmem:[#allocation4 + $0xc0] sm:$0xff] %vm704, 0.0
        %3117 = vst.msk [vmem:[#allocation4 + $0xc8] sm:$0xff] %vm704, 0.0
        %3118 = vst.msk [vmem:[#allocation4 + $0xd0] sm:$0xf] %vm3093, 0.0
        %3119 = vst.msk [vmem:[#allocation4 + $0xd8] sm:$0xff] %vm704, 0.0
        %3120 = vst.msk [vmem:[#allocation4 + $0xe0] sm:$0xff] %vm704, 0.0
        %3121 = vst.msk [vmem:[#allocation4 + $0xe8] sm:$0xf] %vm3093, 0.0
        %3122 = vst.msk [vmem:[#allocation4 + $0xf0] sm:$0xff] %vm704, 0.0
        %3123 = vst.msk [vmem:[#allocation4 + $0xf8] sm:$0xff] %vm704, 0.0
        %3124 = vst.msk [vmem:[#allocation4 + $0x100] sm:$0xf] %vm3093, 0.0
        %3125 = vst.msk [vmem:[#allocation4 + $0x108] sm:$0xff] %vm704, 0.0
        %3126 = vst.msk [vmem:[#allocation4 + $0x110] sm:$0xff] %vm704, 0.0
        %3127 = vst.msk [vmem:[#allocation4 + $0x118] sm:$0xf] %vm3093, 0.0
        %3128 = vst.msk [vmem:[#allocation4 + $0x120] sm:$0xff] %vm704, 0.0
        %3129 = vst.msk [vmem:[#allocation4 + $0x128] sm:$0xff] %vm704, 0.0
        %3130 = vst.msk [vmem:[#allocation4 + $0x130] sm:$0xf] %vm3093, 0.0
        %3131 = vst.msk [vmem:[#allocation4 + $0x138] sm:$0xff] %vm704, 0.0
        %3132 = vst.msk [vmem:[#allocation4 + $0x140] sm:$0xff] %vm704, 0.0
        %3133 = vst.msk [vmem:[#allocation4 + $0x148] sm:$0xf] %vm3093, 0.0
        %3134 = vst.msk [vmem:[#allocation4 + $0x150] sm:$0xff] %vm704, 0.0
        %3135 = vst.msk [vmem:[#allocation4 + $0x158] sm:$0xff] %vm704, 0.0
        %3136 = vst.msk [vmem:[#allocation4 + $0x160] sm:$0xf] %vm3093, 0.0
        %3137 = vst.msk [vmem:[#allocation4 + $0x168] sm:$0xff] %vm704, 0.0
        %3138 = vst.msk [vmem:[#allocation4 + $0x170] sm:$0xff] %vm704, 0.0
        %3139 = vst.msk [vmem:[#allocation4 + $0x178] sm:$0xf] %vm3093, 0.0
        %3140 = vst.msk [vmem:[#allocation4 + $0x180] sm:$0xff] %vm704, 0.0
        %3141 = vst.msk [vmem:[#allocation4 + $0x188] sm:$0xff] %vm704, 0.0
        %3142 = vst.msk [vmem:[#allocation4 + $0x190] sm:$0xf] %vm3093, 0.0
        %3143 = vst.msk [vmem:[#allocation4 + $0x198] sm:$0xff] %vm704, 0.0
        %3144 = vst.msk [vmem:[#allocation4 + $0x1a0] sm:$0xff] %vm704, 0.0
        %3145 = vst.msk [vmem:[#allocation4 + $0x1a8] sm:$0xf] %vm3093, 0.0
        %3146 = vst.msk [vmem:[#allocation4 + $0x1b0] sm:$0xff] %vm704, 0.0
        %3147 = vst.msk [vmem:[#allocation4 + $0x1b8] sm:$0xff] %vm704, 0.0
        %3148 = vst.msk [vmem:[#allocation4 + $0x1c0] sm:$0xf] %vm3093, 0.0
        %3149 = vst.msk [vmem:[#allocation4 + $0x1c8] sm:$0xff] %vm704, 0.0
        %3150 = vst.msk [vmem:[#allocation4 + $0x1d0] sm:$0xff] %vm704, 0.0
        %3151 = vst.msk [vmem:[#allocation4 + $0x1d8] sm:$0xf] %vm3093, 0.0
        %3152 = vrot.lane.b32.xlu0 %v639, 122
        %v3153 = vpop.permute.xlu0 %3152
        %3154 = vrot.lane.b32.xlu0 %v640, 122
        %v3155 = vpop.permute.xlu0 %3154
        %3156 = vrot.lane.b32.xlu0 %v641, 122
        %v3157 = vpop.permute.xlu0 %3156
        %3158 = vrot.lane.b32.xlu0 %v642, 122
        %v3159 = vpop.permute.xlu0 %3158
        %3160 = vrot.lane.b32.xlu0 %v643, 122
        %v3161 = vpop.permute.xlu0 %3160
        %3162 = vrot.lane.b32.xlu0 %v644, 122
        %v3163 = vpop.permute.xlu0 %3162
        %3164 = vrot.lane.b32.xlu0 %v645, 122
        %v3165 = vpop.permute.xlu0 %3164
        %3166 = vrot.lane.b32.xlu0 %v646, 122
        %v3167 = vpop.permute.xlu0 %3166
        %3168 = vrot.lane.b32.xlu0 %v647, 122
        %v3169 = vpop.permute.xlu0 %3168
        %3170 = vrot.lane.b32.xlu0 %v648, 122
        %v3171 = vpop.permute.xlu0 %3170
        %3172 = vrot.lane.b32.xlu0 %v649, 122
        %v3173 = vpop.permute.xlu0 %3172
        %3174 = vrot.lane.b32.xlu0 %v650, 122
        %v3175 = vpop.permute.xlu0 %3174
        %3176 = vrot.lane.b32.xlu0 %v651, 122
        %v3177 = vpop.permute.xlu0 %3176
        %3178 = vrot.lane.b32.xlu0 %v652, 122
        %v3179 = vpop.permute.xlu0 %3178
        %3180 = vrot.lane.b32.xlu0 %v653, 122
        %v3181 = vpop.permute.xlu0 %3180
        %3182 = vrot.lane.b32.xlu0 %v654, 122
        %v3183 = vpop.permute.xlu0 %3182
        %3184 = vrot.lane.b32.xlu0 %v655, 122
        %v3185 = vpop.permute.xlu0 %3184
        %3186 = vrot.lane.b32.xlu0 %v656, 122
        %v3187 = vpop.permute.xlu0 %3186
        %3188 = vrot.lane.b32.xlu0 %v657, 122
        %v3189 = vpop.permute.xlu0 %3188
        %3190 = vrot.lane.b32.xlu0 %v658, 122
        %v3191 = vpop.permute.xlu0 %3190
        %3192 = vrot.lane.b32.xlu0 %v659, 122
        %v3193 = vpop.permute.xlu0 %3192
        %3194 = vrot.lane.b32.xlu0 %v660, 122
        %v3195 = vpop.permute.xlu0 %3194
        %3196 = vrot.lane.b32.xlu0 %v661, 122
        %v3197 = vpop.permute.xlu0 %3196
        %3198 = vrot.lane.b32.xlu0 %v662, 122
        %v3199 = vpop.permute.xlu0 %3198
        %3200 = vrot.lane.b32.xlu0 %v663, 122
        %v3201 = vpop.permute.xlu0 %3200
        %3202 = vrot.lane.b32.xlu0 %v664, 122
        %v3203 = vpop.permute.xlu0 %3202
        %3204 = vrot.lane.b32.xlu0 %v665, 122
        %v3205 = vpop.permute.xlu0 %3204
        %3206 = vrot.lane.b32.xlu0 %v666, 122
        %v3207 = vpop.permute.xlu0 %3206
        %3208 = vrot.lane.b32.xlu0 %v667, 122
        %v3209 = vpop.permute.xlu0 %3208
        %3210 = vrot.lane.b32.xlu0 %v668, 122
        %v3211 = vpop.permute.xlu0 %3210
        %3212 = vrot.lane.b32.xlu0 %v669, 122
        %v3213 = vpop.permute.xlu0 %3212
        %3214 = vrot.lane.b32.xlu0 %v670, 122
        %v3215 = vpop.permute.xlu0 %3214
        %s3248 = scalar_lea.vmem [#allocation4], 48
        %3249 = vst.msk [vmem:[%s3248 + $0x2] sm:$0xff] %vm704, %v3153
        %3250 = vst.msk [vmem:[%s3248 + $0xa] sm:$0xff] %vm704, %v3155
        %3251 = vst.msk [vmem:[%s3248 + $0x1a] sm:$0xff] %vm704, %v3157
        %3252 = vst.msk [vmem:[%s3248 + $0x22] sm:$0xff] %vm704, %v3159
        %3253 = vst.msk [vmem:[%s3248 + $0x32] sm:$0xff] %vm704, %v3161
        %3254 = vst.msk [vmem:[%s3248 + $0x3a] sm:$0xff] %vm704, %v3163
        %3255 = vst.msk [vmem:[%s3248 + $0x4a] sm:$0xff] %vm704, %v3165
        %3256 = vst.msk [vmem:[%s3248 + $0x52] sm:$0xff] %vm704, %v3167
        %3257 = vst.msk [vmem:[%s3248 + $0x62] sm:$0xff] %vm704, %v3169
        %3258 = vst.msk [vmem:[%s3248 + $0x6a] sm:$0xff] %vm704, %v3171
        %3259 = vst.msk [vmem:[%s3248 + $0x7a] sm:$0xff] %vm704, %v3173
        %3260 = vst.msk [vmem:[%s3248 + $0x82] sm:$0xff] %vm704, %v3175
        %3261 = vst.msk [vmem:[%s3248 + $0x92] sm:$0xff] %vm704, %v3177
        %3262 = vst.msk [vmem:[%s3248 + $0x9a] sm:$0xff] %vm704, %v3179
        %3263 = vst.msk [vmem:[%s3248 + $0xaa] sm:$0xff] %vm704, %v3181
        %3264 = vst.msk [vmem:[%s3248 + $0xb2] sm:$0xff] %vm704, %v3183
        %3265 = vst.msk [vmem:[%s3248 + $0xc2] sm:$0xff] %vm704, %v3185
        %3266 = vst.msk [vmem:[%s3248 + $0xca] sm:$0xff] %vm704, %v3187
        %3267 = vst.msk [vmem:[%s3248 + $0xda] sm:$0xff] %vm704, %v3189
        %3268 = vst.msk [vmem:[%s3248 + $0xe2] sm:$0xff] %vm704, %v3191
        %3269 = vst.msk [vmem:[%s3248 + $0xf2] sm:$0xff] %vm704, %v3193
        %3270 = vst.msk [vmem:[%s3248 + $0xfa] sm:$0xff] %vm704, %v3195
        %3271 = vst.msk [vmem:[%s3248 + $0x10a] sm:$0xff] %vm704, %v3197
        %3272 = vst.msk [vmem:[%s3248 + $0x112] sm:$0xff] %vm704, %v3199
        %3273 = vst.msk [vmem:[%s3248 + $0x122] sm:$0xff] %vm704, %v3201
        %3274 = vst.msk [vmem:[%s3248 + $0x12a] sm:$0xff] %vm704, %v3203
        %3275 = vst.msk [vmem:[%s3248 + $0x13a] sm:$0xff] %vm704, %v3205
        %3276 = vst.msk [vmem:[%s3248 + $0x142] sm:$0xff] %vm704, %v3207
        %3277 = vst.msk [vmem:[%s3248 + $0x152] sm:$0xff] %vm704, %v3209
        %3278 = vst.msk [vmem:[%s3248 + $0x15a] sm:$0xff] %vm704, %v3211
        %3279 = vst.msk [vmem:[%s3248 + $0x16a] sm:$0xff] %vm704, %v3213
        %3280 = vst.msk [vmem:[%s3248 + $0x172] sm:$0xff] %vm704, %v3215
        %v3281 = vld [vmem:[#allocation4] sm:$0xff]
        %v3282 = vld [vmem:[#allocation4 + $0x8] sm:$0xff]
        %v3283 = vld [vmem:[#allocation4 + $0x18] sm:$0xff]
        %v3284 = vld [vmem:[#allocation4 + $0x20] sm:$0xff]
        %v3285 = vld [vmem:[#allocation4 + $0x30] sm:$0xff]
        %v3286 = vld [vmem:[#allocation4 + $0x38] sm:$0xff]
        %v3287 = vld [vmem:[#allocation4 + $0x48] sm:$0xff]
        %v3288 = vld [vmem:[#allocation4 + $0x50] sm:$0xff]
        %v3289 = vld [vmem:[#allocation4 + $0x60] sm:$0xff]
        %v3290 = vld [vmem:[#allocation4 + $0x68] sm:$0xff]
        %v3291 = vld [vmem:[#allocation4 + $0x78] sm:$0xff]
        %v3292 = vld [vmem:[#allocation4 + $0x80] sm:$0xff]
        %v3293 = vld [vmem:[#allocation4 + $0x90] sm:$0xff]
        %v3294 = vld [vmem:[#allocation4 + $0x98] sm:$0xff]
        %v3295 = vld [vmem:[#allocation4 + $0xa8] sm:$0xff]
        %v3296 = vld [vmem:[#allocation4 + $0xb0] sm:$0xff]
        %v3297 = vld [vmem:[#allocation4 + $0xc0] sm:$0xff]
        %v3298 = vld [vmem:[#allocation4 + $0xc8] sm:$0xff]
        %v3299 = vld [vmem:[#allocation4 + $0xd8] sm:$0xff]
        %v3300 = vld [vmem:[#allocation4 + $0xe0] sm:$0xff]
        %v3301 = vld [vmem:[#allocation4 + $0xf0] sm:$0xff]
        %v3302 = vld [vmem:[#allocation4 + $0xf8] sm:$0xff]
        %v3303 = vld [vmem:[#allocation4 + $0x108] sm:$0xff]
        %v3304 = vld [vmem:[#allocation4 + $0x110] sm:$0xff]
        %v3305 = vld [vmem:[#allocation4 + $0x120] sm:$0xff]
        %v3306 = vld [vmem:[#allocation4 + $0x128] sm:$0xff]
        %v3307 = vld [vmem:[#allocation4 + $0x138] sm:$0xff]
        %v3308 = vld [vmem:[#allocation4 + $0x140] sm:$0xff]
        %v3309 = vld [vmem:[#allocation4 + $0x150] sm:$0xff]
        %v3310 = vld [vmem:[#allocation4 + $0x158] sm:$0xff]
        %v3311 = vld [vmem:[#allocation4 + $0x168] sm:$0xff]
        %v3312 = vld [vmem:[#allocation4 + $0x170] sm:$0xff]
        %3313 = vst.msk [vmem:[#allocation5] sm:$0xff] %vm704, %v3281
        %3314 = vst.msk [vmem:[#allocation5 + $0x8] sm:$0xff] %vm704, %v3282
        %3315 = vst.msk [vmem:[#allocation5 + $0x10] sm:$0xff] %vm704, %v3283
        %3316 = vst.msk [vmem:[#allocation5 + $0x18] sm:$0xff] %vm704, %v3284
        %3317 = vst.msk [vmem:[#allocation5 + $0x20] sm:$0xff] %vm704, %v3285
        %3318 = vst.msk [vmem:[#allocation5 + $0x28] sm:$0xff] %vm704, %v3286
        %3319 = vst.msk [vmem:[#allocation5 + $0x30] sm:$0xff] %vm704, %v3287
        %3320 = vst.msk [vmem:[#allocation5 + $0x38] sm:$0xff] %vm704, %v3288
        %3321 = vst.msk [vmem:[#allocation5 + $0x40] sm:$0xff] %vm704, %v3289
        %3322 = vst.msk [vmem:[#allocation5 + $0x48] sm:$0xff] %vm704, %v3290
        %3323 = vst.msk [vmem:[#allocation5 + $0x50] sm:$0xff] %vm704, %v3291
        %3324 = vst.msk [vmem:[#allocation5 + $0x58] sm:$0xff] %vm704, %v3292
        %3325 = vst.msk [vmem:[#allocation5 + $0x60] sm:$0xff] %vm704, %v3293
        %3326 = vst.msk [vmem:[#allocation5 + $0x68] sm:$0xff] %vm704, %v3294
        %3327 = vst.msk [vmem:[#allocation5 + $0x70] sm:$0xff] %vm704, %v3295
        %3328 = vst.msk [vmem:[#allocation5 + $0x78] sm:$0xff] %vm704, %v3296
        %3329 = vst.msk [vmem:[#allocation5 + $0x80] sm:$0xff] %vm704, %v3297
        %3330 = vst.msk [vmem:[#allocation5 + $0x88] sm:$0xff] %vm704, %v3298
        %3331 = vst.msk [vmem:[#allocation5 + $0x90] sm:$0xff] %vm704, %v3299
        %3332 = vst.msk [vmem:[#allocation5 + $0x98] sm:$0xff] %vm704, %v3300
        %3333 = vst.msk [vmem:[#allocation5 + $0xa0] sm:$0xff] %vm704, %v3301
        %3334 = vst.msk [vmem:[#allocation5 + $0xa8] sm:$0xff] %vm704, %v3302
        %3335 = vst.msk [vmem:[#allocation5 + $0xb0] sm:$0xff] %vm704, %v3303
        %3336 = vst.msk [vmem:[#allocation5 + $0xb8] sm:$0xff] %vm704, %v3304
        %3337 = vst.msk [vmem:[#allocation5 + $0xc0] sm:$0xff] %vm704, %v3305
        %3338 = vst.msk [vmem:[#allocation5 + $0xc8] sm:$0xff] %vm704, %v3306
        %3339 = vst.msk [vmem:[#allocation5 + $0xd0] sm:$0xff] %vm704, %v3307
        %3340 = vst.msk [vmem:[#allocation5 + $0xd8] sm:$0xff] %vm704, %v3308
        %3341 = vst.msk [vmem:[#allocation5 + $0xe0] sm:$0xff] %vm704, %v3309
        %3342 = vst.msk [vmem:[#allocation5 + $0xe8] sm:$0xff] %vm704, %v3310
        %3343 = vst.msk [vmem:[#allocation5 + $0xf0] sm:$0xff] %vm704, %v3311
        %3344 = vst.msk [vmem:[#allocation5 + $0xf8] sm:$0xff] %vm704, %v3312
        %v3345 = vld [vmem:[#allocation4 + $0x1] sm:$0xff]
        %v3346 = vld [vmem:[#allocation4 + $0x9] sm:$0xff]
        %v3347 = vld [vmem:[#allocation4 + $0x19] sm:$0xff]
        %v3348 = vld [vmem:[#allocation4 + $0x21] sm:$0xff]
        %v3349 = vld [vmem:[#allocation4 + $0x31] sm:$0xff]
        %v3350 = vld [vmem:[#allocation4 + $0x39] sm:$0xff]
        %v3351 = vld [vmem:[#allocation4 + $0x49] sm:$0xff]
        %v3352 = vld [vmem:[#allocation4 + $0x51] sm:$0xff]
        %v3353 = vld [vmem:[#allocation4 + $0x61] sm:$0xff]
        %v3354 = vld [vmem:[#allocation4 + $0x69] sm:$0xff]
        %v3355 = vld [vmem:[#allocation4 + $0x79] sm:$0xff]
        %v3356 = vld [vmem:[#allocation4 + $0x81] sm:$0xff]
        %v3357 = vld [vmem:[#allocation4 + $0x91] sm:$0xff]
        %v3358 = vld [vmem:[#allocation4 + $0x99] sm:$0xff]
        %v3359 = vld [vmem:[#allocation4 + $0xa9] sm:$0xff]
        %v3360 = vld [vmem:[#allocation4 + $0xb1] sm:$0xff]
        %v3361 = vld [vmem:[#allocation4 + $0xc1] sm:$0xff]
        %v3362 = vld [vmem:[#allocation4 + $0xc9] sm:$0xff]
        %v3363 = vld [vmem:[#allocation4 + $0xd9] sm:$0xff]
        %v3364 = vld [vmem:[#allocation4 + $0xe1] sm:$0xff]
        %v3365 = vld [vmem:[#allocation4 + $0xf1] sm:$0xff]
        %v3366 = vld [vmem:[#allocation4 + $0xf9] sm:$0xff]
        %v3367 = vld [vmem:[#allocation4 + $0x109] sm:$0xff]
        %v3368 = vld [vmem:[#allocation4 + $0x111] sm:$0xff]
        %v3369 = vld [vmem:[#allocation4 + $0x121] sm:$0xff]
        %v3370 = vld [vmem:[#allocation4 + $0x129] sm:$0xff]
        %v3371 = vld [vmem:[#allocation4 + $0x139] sm:$0xff]
        %v3372 = vld [vmem:[#allocation4 + $0x141] sm:$0xff]
        %v3373 = vld [vmem:[#allocation4 + $0x151] sm:$0xff]
        %v3374 = vld [vmem:[#allocation4 + $0x159] sm:$0xff]
        %v3375 = vld [vmem:[#allocation4 + $0x169] sm:$0xff]
        %v3376 = vld [vmem:[#allocation4 + $0x171] sm:$0xff]
        %3409 = vrot.lane.b32.xlu0 %v3345, 2
        %v3410 = vpop.permute.xlu0 %3409
        %3411 = vrot.lane.b32.xlu0 %v3346, 2
        %v3412 = vpop.permute.xlu0 %3411
        %3413 = vrot.lane.b32.xlu0 %v3347, 2
        %v3414 = vpop.permute.xlu0 %3413
        %3415 = vrot.lane.b32.xlu0 %v3348, 2
        %v3416 = vpop.permute.xlu0 %3415
        %3417 = vrot.lane.b32.xlu0 %v3349, 2
        %v3418 = vpop.permute.xlu0 %3417
        %3419 = vrot.lane.b32.xlu0 %v3350, 2
        %v3420 = vpop.permute.xlu0 %3419
        %3421 = vrot.lane.b32.xlu0 %v3351, 2
        %v3422 = vpop.permute.xlu0 %3421
        %3423 = vrot.lane.b32.xlu0 %v3352, 2
        %v3424 = vpop.permute.xlu0 %3423
        %3425 = vrot.lane.b32.xlu0 %v3353, 2
        %v3426 = vpop.permute.xlu0 %3425
        %3427 = vrot.lane.b32.xlu0 %v3354, 2
        %v3428 = vpop.permute.xlu0 %3427
        %3429 = vrot.lane.b32.xlu0 %v3355, 2
        %v3430 = vpop.permute.xlu0 %3429
        %3431 = vrot.lane.b32.xlu0 %v3356, 2
        %v3432 = vpop.permute.xlu0 %3431
        %3433 = vrot.lane.b32.xlu0 %v3357, 2
        %v3434 = vpop.permute.xlu0 %3433
        %3435 = vrot.lane.b32.xlu0 %v3358, 2
        %v3436 = vpop.permute.xlu0 %3435
        %3437 = vrot.lane.b32.xlu0 %v3359, 2
        %v3438 = vpop.permute.xlu0 %3437
        %3439 = vrot.lane.b32.xlu0 %v3360, 2
        %v3440 = vpop.permute.xlu0 %3439
        %3441 = vrot.lane.b32.xlu0 %v3361, 2
        %v3442 = vpop.permute.xlu0 %3441
        %3443 = vrot.lane.b32.xlu0 %v3362, 2
        %v3444 = vpop.permute.xlu0 %3443
        %3445 = vrot.lane.b32.xlu0 %v3363, 2
        %v3446 = vpop.permute.xlu0 %3445
        %3447 = vrot.lane.b32.xlu0 %v3364, 2
        %v3448 = vpop.permute.xlu0 %3447
        %3449 = vrot.lane.b32.xlu0 %v3365, 2
        %v3450 = vpop.permute.xlu0 %3449
        %3451 = vrot.lane.b32.xlu0 %v3366, 2
        %v3452 = vpop.permute.xlu0 %3451
        %3453 = vrot.lane.b32.xlu0 %v3367, 2
        %v3454 = vpop.permute.xlu0 %3453
        %3455 = vrot.lane.b32.xlu0 %v3368, 2
        %v3456 = vpop.permute.xlu0 %3455
        %3457 = vrot.lane.b32.xlu0 %v3369, 2
        %v3458 = vpop.permute.xlu0 %3457
        %3459 = vrot.lane.b32.xlu0 %v3370, 2
        %v3460 = vpop.permute.xlu0 %3459
        %3461 = vrot.lane.b32.xlu0 %v3371, 2
        %v3462 = vpop.permute.xlu0 %3461
        %3463 = vrot.lane.b32.xlu0 %v3372, 2
        %v3464 = vpop.permute.xlu0 %3463
        %3465 = vrot.lane.b32.xlu0 %v3373, 2
        %v3466 = vpop.permute.xlu0 %3465
        %3467 = vrot.lane.b32.xlu0 %v3374, 2
        %v3468 = vpop.permute.xlu0 %3467
        %3469 = vrot.lane.b32.xlu0 %v3375, 2
        %v3470 = vpop.permute.xlu0 %3469
        %3471 = vrot.lane.b32.xlu0 %v3376, 2
        %v3472 = vpop.permute.xlu0 %3471
        %3505 = vst.msk [vmem:[#allocation5] sm:$0xff] %vm1145, %v3410
        %3506 = vst.msk [vmem:[#allocation5 + $0x8] sm:$0xff] %vm1145, %v3412
        %3507 = vst.msk [vmem:[#allocation5 + $0x10] sm:$0xff] %vm1145, %v3414
        %3508 = vst.msk [vmem:[#allocation5 + $0x18] sm:$0xff] %vm1145, %v3416
        %3509 = vst.msk [vmem:[#allocation5 + $0x20] sm:$0xff] %vm1145, %v3418
        %3510 = vst.msk [vmem:[#allocation5 + $0x28] sm:$0xff] %vm1145, %v3420
        %3511 = vst.msk [vmem:[#allocation5 + $0x30] sm:$0xff] %vm1145, %v3422
        %3512 = vst.msk [vmem:[#allocation5 + $0x38] sm:$0xff] %vm1145, %v3424
        %3513 = vst.msk [vmem:[#allocation5 + $0x40] sm:$0xff] %vm1145, %v3426
        %3514 = vst.msk [vmem:[#allocation5 + $0x48] sm:$0xff] %vm1145, %v3428
        %3515 = vst.msk [vmem:[#allocation5 + $0x50] sm:$0xff] %vm1145, %v3430
        %3516 = vst.msk [vmem:[#allocation5 + $0x58] sm:$0xff] %vm1145, %v3432
        %3517 = vst.msk [vmem:[#allocation5 + $0x60] sm:$0xff] %vm1145, %v3434
        %3518 = vst.msk [vmem:[#allocation5 + $0x68] sm:$0xff] %vm1145, %v3436
        %3519 = vst.msk [vmem:[#allocation5 + $0x70] sm:$0xff] %vm1145, %v3438
        %3520 = vst.msk [vmem:[#allocation5 + $0x78] sm:$0xff] %vm1145, %v3440
        %3521 = vst.msk [vmem:[#allocation5 + $0x80] sm:$0xff] %vm1145, %v3442
        %3522 = vst.msk [vmem:[#allocation5 + $0x88] sm:$0xff] %vm1145, %v3444
        %3523 = vst.msk [vmem:[#allocation5 + $0x90] sm:$0xff] %vm1145, %v3446
        %3524 = vst.msk [vmem:[#allocation5 + $0x98] sm:$0xff] %vm1145, %v3448
        %3525 = vst.msk [vmem:[#allocation5 + $0xa0] sm:$0xff] %vm1145, %v3450
        %3526 = vst.msk [vmem:[#allocation5 + $0xa8] sm:$0xff] %vm1145, %v3452
        %3527 = vst.msk [vmem:[#allocation5 + $0xb0] sm:$0xff] %vm1145, %v3454
        %3528 = vst.msk [vmem:[#allocation5 + $0xb8] sm:$0xff] %vm1145, %v3456
        %3529 = vst.msk [vmem:[#allocation5 + $0xc0] sm:$0xff] %vm1145, %v3458
        %3530 = vst.msk [vmem:[#allocation5 + $0xc8] sm:$0xff] %vm1145, %v3460
        %3531 = vst.msk [vmem:[#allocation5 + $0xd0] sm:$0xff] %vm1145, %v3462
        %3532 = vst.msk [vmem:[#allocation5 + $0xd8] sm:$0xff] %vm1145, %v3464
        %3533 = vst.msk [vmem:[#allocation5 + $0xe0] sm:$0xff] %vm1145, %v3466
        %3534 = vst.msk [vmem:[#allocation5 + $0xe8] sm:$0xff] %vm1145, %v3468
        %3535 = vst.msk [vmem:[#allocation5 + $0xf0] sm:$0xff] %vm1145, %v3470
        %3536 = vst.msk [vmem:[#allocation5 + $0xf8] sm:$0xff] %vm1145, %v3472
        %v3537 = vld [vmem:[#allocation4 + $0x2] sm:$0xff]
        %v3538 = vld [vmem:[#allocation4 + $0xa] sm:$0xff]
        %v3539 = vld [vmem:[#allocation4 + $0x1a] sm:$0xff]
        %v3540 = vld [vmem:[#allocation4 + $0x22] sm:$0xff]
        %v3541 = vld [vmem:[#allocation4 + $0x32] sm:$0xff]
        %v3542 = vld [vmem:[#allocation4 + $0x3a] sm:$0xff]
        %v3543 = vld [vmem:[#allocation4 + $0x4a] sm:$0xff]
        %v3544 = vld [vmem:[#allocation4 + $0x52] sm:$0xff]
        %v3545 = vld [vmem:[#allocation4 + $0x62] sm:$0xff]
        %v3546 = vld [vmem:[#allocation4 + $0x6a] sm:$0xff]
        %v3547 = vld [vmem:[#allocation4 + $0x7a] sm:$0xff]
        %v3548 = vld [vmem:[#allocation4 + $0x82] sm:$0xff]
        %v3549 = vld [vmem:[#allocation4 + $0x92] sm:$0xff]
        %v3550 = vld [vmem:[#allocation4 + $0x9a] sm:$0xff]
        %v3551 = vld [vmem:[#allocation4 + $0xaa] sm:$0xff]
        %v3552 = vld [vmem:[#allocation4 + $0xb2] sm:$0xff]
        %v3553 = vld [vmem:[#allocation4 + $0xc2] sm:$0xff]
        %v3554 = vld [vmem:[#allocation4 + $0xca] sm:$0xff]
        %v3555 = vld [vmem:[#allocation4 + $0xda] sm:$0xff]
        %v3556 = vld [vmem:[#allocation4 + $0xe2] sm:$0xff]
        %v3557 = vld [vmem:[#allocation4 + $0xf2] sm:$0xff]
        %v3558 = vld [vmem:[#allocation4 + $0xfa] sm:$0xff]
        %v3559 = vld [vmem:[#allocation4 + $0x10a] sm:$0xff]
        %v3560 = vld [vmem:[#allocation4 + $0x112] sm:$0xff]
        %v3561 = vld [vmem:[#allocation4 + $0x122] sm:$0xff]
        %v3562 = vld [vmem:[#allocation4 + $0x12a] sm:$0xff]
        %v3563 = vld [vmem:[#allocation4 + $0x13a] sm:$0xff]
        %v3564 = vld [vmem:[#allocation4 + $0x142] sm:$0xff]
        %v3565 = vld [vmem:[#allocation4 + $0x152] sm:$0xff]
        %v3566 = vld [vmem:[#allocation4 + $0x15a] sm:$0xff]
        %v3567 = vld [vmem:[#allocation4 + $0x16a] sm:$0xff]
        %v3568 = vld [vmem:[#allocation4 + $0x172] sm:$0xff]
        %3601 = vrot.lane.b32.xlu0 %v3537, 4
        %v3602 = vpop.permute.xlu0 %3601
        %3603 = vrot.lane.b32.xlu0 %v3538, 4
        %v3604 = vpop.permute.xlu0 %3603
        %3605 = vrot.lane.b32.xlu0 %v3539, 4
        %v3606 = vpop.permute.xlu0 %3605
        %3607 = vrot.lane.b32.xlu0 %v3540, 4
        %v3608 = vpop.permute.xlu0 %3607
        %3609 = vrot.lane.b32.xlu0 %v3541, 4
        %v3610 = vpop.permute.xlu0 %3609
        %3611 = vrot.lane.b32.xlu0 %v3542, 4
        %v3612 = vpop.permute.xlu0 %3611
        %3613 = vrot.lane.b32.xlu0 %v3543, 4
        %v3614 = vpop.permute.xlu0 %3613
        %3615 = vrot.lane.b32.xlu0 %v3544, 4
        %v3616 = vpop.permute.xlu0 %3615
        %3617 = vrot.lane.b32.xlu0 %v3545, 4
        %v3618 = vpop.permute.xlu0 %3617
        %3619 = vrot.lane.b32.xlu0 %v3546, 4
        %v3620 = vpop.permute.xlu0 %3619
        %3621 = vrot.lane.b32.xlu0 %v3547, 4
        %v3622 = vpop.permute.xlu0 %3621
        %3623 = vrot.lane.b32.xlu0 %v3548, 4
        %v3624 = vpop.permute.xlu0 %3623
        %3625 = vrot.lane.b32.xlu0 %v3549, 4
        %v3626 = vpop.permute.xlu0 %3625
        %3627 = vrot.lane.b32.xlu0 %v3550, 4
        %v3628 = vpop.permute.xlu0 %3627
        %3629 = vrot.lane.b32.xlu0 %v3551, 4
        %v3630 = vpop.permute.xlu0 %3629
        %3631 = vrot.lane.b32.xlu0 %v3552, 4
        %v3632 = vpop.permute.xlu0 %3631
        %3633 = vrot.lane.b32.xlu0 %v3553, 4
        %v3634 = vpop.permute.xlu0 %3633
        %3635 = vrot.lane.b32.xlu0 %v3554, 4
        %v3636 = vpop.permute.xlu0 %3635
        %3637 = vrot.lane.b32.xlu0 %v3555, 4
        %v3638 = vpop.permute.xlu0 %3637
        %3639 = vrot.lane.b32.xlu0 %v3556, 4
        %v3640 = vpop.permute.xlu0 %3639
        %3641 = vrot.lane.b32.xlu0 %v3557, 4
        %v3642 = vpop.permute.xlu0 %3641
        %3643 = vrot.lane.b32.xlu0 %v3558, 4
        %v3644 = vpop.permute.xlu0 %3643
        %3645 = vrot.lane.b32.xlu0 %v3559, 4
        %v3646 = vpop.permute.xlu0 %3645
        %3647 = vrot.lane.b32.xlu0 %v3560, 4
        %v3648 = vpop.permute.xlu0 %3647
        %3649 = vrot.lane.b32.xlu0 %v3561, 4
        %v3650 = vpop.permute.xlu0 %3649
        %3651 = vrot.lane.b32.xlu0 %v3562, 4
        %v3652 = vpop.permute.xlu0 %3651
        %3653 = vrot.lane.b32.xlu0 %v3563, 4
        %v3654 = vpop.permute.xlu0 %3653
        %3655 = vrot.lane.b32.xlu0 %v3564, 4
        %v3656 = vpop.permute.xlu0 %3655
        %3657 = vrot.lane.b32.xlu0 %v3565, 4
        %v3658 = vpop.permute.xlu0 %3657
        %3659 = vrot.lane.b32.xlu0 %v3566, 4
        %v3660 = vpop.permute.xlu0 %3659
        %3661 = vrot.lane.b32.xlu0 %v3567, 4
        %v3662 = vpop.permute.xlu0 %3661
        %3663 = vrot.lane.b32.xlu0 %v3568, 4
        %v3664 = vpop.permute.xlu0 %3663
        %3697 = vst.msk [vmem:[#allocation5] sm:$0xff] %vm1338, %v3602
        %3698 = vst.msk [vmem:[#allocation5 + $0x8] sm:$0xff] %vm1338, %v3604
        %3699 = vst.msk [vmem:[#allocation5 + $0x10] sm:$0xff] %vm1338, %v3606
        %3700 = vst.msk [vmem:[#allocation5 + $0x18] sm:$0xff] %vm1338, %v3608
        %3701 = vst.msk [vmem:[#allocation5 + $0x20] sm:$0xff] %vm1338, %v3610
        %3702 = vst.msk [vmem:[#allocation5 + $0x28] sm:$0xff] %vm1338, %v3612
        %3703 = vst.msk [vmem:[#allocation5 + $0x30] sm:$0xff] %vm1338, %v3614
        %3704 = vst.msk [vmem:[#allocation5 + $0x38] sm:$0xff] %vm1338, %v3616
        %3705 = vst.msk [vmem:[#allocation5 + $0x40] sm:$0xff] %vm1338, %v3618
        %3706 = vst.msk [vmem:[#allocation5 + $0x48] sm:$0xff] %vm1338, %v3620
        %3707 = vst.msk [vmem:[#allocation5 + $0x50] sm:$0xff] %vm1338, %v3622
        %3708 = vst.msk [vmem:[#allocation5 + $0x58] sm:$0xff] %vm1338, %v3624
        %3709 = vst.msk [vmem:[#allocation5 + $0x60] sm:$0xff] %vm1338, %v3626
        %3710 = vst.msk [vmem:[#allocation5 + $0x68] sm:$0xff] %vm1338, %v3628
        %3711 = vst.msk [vmem:[#allocation5 + $0x70] sm:$0xff] %vm1338, %v3630
        %3712 = vst.msk [vmem:[#allocation5 + $0x78] sm:$0xff] %vm1338, %v3632
        %3713 = vst.msk [vmem:[#allocation5 + $0x80] sm:$0xff] %vm1338, %v3634
        %3714 = vst.msk [vmem:[#allocation5 + $0x88] sm:$0xff] %vm1338, %v3636
        %3715 = vst.msk [vmem:[#allocation5 + $0x90] sm:$0xff] %vm1338, %v3638
        %3716 = vst.msk [vmem:[#allocation5 + $0x98] sm:$0xff] %vm1338, %v3640
        %3717 = vst.msk [vmem:[#allocation5 + $0xa0] sm:$0xff] %vm1338, %v3642
        %3718 = vst.msk [vmem:[#allocation5 + $0xa8] sm:$0xff] %vm1338, %v3644
        %3719 = vst.msk [vmem:[#allocation5 + $0xb0] sm:$0xff] %vm1338, %v3646
        %3720 = vst.msk [vmem:[#allocation5 + $0xb8] sm:$0xff] %vm1338, %v3648
        %3721 = vst.msk [vmem:[#allocation5 + $0xc0] sm:$0xff] %vm1338, %v3650
        %3722 = vst.msk [vmem:[#allocation5 + $0xc8] sm:$0xff] %vm1338, %v3652
        %3723 = vst.msk [vmem:[#allocation5 + $0xd0] sm:$0xff] %vm1338, %v3654
        %3724 = vst.msk [vmem:[#allocation5 + $0xd8] sm:$0xff] %vm1338, %v3656
        %3725 = vst.msk [vmem:[#allocation5 + $0xe0] sm:$0xff] %vm1338, %v3658
        %3726 = vst.msk [vmem:[#allocation5 + $0xe8] sm:$0xff] %vm1338, %v3660
        %3727 = vst.msk [vmem:[#allocation5 + $0xf0] sm:$0xff] %vm1338, %v3662
        %3728 = vst.msk [vmem:[#allocation5 + $0xf8] sm:$0xff] %vm1338, %v3664
        %v3729 = vld [vmem:[#allocation4 + $0x3] sm:$0xff]
        %v3730 = vld [vmem:[#allocation4 + $0xb] sm:$0xff]
        %v3731 = vld [vmem:[#allocation4 + $0x1b] sm:$0xff]
        %v3732 = vld [vmem:[#allocation4 + $0x23] sm:$0xff]
        %v3733 = vld [vmem:[#allocation4 + $0x33] sm:$0xff]
        %v3734 = vld [vmem:[#allocation4 + $0x3b] sm:$0xff]
        %v3735 = vld [vmem:[#allocation4 + $0x4b] sm:$0xff]
        %v3736 = vld [vmem:[#allocation4 + $0x53] sm:$0xff]
        %v3737 = vld [vmem:[#allocation4 + $0x63] sm:$0xff]
        %v3738 = vld [vmem:[#allocation4 + $0x6b] sm:$0xff]
        %v3739 = vld [vmem:[#allocation4 + $0x7b] sm:$0xff]
        %v3740 = vld [vmem:[#allocation4 + $0x83] sm:$0xff]
        %v3741 = vld [vmem:[#allocation4 + $0x93] sm:$0xff]
        %v3742 = vld [vmem:[#allocation4 + $0x9b] sm:$0xff]
        %v3743 = vld [vmem:[#allocation4 + $0xab] sm:$0xff]
        %v3744 = vld [vmem:[#allocation4 + $0xb3] sm:$0xff]
        %v3745 = vld [vmem:[#allocation4 + $0xc3] sm:$0xff]
        %v3746 = vld [vmem:[#allocation4 + $0xcb] sm:$0xff]
        %v3747 = vld [vmem:[#allocation4 + $0xdb] sm:$0xff]
        %v3748 = vld [vmem:[#allocation4 + $0xe3] sm:$0xff]
        %v3749 = vld [vmem:[#allocation4 + $0xf3] sm:$0xff]
        %v3750 = vld [vmem:[#allocation4 + $0xfb] sm:$0xff]
        %v3751 = vld [vmem:[#allocation4 + $0x10b] sm:$0xff]
        %v3752 = vld [vmem:[#allocation4 + $0x113] sm:$0xff]
        %v3753 = vld [vmem:[#allocation4 + $0x123] sm:$0xff]
        %v3754 = vld [vmem:[#allocation4 + $0x12b] sm:$0xff]
        %v3755 = vld [vmem:[#allocation4 + $0x13b] sm:$0xff]
        %v3756 = vld [vmem:[#allocation4 + $0x143] sm:$0xff]
        %v3757 = vld [vmem:[#allocation4 + $0x153] sm:$0xff]
        %v3758 = vld [vmem:[#allocation4 + $0x15b] sm:$0xff]
        %v3759 = vld [vmem:[#allocation4 + $0x16b] sm:$0xff]
        %v3760 = vld [vmem:[#allocation4 + $0x173] sm:$0xff]
        %3793 = vrot.lane.b32.xlu0 %v3729, 6
        %v3794 = vpop.permute.xlu0 %3793
        %3795 = vrot.lane.b32.xlu0 %v3730, 6
        %v3796 = vpop.permute.xlu0 %3795
        %3797 = vrot.lane.b32.xlu0 %v3731, 6
        %v3798 = vpop.permute.xlu0 %3797
        %3799 = vrot.lane.b32.xlu0 %v3732, 6
        %v3800 = vpop.permute.xlu0 %3799
        %3801 = vrot.lane.b32.xlu0 %v3733, 6
        %v3802 = vpop.permute.xlu0 %3801
        %3803 = vrot.lane.b32.xlu0 %v3734, 6
        %v3804 = vpop.permute.xlu0 %3803
        %3805 = vrot.lane.b32.xlu0 %v3735, 6
        %v3806 = vpop.permute.xlu0 %3805
        %3807 = vrot.lane.b32.xlu0 %v3736, 6
        %v3808 = vpop.permute.xlu0 %3807
        %3809 = vrot.lane.b32.xlu0 %v3737, 6
        %v3810 = vpop.permute.xlu0 %3809
        %3811 = vrot.lane.b32.xlu0 %v3738, 6
        %v3812 = vpop.permute.xlu0 %3811
        %3813 = vrot.lane.b32.xlu0 %v3739, 6
        %v3814 = vpop.permute.xlu0 %3813
        %3815 = vrot.lane.b32.xlu0 %v3740, 6
        %v3816 = vpop.permute.xlu0 %3815
        %3817 = vrot.lane.b32.xlu0 %v3741, 6
        %v3818 = vpop.permute.xlu0 %3817
        %3819 = vrot.lane.b32.xlu0 %v3742, 6
        %v3820 = vpop.permute.xlu0 %3819
        %3821 = vrot.lane.b32.xlu0 %v3743, 6
        %v3822 = vpop.permute.xlu0 %3821
        %3823 = vrot.lane.b32.xlu0 %v3744, 6
        %v3824 = vpop.permute.xlu0 %3823
        %3825 = vrot.lane.b32.xlu0 %v3745, 6
        %v3826 = vpop.permute.xlu0 %3825
        %3827 = vrot.lane.b32.xlu0 %v3746, 6
        %v3828 = vpop.permute.xlu0 %3827
        %3829 = vrot.lane.b32.xlu0 %v3747, 6
        %v3830 = vpop.permute.xlu0 %3829
        %3831 = vrot.lane.b32.xlu0 %v3748, 6
        %v3832 = vpop.permute.xlu0 %3831
        %3833 = vrot.lane.b32.xlu0 %v3749, 6
        %v3834 = vpop.permute.xlu0 %3833
        %3835 = vrot.lane.b32.xlu0 %v3750, 6
        %v3836 = vpop.permute.xlu0 %3835
        %3837 = vrot.lane.b32.xlu0 %v3751, 6
        %v3838 = vpop.permute.xlu0 %3837
        %3839 = vrot.lane.b32.xlu0 %v3752, 6
        %v3840 = vpop.permute.xlu0 %3839
        %3841 = vrot.lane.b32.xlu0 %v3753, 6
        %v3842 = vpop.permute.xlu0 %3841
        %3843 = vrot.lane.b32.xlu0 %v3754, 6
        %v3844 = vpop.permute.xlu0 %3843
        %3845 = vrot.lane.b32.xlu0 %v3755, 6
        %v3846 = vpop.permute.xlu0 %3845
        %3847 = vrot.lane.b32.xlu0 %v3756, 6
        %v3848 = vpop.permute.xlu0 %3847
        %3849 = vrot.lane.b32.xlu0 %v3757, 6
        %v3850 = vpop.permute.xlu0 %3849
        %3851 = vrot.lane.b32.xlu0 %v3758, 6
        %v3852 = vpop.permute.xlu0 %3851
        %3853 = vrot.lane.b32.xlu0 %v3759, 6
        %v3854 = vpop.permute.xlu0 %3853
        %3855 = vrot.lane.b32.xlu0 %v3760, 6
        %v3856 = vpop.permute.xlu0 %3855
        %3889 = vst.msk [vmem:[#allocation5] sm:$0xff] %vm1531, %v3794
        %3890 = vst.msk [vmem:[#allocation5 + $0x8] sm:$0xff] %vm1531, %v3796
        %3891 = vst.msk [vmem:[#allocation5 + $0x10] sm:$0xff] %vm1531, %v3798
        %3892 = vst.msk [vmem:[#allocation5 + $0x18] sm:$0xff] %vm1531, %v3800
        %3893 = vst.msk [vmem:[#allocation5 + $0x20] sm:$0xff] %vm1531, %v3802
        %3894 = vst.msk [vmem:[#allocation5 + $0x28] sm:$0xff] %vm1531, %v3804
        %3895 = vst.msk [vmem:[#allocation5 + $0x30] sm:$0xff] %vm1531, %v3806
        %3896 = vst.msk [vmem:[#allocation5 + $0x38] sm:$0xff] %vm1531, %v3808
        %3897 = vst.msk [vmem:[#allocation5 + $0x40] sm:$0xff] %vm1531, %v3810
        %3898 = vst.msk [vmem:[#allocation5 + $0x48] sm:$0xff] %vm1531, %v3812
        %3899 = vst.msk [vmem:[#allocation5 + $0x50] sm:$0xff] %vm1531, %v3814
        %3900 = vst.msk [vmem:[#allocation5 + $0x58] sm:$0xff] %vm1531, %v3816
        %3901 = vst.msk [vmem:[#allocation5 + $0x60] sm:$0xff] %vm1531, %v3818
        %3902 = vst.msk [vmem:[#allocation5 + $0x68] sm:$0xff] %vm1531, %v3820
        %3903 = vst.msk [vmem:[#allocation5 + $0x70] sm:$0xff] %vm1531, %v3822
        %3904 = vst.msk [vmem:[#allocation5 + $0x78] sm:$0xff] %vm1531, %v3824
        %3905 = vst.msk [vmem:[#allocation5 + $0x80] sm:$0xff] %vm1531, %v3826
        %3906 = vst.msk [vmem:[#allocation5 + $0x88] sm:$0xff] %vm1531, %v3828
        %3907 = vst.msk [vmem:[#allocation5 + $0x90] sm:$0xff] %vm1531, %v3830
        %3908 = vst.msk [vmem:[#allocation5 + $0x98] sm:$0xff] %vm1531, %v3832
        %3909 = vst.msk [vmem:[#allocation5 + $0xa0] sm:$0xff] %vm1531, %v3834
        %3910 = vst.msk [vmem:[#allocation5 + $0xa8] sm:$0xff] %vm1531, %v3836
        %3911 = vst.msk [vmem:[#allocation5 + $0xb0] sm:$0xff] %vm1531, %v3838
        %3912 = vst.msk [vmem:[#allocation5 + $0xb8] sm:$0xff] %vm1531, %v3840
        %3913 = vst.msk [vmem:[#allocation5 + $0xc0] sm:$0xff] %vm1531, %v3842
        %3914 = vst.msk [vmem:[#allocation5 + $0xc8] sm:$0xff] %vm1531, %v3844
        %3915 = vst.msk [vmem:[#allocation5 + $0xd0] sm:$0xff] %vm1531, %v3846
        %3916 = vst.msk [vmem:[#allocation5 + $0xd8] sm:$0xff] %vm1531, %v3848
        %3917 = vst.msk [vmem:[#allocation5 + $0xe0] sm:$0xff] %vm1531, %v3850
        %3918 = vst.msk [vmem:[#allocation5 + $0xe8] sm:$0xff] %vm1531, %v3852
        %3919 = vst.msk [vmem:[#allocation5 + $0xf0] sm:$0xff] %vm1531, %v3854
        %3920 = vst.msk [vmem:[#allocation5 + $0xf8] sm:$0xff] %vm1531, %v3856
        %v3921 = vld [vmem:[#allocation4 + $0x4] sm:$0xff]
        %v3922 = vld [vmem:[#allocation4 + $0xc] sm:$0xff]
        %v3923 = vld [vmem:[#allocation4 + $0x1c] sm:$0xff]
        %v3924 = vld [vmem:[#allocation4 + $0x24] sm:$0xff]
        %v3925 = vld [vmem:[#allocation4 + $0x34] sm:$0xff]
        %v3926 = vld [vmem:[#allocation4 + $0x3c] sm:$0xff]
        %v3927 = vld [vmem:[#allocation4 + $0x4c] sm:$0xff]
        %v3928 = vld [vmem:[#allocation4 + $0x54] sm:$0xff]
        %v3929 = vld [vmem:[#allocation4 + $0x64] sm:$0xff]
        %v3930 = vld [vmem:[#allocation4 + $0x6c] sm:$0xff]
        %v3931 = vld [vmem:[#allocation4 + $0x7c] sm:$0xff]
        %v3932 = vld [vmem:[#allocation4 + $0x84] sm:$0xff]
        %v3933 = vld [vmem:[#allocation4 + $0x94] sm:$0xff]
        %v3934 = vld [vmem:[#allocation4 + $0x9c] sm:$0xff]
        %v3935 = vld [vmem:[#allocation4 + $0xac] sm:$0xff]
        %v3936 = vld [vmem:[#allocation4 + $0xb4] sm:$0xff]
        %v3937 = vld [vmem:[#allocation4 + $0xc4] sm:$0xff]
        %v3938 = vld [vmem:[#allocation4 + $0xcc] sm:$0xff]
        %v3939 = vld [vmem:[#allocation4 + $0xdc] sm:$0xff]
        %v3940 = vld [vmem:[#allocation4 + $0xe4] sm:$0xff]
        %v3941 = vld [vmem:[#allocation4 + $0xf4] sm:$0xff]
        %v3942 = vld [vmem:[#allocation4 + $0xfc] sm:$0xff]
        %v3943 = vld [vmem:[#allocation4 + $0x10c] sm:$0xff]
        %v3944 = vld [vmem:[#allocation4 + $0x114] sm:$0xff]
        %v3945 = vld [vmem:[#allocation4 + $0x124] sm:$0xff]
        %v3946 = vld [vmem:[#allocation4 + $0x12c] sm:$0xff]
        %v3947 = vld [vmem:[#allocation4 + $0x13c] sm:$0xff]
        %v3948 = vld [vmem:[#allocation4 + $0x144] sm:$0xff]
        %v3949 = vld [vmem:[#allocation4 + $0x154] sm:$0xff]
        %v3950 = vld [vmem:[#allocation4 + $0x15c] sm:$0xff]
        %v3951 = vld [vmem:[#allocation4 + $0x16c] sm:$0xff]
        %v3952 = vld [vmem:[#allocation4 + $0x174] sm:$0xff]
        %3985 = vrot.lane.b32.xlu0 %v3921, 8
        %v3986 = vpop.permute.xlu0 %3985
        %3987 = vrot.lane.b32.xlu0 %v3922, 8
        %v3988 = vpop.permute.xlu0 %3987
        %3989 = vrot.lane.b32.xlu0 %v3923, 8
        %v3990 = vpop.permute.xlu0 %3989
        %3991 = vrot.lane.b32.xlu0 %v3924, 8
        %v3992 = vpop.permute.xlu0 %3991
        %3993 = vrot.lane.b32.xlu0 %v3925, 8
        %v3994 = vpop.permute.xlu0 %3993
        %3995 = vrot.lane.b32.xlu0 %v3926, 8
        %v3996 = vpop.permute.xlu0 %3995
        %3997 = vrot.lane.b32.xlu0 %v3927, 8
        %v3998 = vpop.permute.xlu0 %3997
        %3999 = vrot.lane.b32.xlu0 %v3928, 8
        %v4000 = vpop.permute.xlu0 %3999
        %4001 = vrot.lane.b32.xlu0 %v3929, 8
        %v4002 = vpop.permute.xlu0 %4001
        %4003 = vrot.lane.b32.xlu0 %v3930, 8
        %v4004 = vpop.permute.xlu0 %4003
        %4005 = vrot.lane.b32.xlu0 %v3931, 8
        %v4006 = vpop.permute.xlu0 %4005
        %4007 = vrot.lane.b32.xlu0 %v3932, 8
        %v4008 = vpop.permute.xlu0 %4007
        %4009 = vrot.lane.b32.xlu0 %v3933, 8
        %v4010 = vpop.permute.xlu0 %4009
        %4011 = vrot.lane.b32.xlu0 %v3934, 8
        %v4012 = vpop.permute.xlu0 %4011
        %4013 = vrot.lane.b32.xlu0 %v3935, 8
        %v4014 = vpop.permute.xlu0 %4013
        %4015 = vrot.lane.b32.xlu0 %v3936, 8
        %v4016 = vpop.permute.xlu0 %4015
        %4017 = vrot.lane.b32.xlu0 %v3937, 8
        %v4018 = vpop.permute.xlu0 %4017
        %4019 = vrot.lane.b32.xlu0 %v3938, 8
        %v4020 = vpop.permute.xlu0 %4019
        %4021 = vrot.lane.b32.xlu0 %v3939, 8
        %v4022 = vpop.permute.xlu0 %4021
        %4023 = vrot.lane.b32.xlu0 %v3940, 8
        %v4024 = vpop.permute.xlu0 %4023
        %4025 = vrot.lane.b32.xlu0 %v3941, 8
        %v4026 = vpop.permute.xlu0 %4025
        %4027 = vrot.lane.b32.xlu0 %v3942, 8
        %v4028 = vpop.permute.xlu0 %4027
        %4029 = vrot.lane.b32.xlu0 %v3943, 8
        %v4030 = vpop.permute.xlu0 %4029
        %4031 = vrot.lane.b32.xlu0 %v3944, 8
        %v4032 = vpop.permute.xlu0 %4031
        %4033 = vrot.lane.b32.xlu0 %v3945, 8
        %v4034 = vpop.permute.xlu0 %4033
        %4035 = vrot.lane.b32.xlu0 %v3946, 8
        %v4036 = vpop.permute.xlu0 %4035
        %4037 = vrot.lane.b32.xlu0 %v3947, 8
        %v4038 = vpop.permute.xlu0 %4037
        %4039 = vrot.lane.b32.xlu0 %v3948, 8
        %v4040 = vpop.permute.xlu0 %4039
        %4041 = vrot.lane.b32.xlu0 %v3949, 8
        %v4042 = vpop.permute.xlu0 %4041
        %4043 = vrot.lane.b32.xlu0 %v3950, 8
        %v4044 = vpop.permute.xlu0 %4043
        %4045 = vrot.lane.b32.xlu0 %v3951, 8
        %v4046 = vpop.permute.xlu0 %4045
        %4047 = vrot.lane.b32.xlu0 %v3952, 8
        %v4048 = vpop.permute.xlu0 %4047
        %4081 = vst.msk [vmem:[#allocation5] sm:$0xff] %vm1724, %v3986
        %4082 = vst.msk [vmem:[#allocation5 + $0x8] sm:$0xff] %vm1724, %v3988
        %4083 = vst.msk [vmem:[#allocation5 + $0x10] sm:$0xff] %vm1724, %v3990
        %4084 = vst.msk [vmem:[#allocation5 + $0x18] sm:$0xff] %vm1724, %v3992
        %4085 = vst.msk [vmem:[#allocation5 + $0x20] sm:$0xff] %vm1724, %v3994
        %4086 = vst.msk [vmem:[#allocation5 + $0x28] sm:$0xff] %vm1724, %v3996
        %4087 = vst.msk [vmem:[#allocation5 + $0x30] sm:$0xff] %vm1724, %v3998
        %4088 = vst.msk [vmem:[#allocation5 + $0x38] sm:$0xff] %vm1724, %v4000
        %4089 = vst.msk [vmem:[#allocation5 + $0x40] sm:$0xff] %vm1724, %v4002
        %4090 = vst.msk [vmem:[#allocation5 + $0x48] sm:$0xff] %vm1724, %v4004
        %4091 = vst.msk [vmem:[#allocation5 + $0x50] sm:$0xff] %vm1724, %v4006
        %4092 = vst.msk [vmem:[#allocation5 + $0x58] sm:$0xff] %vm1724, %v4008
        %4093 = vst.msk [vmem:[#allocation5 + $0x60] sm:$0xff] %vm1724, %v4010
        %4094 = vst.msk [vmem:[#allocation5 + $0x68] sm:$0xff] %vm1724, %v4012
        %4095 = vst.msk [vmem:[#allocation5 + $0x70] sm:$0xff] %vm1724, %v4014
        %4096 = vst.msk [vmem:[#allocation5 + $0x78] sm:$0xff] %vm1724, %v4016
        %4097 = vst.msk [vmem:[#allocation5 + $0x80] sm:$0xff] %vm1724, %v4018
        %4098 = vst.msk [vmem:[#allocation5 + $0x88] sm:$0xff] %vm1724, %v4020
        %4099 = vst.msk [vmem:[#allocation5 + $0x90] sm:$0xff] %vm1724, %v4022
        %4100 = vst.msk [vmem:[#allocation5 + $0x98] sm:$0xff] %vm1724, %v4024
        %4101 = vst.msk [vmem:[#allocation5 + $0xa0] sm:$0xff] %vm1724, %v4026
        %4102 = vst.msk [vmem:[#allocation5 + $0xa8] sm:$0xff] %vm1724, %v4028
        %4103 = vst.msk [vmem:[#allocation5 + $0xb0] sm:$0xff] %vm1724, %v4030
        %4104 = vst.msk [vmem:[#allocation5 + $0xb8] sm:$0xff] %vm1724, %v4032
        %4105 = vst.msk [vmem:[#allocation5 + $0xc0] sm:$0xff] %vm1724, %v4034
        %4106 = vst.msk [vmem:[#allocation5 + $0xc8] sm:$0xff] %vm1724, %v4036
        %4107 = vst.msk [vmem:[#allocation5 + $0xd0] sm:$0xff] %vm1724, %v4038
        %4108 = vst.msk [vmem:[#allocation5 + $0xd8] sm:$0xff] %vm1724, %v4040
        %4109 = vst.msk [vmem:[#allocation5 + $0xe0] sm:$0xff] %vm1724, %v4042
        %4110 = vst.msk [vmem:[#allocation5 + $0xe8] sm:$0xff] %vm1724, %v4044
        %4111 = vst.msk [vmem:[#allocation5 + $0xf0] sm:$0xff] %vm1724, %v4046
        %4112 = vst.msk [vmem:[#allocation5 + $0xf8] sm:$0xff] %vm1724, %v4048
        %s4113 = scalar_lea.vmem [#allocation4], 24
        %v4114 = vld [vmem:[%s4113] sm:$0xff]
        %v4115 = vld [vmem:[%s4113 + $0x8] sm:$0xff]
        %v4116 = vld [vmem:[%s4113 + $0x18] sm:$0xff]
        %v4117 = vld [vmem:[%s4113 + $0x20] sm:$0xff]
        %v4118 = vld [vmem:[%s4113 + $0x30] sm:$0xff]
        %v4119 = vld [vmem:[%s4113 + $0x38] sm:$0xff]
        %v4120 = vld [vmem:[%s4113 + $0x48] sm:$0xff]
        %v4121 = vld [vmem:[%s4113 + $0x50] sm:$0xff]
        %v4122 = vld [vmem:[%s4113 + $0x60] sm:$0xff]
        %v4123 = vld [vmem:[%s4113 + $0x68] sm:$0xff]
        %v4124 = vld [vmem:[%s4113 + $0x78] sm:$0xff]
        %v4125 = vld [vmem:[%s4113 + $0x80] sm:$0xff]
        %v4126 = vld [vmem:[%s4113 + $0x90] sm:$0xff]
        %v4127 = vld [vmem:[%s4113 + $0x98] sm:$0xff]
        %v4128 = vld [vmem:[%s4113 + $0xa8] sm:$0xff]
        %v4129 = vld [vmem:[%s4113 + $0xb0] sm:$0xff]
        %v4130 = vld [vmem:[%s4113 + $0xc0] sm:$0xff]
        %v4131 = vld [vmem:[%s4113 + $0xc8] sm:$0xff]
        %v4132 = vld [vmem:[%s4113 + $0xd8] sm:$0xff]
        %v4133 = vld [vmem:[%s4113 + $0xe0] sm:$0xff]
        %v4134 = vld [vmem:[%s4113 + $0xf0] sm:$0xff]
        %v4135 = vld [vmem:[%s4113 + $0xf8] sm:$0xff]
        %v4136 = vld [vmem:[%s4113 + $0x108] sm:$0xff]
        %v4137 = vld [vmem:[%s4113 + $0x110] sm:$0xff]
        %v4138 = vld [vmem:[%s4113 + $0x120] sm:$0xff]
        %v4139 = vld [vmem:[%s4113 + $0x128] sm:$0xff]
        %v4140 = vld [vmem:[%s4113 + $0x138] sm:$0xff]
        %v4141 = vld [vmem:[%s4113 + $0x140] sm:$0xff]
        %v4142 = vld [vmem:[%s4113 + $0x150] sm:$0xff]
        %v4143 = vld [vmem:[%s4113 + $0x158] sm:$0xff]
        %v4144 = vld [vmem:[%s4113 + $0x168] sm:$0xff]
        %v4145 = vld [vmem:[%s4113 + $0x170] sm:$0xff]
        %4178 = vrot.lane.b32.xlu0 %v4114, 10
        %v4179 = vpop.permute.xlu0 %4178
        %4180 = vrot.lane.b32.xlu0 %v4115, 10
        %v4181 = vpop.permute.xlu0 %4180
        %4182 = vrot.lane.b32.xlu0 %v4116, 10
        %v4183 = vpop.permute.xlu0 %4182
        %4184 = vrot.lane.b32.xlu0 %v4117, 10
        %v4185 = vpop.permute.xlu0 %4184
        %4186 = vrot.lane.b32.xlu0 %v4118, 10
        %v4187 = vpop.permute.xlu0 %4186
        %4188 = vrot.lane.b32.xlu0 %v4119, 10
        %v4189 = vpop.permute.xlu0 %4188
        %4190 = vrot.lane.b32.xlu0 %v4120, 10
        %v4191 = vpop.permute.xlu0 %4190
        %4192 = vrot.lane.b32.xlu0 %v4121, 10
        %v4193 = vpop.permute.xlu0 %4192
        %4194 = vrot.lane.b32.xlu0 %v4122, 10
        %v4195 = vpop.permute.xlu0 %4194
        %4196 = vrot.lane.b32.xlu0 %v4123, 10
        %v4197 = vpop.permute.xlu0 %4196
        %4198 = vrot.lane.b32.xlu0 %v4124, 10
        %v4199 = vpop.permute.xlu0 %4198
        %4200 = vrot.lane.b32.xlu0 %v4125, 10
        %v4201 = vpop.permute.xlu0 %4200
        %4202 = vrot.lane.b32.xlu0 %v4126, 10
        %v4203 = vpop.permute.xlu0 %4202
        %4204 = vrot.lane.b32.xlu0 %v4127, 10
        %v4205 = vpop.permute.xlu0 %4204
        %4206 = vrot.lane.b32.xlu0 %v4128, 10
        %v4207 = vpop.permute.xlu0 %4206
        %4208 = vrot.lane.b32.xlu0 %v4129, 10
        %v4209 = vpop.permute.xlu0 %4208
        %4210 = vrot.lane.b32.xlu0 %v4130, 10
        %v4211 = vpop.permute.xlu0 %4210
        %4212 = vrot.lane.b32.xlu0 %v4131, 10
        %v4213 = vpop.permute.xlu0 %4212
        %4214 = vrot.lane.b32.xlu0 %v4132, 10
        %v4215 = vpop.permute.xlu0 %4214
        %4216 = vrot.lane.b32.xlu0 %v4133, 10
        %v4217 = vpop.permute.xlu0 %4216
        %4218 = vrot.lane.b32.xlu0 %v4134, 10
        %v4219 = vpop.permute.xlu0 %4218
        %4220 = vrot.lane.b32.xlu0 %v4135, 10
        %v4221 = vpop.permute.xlu0 %4220
        %4222 = vrot.lane.b32.xlu0 %v4136, 10
        %v4223 = vpop.permute.xlu0 %4222
        %4224 = vrot.lane.b32.xlu0 %v4137, 10
        %v4225 = vpop.permute.xlu0 %4224
        %4226 = vrot.lane.b32.xlu0 %v4138, 10
        %v4227 = vpop.permute.xlu0 %4226
        %4228 = vrot.lane.b32.xlu0 %v4139, 10
        %v4229 = vpop.permute.xlu0 %4228
        %4230 = vrot.lane.b32.xlu0 %v4140, 10
        %v4231 = vpop.permute.xlu0 %4230
        %4232 = vrot.lane.b32.xlu0 %v4141, 10
        %v4233 = vpop.permute.xlu0 %4232
        %4234 = vrot.lane.b32.xlu0 %v4142, 10
        %v4235 = vpop.permute.xlu0 %4234
        %4236 = vrot.lane.b32.xlu0 %v4143, 10
        %v4237 = vpop.permute.xlu0 %4236
        %4238 = vrot.lane.b32.xlu0 %v4144, 10
        %v4239 = vpop.permute.xlu0 %4238
        %4240 = vrot.lane.b32.xlu0 %v4145, 10
        %v4241 = vpop.permute.xlu0 %4240
        %4274 = vst.msk [vmem:[#allocation5] sm:$0xff] %vm1917, %v4179
        %4275 = vst.msk [vmem:[#allocation5 + $0x8] sm:$0xff] %vm1917, %v4181
        %4276 = vst.msk [vmem:[#allocation5 + $0x10] sm:$0xff] %vm1917, %v4183
        %4277 = vst.msk [vmem:[#allocation5 + $0x18] sm:$0xff] %vm1917, %v4185
        %4278 = vst.msk [vmem:[#allocation5 + $0x20] sm:$0xff] %vm1917, %v4187
        %4279 = vst.msk [vmem:[#allocation5 + $0x28] sm:$0xff] %vm1917, %v4189
        %4280 = vst.msk [vmem:[#allocation5 + $0x30] sm:$0xff] %vm1917, %v4191
        %4281 = vst.msk [vmem:[#allocation5 + $0x38] sm:$0xff] %vm1917, %v4193
        %4282 = vst.msk [vmem:[#allocation5 + $0x40] sm:$0xff] %vm1917, %v4195
        %4283 = vst.msk [vmem:[#allocation5 + $0x48] sm:$0xff] %vm1917, %v4197
        %4284 = vst.msk [vmem:[#allocation5 + $0x50] sm:$0xff] %vm1917, %v4199
        %4285 = vst.msk [vmem:[#allocation5 + $0x58] sm:$0xff] %vm1917, %v4201
        %4286 = vst.msk [vmem:[#allocation5 + $0x60] sm:$0xff] %vm1917, %v4203
        %4287 = vst.msk [vmem:[#allocation5 + $0x68] sm:$0xff] %vm1917, %v4205
        %4288 = vst.msk [vmem:[#allocation5 + $0x70] sm:$0xff] %vm1917, %v4207
        %4289 = vst.msk [vmem:[#allocation5 + $0x78] sm:$0xff] %vm1917, %v4209
        %4290 = vst.msk [vmem:[#allocation5 + $0x80] sm:$0xff] %vm1917, %v4211
        %4291 = vst.msk [vmem:[#allocation5 + $0x88] sm:$0xff] %vm1917, %v4213
        %4292 = vst.msk [vmem:[#allocation5 + $0x90] sm:$0xff] %vm1917, %v4215
        %4293 = vst.msk [vmem:[#allocation5 + $0x98] sm:$0xff] %vm1917, %v4217
        %4294 = vst.msk [vmem:[#allocation5 + $0xa0] sm:$0xff] %vm1917, %v4219
        %4295 = vst.msk [vmem:[#allocation5 + $0xa8] sm:$0xff] %vm1917, %v4221
        %4296 = vst.msk [vmem:[#allocation5 + $0xb0] sm:$0xff] %vm1917, %v4223
        %4297 = vst.msk [vmem:[#allocation5 + $0xb8] sm:$0xff] %vm1917, %v4225
        %4298 = vst.msk [vmem:[#allocation5 + $0xc0] sm:$0xff] %vm1917, %v4227
        %4299 = vst.msk [vmem:[#allocation5 + $0xc8] sm:$0xff] %vm1917, %v4229
        %4300 = vst.msk [vmem:[#allocation5 + $0xd0] sm:$0xff] %vm1917, %v4231
        %4301 = vst.msk [vmem:[#allocation5 + $0xd8] sm:$0xff] %vm1917, %v4233
        %4302 = vst.msk [vmem:[#allocation5 + $0xe0] sm:$0xff] %vm1917, %v4235
        %4303 = vst.msk [vmem:[#allocation5 + $0xe8] sm:$0xff] %vm1917, %v4237
        %4304 = vst.msk [vmem:[#allocation5 + $0xf0] sm:$0xff] %vm1917, %v4239
        %4305 = vst.msk [vmem:[#allocation5 + $0xf8] sm:$0xff] %vm1917, %v4241
        %v4306 = vld [vmem:[%s4113 + $0x1] sm:$0xff]
        %v4307 = vld [vmem:[%s4113 + $0x9] sm:$0xff]
        %v4308 = vld [vmem:[%s4113 + $0x19] sm:$0xff]
        %v4309 = vld [vmem:[%s4113 + $0x21] sm:$0xff]
        %v4310 = vld [vmem:[%s4113 + $0x31] sm:$0xff]
        %v4311 = vld [vmem:[%s4113 + $0x39] sm:$0xff]
        %v4312 = vld [vmem:[%s4113 + $0x49] sm:$0xff]
        %v4313 = vld [vmem:[%s4113 + $0x51] sm:$0xff]
        %v4314 = vld [vmem:[%s4113 + $0x61] sm:$0xff]
        %v4315 = vld [vmem:[%s4113 + $0x69] sm:$0xff]
        %v4316 = vld [vmem:[%s4113 + $0x79] sm:$0xff]
        %v4317 = vld [vmem:[%s4113 + $0x81] sm:$0xff]
        %v4318 = vld [vmem:[%s4113 + $0x91] sm:$0xff]
        %v4319 = vld [vmem:[%s4113 + $0x99] sm:$0xff]
        %v4320 = vld [vmem:[%s4113 + $0xa9] sm:$0xff]
        %v4321 = vld [vmem:[%s4113 + $0xb1] sm:$0xff]
        %v4322 = vld [vmem:[%s4113 + $0xc1] sm:$0xff]
        %v4323 = vld [vmem:[%s4113 + $0xc9] sm:$0xff]
        %v4324 = vld [vmem:[%s4113 + $0xd9] sm:$0xff]
        %v4325 = vld [vmem:[%s4113 + $0xe1] sm:$0xff]
        %v4326 = vld [vmem:[%s4113 + $0xf1] sm:$0xff]
        %v4327 = vld [vmem:[%s4113 + $0xf9] sm:$0xff]
        %v4328 = vld [vmem:[%s4113 + $0x109] sm:$0xff]
        %v4329 = vld [vmem:[%s4113 + $0x111] sm:$0xff]
        %v4330 = vld [vmem:[%s4113 + $0x121] sm:$0xff]
        %v4331 = vld [vmem:[%s4113 + $0x129] sm:$0xff]
        %v4332 = vld [vmem:[%s4113 + $0x139] sm:$0xff]
        %v4333 = vld [vmem:[%s4113 + $0x141] sm:$0xff]
        %v4334 = vld [vmem:[%s4113 + $0x151] sm:$0xff]
        %v4335 = vld [vmem:[%s4113 + $0x159] sm:$0xff]
        %v4336 = vld [vmem:[%s4113 + $0x169] sm:$0xff]
        %v4337 = vld [vmem:[%s4113 + $0x171] sm:$0xff]
        %4370 = vrot.lane.b32.xlu0 %v4306, 12
        %v4371 = vpop.permute.xlu0 %4370
        %4372 = vrot.lane.b32.xlu0 %v4307, 12
        %v4373 = vpop.permute.xlu0 %4372
        %4374 = vrot.lane.b32.xlu0 %v4308, 12
        %v4375 = vpop.permute.xlu0 %4374
        %4376 = vrot.lane.b32.xlu0 %v4309, 12
        %v4377 = vpop.permute.xlu0 %4376
        %4378 = vrot.lane.b32.xlu0 %v4310, 12
        %v4379 = vpop.permute.xlu0 %4378
        %4380 = vrot.lane.b32.xlu0 %v4311, 12
        %v4381 = vpop.permute.xlu0 %4380
        %4382 = vrot.lane.b32.xlu0 %v4312, 12
        %v4383 = vpop.permute.xlu0 %4382
        %4384 = vrot.lane.b32.xlu0 %v4313, 12
        %v4385 = vpop.permute.xlu0 %4384
        %4386 = vrot.lane.b32.xlu0 %v4314, 12
        %v4387 = vpop.permute.xlu0 %4386
        %4388 = vrot.lane.b32.xlu0 %v4315, 12
        %v4389 = vpop.permute.xlu0 %4388
        %4390 = vrot.lane.b32.xlu0 %v4316, 12
        %v4391 = vpop.permute.xlu0 %4390
        %4392 = vrot.lane.b32.xlu0 %v4317, 12
        %v4393 = vpop.permute.xlu0 %4392
        %4394 = vrot.lane.b32.xlu0 %v4318, 12
        %v4395 = vpop.permute.xlu0 %4394
        %4396 = vrot.lane.b32.xlu0 %v4319, 12
        %v4397 = vpop.permute.xlu0 %4396
        %4398 = vrot.lane.b32.xlu0 %v4320, 12
        %v4399 = vpop.permute.xlu0 %4398
        %4400 = vrot.lane.b32.xlu0 %v4321, 12
        %v4401 = vpop.permute.xlu0 %4400
        %4402 = vrot.lane.b32.xlu0 %v4322, 12
        %v4403 = vpop.permute.xlu0 %4402
        %4404 = vrot.lane.b32.xlu0 %v4323, 12
        %v4405 = vpop.permute.xlu0 %4404
        %4406 = vrot.lane.b32.xlu0 %v4324, 12
        %v4407 = vpop.permute.xlu0 %4406
        %4408 = vrot.lane.b32.xlu0 %v4325, 12
        %v4409 = vpop.permute.xlu0 %4408
        %4410 = vrot.lane.b32.xlu0 %v4326, 12
        %v4411 = vpop.permute.xlu0 %4410
        %4412 = vrot.lane.b32.xlu0 %v4327, 12
        %v4413 = vpop.permute.xlu0 %4412
        %4414 = vrot.lane.b32.xlu0 %v4328, 12
        %v4415 = vpop.permute.xlu0 %4414
        %4416 = vrot.lane.b32.xlu0 %v4329, 12
        %v4417 = vpop.permute.xlu0 %4416
        %4418 = vrot.lane.b32.xlu0 %v4330, 12
        %v4419 = vpop.permute.xlu0 %4418
        %4420 = vrot.lane.b32.xlu0 %v4331, 12
        %v4421 = vpop.permute.xlu0 %4420
        %4422 = vrot.lane.b32.xlu0 %v4332, 12
        %v4423 = vpop.permute.xlu0 %4422
        %4424 = vrot.lane.b32.xlu0 %v4333, 12
        %v4425 = vpop.permute.xlu0 %4424
        %4426 = vrot.lane.b32.xlu0 %v4334, 12
        %v4427 = vpop.permute.xlu0 %4426
        %4428 = vrot.lane.b32.xlu0 %v4335, 12
        %v4429 = vpop.permute.xlu0 %4428
        %4430 = vrot.lane.b32.xlu0 %v4336, 12
        %v4431 = vpop.permute.xlu0 %4430
        %4432 = vrot.lane.b32.xlu0 %v4337, 12
        %v4433 = vpop.permute.xlu0 %4432
        %4466 = vst.msk [vmem:[#allocation5] sm:$0xff] %vm2111, %v4371
        %4467 = vst.msk [vmem:[#allocation5 + $0x8] sm:$0xff] %vm2111, %v4373
        %4468 = vst.msk [vmem:[#allocation5 + $0x10] sm:$0xff] %vm2111, %v4375
        %4469 = vst.msk [vmem:[#allocation5 + $0x18] sm:$0xff] %vm2111, %v4377
        %4470 = vst.msk [vmem:[#allocation5 + $0x20] sm:$0xff] %vm2111, %v4379
        %4471 = vst.msk [vmem:[#allocation5 + $0x28] sm:$0xff] %vm2111, %v4381
        %4472 = vst.msk [vmem:[#allocation5 + $0x30] sm:$0xff] %vm2111, %v4383
        %4473 = vst.msk [vmem:[#allocation5 + $0x38] sm:$0xff] %vm2111, %v4385
        %4474 = vst.msk [vmem:[#allocation5 + $0x40] sm:$0xff] %vm2111, %v4387
        %4475 = vst.msk [vmem:[#allocation5 + $0x48] sm:$0xff] %vm2111, %v4389
        %4476 = vst.msk [vmem:[#allocation5 + $0x50] sm:$0xff] %vm2111, %v4391
        %4477 = vst.msk [vmem:[#allocation5 + $0x58] sm:$0xff] %vm2111, %v4393
        %4478 = vst.msk [vmem:[#allocation5 + $0x60] sm:$0xff] %vm2111, %v4395
        %4479 = vst.msk [vmem:[#allocation5 + $0x68] sm:$0xff] %vm2111, %v4397
        %4480 = vst.msk [vmem:[#allocation5 + $0x70] sm:$0xff] %vm2111, %v4399
        %4481 = vst.msk [vmem:[#allocation5 + $0x78] sm:$0xff] %vm2111, %v4401
        %4482 = vst.msk [vmem:[#allocation5 + $0x80] sm:$0xff] %vm2111, %v4403
        %4483 = vst.msk [vmem:[#allocation5 + $0x88] sm:$0xff] %vm2111, %v4405
        %4484 = vst.msk [vmem:[#allocation5 + $0x90] sm:$0xff] %vm2111, %v4407
        %4485 = vst.msk [vmem:[#allocation5 + $0x98] sm:$0xff] %vm2111, %v4409
        %4486 = vst.msk [vmem:[#allocation5 + $0xa0] sm:$0xff] %vm2111, %v4411
        %4487 = vst.msk [vmem:[#allocation5 + $0xa8] sm:$0xff] %vm2111, %v4413
        %4488 = vst.msk [vmem:[#allocation5 + $0xb0] sm:$0xff] %vm2111, %v4415
        %4489 = vst.msk [vmem:[#allocation5 + $0xb8] sm:$0xff] %vm2111, %v4417
        %4490 = vst.msk [vmem:[#allocation5 + $0xc0] sm:$0xff] %vm2111, %v4419
        %4491 = vst.msk [vmem:[#allocation5 + $0xc8] sm:$0xff] %vm2111, %v4421
        %4492 = vst.msk [vmem:[#allocation5 + $0xd0] sm:$0xff] %vm2111, %v4423
        %4493 = vst.msk [vmem:[#allocation5 + $0xd8] sm:$0xff] %vm2111, %v4425
        %4494 = vst.msk [vmem:[#allocation5 + $0xe0] sm:$0xff] %vm2111, %v4427
        %4495 = vst.msk [vmem:[#allocation5 + $0xe8] sm:$0xff] %vm2111, %v4429
        %4496 = vst.msk [vmem:[#allocation5 + $0xf0] sm:$0xff] %vm2111, %v4431
        %4497 = vst.msk [vmem:[#allocation5 + $0xf8] sm:$0xff] %vm2111, %v4433
        %v4498 = vld [vmem:[%s4113 + $0x2] sm:$0xff]
        %v4499 = vld [vmem:[%s4113 + $0xa] sm:$0xff]
        %v4500 = vld [vmem:[%s4113 + $0x1a] sm:$0xff]
        %v4501 = vld [vmem:[%s4113 + $0x22] sm:$0xff]
        %v4502 = vld [vmem:[%s4113 + $0x32] sm:$0xff]
        %v4503 = vld [vmem:[%s4113 + $0x3a] sm:$0xff]
        %v4504 = vld [vmem:[%s4113 + $0x4a] sm:$0xff]
        %v4505 = vld [vmem:[%s4113 + $0x52] sm:$0xff]
        %v4506 = vld [vmem:[%s4113 + $0x62] sm:$0xff]
        %v4507 = vld [vmem:[%s4113 + $0x6a] sm:$0xff]
        %v4508 = vld [vmem:[%s4113 + $0x7a] sm:$0xff]
        %v4509 = vld [vmem:[%s4113 + $0x82] sm:$0xff]
        %v4510 = vld [vmem:[%s4113 + $0x92] sm:$0xff]
        %v4511 = vld [vmem:[%s4113 + $0x9a] sm:$0xff]
        %v4512 = vld [vmem:[%s4113 + $0xaa] sm:$0xff]
        %v4513 = vld [vmem:[%s4113 + $0xb2] sm:$0xff]
        %v4514 = vld [vmem:[%s4113 + $0xc2] sm:$0xff]
        %v4515 = vld [vmem:[%s4113 + $0xca] sm:$0xff]
        %v4516 = vld [vmem:[%s4113 + $0xda] sm:$0xff]
        %v4517 = vld [vmem:[%s4113 + $0xe2] sm:$0xff]
        %v4518 = vld [vmem:[%s4113 + $0xf2] sm:$0xff]
        %v4519 = vld [vmem:[%s4113 + $0xfa] sm:$0xff]
        %v4520 = vld [vmem:[%s4113 + $0x10a] sm:$0xff]
        %v4521 = vld [vmem:[%s4113 + $0x112] sm:$0xff]
        %v4522 = vld [vmem:[%s4113 + $0x122] sm:$0xff]
        %v4523 = vld [vmem:[%s4113 + $0x12a] sm:$0xff]
        %v4524 = vld [vmem:[%s4113 + $0x13a] sm:$0xff]
        %v4525 = vld [vmem:[%s4113 + $0x142] sm:$0xff]
        %v4526 = vld [vmem:[%s4113 + $0x152] sm:$0xff]
        %v4527 = vld [vmem:[%s4113 + $0x15a] sm:$0xff]
        %v4528 = vld [vmem:[%s4113 + $0x16a] sm:$0xff]
        %v4529 = vld [vmem:[%s4113 + $0x172] sm:$0xff]
        %4562 = vrot.lane.b32.xlu0 %v4498, 14
        %v4563 = vpop.permute.xlu0 %4562
        %4564 = vrot.lane.b32.xlu0 %v4499, 14
        %v4565 = vpop.permute.xlu0 %4564
        %4566 = vrot.lane.b32.xlu0 %v4500, 14
        %v4567 = vpop.permute.xlu0 %4566
        %4568 = vrot.lane.b32.xlu0 %v4501, 14
        %v4569 = vpop.permute.xlu0 %4568
        %4570 = vrot.lane.b32.xlu0 %v4502, 14
        %v4571 = vpop.permute.xlu0 %4570
        %4572 = vrot.lane.b32.xlu0 %v4503, 14
        %v4573 = vpop.permute.xlu0 %4572
        %4574 = vrot.lane.b32.xlu0 %v4504, 14
        %v4575 = vpop.permute.xlu0 %4574
        %4576 = vrot.lane.b32.xlu0 %v4505, 14
        %v4577 = vpop.permute.xlu0 %4576
        %4578 = vrot.lane.b32.xlu0 %v4506, 14
        %v4579 = vpop.permute.xlu0 %4578
        %4580 = vrot.lane.b32.xlu0 %v4507, 14
        %v4581 = vpop.permute.xlu0 %4580
        %4582 = vrot.lane.b32.xlu0 %v4508, 14
        %v4583 = vpop.permute.xlu0 %4582
        %4584 = vrot.lane.b32.xlu0 %v4509, 14
        %v4585 = vpop.permute.xlu0 %4584
        %4586 = vrot.lane.b32.xlu0 %v4510, 14
        %v4587 = vpop.permute.xlu0 %4586
        %4588 = vrot.lane.b32.xlu0 %v4511, 14
        %v4589 = vpop.permute.xlu0 %4588
        %4590 = vrot.lane.b32.xlu0 %v4512, 14
        %v4591 = vpop.permute.xlu0 %4590
        %4592 = vrot.lane.b32.xlu0 %v4513, 14
        %v4593 = vpop.permute.xlu0 %4592
        %4594 = vrot.lane.b32.xlu0 %v4514, 14
        %v4595 = vpop.permute.xlu0 %4594
        %4596 = vrot.lane.b32.xlu0 %v4515, 14
        %v4597 = vpop.permute.xlu0 %4596
        %4598 = vrot.lane.b32.xlu0 %v4516, 14
        %v4599 = vpop.permute.xlu0 %4598
        %4600 = vrot.lane.b32.xlu0 %v4517, 14
        %v4601 = vpop.permute.xlu0 %4600
        %4602 = vrot.lane.b32.xlu0 %v4518, 14
        %v4603 = vpop.permute.xlu0 %4602
        %4604 = vrot.lane.b32.xlu0 %v4519, 14
        %v4605 = vpop.permute.xlu0 %4604
        %4606 = vrot.lane.b32.xlu0 %v4520, 14
        %v4607 = vpop.permute.xlu0 %4606
        %4608 = vrot.lane.b32.xlu0 %v4521, 14
        %v4609 = vpop.permute.xlu0 %4608
        %4610 = vrot.lane.b32.xlu0 %v4522, 14
        %v4611 = vpop.permute.xlu0 %4610
        %4612 = vrot.lane.b32.xlu0 %v4523, 14
        %v4613 = vpop.permute.xlu0 %4612
        %4614 = vrot.lane.b32.xlu0 %v4524, 14
        %v4615 = vpop.permute.xlu0 %4614
        %4616 = vrot.lane.b32.xlu0 %v4525, 14
        %v4617 = vpop.permute.xlu0 %4616
        %4618 = vrot.lane.b32.xlu0 %v4526, 14
        %v4619 = vpop.permute.xlu0 %4618
        %4620 = vrot.lane.b32.xlu0 %v4527, 14
        %v4621 = vpop.permute.xlu0 %4620
        %4622 = vrot.lane.b32.xlu0 %v4528, 14
        %v4623 = vpop.permute.xlu0 %4622
        %4624 = vrot.lane.b32.xlu0 %v4529, 14
        %v4625 = vpop.permute.xlu0 %4624
        %4658 = vst.msk [vmem:[#allocation5] sm:$0xff] %vm2304, %v4563
        %4659 = vst.msk [vmem:[#allocation5 + $0x8] sm:$0xff] %vm2304, %v4565
        %4660 = vst.msk [vmem:[#allocation5 + $0x10] sm:$0xff] %vm2304, %v4567
        %4661 = vst.msk [vmem:[#allocation5 + $0x18] sm:$0xff] %vm2304, %v4569
        %4662 = vst.msk [vmem:[#allocation5 + $0x20] sm:$0xff] %vm2304, %v4571
        %4663 = vst.msk [vmem:[#allocation5 + $0x28] sm:$0xff] %vm2304, %v4573
        %4664 = vst.msk [vmem:[#allocation5 + $0x30] sm:$0xff] %vm2304, %v4575
        %4665 = vst.msk [vmem:[#allocation5 + $0x38] sm:$0xff] %vm2304, %v4577
        %4666 = vst.msk [vmem:[#allocation5 + $0x40] sm:$0xff] %vm2304, %v4579
        %4667 = vst.msk [vmem:[#allocation5 + $0x48] sm:$0xff] %vm2304, %v4581
        %4668 = vst.msk [vmem:[#allocation5 + $0x50] sm:$0xff] %vm2304, %v4583
        %4669 = vst.msk [vmem:[#allocation5 + $0x58] sm:$0xff] %vm2304, %v4585
        %4670 = vst.msk [vmem:[#allocation5 + $0x60] sm:$0xff] %vm2304, %v4587
        %4671 = vst.msk [vmem:[#allocation5 + $0x68] sm:$0xff] %vm2304, %v4589
        %4672 = vst.msk [vmem:[#allocation5 + $0x70] sm:$0xff] %vm2304, %v4591
        %4673 = vst.msk [vmem:[#allocation5 + $0x78] sm:$0xff] %vm2304, %v4593
        %4674 = vst.msk [vmem:[#allocation5 + $0x80] sm:$0xff] %vm2304, %v4595
        %4675 = vst.msk [vmem:[#allocation5 + $0x88] sm:$0xff] %vm2304, %v4597
        %4676 = vst.msk [vmem:[#allocation5 + $0x90] sm:$0xff] %vm2304, %v4599
        %4677 = vst.msk [vmem:[#allocation5 + $0x98] sm:$0xff] %vm2304, %v4601
        %4678 = vst.msk [vmem:[#allocation5 + $0xa0] sm:$0xff] %vm2304, %v4603
        %4679 = vst.msk [vmem:[#allocation5 + $0xa8] sm:$0xff] %vm2304, %v4605
        %4680 = vst.msk [vmem:[#allocation5 + $0xb0] sm:$0xff] %vm2304, %v4607
        %4681 = vst.msk [vmem:[#allocation5 + $0xb8] sm:$0xff] %vm2304, %v4609
        %4682 = vst.msk [vmem:[#allocation5 + $0xc0] sm:$0xff] %vm2304, %v4611
        %4683 = vst.msk [vmem:[#allocation5 + $0xc8] sm:$0xff] %vm2304, %v4613
        %4684 = vst.msk [vmem:[#allocation5 + $0xd0] sm:$0xff] %vm2304, %v4615
        %4685 = vst.msk [vmem:[#allocation5 + $0xd8] sm:$0xff] %vm2304, %v4617
        %4686 = vst.msk [vmem:[#allocation5 + $0xe0] sm:$0xff] %vm2304, %v4619
        %4687 = vst.msk [vmem:[#allocation5 + $0xe8] sm:$0xff] %vm2304, %v4621
        %4688 = vst.msk [vmem:[#allocation5 + $0xf0] sm:$0xff] %vm2304, %v4623
        %4689 = vst.msk [vmem:[#allocation5 + $0xf8] sm:$0xff] %vm2304, %v4625
        %v4690 = vld [vmem:[%s4113 + $0x3] sm:$0xff]
        %v4691 = vld [vmem:[%s4113 + $0xb] sm:$0xff]
        %v4692 = vld [vmem:[%s4113 + $0x1b] sm:$0xff]
        %v4693 = vld [vmem:[%s4113 + $0x23] sm:$0xff]
        %v4694 = vld [vmem:[%s4113 + $0x33] sm:$0xff]
        %v4695 = vld [vmem:[%s4113 + $0x3b] sm:$0xff]
        %v4696 = vld [vmem:[%s4113 + $0x4b] sm:$0xff]
        %v4697 = vld [vmem:[%s4113 + $0x53] sm:$0xff]
        %v4698 = vld [vmem:[%s4113 + $0x63] sm:$0xff]
        %v4699 = vld [vmem:[%s4113 + $0x6b] sm:$0xff]
        %v4700 = vld [vmem:[%s4113 + $0x7b] sm:$0xff]
        %v4701 = vld [vmem:[%s4113 + $0x83] sm:$0xff]
        %v4702 = vld [vmem:[%s4113 + $0x93] sm:$0xff]
        %v4703 = vld [vmem:[%s4113 + $0x9b] sm:$0xff]
        %v4704 = vld [vmem:[%s4113 + $0xab] sm:$0xff]
        %v4705 = vld [vmem:[%s4113 + $0xb3] sm:$0xff]
        %v4706 = vld [vmem:[%s4113 + $0xc3] sm:$0xff]
        %v4707 = vld [vmem:[%s4113 + $0xcb] sm:$0xff]
        %v4708 = vld [vmem:[%s4113 + $0xdb] sm:$0xff]
        %v4709 = vld [vmem:[%s4113 + $0xe3] sm:$0xff]
        %v4710 = vld [vmem:[%s4113 + $0xf3] sm:$0xff]
        %v4711 = vld [vmem:[%s4113 + $0xfb] sm:$0xff]
        %v4712 = vld [vmem:[%s4113 + $0x10b] sm:$0xff]
        %v4713 = vld [vmem:[%s4113 + $0x113] sm:$0xff]
        %v4714 = vld [vmem:[%s4113 + $0x123] sm:$0xff]
        %v4715 = vld [vmem:[%s4113 + $0x12b] sm:$0xff]
        %v4716 = vld [vmem:[%s4113 + $0x13b] sm:$0xff]
        %v4717 = vld [vmem:[%s4113 + $0x143] sm:$0xff]
        %v4718 = vld [vmem:[%s4113 + $0x153] sm:$0xff]
        %v4719 = vld [vmem:[%s4113 + $0x15b] sm:$0xff]
        %v4720 = vld [vmem:[%s4113 + $0x16b] sm:$0xff]
        %v4721 = vld [vmem:[%s4113 + $0x173] sm:$0xff]
        %4754 = vrot.lane.b32.xlu0 %v4690, 16
        %v4755 = vpop.permute.xlu0 %4754
        %4756 = vrot.lane.b32.xlu0 %v4691, 16
        %v4757 = vpop.permute.xlu0 %4756
        %4758 = vrot.lane.b32.xlu0 %v4692, 16
        %v4759 = vpop.permute.xlu0 %4758
        %4760 = vrot.lane.b32.xlu0 %v4693, 16
        %v4761 = vpop.permute.xlu0 %4760
        %4762 = vrot.lane.b32.xlu0 %v4694, 16
        %v4763 = vpop.permute.xlu0 %4762
        %4764 = vrot.lane.b32.xlu0 %v4695, 16
        %v4765 = vpop.permute.xlu0 %4764
        %4766 = vrot.lane.b32.xlu0 %v4696, 16
        %v4767 = vpop.permute.xlu0 %4766
        %4768 = vrot.lane.b32.xlu0 %v4697, 16
        %v4769 = vpop.permute.xlu0 %4768
        %4770 = vrot.lane.b32.xlu0 %v4698, 16
        %v4771 = vpop.permute.xlu0 %4770
        %4772 = vrot.lane.b32.xlu0 %v4699, 16
        %v4773 = vpop.permute.xlu0 %4772
        %4774 = vrot.lane.b32.xlu0 %v4700, 16
        %v4775 = vpop.permute.xlu0 %4774
        %4776 = vrot.lane.b32.xlu0 %v4701, 16
        %v4777 = vpop.permute.xlu0 %4776
        %4778 = vrot.lane.b32.xlu0 %v4702, 16
        %v4779 = vpop.permute.xlu0 %4778
        %4780 = vrot.lane.b32.xlu0 %v4703, 16
        %v4781 = vpop.permute.xlu0 %4780
        %4782 = vrot.lane.b32.xlu0 %v4704, 16
        %v4783 = vpop.permute.xlu0 %4782
        %4784 = vrot.lane.b32.xlu0 %v4705, 16
        %v4785 = vpop.permute.xlu0 %4784
        %4786 = vrot.lane.b32.xlu0 %v4706, 16
        %v4787 = vpop.permute.xlu0 %4786
        %4788 = vrot.lane.b32.xlu0 %v4707, 16
        %v4789 = vpop.permute.xlu0 %4788
        %4790 = vrot.lane.b32.xlu0 %v4708, 16
        %v4791 = vpop.permute.xlu0 %4790
        %4792 = vrot.lane.b32.xlu0 %v4709, 16
        %v4793 = vpop.permute.xlu0 %4792
        %4794 = vrot.lane.b32.xlu0 %v4710, 16
        %v4795 = vpop.permute.xlu0 %4794
        %4796 = vrot.lane.b32.xlu0 %v4711, 16
        %v4797 = vpop.permute.xlu0 %4796
        %4798 = vrot.lane.b32.xlu0 %v4712, 16
        %v4799 = vpop.permute.xlu0 %4798
        %4800 = vrot.lane.b32.xlu0 %v4713, 16
        %v4801 = vpop.permute.xlu0 %4800
        %4802 = vrot.lane.b32.xlu0 %v4714, 16
        %v4803 = vpop.permute.xlu0 %4802
        %4804 = vrot.lane.b32.xlu0 %v4715, 16
        %v4805 = vpop.permute.xlu0 %4804
        %4806 = vrot.lane.b32.xlu0 %v4716, 16
        %v4807 = vpop.permute.xlu0 %4806
        %4808 = vrot.lane.b32.xlu0 %v4717, 16
        %v4809 = vpop.permute.xlu0 %4808
        %4810 = vrot.lane.b32.xlu0 %v4718, 16
        %v4811 = vpop.permute.xlu0 %4810
        %4812 = vrot.lane.b32.xlu0 %v4719, 16
        %v4813 = vpop.permute.xlu0 %4812
        %4814 = vrot.lane.b32.xlu0 %v4720, 16
        %v4815 = vpop.permute.xlu0 %4814
        %4816 = vrot.lane.b32.xlu0 %v4721, 16
        %v4817 = vpop.permute.xlu0 %4816
        %4850 = vst.msk [vmem:[#allocation5] sm:$0xff] %vm2497, %v4755
        %4851 = vst.msk [vmem:[#allocation5 + $0x8] sm:$0xff] %vm2497, %v4757
        %4852 = vst.msk [vmem:[#allocation5 + $0x10] sm:$0xff] %vm2497, %v4759
        %4853 = vst.msk [vmem:[#allocation5 + $0x18] sm:$0xff] %vm2497, %v4761
        %4854 = vst.msk [vmem:[#allocation5 + $0x20] sm:$0xff] %vm2497, %v4763
        %4855 = vst.msk [vmem:[#allocation5 + $0x28] sm:$0xff] %vm2497, %v4765
        %4856 = vst.msk [vmem:[#allocation5 + $0x30] sm:$0xff] %vm2497, %v4767
        %4857 = vst.msk [vmem:[#allocation5 + $0x38] sm:$0xff] %vm2497, %v4769
        %4858 = vst.msk [vmem:[#allocation5 + $0x40] sm:$0xff] %vm2497, %v4771
        %4859 = vst.msk [vmem:[#allocation5 + $0x48] sm:$0xff] %vm2497, %v4773
        %4860 = vst.msk [vmem:[#allocation5 + $0x50] sm:$0xff] %vm2497, %v4775
        %4861 = vst.msk [vmem:[#allocation5 + $0x58] sm:$0xff] %vm2497, %v4777
        %4862 = vst.msk [vmem:[#allocation5 + $0x60] sm:$0xff] %vm2497, %v4779
        %4863 = vst.msk [vmem:[#allocation5 + $0x68] sm:$0xff] %vm2497, %v4781
        %4864 = vst.msk [vmem:[#allocation5 + $0x70] sm:$0xff] %vm2497, %v4783
        %4865 = vst.msk [vmem:[#allocation5 + $0x78] sm:$0xff] %vm2497, %v4785
        %4866 = vst.msk [vmem:[#allocation5 + $0x80] sm:$0xff] %vm2497, %v4787
        %4867 = vst.msk [vmem:[#allocation5 + $0x88] sm:$0xff] %vm2497, %v4789
        %4868 = vst.msk [vmem:[#allocation5 + $0x90] sm:$0xff] %vm2497, %v4791
        %4869 = vst.msk [vmem:[#allocation5 + $0x98] sm:$0xff] %vm2497, %v4793
        %4870 = vst.msk [vmem:[#allocation5 + $0xa0] sm:$0xff] %vm2497, %v4795
        %4871 = vst.msk [vmem:[#allocation5 + $0xa8] sm:$0xff] %vm2497, %v4797
        %4872 = vst.msk [vmem:[#allocation5 + $0xb0] sm:$0xff] %vm2497, %v4799
        %4873 = vst.msk [vmem:[#allocation5 + $0xb8] sm:$0xff] %vm2497, %v4801
        %4874 = vst.msk [vmem:[#allocation5 + $0xc0] sm:$0xff] %vm2497, %v4803
        %4875 = vst.msk [vmem:[#allocation5 + $0xc8] sm:$0xff] %vm2497, %v4805
        %4876 = vst.msk [vmem:[#allocation5 + $0xd0] sm:$0xff] %vm2497, %v4807
        %4877 = vst.msk [vmem:[#allocation5 + $0xd8] sm:$0xff] %vm2497, %v4809
        %4878 = vst.msk [vmem:[#allocation5 + $0xe0] sm:$0xff] %vm2497, %v4811
        %4879 = vst.msk [vmem:[#allocation5 + $0xe8] sm:$0xff] %vm2497, %v4813
        %4880 = vst.msk [vmem:[#allocation5 + $0xf0] sm:$0xff] %vm2497, %v4815
        %4881 = vst.msk [vmem:[#allocation5 + $0xf8] sm:$0xff] %vm2497, %v4817
        %v4882 = vld [vmem:[%s4113 + $0x4] sm:$0xff]
        %v4883 = vld [vmem:[%s4113 + $0xc] sm:$0xff]
        %v4884 = vld [vmem:[%s4113 + $0x1c] sm:$0xff]
        %v4885 = vld [vmem:[%s4113 + $0x24] sm:$0xff]
        %v4886 = vld [vmem:[%s4113 + $0x34] sm:$0xff]
        %v4887 = vld [vmem:[%s4113 + $0x3c] sm:$0xff]
        %v4888 = vld [vmem:[%s4113 + $0x4c] sm:$0xff]
        %v4889 = vld [vmem:[%s4113 + $0x54] sm:$0xff]
        %v4890 = vld [vmem:[%s4113 + $0x64] sm:$0xff]
        %v4891 = vld [vmem:[%s4113 + $0x6c] sm:$0xff]
        %v4892 = vld [vmem:[%s4113 + $0x7c] sm:$0xff]
        %v4893 = vld [vmem:[%s4113 + $0x84] sm:$0xff]
        %v4894 = vld [vmem:[%s4113 + $0x94] sm:$0xff]
        %v4895 = vld [vmem:[%s4113 + $0x9c] sm:$0xff]
        %v4896 = vld [vmem:[%s4113 + $0xac] sm:$0xff]
        %v4897 = vld [vmem:[%s4113 + $0xb4] sm:$0xff]
        %v4898 = vld [vmem:[%s4113 + $0xc4] sm:$0xff]
        %v4899 = vld [vmem:[%s4113 + $0xcc] sm:$0xff]
        %v4900 = vld [vmem:[%s4113 + $0xdc] sm:$0xff]
        %v4901 = vld [vmem:[%s4113 + $0xe4] sm:$0xff]
        %v4902 = vld [vmem:[%s4113 + $0xf4] sm:$0xff]
        %v4903 = vld [vmem:[%s4113 + $0xfc] sm:$0xff]
        %v4904 = vld [vmem:[%s4113 + $0x10c] sm:$0xff]
        %v4905 = vld [vmem:[%s4113 + $0x114] sm:$0xff]
        %v4906 = vld [vmem:[%s4113 + $0x124] sm:$0xff]
        %v4907 = vld [vmem:[%s4113 + $0x12c] sm:$0xff]
        %v4908 = vld [vmem:[%s4113 + $0x13c] sm:$0xff]
        %v4909 = vld [vmem:[%s4113 + $0x144] sm:$0xff]
        %v4910 = vld [vmem:[%s4113 + $0x154] sm:$0xff]
        %v4911 = vld [vmem:[%s4113 + $0x15c] sm:$0xff]
        %v4912 = vld [vmem:[%s4113 + $0x16c] sm:$0xff]
        %v4913 = vld [vmem:[%s4113 + $0x174] sm:$0xff]
        %4946 = vrot.lane.b32.xlu0 %v4882, 18
        %v4947 = vpop.permute.xlu0 %4946
        %4948 = vrot.lane.b32.xlu0 %v4883, 18
        %v4949 = vpop.permute.xlu0 %4948
        %4950 = vrot.lane.b32.xlu0 %v4884, 18
        %v4951 = vpop.permute.xlu0 %4950
        %4952 = vrot.lane.b32.xlu0 %v4885, 18
        %v4953 = vpop.permute.xlu0 %4952
        %4954 = vrot.lane.b32.xlu0 %v4886, 18
        %v4955 = vpop.permute.xlu0 %4954
        %4956 = vrot.lane.b32.xlu0 %v4887, 18
        %v4957 = vpop.permute.xlu0 %4956
        %4958 = vrot.lane.b32.xlu0 %v4888, 18
        %v4959 = vpop.permute.xlu0 %4958
        %4960 = vrot.lane.b32.xlu0 %v4889, 18
        %v4961 = vpop.permute.xlu0 %4960
        %4962 = vrot.lane.b32.xlu0 %v4890, 18
        %v4963 = vpop.permute.xlu0 %4962
        %4964 = vrot.lane.b32.xlu0 %v4891, 18
        %v4965 = vpop.permute.xlu0 %4964
        %4966 = vrot.lane.b32.xlu0 %v4892, 18
        %v4967 = vpop.permute.xlu0 %4966
        %4968 = vrot.lane.b32.xlu0 %v4893, 18
        %v4969 = vpop.permute.xlu0 %4968
        %4970 = vrot.lane.b32.xlu0 %v4894, 18
        %v4971 = vpop.permute.xlu0 %4970
        %4972 = vrot.lane.b32.xlu0 %v4895, 18
        %v4973 = vpop.permute.xlu0 %4972
        %4974 = vrot.lane.b32.xlu0 %v4896, 18
        %v4975 = vpop.permute.xlu0 %4974
        %4976 = vrot.lane.b32.xlu0 %v4897, 18
        %v4977 = vpop.permute.xlu0 %4976
        %4978 = vrot.lane.b32.xlu0 %v4898, 18
        %v4979 = vpop.permute.xlu0 %4978
        %4980 = vrot.lane.b32.xlu0 %v4899, 18
        %v4981 = vpop.permute.xlu0 %4980
        %4982 = vrot.lane.b32.xlu0 %v4900, 18
        %v4983 = vpop.permute.xlu0 %4982
        %4984 = vrot.lane.b32.xlu0 %v4901, 18
        %v4985 = vpop.permute.xlu0 %4984
        %4986 = vrot.lane.b32.xlu0 %v4902, 18
        %v4987 = vpop.permute.xlu0 %4986
        %4988 = vrot.lane.b32.xlu0 %v4903, 18
        %v4989 = vpop.permute.xlu0 %4988
        %4990 = vrot.lane.b32.xlu0 %v4904, 18
        %v4991 = vpop.permute.xlu0 %4990
        %4992 = vrot.lane.b32.xlu0 %v4905, 18
        %v4993 = vpop.permute.xlu0 %4992
        %4994 = vrot.lane.b32.xlu0 %v4906, 18
        %v4995 = vpop.permute.xlu0 %4994
        %4996 = vrot.lane.b32.xlu0 %v4907, 18
        %v4997 = vpop.permute.xlu0 %4996
        %4998 = vrot.lane.b32.xlu0 %v4908, 18
        %v4999 = vpop.permute.xlu0 %4998
        %5000 = vrot.lane.b32.xlu0 %v4909, 18
        %v5001 = vpop.permute.xlu0 %5000
        %5002 = vrot.lane.b32.xlu0 %v4910, 18
        %v5003 = vpop.permute.xlu0 %5002
        %5004 = vrot.lane.b32.xlu0 %v4911, 18
        %v5005 = vpop.permute.xlu0 %5004
        %5006 = vrot.lane.b32.xlu0 %v4912, 18
        %v5007 = vpop.permute.xlu0 %5006
        %5008 = vrot.lane.b32.xlu0 %v4913, 18
        %v5009 = vpop.permute.xlu0 %5008
        %vm5042 = vcmask 162960
        %5043 = vst.msk [vmem:[#allocation5] sm:$0xff] %vm5042, %v4947
        %5044 = vst.msk [vmem:[#allocation5 + $0x8] sm:$0xff] %vm5042, %v4949
        %5045 = vst.msk [vmem:[#allocation5 + $0x10] sm:$0xff] %vm5042, %v4951
        %5046 = vst.msk [vmem:[#allocation5 + $0x18] sm:$0xff] %vm5042, %v4953
        %5047 = vst.msk [vmem:[#allocation5 + $0x20] sm:$0xff] %vm5042, %v4955
        %5048 = vst.msk [vmem:[#allocation5 + $0x28] sm:$0xff] %vm5042, %v4957
        %5049 = vst.msk [vmem:[#allocation5 + $0x30] sm:$0xff] %vm5042, %v4959
        %5050 = vst.msk [vmem:[#allocation5 + $0x38] sm:$0xff] %vm5042, %v4961
        %5051 = vst.msk [vmem:[#allocation5 + $0x40] sm:$0xff] %vm5042, %v4963
        %5052 = vst.msk [vmem:[#allocation5 + $0x48] sm:$0xff] %vm5042, %v4965
        %5053 = vst.msk [vmem:[#allocation5 + $0x50] sm:$0xff] %vm5042, %v4967
        %5054 = vst.msk [vmem:[#allocation5 + $0x58] sm:$0xff] %vm5042, %v4969
        %5055 = vst.msk [vmem:[#allocation5 + $0x60] sm:$0xff] %vm5042, %v4971
        %5056 = vst.msk [vmem:[#allocation5 + $0x68] sm:$0xff] %vm5042, %v4973
        %5057 = vst.msk [vmem:[#allocation5 + $0x70] sm:$0xff] %vm5042, %v4975
        %5058 = vst.msk [vmem:[#allocation5 + $0x78] sm:$0xff] %vm5042, %v4977
        %5059 = vst.msk [vmem:[#allocation5 + $0x80] sm:$0xff] %vm5042, %v4979
        %5060 = vst.msk [vmem:[#allocation5 + $0x88] sm:$0xff] %vm5042, %v4981
        %5061 = vst.msk [vmem:[#allocation5 + $0x90] sm:$0xff] %vm5042, %v4983
        %5062 = vst.msk [vmem:[#allocation5 + $0x98] sm:$0xff] %vm5042, %v4985
        %5063 = vst.msk [vmem:[#allocation5 + $0xa0] sm:$0xff] %vm5042, %v4987
        %5064 = vst.msk [vmem:[#allocation5 + $0xa8] sm:$0xff] %vm5042, %v4989
        %5065 = vst.msk [vmem:[#allocation5 + $0xb0] sm:$0xff] %vm5042, %v4991
        %5066 = vst.msk [vmem:[#allocation5 + $0xb8] sm:$0xff] %vm5042, %v4993
        %5067 = vst.msk [vmem:[#allocation5 + $0xc0] sm:$0xff] %vm5042, %v4995
        %5068 = vst.msk [vmem:[#allocation5 + $0xc8] sm:$0xff] %vm5042, %v4997
        %5069 = vst.msk [vmem:[#allocation5 + $0xd0] sm:$0xff] %vm5042, %v4999
        %5070 = vst.msk [vmem:[#allocation5 + $0xd8] sm:$0xff] %vm5042, %v5001
        %5071 = vst.msk [vmem:[#allocation5 + $0xe0] sm:$0xff] %vm5042, %v5003
        %5072 = vst.msk [vmem:[#allocation5 + $0xe8] sm:$0xff] %vm5042, %v5005
        %5073 = vst.msk [vmem:[#allocation5 + $0xf0] sm:$0xff] %vm5042, %v5007
        %5074 = vst.msk [vmem:[#allocation5 + $0xf8] sm:$0xff] %vm5042, %v5009
        %v5075 = vld [vmem:[%s3248] sm:$0xff]
        %v5076 = vld [vmem:[%s3248 + $0x8] sm:$0xff]
        %v5077 = vld [vmem:[%s3248 + $0x18] sm:$0xff]
        %v5078 = vld [vmem:[%s3248 + $0x20] sm:$0xff]
        %v5079 = vld [vmem:[%s3248 + $0x30] sm:$0xff]
        %v5080 = vld [vmem:[%s3248 + $0x38] sm:$0xff]
        %v5081 = vld [vmem:[%s3248 + $0x48] sm:$0xff]
        %v5082 = vld [vmem:[%s3248 + $0x50] sm:$0xff]
        %v5083 = vld [vmem:[%s3248 + $0x60] sm:$0xff]
        %v5084 = vld [vmem:[%s3248 + $0x68] sm:$0xff]
        %v5085 = vld [vmem:[%s3248 + $0x78] sm:$0xff]
        %v5086 = vld [vmem:[%s3248 + $0x80] sm:$0xff]
        %v5087 = vld [vmem:[%s3248 + $0x90] sm:$0xff]
        %v5088 = vld [vmem:[%s3248 + $0x98] sm:$0xff]
        %v5089 = vld [vmem:[%s3248 + $0xa8] sm:$0xff]
        %v5090 = vld [vmem:[%s3248 + $0xb0] sm:$0xff]
        %v5091 = vld [vmem:[%s3248 + $0xc0] sm:$0xff]
        %v5092 = vld [vmem:[%s3248 + $0xc8] sm:$0xff]
        %v5093 = vld [vmem:[%s3248 + $0xd8] sm:$0xff]
        %v5094 = vld [vmem:[%s3248 + $0xe0] sm:$0xff]
        %v5095 = vld [vmem:[%s3248 + $0xf0] sm:$0xff]
        %v5096 = vld [vmem:[%s3248 + $0xf8] sm:$0xff]
        %v5097 = vld [vmem:[%s3248 + $0x108] sm:$0xff]
        %v5098 = vld [vmem:[%s3248 + $0x110] sm:$0xff]
        %v5099 = vld [vmem:[%s3248 + $0x120] sm:$0xff]
        %v5100 = vld [vmem:[%s3248 + $0x128] sm:$0xff]
        %v5101 = vld [vmem:[%s3248 + $0x138] sm:$0xff]
        %v5102 = vld [vmem:[%s3248 + $0x140] sm:$0xff]
        %v5103 = vld [vmem:[%s3248 + $0x150] sm:$0xff]
        %v5104 = vld [vmem:[%s3248 + $0x158] sm:$0xff]
        %v5105 = vld [vmem:[%s3248 + $0x168] sm:$0xff]
        %v5106 = vld [vmem:[%s3248 + $0x170] sm:$0xff]
        %5139 = vrot.lane.b32.xlu0 %v5075, 20
        %v5140 = vpop.permute.xlu0 %5139
        %5141 = vrot.lane.b32.xlu0 %v5076, 20
        %v5142 = vpop.permute.xlu0 %5141
        %5143 = vrot.lane.b32.xlu0 %v5077, 20
        %v5144 = vpop.permute.xlu0 %5143
        %5145 = vrot.lane.b32.xlu0 %v5078, 20
        %v5146 = vpop.permute.xlu0 %5145
        %5147 = vrot.lane.b32.xlu0 %v5079, 20
        %v5148 = vpop.permute.xlu0 %5147
        %5149 = vrot.lane.b32.xlu0 %v5080, 20
        %v5150 = vpop.permute.xlu0 %5149
        %5151 = vrot.lane.b32.xlu0 %v5081, 20
        %v5152 = vpop.permute.xlu0 %5151
        %5153 = vrot.lane.b32.xlu0 %v5082, 20
        %v5154 = vpop.permute.xlu0 %5153
        %5155 = vrot.lane.b32.xlu0 %v5083, 20
        %v5156 = vpop.permute.xlu0 %5155
        %5157 = vrot.lane.b32.xlu0 %v5084, 20
        %v5158 = vpop.permute.xlu0 %5157
        %5159 = vrot.lane.b32.xlu0 %v5085, 20
        %v5160 = vpop.permute.xlu0 %5159
        %5161 = vrot.lane.b32.xlu0 %v5086, 20
        %v5162 = vpop.permute.xlu0 %5161
        %5163 = vrot.lane.b32.xlu0 %v5087, 20
        %v5164 = vpop.permute.xlu0 %5163
        %5165 = vrot.lane.b32.xlu0 %v5088, 20
        %v5166 = vpop.permute.xlu0 %5165
        %5167 = vrot.lane.b32.xlu0 %v5089, 20
        %v5168 = vpop.permute.xlu0 %5167
        %5169 = vrot.lane.b32.xlu0 %v5090, 20
        %v5170 = vpop.permute.xlu0 %5169
        %5171 = vrot.lane.b32.xlu0 %v5091, 20
        %v5172 = vpop.permute.xlu0 %5171
        %5173 = vrot.lane.b32.xlu0 %v5092, 20
        %v5174 = vpop.permute.xlu0 %5173
        %5175 = vrot.lane.b32.xlu0 %v5093, 20
        %v5176 = vpop.permute.xlu0 %5175
        %5177 = vrot.lane.b32.xlu0 %v5094, 20
        %v5178 = vpop.permute.xlu0 %5177
        %5179 = vrot.lane.b32.xlu0 %v5095, 20
        %v5180 = vpop.permute.xlu0 %5179
        %5181 = vrot.lane.b32.xlu0 %v5096, 20
        %v5182 = vpop.permute.xlu0 %5181
        %5183 = vrot.lane.b32.xlu0 %v5097, 20
        %v5184 = vpop.permute.xlu0 %5183
        %5185 = vrot.lane.b32.xlu0 %v5098, 20
        %v5186 = vpop.permute.xlu0 %5185
        %5187 = vrot.lane.b32.xlu0 %v5099, 20
        %v5188 = vpop.permute.xlu0 %5187
        %5189 = vrot.lane.b32.xlu0 %v5100, 20
        %v5190 = vpop.permute.xlu0 %5189
        %5191 = vrot.lane.b32.xlu0 %v5101, 20
        %v5192 = vpop.permute.xlu0 %5191
        %5193 = vrot.lane.b32.xlu0 %v5102, 20
        %v5194 = vpop.permute.xlu0 %5193
        %5195 = vrot.lane.b32.xlu0 %v5103, 20
        %v5196 = vpop.permute.xlu0 %5195
        %5197 = vrot.lane.b32.xlu0 %v5104, 20
        %v5198 = vpop.permute.xlu0 %5197
        %5199 = vrot.lane.b32.xlu0 %v5105, 20
        %v5200 = vpop.permute.xlu0 %5199
        %5201 = vrot.lane.b32.xlu0 %v5106, 20
        %v5202 = vpop.permute.xlu0 %5201
        %vm5235 = vcmask 179360
        %5236 = vst.msk [vmem:[#allocation5] sm:$0xff] %vm5235, %v5140
        %5237 = vst.msk [vmem:[#allocation5 + $0x8] sm:$0xff] %vm5235, %v5142
        %5238 = vst.msk [vmem:[#allocation5 + $0x10] sm:$0xff] %vm5235, %v5144
        %5239 = vst.msk [vmem:[#allocation5 + $0x18] sm:$0xff] %vm5235, %v5146
        %5240 = vst.msk [vmem:[#allocation5 + $0x20] sm:$0xff] %vm5235, %v5148
        %5241 = vst.msk [vmem:[#allocation5 + $0x28] sm:$0xff] %vm5235, %v5150
        %5242 = vst.msk [vmem:[#allocation5 + $0x30] sm:$0xff] %vm5235, %v5152
        %5243 = vst.msk [vmem:[#allocation5 + $0x38] sm:$0xff] %vm5235, %v5154
        %5244 = vst.msk [vmem:[#allocation5 + $0x40] sm:$0xff] %vm5235, %v5156
        %5245 = vst.msk [vmem:[#allocation5 + $0x48] sm:$0xff] %vm5235, %v5158
        %5246 = vst.msk [vmem:[#allocation5 + $0x50] sm:$0xff] %vm5235, %v5160
        %5247 = vst.msk [vmem:[#allocation5 + $0x58] sm:$0xff] %vm5235, %v5162
        %5248 = vst.msk [vmem:[#allocation5 + $0x60] sm:$0xff] %vm5235, %v5164
        %5249 = vst.msk [vmem:[#allocation5 + $0x68] sm:$0xff] %vm5235, %v5166
        %5250 = vst.msk [vmem:[#allocation5 + $0x70] sm:$0xff] %vm5235, %v5168
        %5251 = vst.msk [vmem:[#allocation5 + $0x78] sm:$0xff] %vm5235, %v5170
        %5252 = vst.msk [vmem:[#allocation5 + $0x80] sm:$0xff] %vm5235, %v5172
        %5253 = vst.msk [vmem:[#allocation5 + $0x88] sm:$0xff] %vm5235, %v5174
        %5254 = vst.msk [vmem:[#allocation5 + $0x90] sm:$0xff] %vm5235, %v5176
        %5255 = vst.msk [vmem:[#allocation5 + $0x98] sm:$0xff] %vm5235, %v5178
        %5256 = vst.msk [vmem:[#allocation5 + $0xa0] sm:$0xff] %vm5235, %v5180
        %5257 = vst.msk [vmem:[#allocation5 + $0xa8] sm:$0xff] %vm5235, %v5182
        %5258 = vst.msk [vmem:[#allocation5 + $0xb0] sm:$0xff] %vm5235, %v5184
        %5259 = vst.msk [vmem:[#allocation5 + $0xb8] sm:$0xff] %vm5235, %v5186
        %5260 = vst.msk [vmem:[#allocation5 + $0xc0] sm:$0xff] %vm5235, %v5188
        %5261 = vst.msk [vmem:[#allocation5 + $0xc8] sm:$0xff] %vm5235, %v5190
        %5262 = vst.msk [vmem:[#allocation5 + $0xd0] sm:$0xff] %vm5235, %v5192
        %5263 = vst.msk [vmem:[#allocation5 + $0xd8] sm:$0xff] %vm5235, %v5194
        %5264 = vst.msk [vmem:[#allocation5 + $0xe0] sm:$0xff] %vm5235, %v5196
        %5265 = vst.msk [vmem:[#allocation5 + $0xe8] sm:$0xff] %vm5235, %v5198
        %5266 = vst.msk [vmem:[#allocation5 + $0xf0] sm:$0xff] %vm5235, %v5200
        %5267 = vst.msk [vmem:[#allocation5 + $0xf8] sm:$0xff] %vm5235, %v5202
        %v5268 = vld [vmem:[%s3248 + $0x1] sm:$0xff]
        %v5269 = vld [vmem:[%s3248 + $0x9] sm:$0xff]
        %v5270 = vld [vmem:[%s3248 + $0x19] sm:$0xff]
        %v5271 = vld [vmem:[%s3248 + $0x21] sm:$0xff]
        %v5272 = vld [vmem:[%s3248 + $0x31] sm:$0xff]
        %v5273 = vld [vmem:[%s3248 + $0x39] sm:$0xff]
        %v5274 = vld [vmem:[%s3248 + $0x49] sm:$0xff]
        %v5275 = vld [vmem:[%s3248 + $0x51] sm:$0xff]
        %v5276 = vld [vmem:[%s3248 + $0x61] sm:$0xff]
        %v5277 = vld [vmem:[%s3248 + $0x69] sm:$0xff]
        %v5278 = vld [vmem:[%s3248 + $0x79] sm:$0xff]
        %v5279 = vld [vmem:[%s3248 + $0x81] sm:$0xff]
        %v5280 = vld [vmem:[%s3248 + $0x91] sm:$0xff]
        %v5281 = vld [vmem:[%s3248 + $0x99] sm:$0xff]
        %v5282 = vld [vmem:[%s3248 + $0xa9] sm:$0xff]
        %v5283 = vld [vmem:[%s3248 + $0xb1] sm:$0xff]
        %v5284 = vld [vmem:[%s3248 + $0xc1] sm:$0xff]
        %v5285 = vld [vmem:[%s3248 + $0xc9] sm:$0xff]
        %v5286 = vld [vmem:[%s3248 + $0xd9] sm:$0xff]
        %v5287 = vld [vmem:[%s3248 + $0xe1] sm:$0xff]
        %v5288 = vld [vmem:[%s3248 + $0xf1] sm:$0xff]
        %v5289 = vld [vmem:[%s3248 + $0xf9] sm:$0xff]
        %v5290 = vld [vmem:[%s3248 + $0x109] sm:$0xff]
        %v5291 = vld [vmem:[%s3248 + $0x111] sm:$0xff]
        %v5292 = vld [vmem:[%s3248 + $0x121] sm:$0xff]
        %v5293 = vld [vmem:[%s3248 + $0x129] sm:$0xff]
        %v5294 = vld [vmem:[%s3248 + $0x139] sm:$0xff]
        %v5295 = vld [vmem:[%s3248 + $0x141] sm:$0xff]
        %v5296 = vld [vmem:[%s3248 + $0x151] sm:$0xff]
        %v5297 = vld [vmem:[%s3248 + $0x159] sm:$0xff]
        %v5298 = vld [vmem:[%s3248 + $0x169] sm:$0xff]
        %v5299 = vld [vmem:[%s3248 + $0x171] sm:$0xff]
        %5332 = vrot.lane.b32.xlu0 %v5268, 22
        %v5333 = vpop.permute.xlu0 %5332
        %5334 = vrot.lane.b32.xlu0 %v5269, 22
        %v5335 = vpop.permute.xlu0 %5334
        %5336 = vrot.lane.b32.xlu0 %v5270, 22
        %v5337 = vpop.permute.xlu0 %5336
        %5338 = vrot.lane.b32.xlu0 %v5271, 22
        %v5339 = vpop.permute.xlu0 %5338
        %5340 = vrot.lane.b32.xlu0 %v5272, 22
        %v5341 = vpop.permute.xlu0 %5340
        %5342 = vrot.lane.b32.xlu0 %v5273, 22
        %v5343 = vpop.permute.xlu0 %5342
        %5344 = vrot.lane.b32.xlu0 %v5274, 22
        %v5345 = vpop.permute.xlu0 %5344
        %5346 = vrot.lane.b32.xlu0 %v5275, 22
        %v5347 = vpop.permute.xlu0 %5346
        %5348 = vrot.lane.b32.xlu0 %v5276, 22
        %v5349 = vpop.permute.xlu0 %5348
        %5350 = vrot.lane.b32.xlu0 %v5277, 22
        %v5351 = vpop.permute.xlu0 %5350
        %5352 = vrot.lane.b32.xlu0 %v5278, 22
        %v5353 = vpop.permute.xlu0 %5352
        %5354 = vrot.lane.b32.xlu0 %v5279, 22
        %v5355 = vpop.permute.xlu0 %5354
        %5356 = vrot.lane.b32.xlu0 %v5280, 22
        %v5357 = vpop.permute.xlu0 %5356
        %5358 = vrot.lane.b32.xlu0 %v5281, 22
        %v5359 = vpop.permute.xlu0 %5358
        %5360 = vrot.lane.b32.xlu0 %v5282, 22
        %v5361 = vpop.permute.xlu0 %5360
        %5362 = vrot.lane.b32.xlu0 %v5283, 22
        %v5363 = vpop.permute.xlu0 %5362
        %5364 = vrot.lane.b32.xlu0 %v5284, 22
        %v5365 = vpop.permute.xlu0 %5364
        %5366 = vrot.lane.b32.xlu0 %v5285, 22
        %v5367 = vpop.permute.xlu0 %5366
        %5368 = vrot.lane.b32.xlu0 %v5286, 22
        %v5369 = vpop.permute.xlu0 %5368
        %5370 = vrot.lane.b32.xlu0 %v5287, 22
        %v5371 = vpop.permute.xlu0 %5370
        %5372 = vrot.lane.b32.xlu0 %v5288, 22
        %v5373 = vpop.permute.xlu0 %5372
        %5374 = vrot.lane.b32.xlu0 %v5289, 22
        %v5375 = vpop.permute.xlu0 %5374
        %5376 = vrot.lane.b32.xlu0 %v5290, 22
        %v5377 = vpop.permute.xlu0 %5376
        %5378 = vrot.lane.b32.xlu0 %v5291, 22
        %v5379 = vpop.permute.xlu0 %5378
        %5380 = vrot.lane.b32.xlu0 %v5292, 22
        %v5381 = vpop.permute.xlu0 %5380
        %5382 = vrot.lane.b32.xlu0 %v5293, 22
        %v5383 = vpop.permute.xlu0 %5382
        %5384 = vrot.lane.b32.xlu0 %v5294, 22
        %v5385 = vpop.permute.xlu0 %5384
        %5386 = vrot.lane.b32.xlu0 %v5295, 22
        %v5387 = vpop.permute.xlu0 %5386
        %5388 = vrot.lane.b32.xlu0 %v5296, 22
        %v5389 = vpop.permute.xlu0 %5388
        %5390 = vrot.lane.b32.xlu0 %v5297, 22
        %v5391 = vpop.permute.xlu0 %5390
        %5392 = vrot.lane.b32.xlu0 %v5298, 22
        %v5393 = vpop.permute.xlu0 %5392
        %5394 = vrot.lane.b32.xlu0 %v5299, 22
        %v5395 = vpop.permute.xlu0 %5394
        %vm5428 = vcmask 195760
        %5429 = vst.msk [vmem:[#allocation5] sm:$0xff] %vm5428, %v5333
        %5430 = vst.msk [vmem:[#allocation5 + $0x8] sm:$0xff] %vm5428, %v5335
        %5431 = vst.msk [vmem:[#allocation5 + $0x10] sm:$0xff] %vm5428, %v5337
        %5432 = vst.msk [vmem:[#allocation5 + $0x18] sm:$0xff] %vm5428, %v5339
        %5433 = vst.msk [vmem:[#allocation5 + $0x20] sm:$0xff] %vm5428, %v5341
        %5434 = vst.msk [vmem:[#allocation5 + $0x28] sm:$0xff] %vm5428, %v5343
        %5435 = vst.msk [vmem:[#allocation5 + $0x30] sm:$0xff] %vm5428, %v5345
        %5436 = vst.msk [vmem:[#allocation5 + $0x38] sm:$0xff] %vm5428, %v5347
        %5437 = vst.msk [vmem:[#allocation5 + $0x40] sm:$0xff] %vm5428, %v5349
        %5438 = vst.msk [vmem:[#allocation5 + $0x48] sm:$0xff] %vm5428, %v5351
        %5439 = vst.msk [vmem:[#allocation5 + $0x50] sm:$0xff] %vm5428, %v5353
        %5440 = vst.msk [vmem:[#allocation5 + $0x58] sm:$0xff] %vm5428, %v5355
        %5441 = vst.msk [vmem:[#allocation5 + $0x60] sm:$0xff] %vm5428, %v5357
        %5442 = vst.msk [vmem:[#allocation5 + $0x68] sm:$0xff] %vm5428, %v5359
        %5443 = vst.msk [vmem:[#allocation5 + $0x70] sm:$0xff] %vm5428, %v5361
        %5444 = vst.msk [vmem:[#allocation5 + $0x78] sm:$0xff] %vm5428, %v5363
        %5445 = vst.msk [vmem:[#allocation5 + $0x80] sm:$0xff] %vm5428, %v5365
        %5446 = vst.msk [vmem:[#allocation5 + $0x88] sm:$0xff] %vm5428, %v5367
        %5447 = vst.msk [vmem:[#allocation5 + $0x90] sm:$0xff] %vm5428, %v5369
        %5448 = vst.msk [vmem:[#allocation5 + $0x98] sm:$0xff] %vm5428, %v5371
        %5449 = vst.msk [vmem:[#allocation5 + $0xa0] sm:$0xff] %vm5428, %v5373
        %5450 = vst.msk [vmem:[#allocation5 + $0xa8] sm:$0xff] %vm5428, %v5375
        %5451 = vst.msk [vmem:[#allocation5 + $0xb0] sm:$0xff] %vm5428, %v5377
        %5452 = vst.msk [vmem:[#allocation5 + $0xb8] sm:$0xff] %vm5428, %v5379
        %5453 = vst.msk [vmem:[#allocation5 + $0xc0] sm:$0xff] %vm5428, %v5381
        %5454 = vst.msk [vmem:[#allocation5 + $0xc8] sm:$0xff] %vm5428, %v5383
        %5455 = vst.msk [vmem:[#allocation5 + $0xd0] sm:$0xff] %vm5428, %v5385
        %5456 = vst.msk [vmem:[#allocation5 + $0xd8] sm:$0xff] %vm5428, %v5387
        %5457 = vst.msk [vmem:[#allocation5 + $0xe0] sm:$0xff] %vm5428, %v5389
        %5458 = vst.msk [vmem:[#allocation5 + $0xe8] sm:$0xff] %vm5428, %v5391
        %5459 = vst.msk [vmem:[#allocation5 + $0xf0] sm:$0xff] %vm5428, %v5393
        %5460 = vst.msk [vmem:[#allocation5 + $0xf8] sm:$0xff] %vm5428, %v5395
        %v5461 = vld [vmem:[%s3248 + $0x2] sm:$0xff]
        %v5462 = vld [vmem:[%s3248 + $0xa] sm:$0xff]
        %v5463 = vld [vmem:[%s3248 + $0x1a] sm:$0xff]
        %v5464 = vld [vmem:[%s3248 + $0x22] sm:$0xff]
        %v5465 = vld [vmem:[%s3248 + $0x32] sm:$0xff]
        %v5466 = vld [vmem:[%s3248 + $0x3a] sm:$0xff]
        %v5467 = vld [vmem:[%s3248 + $0x4a] sm:$0xff]
        %v5468 = vld [vmem:[%s3248 + $0x52] sm:$0xff]
        %v5469 = vld [vmem:[%s3248 + $0x62] sm:$0xff]
        %v5470 = vld [vmem:[%s3248 + $0x6a] sm:$0xff]
        %v5471 = vld [vmem:[%s3248 + $0x7a] sm:$0xff]
        %v5472 = vld [vmem:[%s3248 + $0x82] sm:$0xff]
        %v5473 = vld [vmem:[%s3248 + $0x92] sm:$0xff]
        %v5474 = vld [vmem:[%s3248 + $0x9a] sm:$0xff]
        %v5475 = vld [vmem:[%s3248 + $0xaa] sm:$0xff]
        %v5476 = vld [vmem:[%s3248 + $0xb2] sm:$0xff]
        %v5477 = vld [vmem:[%s3248 + $0xc2] sm:$0xff]
        %v5478 = vld [vmem:[%s3248 + $0xca] sm:$0xff]
        %v5479 = vld [vmem:[%s3248 + $0xda] sm:$0xff]
        %v5480 = vld [vmem:[%s3248 + $0xe2] sm:$0xff]
        %v5481 = vld [vmem:[%s3248 + $0xf2] sm:$0xff]
        %v5482 = vld [vmem:[%s3248 + $0xfa] sm:$0xff]
        %v5483 = vld [vmem:[%s3248 + $0x10a] sm:$0xff]
        %v5484 = vld [vmem:[%s3248 + $0x112] sm:$0xff]
        %v5485 = vld [vmem:[%s3248 + $0x122] sm:$0xff]
        %v5486 = vld [vmem:[%s3248 + $0x12a] sm:$0xff]
        %v5487 = vld [vmem:[%s3248 + $0x13a] sm:$0xff]
        %v5488 = vld [vmem:[%s3248 + $0x142] sm:$0xff]
        %v5489 = vld [vmem:[%s3248 + $0x152] sm:$0xff]
        %v5490 = vld [vmem:[%s3248 + $0x15a] sm:$0xff]
        %v5491 = vld [vmem:[%s3248 + $0x16a] sm:$0xff]
        %v5492 = vld [vmem:[%s3248 + $0x172] sm:$0xff]
        %5525 = vrot.lane.b32.xlu0 %v5461, 24
        %v5526 = vpop.permute.xlu0 %5525
        %5527 = vrot.lane.b32.xlu0 %v5462, 24
        %v5528 = vpop.permute.xlu0 %5527
        %5529 = vrot.lane.b32.xlu0 %v5463, 24
        %v5530 = vpop.permute.xlu0 %5529
        %5531 = vrot.lane.b32.xlu0 %v5464, 24
        %v5532 = vpop.permute.xlu0 %5531
        %5533 = vrot.lane.b32.xlu0 %v5465, 24
        %v5534 = vpop.permute.xlu0 %5533
        %5535 = vrot.lane.b32.xlu0 %v5466, 24
        %v5536 = vpop.permute.xlu0 %5535
        %5537 = vrot.lane.b32.xlu0 %v5467, 24
        %v5538 = vpop.permute.xlu0 %5537
        %5539 = vrot.lane.b32.xlu0 %v5468, 24
        %v5540 = vpop.permute.xlu0 %5539
        %5541 = vrot.lane.b32.xlu0 %v5469, 24
        %v5542 = vpop.permute.xlu0 %5541
        %5543 = vrot.lane.b32.xlu0 %v5470, 24
        %v5544 = vpop.permute.xlu0 %5543
        %5545 = vrot.lane.b32.xlu0 %v5471, 24
        %v5546 = vpop.permute.xlu0 %5545
        %5547 = vrot.lane.b32.xlu0 %v5472, 24
        %v5548 = vpop.permute.xlu0 %5547
        %5549 = vrot.lane.b32.xlu0 %v5473, 24
        %v5550 = vpop.permute.xlu0 %5549
        %5551 = vrot.lane.b32.xlu0 %v5474, 24
        %v5552 = vpop.permute.xlu0 %5551
        %5553 = vrot.lane.b32.xlu0 %v5475, 24
        %v5554 = vpop.permute.xlu0 %5553
        %5555 = vrot.lane.b32.xlu0 %v5476, 24
        %v5556 = vpop.permute.xlu0 %5555
        %5557 = vrot.lane.b32.xlu0 %v5477, 24
        %v5558 = vpop.permute.xlu0 %5557
        %5559 = vrot.lane.b32.xlu0 %v5478, 24
        %v5560 = vpop.permute.xlu0 %5559
        %5561 = vrot.lane.b32.xlu0 %v5479, 24
        %v5562 = vpop.permute.xlu0 %5561
        %5563 = vrot.lane.b32.xlu0 %v5480, 24
        %v5564 = vpop.permute.xlu0 %5563
        %5565 = vrot.lane.b32.xlu0 %v5481, 24
        %v5566 = vpop.permute.xlu0 %5565
        %5567 = vrot.lane.b32.xlu0 %v5482, 24
        %v5568 = vpop.permute.xlu0 %5567
        %5569 = vrot.lane.b32.xlu0 %v5483, 24
        %v5570 = vpop.permute.xlu0 %5569
        %5571 = vrot.lane.b32.xlu0 %v5484, 24
        %v5572 = vpop.permute.xlu0 %5571
        %5573 = vrot.lane.b32.xlu0 %v5485, 24
        %v5574 = vpop.permute.xlu0 %5573
        %5575 = vrot.lane.b32.xlu0 %v5486, 24
        %v5576 = vpop.permute.xlu0 %5575
        %5577 = vrot.lane.b32.xlu0 %v5487, 24
        %v5578 = vpop.permute.xlu0 %5577
        %5579 = vrot.lane.b32.xlu0 %v5488, 24
        %v5580 = vpop.permute.xlu0 %5579
        %5581 = vrot.lane.b32.xlu0 %v5489, 24
        %v5582 = vpop.permute.xlu0 %5581
        %5583 = vrot.lane.b32.xlu0 %v5490, 24
        %v5584 = vpop.permute.xlu0 %5583
        %5585 = vrot.lane.b32.xlu0 %v5491, 24
        %v5586 = vpop.permute.xlu0 %5585
        %5587 = vrot.lane.b32.xlu0 %v5492, 24
        %v5588 = vpop.permute.xlu0 %5587
        %vm5621 = vcmask 212160
        %5622 = vst.msk [vmem:[#allocation5] sm:$0xff] %vm5621, %v5526
        %5623 = vst.msk [vmem:[#allocation5 + $0x8] sm:$0xff] %vm5621, %v5528
        %5624 = vst.msk [vmem:[#allocation5 + $0x10] sm:$0xff] %vm5621, %v5530
        %5625 = vst.msk [vmem:[#allocation5 + $0x18] sm:$0xff] %vm5621, %v5532
        %5626 = vst.msk [vmem:[#allocation5 + $0x20] sm:$0xff] %vm5621, %v5534
        %5627 = vst.msk [vmem:[#allocation5 + $0x28] sm:$0xff] %vm5621, %v5536
        %5628 = vst.msk [vmem:[#allocation5 + $0x30] sm:$0xff] %vm5621, %v5538
        %5629 = vst.msk [vmem:[#allocation5 + $0x38] sm:$0xff] %vm5621, %v5540
        %5630 = vst.msk [vmem:[#allocation5 + $0x40] sm:$0xff] %vm5621, %v5542
        %5631 = vst.msk [vmem:[#allocation5 + $0x48] sm:$0xff] %vm5621, %v5544
        %5632 = vst.msk [vmem:[#allocation5 + $0x50] sm:$0xff] %vm5621, %v5546
        %5633 = vst.msk [vmem:[#allocation5 + $0x58] sm:$0xff] %vm5621, %v5548
        %5634 = vst.msk [vmem:[#allocation5 + $0x60] sm:$0xff] %vm5621, %v5550
        %5635 = vst.msk [vmem:[#allocation5 + $0x68] sm:$0xff] %vm5621, %v5552
        %5636 = vst.msk [vmem:[#allocation5 + $0x70] sm:$0xff] %vm5621, %v5554
        %5637 = vst.msk [vmem:[#allocation5 + $0x78] sm:$0xff] %vm5621, %v5556
        %5638 = vst.msk [vmem:[#allocation5 + $0x80] sm:$0xff] %vm5621, %v5558
        %5639 = vst.msk [vmem:[#allocation5 + $0x88] sm:$0xff] %vm5621, %v5560
        %5640 = vst.msk [vmem:[#allocation5 + $0x90] sm:$0xff] %vm5621, %v5562
        %5641 = vst.msk [vmem:[#allocation5 + $0x98] sm:$0xff] %vm5621, %v5564
        %5642 = vst.msk [vmem:[#allocation5 + $0xa0] sm:$0xff] %vm5621, %v5566
        %5643 = vst.msk [vmem:[#allocation5 + $0xa8] sm:$0xff] %vm5621, %v5568
        %5644 = vst.msk [vmem:[#allocation5 + $0xb0] sm:$0xff] %vm5621, %v5570
        %5645 = vst.msk [vmem:[#allocation5 + $0xb8] sm:$0xff] %vm5621, %v5572
        %5646 = vst.msk [vmem:[#allocation5 + $0xc0] sm:$0xff] %vm5621, %v5574
        %5647 = vst.msk [vmem:[#allocation5 + $0xc8] sm:$0xff] %vm5621, %v5576
        %5648 = vst.msk [vmem:[#allocation5 + $0xd0] sm:$0xff] %vm5621, %v5578
        %5649 = vst.msk [vmem:[#allocation5 + $0xd8] sm:$0xff] %vm5621, %v5580
        %5650 = vst.msk [vmem:[#allocation5 + $0xe0] sm:$0xff] %vm5621, %v5582
        %5651 = vst.msk [vmem:[#allocation5 + $0xe8] sm:$0xff] %vm5621, %v5584
        %5652 = vst.msk [vmem:[#allocation5 + $0xf0] sm:$0xff] %vm5621, %v5586
        %5653 = vst.msk [vmem:[#allocation5 + $0xf8] sm:$0xff] %vm5621, %v5588
        %v5654 = vld [vmem:[%s3248 + $0x3] sm:$0xff]
        %v5655 = vld [vmem:[%s3248 + $0xb] sm:$0xff]
        %v5656 = vld [vmem:[%s3248 + $0x1b] sm:$0xff]
        %v5657 = vld [vmem:[%s3248 + $0x23] sm:$0xff]
        %v5658 = vld [vmem:[%s3248 + $0x33] sm:$0xff]
        %v5659 = vld [vmem:[%s3248 + $0x3b] sm:$0xff]
        %v5660 = vld [vmem:[%s3248 + $0x4b] sm:$0xff]
        %v5661 = vld [vmem:[%s3248 + $0x53] sm:$0xff]
        %v5662 = vld [vmem:[%s3248 + $0x63] sm:$0xff]
        %v5663 = vld [vmem:[%s3248 + $0x6b] sm:$0xff]
        %v5664 = vld [vmem:[%s3248 + $0x7b] sm:$0xff]
        %v5665 = vld [vmem:[%s3248 + $0x83] sm:$0xff]
        %v5666 = vld [vmem:[%s3248 + $0x93] sm:$0xff]
        %v5667 = vld [vmem:[%s3248 + $0x9b] sm:$0xff]
        %v5668 = vld [vmem:[%s3248 + $0xab] sm:$0xff]
        %v5669 = vld [vmem:[%s3248 + $0xb3] sm:$0xff]
        %v5670 = vld [vmem:[%s3248 + $0xc3] sm:$0xff]
        %v5671 = vld [vmem:[%s3248 + $0xcb] sm:$0xff]
        %v5672 = vld [vmem:[%s3248 + $0xdb] sm:$0xff]
        %v5673 = vld [vmem:[%s3248 + $0xe3] sm:$0xff]
        %v5674 = vld [vmem:[%s3248 + $0xf3] sm:$0xff]
        %v5675 = vld [vmem:[%s3248 + $0xfb] sm:$0xff]
        %v5676 = vld [vmem:[%s3248 + $0x10b] sm:$0xff]
        %v5677 = vld [vmem:[%s3248 + $0x113] sm:$0xff]
        %v5678 = vld [vmem:[%s3248 + $0x123] sm:$0xff]
        %v5679 = vld [vmem:[%s3248 + $0x12b] sm:$0xff]
        %v5680 = vld [vmem:[%s3248 + $0x13b] sm:$0xff]
        %v5681 = vld [vmem:[%s3248 + $0x143] sm:$0xff]
        %v5682 = vld [vmem:[%s3248 + $0x153] sm:$0xff]
        %v5683 = vld [vmem:[%s3248 + $0x15b] sm:$0xff]
        %v5684 = vld [vmem:[%s3248 + $0x16b] sm:$0xff]
        %v5685 = vld [vmem:[%s3248 + $0x173] sm:$0xff]
        %5718 = vrot.lane.b32.xlu0 %v5654, 26
        %v5719 = vpop.permute.xlu0 %5718
        %5720 = vrot.lane.b32.xlu0 %v5655, 26
        %v5721 = vpop.permute.xlu0 %5720
        %5722 = vrot.lane.b32.xlu0 %v5656, 26
        %v5723 = vpop.permute.xlu0 %5722
        %5724 = vrot.lane.b32.xlu0 %v5657, 26
        %v5725 = vpop.permute.xlu0 %5724
        %5726 = vrot.lane.b32.xlu0 %v5658, 26
        %v5727 = vpop.permute.xlu0 %5726
        %5728 = vrot.lane.b32.xlu0 %v5659, 26
        %v5729 = vpop.permute.xlu0 %5728
        %5730 = vrot.lane.b32.xlu0 %v5660, 26
        %v5731 = vpop.permute.xlu0 %5730
        %5732 = vrot.lane.b32.xlu0 %v5661, 26
        %v5733 = vpop.permute.xlu0 %5732
        %5734 = vrot.lane.b32.xlu0 %v5662, 26
        %v5735 = vpop.permute.xlu0 %5734
        %5736 = vrot.lane.b32.xlu0 %v5663, 26
        %v5737 = vpop.permute.xlu0 %5736
        %5738 = vrot.lane.b32.xlu0 %v5664, 26
        %v5739 = vpop.permute.xlu0 %5738
        %5740 = vrot.lane.b32.xlu0 %v5665, 26
        %v5741 = vpop.permute.xlu0 %5740
        %5742 = vrot.lane.b32.xlu0 %v5666, 26
        %v5743 = vpop.permute.xlu0 %5742
        %5744 = vrot.lane.b32.xlu0 %v5667, 26
        %v5745 = vpop.permute.xlu0 %5744
        %5746 = vrot.lane.b32.xlu0 %v5668, 26
        %v5747 = vpop.permute.xlu0 %5746
        %5748 = vrot.lane.b32.xlu0 %v5669, 26
        %v5749 = vpop.permute.xlu0 %5748
        %5750 = vrot.lane.b32.xlu0 %v5670, 26
        %v5751 = vpop.permute.xlu0 %5750
        %5752 = vrot.lane.b32.xlu0 %v5671, 26
        %v5753 = vpop.permute.xlu0 %5752
        %5754 = vrot.lane.b32.xlu0 %v5672, 26
        %v5755 = vpop.permute.xlu0 %5754
        %5756 = vrot.lane.b32.xlu0 %v5673, 26
        %v5757 = vpop.permute.xlu0 %5756
        %5758 = vrot.lane.b32.xlu0 %v5674, 26
        %v5759 = vpop.permute.xlu0 %5758
        %5760 = vrot.lane.b32.xlu0 %v5675, 26
        %v5761 = vpop.permute.xlu0 %5760
        %5762 = vrot.lane.b32.xlu0 %v5676, 26
        %v5763 = vpop.permute.xlu0 %5762
        %5764 = vrot.lane.b32.xlu0 %v5677, 26
        %v5765 = vpop.permute.xlu0 %5764
        %5766 = vrot.lane.b32.xlu0 %v5678, 26
        %v5767 = vpop.permute.xlu0 %5766
        %5768 = vrot.lane.b32.xlu0 %v5679, 26
        %v5769 = vpop.permute.xlu0 %5768
        %5770 = vrot.lane.b32.xlu0 %v5680, 26
        %v5771 = vpop.permute.xlu0 %5770
        %5772 = vrot.lane.b32.xlu0 %v5681, 26
        %v5773 = vpop.permute.xlu0 %5772
        %5774 = vrot.lane.b32.xlu0 %v5682, 26
        %v5775 = vpop.permute.xlu0 %5774
        %5776 = vrot.lane.b32.xlu0 %v5683, 26
        %v5777 = vpop.permute.xlu0 %5776
        %5778 = vrot.lane.b32.xlu0 %v5684, 26
        %v5779 = vpop.permute.xlu0 %5778
        %5780 = vrot.lane.b32.xlu0 %v5685, 26
        %v5781 = vpop.permute.xlu0 %5780
        %vm5814 = vcmask 228560
        %5815 = vst.msk [vmem:[#allocation5] sm:$0xff] %vm5814, %v5719
        %5816 = vst.msk [vmem:[#allocation5 + $0x8] sm:$0xff] %vm5814, %v5721
        %5817 = vst.msk [vmem:[#allocation5 + $0x10] sm:$0xff] %vm5814, %v5723
        %5818 = vst.msk [vmem:[#allocation5 + $0x18] sm:$0xff] %vm5814, %v5725
        %5819 = vst.msk [vmem:[#allocation5 + $0x20] sm:$0xff] %vm5814, %v5727
        %5820 = vst.msk [vmem:[#allocation5 + $0x28] sm:$0xff] %vm5814, %v5729
        %5821 = vst.msk [vmem:[#allocation5 + $0x30] sm:$0xff] %vm5814, %v5731
        %5822 = vst.msk [vmem:[#allocation5 + $0x38] sm:$0xff] %vm5814, %v5733
        %5823 = vst.msk [vmem:[#allocation5 + $0x40] sm:$0xff] %vm5814, %v5735
        %5824 = vst.msk [vmem:[#allocation5 + $0x48] sm:$0xff] %vm5814, %v5737
        %5825 = vst.msk [vmem:[#allocation5 + $0x50] sm:$0xff] %vm5814, %v5739
        %5826 = vst.msk [vmem:[#allocation5 + $0x58] sm:$0xff] %vm5814, %v5741
        %5827 = vst.msk [vmem:[#allocation5 + $0x60] sm:$0xff] %vm5814, %v5743
        %5828 = vst.msk [vmem:[#allocation5 + $0x68] sm:$0xff] %vm5814, %v5745
        %5829 = vst.msk [vmem:[#allocation5 + $0x70] sm:$0xff] %vm5814, %v5747
        %5830 = vst.msk [vmem:[#allocation5 + $0x78] sm:$0xff] %vm5814, %v5749
        %5831 = vst.msk [vmem:[#allocation5 + $0x80] sm:$0xff] %vm5814, %v5751
        %5832 = vst.msk [vmem:[#allocation5 + $0x88] sm:$0xff] %vm5814, %v5753
        %5833 = vst.msk [vmem:[#allocation5 + $0x90] sm:$0xff] %vm5814, %v5755
        %5834 = vst.msk [vmem:[#allocation5 + $0x98] sm:$0xff] %vm5814, %v5757
        %5835 = vst.msk [vmem:[#allocation5 + $0xa0] sm:$0xff] %vm5814, %v5759
        %5836 = vst.msk [vmem:[#allocation5 + $0xa8] sm:$0xff] %vm5814, %v5761
        %5837 = vst.msk [vmem:[#allocation5 + $0xb0] sm:$0xff] %vm5814, %v5763
        %5838 = vst.msk [vmem:[#allocation5 + $0xb8] sm:$0xff] %vm5814, %v5765
        %5839 = vst.msk [vmem:[#allocation5 + $0xc0] sm:$0xff] %vm5814, %v5767
        %5840 = vst.msk [vmem:[#allocation5 + $0xc8] sm:$0xff] %vm5814, %v5769
        %5841 = vst.msk [vmem:[#allocation5 + $0xd0] sm:$0xff] %vm5814, %v5771
        %5842 = vst.msk [vmem:[#allocation5 + $0xd8] sm:$0xff] %vm5814, %v5773
        %5843 = vst.msk [vmem:[#allocation5 + $0xe0] sm:$0xff] %vm5814, %v5775
        %5844 = vst.msk [vmem:[#allocation5 + $0xe8] sm:$0xff] %vm5814, %v5777
        %5845 = vst.msk [vmem:[#allocation5 + $0xf0] sm:$0xff] %vm5814, %v5779
        %5846 = vst.msk [vmem:[#allocation5 + $0xf8] sm:$0xff] %vm5814, %v5781
        %v5847 = vld [vmem:[%s3248 + $0x4] sm:$0xff]
        %v5848 = vld [vmem:[%s3248 + $0xc] sm:$0xff]
        %v5849 = vld [vmem:[%s3248 + $0x1c] sm:$0xff]
        %v5850 = vld [vmem:[%s3248 + $0x24] sm:$0xff]
        %v5851 = vld [vmem:[%s3248 + $0x34] sm:$0xff]
        %v5852 = vld [vmem:[%s3248 + $0x3c] sm:$0xff]
        %v5853 = vld [vmem:[%s3248 + $0x4c] sm:$0xff]
        %v5854 = vld [vmem:[%s3248 + $0x54] sm:$0xff]
        %v5855 = vld [vmem:[%s3248 + $0x64] sm:$0xff]
        %v5856 = vld [vmem:[%s3248 + $0x6c] sm:$0xff]
        %v5857 = vld [vmem:[%s3248 + $0x7c] sm:$0xff]
        %v5858 = vld [vmem:[%s3248 + $0x84] sm:$0xff]
        %v5859 = vld [vmem:[%s3248 + $0x94] sm:$0xff]
        %v5860 = vld [vmem:[%s3248 + $0x9c] sm:$0xff]
        %v5861 = vld [vmem:[%s3248 + $0xac] sm:$0xff]
        %v5862 = vld [vmem:[%s3248 + $0xb4] sm:$0xff]
        %v5863 = vld [vmem:[%s3248 + $0xc4] sm:$0xff]
        %v5864 = vld [vmem:[%s3248 + $0xcc] sm:$0xff]
        %v5865 = vld [vmem:[%s3248 + $0xdc] sm:$0xff]
        %v5866 = vld [vmem:[%s3248 + $0xe4] sm:$0xff]
        %v5867 = vld [vmem:[%s3248 + $0xf4] sm:$0xff]
        %v5868 = vld [vmem:[%s3248 + $0xfc] sm:$0xff]
        %v5869 = vld [vmem:[%s3248 + $0x10c] sm:$0xff]
        %v5870 = vld [vmem:[%s3248 + $0x114] sm:$0xff]
        %v5871 = vld [vmem:[%s3248 + $0x124] sm:$0xff]
        %v5872 = vld [vmem:[%s3248 + $0x12c] sm:$0xff]
        %v5873 = vld [vmem:[%s3248 + $0x13c] sm:$0xff]
        %v5874 = vld [vmem:[%s3248 + $0x144] sm:$0xff]
        %v5875 = vld [vmem:[%s3248 + $0x154] sm:$0xff]
        %v5876 = vld [vmem:[%s3248 + $0x15c] sm:$0xff]
        %v5877 = vld [vmem:[%s3248 + $0x16c] sm:$0xff]
        %v5878 = vld [vmem:[%s3248 + $0x174] sm:$0xff]
        %5911 = vrot.lane.b32.xlu0 %v5847, 28
        %v5912 = vpop.permute.xlu0 %5911
        %5913 = vrot.lane.b32.xlu0 %v5848, 28
        %v5914 = vpop.permute.xlu0 %5913
        %5915 = vrot.lane.b32.xlu0 %v5849, 28
        %v5916 = vpop.permute.xlu0 %5915
        %5917 = vrot.lane.b32.xlu0 %v5850, 28
        %v5918 = vpop.permute.xlu0 %5917
        %5919 = vrot.lane.b32.xlu0 %v5851, 28
        %v5920 = vpop.permute.xlu0 %5919
        %5921 = vrot.lane.b32.xlu0 %v5852, 28
        %v5922 = vpop.permute.xlu0 %5921
        %5923 = vrot.lane.b32.xlu0 %v5853, 28
        %v5924 = vpop.permute.xlu0 %5923
        %5925 = vrot.lane.b32.xlu0 %v5854, 28
        %v5926 = vpop.permute.xlu0 %5925
        %5927 = vrot.lane.b32.xlu0 %v5855, 28
        %v5928 = vpop.permute.xlu0 %5927
        %5929 = vrot.lane.b32.xlu0 %v5856, 28
        %v5930 = vpop.permute.xlu0 %5929
        %5931 = vrot.lane.b32.xlu0 %v5857, 28
        %v5932 = vpop.permute.xlu0 %5931
        %5933 = vrot.lane.b32.xlu0 %v5858, 28
        %v5934 = vpop.permute.xlu0 %5933
        %5935 = vrot.lane.b32.xlu0 %v5859, 28
        %v5936 = vpop.permute.xlu0 %5935
        %5937 = vrot.lane.b32.xlu0 %v5860, 28
        %v5938 = vpop.permute.xlu0 %5937
        %5939 = vrot.lane.b32.xlu0 %v5861, 28
        %v5940 = vpop.permute.xlu0 %5939
        %5941 = vrot.lane.b32.xlu0 %v5862, 28
        %v5942 = vpop.permute.xlu0 %5941
        %5943 = vrot.lane.b32.xlu0 %v5863, 28
        %v5944 = vpop.permute.xlu0 %5943
        %5945 = vrot.lane.b32.xlu0 %v5864, 28
        %v5946 = vpop.permute.xlu0 %5945
        %5947 = vrot.lane.b32.xlu0 %v5865, 28
        %v5948 = vpop.permute.xlu0 %5947
        %5949 = vrot.lane.b32.xlu0 %v5866, 28
        %v5950 = vpop.permute.xlu0 %5949
        %5951 = vrot.lane.b32.xlu0 %v5867, 28
        %v5952 = vpop.permute.xlu0 %5951
        %5953 = vrot.lane.b32.xlu0 %v5868, 28
        %v5954 = vpop.permute.xlu0 %5953
        %5955 = vrot.lane.b32.xlu0 %v5869, 28
        %v5956 = vpop.permute.xlu0 %5955
        %5957 = vrot.lane.b32.xlu0 %v5870, 28
        %v5958 = vpop.permute.xlu0 %5957
        %5959 = vrot.lane.b32.xlu0 %v5871, 28
        %v5960 = vpop.permute.xlu0 %5959
        %5961 = vrot.lane.b32.xlu0 %v5872, 28
        %v5962 = vpop.permute.xlu0 %5961
        %5963 = vrot.lane.b32.xlu0 %v5873, 28
        %v5964 = vpop.permute.xlu0 %5963
        %5965 = vrot.lane.b32.xlu0 %v5874, 28
        %v5966 = vpop.permute.xlu0 %5965
        %5967 = vrot.lane.b32.xlu0 %v5875, 28
        %v5968 = vpop.permute.xlu0 %5967
        %5969 = vrot.lane.b32.xlu0 %v5876, 28
        %v5970 = vpop.permute.xlu0 %5969
        %5971 = vrot.lane.b32.xlu0 %v5877, 28
        %v5972 = vpop.permute.xlu0 %5971
        %5973 = vrot.lane.b32.xlu0 %v5878, 28
        %v5974 = vpop.permute.xlu0 %5973
        %vm6007 = vcmask 244960
        %6008 = vst.msk [vmem:[#allocation5] sm:$0xff] %vm6007, %v5912
        %6009 = vst.msk [vmem:[#allocation5 + $0x8] sm:$0xff] %vm6007, %v5914
        %6010 = vst.msk [vmem:[#allocation5 + $0x10] sm:$0xff] %vm6007, %v5916
        %6011 = vst.msk [vmem:[#allocation5 + $0x18] sm:$0xff] %vm6007, %v5918
        %6012 = vst.msk [vmem:[#allocation5 + $0x20] sm:$0xff] %vm6007, %v5920
        %6013 = vst.msk [vmem:[#allocation5 + $0x28] sm:$0xff] %vm6007, %v5922
        %6014 = vst.msk [vmem:[#allocation5 + $0x30] sm:$0xff] %vm6007, %v5924
        %6015 = vst.msk [vmem:[#allocation5 + $0x38] sm:$0xff] %vm6007, %v5926
        %6016 = vst.msk [vmem:[#allocation5 + $0x40] sm:$0xff] %vm6007, %v5928
        %6017 = vst.msk [vmem:[#allocation5 + $0x48] sm:$0xff] %vm6007, %v5930
        %6018 = vst.msk [vmem:[#allocation5 + $0x50] sm:$0xff] %vm6007, %v5932
        %6019 = vst.msk [vmem:[#allocation5 + $0x58] sm:$0xff] %vm6007, %v5934
        %6020 = vst.msk [vmem:[#allocation5 + $0x60] sm:$0xff] %vm6007, %v5936
        %6021 = vst.msk [vmem:[#allocation5 + $0x68] sm:$0xff] %vm6007, %v5938
        %6022 = vst.msk [vmem:[#allocation5 + $0x70] sm:$0xff] %vm6007, %v5940
        %6023 = vst.msk [vmem:[#allocation5 + $0x78] sm:$0xff] %vm6007, %v5942
        %6024 = vst.msk [vmem:[#allocation5 + $0x80] sm:$0xff] %vm6007, %v5944
        %6025 = vst.msk [vmem:[#allocation5 + $0x88] sm:$0xff] %vm6007, %v5946
        %6026 = vst.msk [vmem:[#allocation5 + $0x90] sm:$0xff] %vm6007, %v5948
        %6027 = vst.msk [vmem:[#allocation5 + $0x98] sm:$0xff] %vm6007, %v5950
        %6028 = vst.msk [vmem:[#allocation5 + $0xa0] sm:$0xff] %vm6007, %v5952
        %6029 = vst.msk [vmem:[#allocation5 + $0xa8] sm:$0xff] %vm6007, %v5954
        %6030 = vst.msk [vmem:[#allocation5 + $0xb0] sm:$0xff] %vm6007, %v5956
        %6031 = vst.msk [vmem:[#allocation5 + $0xb8] sm:$0xff] %vm6007, %v5958
        %6032 = vst.msk [vmem:[#allocation5 + $0xc0] sm:$0xff] %vm6007, %v5960
        %6033 = vst.msk [vmem:[#allocation5 + $0xc8] sm:$0xff] %vm6007, %v5962
        %6034 = vst.msk [vmem:[#allocation5 + $0xd0] sm:$0xff] %vm6007, %v5964
        %6035 = vst.msk [vmem:[#allocation5 + $0xd8] sm:$0xff] %vm6007, %v5966
        %6036 = vst.msk [vmem:[#allocation5 + $0xe0] sm:$0xff] %vm6007, %v5968
        %6037 = vst.msk [vmem:[#allocation5 + $0xe8] sm:$0xff] %vm6007, %v5970
        %6038 = vst.msk [vmem:[#allocation5 + $0xf0] sm:$0xff] %vm6007, %v5972
        %6039 = vst.msk [vmem:[#allocation5 + $0xf8] sm:$0xff] %vm6007, %v5974
        %s6040 = scalar_lea.vmem [#allocation4], 72
        %v6041 = vld [vmem:[%s6040] sm:$0xff]
        %v6042 = vld [vmem:[%s6040 + $0x8] sm:$0xff]
        %v6043 = vld [vmem:[%s6040 + $0x18] sm:$0xff]
        %v6044 = vld [vmem:[%s6040 + $0x20] sm:$0xff]
        %v6045 = vld [vmem:[%s6040 + $0x30] sm:$0xff]
        %v6046 = vld [vmem:[%s6040 + $0x38] sm:$0xff]
        %v6047 = vld [vmem:[%s6040 + $0x48] sm:$0xff]
        %v6048 = vld [vmem:[%s6040 + $0x50] sm:$0xff]
        %v6049 = vld [vmem:[%s6040 + $0x60] sm:$0xff]
        %v6050 = vld [vmem:[%s6040 + $0x68] sm:$0xff]
        %v6051 = vld [vmem:[%s6040 + $0x78] sm:$0xff]
        %v6052 = vld [vmem:[%s6040 + $0x80] sm:$0xff]
        %v6053 = vld [vmem:[%s6040 + $0x90] sm:$0xff]
        %v6054 = vld [vmem:[%s6040 + $0x98] sm:$0xff]
        %v6055 = vld [vmem:[%s6040 + $0xa8] sm:$0xff]
        %v6056 = vld [vmem:[%s6040 + $0xb0] sm:$0xff]
        %v6057 = vld [vmem:[%s6040 + $0xc0] sm:$0xff]
        %v6058 = vld [vmem:[%s6040 + $0xc8] sm:$0xff]
        %v6059 = vld [vmem:[%s6040 + $0xd8] sm:$0xff]
        %v6060 = vld [vmem:[%s6040 + $0xe0] sm:$0xff]
        %v6061 = vld [vmem:[%s6040 + $0xf0] sm:$0xff]
        %v6062 = vld [vmem:[%s6040 + $0xf8] sm:$0xff]
        %v6063 = vld [vmem:[%s6040 + $0x108] sm:$0xff]
        %v6064 = vld [vmem:[%s6040 + $0x110] sm:$0xff]
        %v6065 = vld [vmem:[%s6040 + $0x120] sm:$0xff]
        %v6066 = vld [vmem:[%s6040 + $0x128] sm:$0xff]
        %v6067 = vld [vmem:[%s6040 + $0x138] sm:$0xff]
        %v6068 = vld [vmem:[%s6040 + $0x140] sm:$0xff]
        %v6069 = vld [vmem:[%s6040 + $0x150] sm:$0xff]
        %v6070 = vld [vmem:[%s6040 + $0x158] sm:$0xff]
        %v6071 = vld [vmem:[%s6040 + $0x168] sm:$0xff]
        %v6072 = vld [vmem:[%s6040 + $0x170] sm:$0xff]
        %6105 = vrot.lane.b32.xlu0 %v6041, 30
        %v6106 = vpop.permute.xlu0 %6105
        %6107 = vrot.lane.b32.xlu0 %v6042, 30
        %v6108 = vpop.permute.xlu0 %6107
        %6109 = vrot.lane.b32.xlu0 %v6043, 30
        %v6110 = vpop.permute.xlu0 %6109
        %6111 = vrot.lane.b32.xlu0 %v6044, 30
        %v6112 = vpop.permute.xlu0 %6111
        %6113 = vrot.lane.b32.xlu0 %v6045, 30
        %v6114 = vpop.permute.xlu0 %6113
        %6115 = vrot.lane.b32.xlu0 %v6046, 30
        %v6116 = vpop.permute.xlu0 %6115
        %6117 = vrot.lane.b32.xlu0 %v6047, 30
        %v6118 = vpop.permute.xlu0 %6117
        %6119 = vrot.lane.b32.xlu0 %v6048, 30
        %v6120 = vpop.permute.xlu0 %6119
        %6121 = vrot.lane.b32.xlu0 %v6049, 30
        %v6122 = vpop.permute.xlu0 %6121
        %6123 = vrot.lane.b32.xlu0 %v6050, 30
        %v6124 = vpop.permute.xlu0 %6123
        %6125 = vrot.lane.b32.xlu0 %v6051, 30
        %v6126 = vpop.permute.xlu0 %6125
        %6127 = vrot.lane.b32.xlu0 %v6052, 30
        %v6128 = vpop.permute.xlu0 %6127
        %6129 = vrot.lane.b32.xlu0 %v6053, 30
        %v6130 = vpop.permute.xlu0 %6129
        %6131 = vrot.lane.b32.xlu0 %v6054, 30
        %v6132 = vpop.permute.xlu0 %6131
        %6133 = vrot.lane.b32.xlu0 %v6055, 30
        %v6134 = vpop.permute.xlu0 %6133
        %6135 = vrot.lane.b32.xlu0 %v6056, 30
        %v6136 = vpop.permute.xlu0 %6135
        %6137 = vrot.lane.b32.xlu0 %v6057, 30
        %v6138 = vpop.permute.xlu0 %6137
        %6139 = vrot.lane.b32.xlu0 %v6058, 30
        %v6140 = vpop.permute.xlu0 %6139
        %6141 = vrot.lane.b32.xlu0 %v6059, 30
        %v6142 = vpop.permute.xlu0 %6141
        %6143 = vrot.lane.b32.xlu0 %v6060, 30
        %v6144 = vpop.permute.xlu0 %6143
        %6145 = vrot.lane.b32.xlu0 %v6061, 30
        %v6146 = vpop.permute.xlu0 %6145
        %6147 = vrot.lane.b32.xlu0 %v6062, 30
        %v6148 = vpop.permute.xlu0 %6147
        %6149 = vrot.lane.b32.xlu0 %v6063, 30
        %v6150 = vpop.permute.xlu0 %6149
        %6151 = vrot.lane.b32.xlu0 %v6064, 30
        %v6152 = vpop.permute.xlu0 %6151
        %6153 = vrot.lane.b32.xlu0 %v6065, 30
        %v6154 = vpop.permute.xlu0 %6153
        %6155 = vrot.lane.b32.xlu0 %v6066, 30
        %v6156 = vpop.permute.xlu0 %6155
        %6157 = vrot.lane.b32.xlu0 %v6067, 30
        %v6158 = vpop.permute.xlu0 %6157
        %6159 = vrot.lane.b32.xlu0 %v6068, 30
        %v6160 = vpop.permute.xlu0 %6159
        %6161 = vrot.lane.b32.xlu0 %v6069, 30
        %v6162 = vpop.permute.xlu0 %6161
        %6163 = vrot.lane.b32.xlu0 %v6070, 30
        %v6164 = vpop.permute.xlu0 %6163
        %6165 = vrot.lane.b32.xlu0 %v6071, 30
        %v6166 = vpop.permute.xlu0 %6165
        %6167 = vrot.lane.b32.xlu0 %v6072, 30
        %v6168 = vpop.permute.xlu0 %6167
        %vm6201 = vcmask 261360
        %6202 = vst.msk [vmem:[#allocation5] sm:$0xff] %vm6201, %v6106
        %6203 = vst.msk [vmem:[#allocation5 + $0x8] sm:$0xff] %vm6201, %v6108
        %6204 = vst.msk [vmem:[#allocation5 + $0x10] sm:$0xff] %vm6201, %v6110
        %6205 = vst.msk [vmem:[#allocation5 + $0x18] sm:$0xff] %vm6201, %v6112
        %6206 = vst.msk [vmem:[#allocation5 + $0x20] sm:$0xff] %vm6201, %v6114
        %6207 = vst.msk [vmem:[#allocation5 + $0x28] sm:$0xff] %vm6201, %v6116
        %6208 = vst.msk [vmem:[#allocation5 + $0x30] sm:$0xff] %vm6201, %v6118
        %6209 = vst.msk [vmem:[#allocation5 + $0x38] sm:$0xff] %vm6201, %v6120
        %6210 = vst.msk [vmem:[#allocation5 + $0x40] sm:$0xff] %vm6201, %v6122
        %6211 = vst.msk [vmem:[#allocation5 + $0x48] sm:$0xff] %vm6201, %v6124
        %6212 = vst.msk [vmem:[#allocation5 + $0x50] sm:$0xff] %vm6201, %v6126
        %6213 = vst.msk [vmem:[#allocation5 + $0x58] sm:$0xff] %vm6201, %v6128
        %6214 = vst.msk [vmem:[#allocation5 + $0x60] sm:$0xff] %vm6201, %v6130
        %6215 = vst.msk [vmem:[#allocation5 + $0x68] sm:$0xff] %vm6201, %v6132
        %6216 = vst.msk [vmem:[#allocation5 + $0x70] sm:$0xff] %vm6201, %v6134
        %6217 = vst.msk [vmem:[#allocation5 + $0x78] sm:$0xff] %vm6201, %v6136
        %6218 = vst.msk [vmem:[#allocation5 + $0x80] sm:$0xff] %vm6201, %v6138
        %6219 = vst.msk [vmem:[#allocation5 + $0x88] sm:$0xff] %vm6201, %v6140
        %6220 = vst.msk [vmem:[#allocation5 + $0x90] sm:$0xff] %vm6201, %v6142
        %6221 = vst.msk [vmem:[#allocation5 + $0x98] sm:$0xff] %vm6201, %v6144
        %6222 = vst.msk [vmem:[#allocation5 + $0xa0] sm:$0xff] %vm6201, %v6146
        %6223 = vst.msk [vmem:[#allocation5 + $0xa8] sm:$0xff] %vm6201, %v6148
        %6224 = vst.msk [vmem:[#allocation5 + $0xb0] sm:$0xff] %vm6201, %v6150
        %6225 = vst.msk [vmem:[#allocation5 + $0xb8] sm:$0xff] %vm6201, %v6152
        %6226 = vst.msk [vmem:[#allocation5 + $0xc0] sm:$0xff] %vm6201, %v6154
        %6227 = vst.msk [vmem:[#allocation5 + $0xc8] sm:$0xff] %vm6201, %v6156
        %6228 = vst.msk [vmem:[#allocation5 + $0xd0] sm:$0xff] %vm6201, %v6158
        %6229 = vst.msk [vmem:[#allocation5 + $0xd8] sm:$0xff] %vm6201, %v6160
        %6230 = vst.msk [vmem:[#allocation5 + $0xe0] sm:$0xff] %vm6201, %v6162
        %6231 = vst.msk [vmem:[#allocation5 + $0xe8] sm:$0xff] %vm6201, %v6164
        %6232 = vst.msk [vmem:[#allocation5 + $0xf0] sm:$0xff] %vm6201, %v6166
        %6233 = vst.msk [vmem:[#allocation5 + $0xf8] sm:$0xff] %vm6201, %v6168
        %v6234 = vld [vmem:[%s6040 + $0x1] sm:$0xff]
        %v6235 = vld [vmem:[%s6040 + $0x9] sm:$0xff]
        %v6236 = vld [vmem:[%s6040 + $0x19] sm:$0xff]
        %v6237 = vld [vmem:[%s6040 + $0x21] sm:$0xff]
        %v6238 = vld [vmem:[%s6040 + $0x31] sm:$0xff]
        %v6239 = vld [vmem:[%s6040 + $0x39] sm:$0xff]
        %v6240 = vld [vmem:[%s6040 + $0x49] sm:$0xff]
        %v6241 = vld [vmem:[%s6040 + $0x51] sm:$0xff]
        %v6242 = vld [vmem:[%s6040 + $0x61] sm:$0xff]
        %v6243 = vld [vmem:[%s6040 + $0x69] sm:$0xff]
        %v6244 = vld [vmem:[%s6040 + $0x79] sm:$0xff]
        %v6245 = vld [vmem:[%s6040 + $0x81] sm:$0xff]
        %v6246 = vld [vmem:[%s6040 + $0x91] sm:$0xff]
        %v6247 = vld [vmem:[%s6040 + $0x99] sm:$0xff]
        %v6248 = vld [vmem:[%s6040 + $0xa9] sm:$0xff]
        %v6249 = vld [vmem:[%s6040 + $0xb1] sm:$0xff]
        %v6250 = vld [vmem:[%s6040 + $0xc1] sm:$0xff]
        %v6251 = vld [vmem:[%s6040 + $0xc9] sm:$0xff]
        %v6252 = vld [vmem:[%s6040 + $0xd9] sm:$0xff]
        %v6253 = vld [vmem:[%s6040 + $0xe1] sm:$0xff]
        %v6254 = vld [vmem:[%s6040 + $0xf1] sm:$0xff]
        %v6255 = vld [vmem:[%s6040 + $0xf9] sm:$0xff]
        %v6256 = vld [vmem:[%s6040 + $0x109] sm:$0xff]
        %v6257 = vld [vmem:[%s6040 + $0x111] sm:$0xff]
        %v6258 = vld [vmem:[%s6040 + $0x121] sm:$0xff]
        %v6259 = vld [vmem:[%s6040 + $0x129] sm:$0xff]
        %v6260 = vld [vmem:[%s6040 + $0x139] sm:$0xff]
        %v6261 = vld [vmem:[%s6040 + $0x141] sm:$0xff]
        %v6262 = vld [vmem:[%s6040 + $0x151] sm:$0xff]
        %v6263 = vld [vmem:[%s6040 + $0x159] sm:$0xff]
        %v6264 = vld [vmem:[%s6040 + $0x169] sm:$0xff]
        %v6265 = vld [vmem:[%s6040 + $0x171] sm:$0xff]
        %6298 = vrot.lane.b32.xlu0 %v6234, 32
        %v6299 = vpop.permute.xlu0 %6298
        %6300 = vrot.lane.b32.xlu0 %v6235, 32
        %v6301 = vpop.permute.xlu0 %6300
        %6302 = vrot.lane.b32.xlu0 %v6236, 32
        %v6303 = vpop.permute.xlu0 %6302
        %6304 = vrot.lane.b32.xlu0 %v6237, 32
        %v6305 = vpop.permute.xlu0 %6304
        %6306 = vrot.lane.b32.xlu0 %v6238, 32
        %v6307 = vpop.permute.xlu0 %6306
        %6308 = vrot.lane.b32.xlu0 %v6239, 32
        %v6309 = vpop.permute.xlu0 %6308
        %6310 = vrot.lane.b32.xlu0 %v6240, 32
        %v6311 = vpop.permute.xlu0 %6310
        %6312 = vrot.lane.b32.xlu0 %v6241, 32
        %v6313 = vpop.permute.xlu0 %6312
        %6314 = vrot.lane.b32.xlu0 %v6242, 32
        %v6315 = vpop.permute.xlu0 %6314
        %6316 = vrot.lane.b32.xlu0 %v6243, 32
        %v6317 = vpop.permute.xlu0 %6316
        %6318 = vrot.lane.b32.xlu0 %v6244, 32
        %v6319 = vpop.permute.xlu0 %6318
        %6320 = vrot.lane.b32.xlu0 %v6245, 32
        %v6321 = vpop.permute.xlu0 %6320
        %6322 = vrot.lane.b32.xlu0 %v6246, 32
        %v6323 = vpop.permute.xlu0 %6322
        %6324 = vrot.lane.b32.xlu0 %v6247, 32
        %v6325 = vpop.permute.xlu0 %6324
        %6326 = vrot.lane.b32.xlu0 %v6248, 32
        %v6327 = vpop.permute.xlu0 %6326
        %6328 = vrot.lane.b32.xlu0 %v6249, 32
        %v6329 = vpop.permute.xlu0 %6328
        %6330 = vrot.lane.b32.xlu0 %v6250, 32
        %v6331 = vpop.permute.xlu0 %6330
        %6332 = vrot.lane.b32.xlu0 %v6251, 32
        %v6333 = vpop.permute.xlu0 %6332
        %6334 = vrot.lane.b32.xlu0 %v6252, 32
        %v6335 = vpop.permute.xlu0 %6334
        %6336 = vrot.lane.b32.xlu0 %v6253, 32
        %v6337 = vpop.permute.xlu0 %6336
        %6338 = vrot.lane.b32.xlu0 %v6254, 32
        %v6339 = vpop.permute.xlu0 %6338
        %6340 = vrot.lane.b32.xlu0 %v6255, 32
        %v6341 = vpop.permute.xlu0 %6340
        %6342 = vrot.lane.b32.xlu0 %v6256, 32
        %v6343 = vpop.permute.xlu0 %6342
        %6344 = vrot.lane.b32.xlu0 %v6257, 32
        %v6345 = vpop.permute.xlu0 %6344
        %6346 = vrot.lane.b32.xlu0 %v6258, 32
        %v6347 = vpop.permute.xlu0 %6346
        %6348 = vrot.lane.b32.xlu0 %v6259, 32
        %v6349 = vpop.permute.xlu0 %6348
        %6350 = vrot.lane.b32.xlu0 %v6260, 32
        %v6351 = vpop.permute.xlu0 %6350
        %6352 = vrot.lane.b32.xlu0 %v6261, 32
        %v6353 = vpop.permute.xlu0 %6352
        %6354 = vrot.lane.b32.xlu0 %v6262, 32
        %v6355 = vpop.permute.xlu0 %6354
        %6356 = vrot.lane.b32.xlu0 %v6263, 32
        %v6357 = vpop.permute.xlu0 %6356
        %6358 = vrot.lane.b32.xlu0 %v6264, 32
        %v6359 = vpop.permute.xlu0 %6358
        %6360 = vrot.lane.b32.xlu0 %v6265, 32
        %v6361 = vpop.permute.xlu0 %6360
        %vm6394 = vcmask 277760
        %6395 = vst.msk [vmem:[#allocation5] sm:$0xff] %vm6394, %v6299
        %6396 = vst.msk [vmem:[#allocation5 + $0x8] sm:$0xff] %vm6394, %v6301
        %6397 = vst.msk [vmem:[#allocation5 + $0x10] sm:$0xff] %vm6394, %v6303
        %6398 = vst.msk [vmem:[#allocation5 + $0x18] sm:$0xff] %vm6394, %v6305
        %6399 = vst.msk [vmem:[#allocation5 + $0x20] sm:$0xff] %vm6394, %v6307
        %6400 = vst.msk [vmem:[#allocation5 + $0x28] sm:$0xff] %vm6394, %v6309
        %6401 = vst.msk [vmem:[#allocation5 + $0x30] sm:$0xff] %vm6394, %v6311
        %6402 = vst.msk [vmem:[#allocation5 + $0x38] sm:$0xff] %vm6394, %v6313
        %6403 = vst.msk [vmem:[#allocation5 + $0x40] sm:$0xff] %vm6394, %v6315
        %6404 = vst.msk [vmem:[#allocation5 + $0x48] sm:$0xff] %vm6394, %v6317
        %6405 = vst.msk [vmem:[#allocation5 + $0x50] sm:$0xff] %vm6394, %v6319
        %6406 = vst.msk [vmem:[#allocation5 + $0x58] sm:$0xff] %vm6394, %v6321
        %6407 = vst.msk [vmem:[#allocation5 + $0x60] sm:$0xff] %vm6394, %v6323
        %6408 = vst.msk [vmem:[#allocation5 + $0x68] sm:$0xff] %vm6394, %v6325
        %6409 = vst.msk [vmem:[#allocation5 + $0x70] sm:$0xff] %vm6394, %v6327
        %6410 = vst.msk [vmem:[#allocation5 + $0x78] sm:$0xff] %vm6394, %v6329
        %6411 = vst.msk [vmem:[#allocation5 + $0x80] sm:$0xff] %vm6394, %v6331
        %6412 = vst.msk [vmem:[#allocation5 + $0x88] sm:$0xff] %vm6394, %v6333
        %6413 = vst.msk [vmem:[#allocation5 + $0x90] sm:$0xff] %vm6394, %v6335
        %6414 = vst.msk [vmem:[#allocation5 + $0x98] sm:$0xff] %vm6394, %v6337
        %6415 = vst.msk [vmem:[#allocation5 + $0xa0] sm:$0xff] %vm6394, %v6339
        %6416 = vst.msk [vmem:[#allocation5 + $0xa8] sm:$0xff] %vm6394, %v6341
        %6417 = vst.msk [vmem:[#allocation5 + $0xb0] sm:$0xff] %vm6394, %v6343
        %6418 = vst.msk [vmem:[#allocation5 + $0xb8] sm:$0xff] %vm6394, %v6345
        %6419 = vst.msk [vmem:[#allocation5 + $0xc0] sm:$0xff] %vm6394, %v6347
        %6420 = vst.msk [vmem:[#allocation5 + $0xc8] sm:$0xff] %vm6394, %v6349
        %6421 = vst.msk [vmem:[#allocation5 + $0xd0] sm:$0xff] %vm6394, %v6351
        %6422 = vst.msk [vmem:[#allocation5 + $0xd8] sm:$0xff] %vm6394, %v6353
        %6423 = vst.msk [vmem:[#allocation5 + $0xe0] sm:$0xff] %vm6394, %v6355
        %6424 = vst.msk [vmem:[#allocation5 + $0xe8] sm:$0xff] %vm6394, %v6357
        %6425 = vst.msk [vmem:[#allocation5 + $0xf0] sm:$0xff] %vm6394, %v6359
        %6426 = vst.msk [vmem:[#allocation5 + $0xf8] sm:$0xff] %vm6394, %v6361
        %v6427 = vld [vmem:[%s6040 + $0x2] sm:$0xff]
        %v6428 = vld [vmem:[%s6040 + $0xa] sm:$0xff]
        %v6429 = vld [vmem:[%s6040 + $0x1a] sm:$0xff]
        %v6430 = vld [vmem:[%s6040 + $0x22] sm:$0xff]
        %v6431 = vld [vmem:[%s6040 + $0x32] sm:$0xff]
        %v6432 = vld [vmem:[%s6040 + $0x3a] sm:$0xff]
        %v6433 = vld [vmem:[%s6040 + $0x4a] sm:$0xff]
        %v6434 = vld [vmem:[%s6040 + $0x52] sm:$0xff]
        %v6435 = vld [vmem:[%s6040 + $0x62] sm:$0xff]
        %v6436 = vld [vmem:[%s6040 + $0x6a] sm:$0xff]
        %v6437 = vld [vmem:[%s6040 + $0x7a] sm:$0xff]
        %v6438 = vld [vmem:[%s6040 + $0x82] sm:$0xff]
        %v6439 = vld [vmem:[%s6040 + $0x92] sm:$0xff]
        %v6440 = vld [vmem:[%s6040 + $0x9a] sm:$0xff]
        %v6441 = vld [vmem:[%s6040 + $0xaa] sm:$0xff]
        %v6442 = vld [vmem:[%s6040 + $0xb2] sm:$0xff]
        %v6443 = vld [vmem:[%s6040 + $0xc2] sm:$0xff]
        %v6444 = vld [vmem:[%s6040 + $0xca] sm:$0xff]
        %v6445 = vld [vmem:[%s6040 + $0xda] sm:$0xff]
        %v6446 = vld [vmem:[%s6040 + $0xe2] sm:$0xff]
        %v6447 = vld [vmem:[%s6040 + $0xf2] sm:$0xff]
        %v6448 = vld [vmem:[%s6040 + $0xfa] sm:$0xff]
        %v6449 = vld [vmem:[%s6040 + $0x10a] sm:$0xff]
        %v6450 = vld [vmem:[%s6040 + $0x112] sm:$0xff]
        %v6451 = vld [vmem:[%s6040 + $0x122] sm:$0xff]
        %v6452 = vld [vmem:[%s6040 + $0x12a] sm:$0xff]
        %v6453 = vld [vmem:[%s6040 + $0x13a] sm:$0xff]
        %v6454 = vld [vmem:[%s6040 + $0x142] sm:$0xff]
        %v6455 = vld [vmem:[%s6040 + $0x152] sm:$0xff]
        %v6456 = vld [vmem:[%s6040 + $0x15a] sm:$0xff]
        %v6457 = vld [vmem:[%s6040 + $0x16a] sm:$0xff]
        %v6458 = vld [vmem:[%s6040 + $0x172] sm:$0xff]
        %6491 = vrot.lane.b32.xlu0 %v6427, 34
        %v6492 = vpop.permute.xlu0 %6491
        %6493 = vrot.lane.b32.xlu0 %v6428, 34
        %v6494 = vpop.permute.xlu0 %6493
        %6495 = vrot.lane.b32.xlu0 %v6429, 34
        %v6496 = vpop.permute.xlu0 %6495
        %6497 = vrot.lane.b32.xlu0 %v6430, 34
        %v6498 = vpop.permute.xlu0 %6497
        %6499 = vrot.lane.b32.xlu0 %v6431, 34
        %v6500 = vpop.permute.xlu0 %6499
        %6501 = vrot.lane.b32.xlu0 %v6432, 34
        %v6502 = vpop.permute.xlu0 %6501
        %6503 = vrot.lane.b32.xlu0 %v6433, 34
        %v6504 = vpop.permute.xlu0 %6503
        %6505 = vrot.lane.b32.xlu0 %v6434, 34
        %v6506 = vpop.permute.xlu0 %6505
        %6507 = vrot.lane.b32.xlu0 %v6435, 34
        %v6508 = vpop.permute.xlu0 %6507
        %6509 = vrot.lane.b32.xlu0 %v6436, 34
        %v6510 = vpop.permute.xlu0 %6509
        %6511 = vrot.lane.b32.xlu0 %v6437, 34
        %v6512 = vpop.permute.xlu0 %6511
        %6513 = vrot.lane.b32.xlu0 %v6438, 34
        %v6514 = vpop.permute.xlu0 %6513
        %6515 = vrot.lane.b32.xlu0 %v6439, 34
        %v6516 = vpop.permute.xlu0 %6515
        %6517 = vrot.lane.b32.xlu0 %v6440, 34
        %v6518 = vpop.permute.xlu0 %6517
        %6519 = vrot.lane.b32.xlu0 %v6441, 34
        %v6520 = vpop.permute.xlu0 %6519
        %6521 = vrot.lane.b32.xlu0 %v6442, 34
        %v6522 = vpop.permute.xlu0 %6521
        %6523 = vrot.lane.b32.xlu0 %v6443, 34
        %v6524 = vpop.permute.xlu0 %6523
        %6525 = vrot.lane.b32.xlu0 %v6444, 34
        %v6526 = vpop.permute.xlu0 %6525
        %6527 = vrot.lane.b32.xlu0 %v6445, 34
        %v6528 = vpop.permute.xlu0 %6527
        %6529 = vrot.lane.b32.xlu0 %v6446, 34
        %v6530 = vpop.permute.xlu0 %6529
        %6531 = vrot.lane.b32.xlu0 %v6447, 34
        %v6532 = vpop.permute.xlu0 %6531
        %6533 = vrot.lane.b32.xlu0 %v6448, 34
        %v6534 = vpop.permute.xlu0 %6533
        %6535 = vrot.lane.b32.xlu0 %v6449, 34
        %v6536 = vpop.permute.xlu0 %6535
        %6537 = vrot.lane.b32.xlu0 %v6450, 34
        %v6538 = vpop.permute.xlu0 %6537
        %6539 = vrot.lane.b32.xlu0 %v6451, 34
        %v6540 = vpop.permute.xlu0 %6539
        %6541 = vrot.lane.b32.xlu0 %v6452, 34
        %v6542 = vpop.permute.xlu0 %6541
        %6543 = vrot.lane.b32.xlu0 %v6453, 34
        %v6544 = vpop.permute.xlu0 %6543
        %6545 = vrot.lane.b32.xlu0 %v6454, 34
        %v6546 = vpop.permute.xlu0 %6545
        %6547 = vrot.lane.b32.xlu0 %v6455, 34
        %v6548 = vpop.permute.xlu0 %6547
        %6549 = vrot.lane.b32.xlu0 %v6456, 34
        %v6550 = vpop.permute.xlu0 %6549
        %6551 = vrot.lane.b32.xlu0 %v6457, 34
        %v6552 = vpop.permute.xlu0 %6551
        %6553 = vrot.lane.b32.xlu0 %v6458, 34
        %v6554 = vpop.permute.xlu0 %6553
        %vm6587 = vcmask 294160
        %6588 = vst.msk [vmem:[#allocation5] sm:$0xff] %vm6587, %v6492
        %6589 = vst.msk [vmem:[#allocation5 + $0x8] sm:$0xff] %vm6587, %v6494
        %6590 = vst.msk [vmem:[#allocation5 + $0x10] sm:$0xff] %vm6587, %v6496
        %6591 = vst.msk [vmem:[#allocation5 + $0x18] sm:$0xff] %vm6587, %v6498
        %6592 = vst.msk [vmem:[#allocation5 + $0x20] sm:$0xff] %vm6587, %v6500
        %6593 = vst.msk [vmem:[#allocation5 + $0x28] sm:$0xff] %vm6587, %v6502
        %6594 = vst.msk [vmem:[#allocation5 + $0x30] sm:$0xff] %vm6587, %v6504
        %6595 = vst.msk [vmem:[#allocation5 + $0x38] sm:$0xff] %vm6587, %v6506
        %6596 = vst.msk [vmem:[#allocation5 + $0x40] sm:$0xff] %vm6587, %v6508
        %6597 = vst.msk [vmem:[#allocation5 + $0x48] sm:$0xff] %vm6587, %v6510
        %6598 = vst.msk [vmem:[#allocation5 + $0x50] sm:$0xff] %vm6587, %v6512
        %6599 = vst.msk [vmem:[#allocation5 + $0x58] sm:$0xff] %vm6587, %v6514
        %6600 = vst.msk [vmem:[#allocation5 + $0x60] sm:$0xff] %vm6587, %v6516
        %6601 = vst.msk [vmem:[#allocation5 + $0x68] sm:$0xff] %vm6587, %v6518
        %6602 = vst.msk [vmem:[#allocation5 + $0x70] sm:$0xff] %vm6587, %v6520
        %6603 = vst.msk [vmem:[#allocation5 + $0x78] sm:$0xff] %vm6587, %v6522
        %6604 = vst.msk [vmem:[#allocation5 + $0x80] sm:$0xff] %vm6587, %v6524
        %6605 = vst.msk [vmem:[#allocation5 + $0x88] sm:$0xff] %vm6587, %v6526
        %6606 = vst.msk [vmem:[#allocation5 + $0x90] sm:$0xff] %vm6587, %v6528
        %6607 = vst.msk [vmem:[#allocation5 + $0x98] sm:$0xff] %vm6587, %v6530
        %6608 = vst.msk [vmem:[#allocation5 + $0xa0] sm:$0xff] %vm6587, %v6532
        %6609 = vst.msk [vmem:[#allocation5 + $0xa8] sm:$0xff] %vm6587, %v6534
        %6610 = vst.msk [vmem:[#allocation5 + $0xb0] sm:$0xff] %vm6587, %v6536
        %6611 = vst.msk [vmem:[#allocation5 + $0xb8] sm:$0xff] %vm6587, %v6538
        %6612 = vst.msk [vmem:[#allocation5 + $0xc0] sm:$0xff] %vm6587, %v6540
        %6613 = vst.msk [vmem:[#allocation5 + $0xc8] sm:$0xff] %vm6587, %v6542
        %6614 = vst.msk [vmem:[#allocation5 + $0xd0] sm:$0xff] %vm6587, %v6544
        %6615 = vst.msk [vmem:[#allocation5 + $0xd8] sm:$0xff] %vm6587, %v6546
        %6616 = vst.msk [vmem:[#allocation5 + $0xe0] sm:$0xff] %vm6587, %v6548
        %6617 = vst.msk [vmem:[#allocation5 + $0xe8] sm:$0xff] %vm6587, %v6550
        %6618 = vst.msk [vmem:[#allocation5 + $0xf0] sm:$0xff] %vm6587, %v6552
        %6619 = vst.msk [vmem:[#allocation5 + $0xf8] sm:$0xff] %vm6587, %v6554
        %v6620 = vld [vmem:[%s6040 + $0x3] sm:$0xff]
        %v6621 = vld [vmem:[%s6040 + $0xb] sm:$0xff]
        %v6622 = vld [vmem:[%s6040 + $0x1b] sm:$0xff]
        %v6623 = vld [vmem:[%s6040 + $0x23] sm:$0xff]
        %v6624 = vld [vmem:[%s6040 + $0x33] sm:$0xff]
        %v6625 = vld [vmem:[%s6040 + $0x3b] sm:$0xff]
        %v6626 = vld [vmem:[%s6040 + $0x4b] sm:$0xff]
        %v6627 = vld [vmem:[%s6040 + $0x53] sm:$0xff]
        %v6628 = vld [vmem:[%s6040 + $0x63] sm:$0xff]
        %v6629 = vld [vmem:[%s6040 + $0x6b] sm:$0xff]
        %v6630 = vld [vmem:[%s6040 + $0x7b] sm:$0xff]
        %v6631 = vld [vmem:[%s6040 + $0x83] sm:$0xff]
        %v6632 = vld [vmem:[%s6040 + $0x93] sm:$0xff]
        %v6633 = vld [vmem:[%s6040 + $0x9b] sm:$0xff]
        %v6634 = vld [vmem:[%s6040 + $0xab] sm:$0xff]
        %v6635 = vld [vmem:[%s6040 + $0xb3] sm:$0xff]
        %v6636 = vld [vmem:[%s6040 + $0xc3] sm:$0xff]
        %v6637 = vld [vmem:[%s6040 + $0xcb] sm:$0xff]
        %v6638 = vld [vmem:[%s6040 + $0xdb] sm:$0xff]
        %v6639 = vld [vmem:[%s6040 + $0xe3] sm:$0xff]
        %v6640 = vld [vmem:[%s6040 + $0xf3] sm:$0xff]
        %v6641 = vld [vmem:[%s6040 + $0xfb] sm:$0xff]
        %v6642 = vld [vmem:[%s6040 + $0x10b] sm:$0xff]
        %v6643 = vld [vmem:[%s6040 + $0x113] sm:$0xff]
        %v6644 = vld [vmem:[%s6040 + $0x123] sm:$0xff]
        %v6645 = vld [vmem:[%s6040 + $0x12b] sm:$0xff]
        %v6646 = vld [vmem:[%s6040 + $0x13b] sm:$0xff]
        %v6647 = vld [vmem:[%s6040 + $0x143] sm:$0xff]
        %v6648 = vld [vmem:[%s6040 + $0x153] sm:$0xff]
        %v6649 = vld [vmem:[%s6040 + $0x15b] sm:$0xff]
        %v6650 = vld [vmem:[%s6040 + $0x16b] sm:$0xff]
        %v6651 = vld [vmem:[%s6040 + $0x173] sm:$0xff]
        %6684 = vrot.lane.b32.xlu0 %v6620, 36
        %v6685 = vpop.permute.xlu0 %6684
        %6686 = vrot.lane.b32.xlu0 %v6621, 36
        %v6687 = vpop.permute.xlu0 %6686
        %6688 = vrot.lane.b32.xlu0 %v6622, 36
        %v6689 = vpop.permute.xlu0 %6688
        %6690 = vrot.lane.b32.xlu0 %v6623, 36
        %v6691 = vpop.permute.xlu0 %6690
        %6692 = vrot.lane.b32.xlu0 %v6624, 36
        %v6693 = vpop.permute.xlu0 %6692
        %6694 = vrot.lane.b32.xlu0 %v6625, 36
        %v6695 = vpop.permute.xlu0 %6694
        %6696 = vrot.lane.b32.xlu0 %v6626, 36
        %v6697 = vpop.permute.xlu0 %6696
        %6698 = vrot.lane.b32.xlu0 %v6627, 36
        %v6699 = vpop.permute.xlu0 %6698
        %6700 = vrot.lane.b32.xlu0 %v6628, 36
        %v6701 = vpop.permute.xlu0 %6700
        %6702 = vrot.lane.b32.xlu0 %v6629, 36
        %v6703 = vpop.permute.xlu0 %6702
        %6704 = vrot.lane.b32.xlu0 %v6630, 36
        %v6705 = vpop.permute.xlu0 %6704
        %6706 = vrot.lane.b32.xlu0 %v6631, 36
        %v6707 = vpop.permute.xlu0 %6706
        %6708 = vrot.lane.b32.xlu0 %v6632, 36
        %v6709 = vpop.permute.xlu0 %6708
        %6710 = vrot.lane.b32.xlu0 %v6633, 36
        %v6711 = vpop.permute.xlu0 %6710
        %6712 = vrot.lane.b32.xlu0 %v6634, 36
        %v6713 = vpop.permute.xlu0 %6712
        %6714 = vrot.lane.b32.xlu0 %v6635, 36
        %v6715 = vpop.permute.xlu0 %6714
        %6716 = vrot.lane.b32.xlu0 %v6636, 36
        %v6717 = vpop.permute.xlu0 %6716
        %6718 = vrot.lane.b32.xlu0 %v6637, 36
        %v6719 = vpop.permute.xlu0 %6718
        %6720 = vrot.lane.b32.xlu0 %v6638, 36
        %v6721 = vpop.permute.xlu0 %6720
        %6722 = vrot.lane.b32.xlu0 %v6639, 36
        %v6723 = vpop.permute.xlu0 %6722
        %6724 = vrot.lane.b32.xlu0 %v6640, 36
        %v6725 = vpop.permute.xlu0 %6724
        %6726 = vrot.lane.b32.xlu0 %v6641, 36
        %v6727 = vpop.permute.xlu0 %6726
        %6728 = vrot.lane.b32.xlu0 %v6642, 36
        %v6729 = vpop.permute.xlu0 %6728
        %6730 = vrot.lane.b32.xlu0 %v6643, 36
        %v6731 = vpop.permute.xlu0 %6730
        %6732 = vrot.lane.b32.xlu0 %v6644, 36
        %v6733 = vpop.permute.xlu0 %6732
        %6734 = vrot.lane.b32.xlu0 %v6645, 36
        %v6735 = vpop.permute.xlu0 %6734
        %6736 = vrot.lane.b32.xlu0 %v6646, 36
        %v6737 = vpop.permute.xlu0 %6736
        %6738 = vrot.lane.b32.xlu0 %v6647, 36
        %v6739 = vpop.permute.xlu0 %6738
        %6740 = vrot.lane.b32.xlu0 %v6648, 36
        %v6741 = vpop.permute.xlu0 %6740
        %6742 = vrot.lane.b32.xlu0 %v6649, 36
        %v6743 = vpop.permute.xlu0 %6742
        %6744 = vrot.lane.b32.xlu0 %v6650, 36
        %v6745 = vpop.permute.xlu0 %6744
        %6746 = vrot.lane.b32.xlu0 %v6651, 36
        %v6747 = vpop.permute.xlu0 %6746
        %vm6780 = vcmask 310560
        %6781 = vst.msk [vmem:[#allocation5] sm:$0xff] %vm6780, %v6685
        %6782 = vst.msk [vmem:[#allocation5 + $0x8] sm:$0xff] %vm6780, %v6687
        %6783 = vst.msk [vmem:[#allocation5 + $0x10] sm:$0xff] %vm6780, %v6689
        %6784 = vst.msk [vmem:[#allocation5 + $0x18] sm:$0xff] %vm6780, %v6691
        %6785 = vst.msk [vmem:[#allocation5 + $0x20] sm:$0xff] %vm6780, %v6693
        %6786 = vst.msk [vmem:[#allocation5 + $0x28] sm:$0xff] %vm6780, %v6695
        %6787 = vst.msk [vmem:[#allocation5 + $0x30] sm:$0xff] %vm6780, %v6697
        %6788 = vst.msk [vmem:[#allocation5 + $0x38] sm:$0xff] %vm6780, %v6699
        %6789 = vst.msk [vmem:[#allocation5 + $0x40] sm:$0xff] %vm6780, %v6701
        %6790 = vst.msk [vmem:[#allocation5 + $0x48] sm:$0xff] %vm6780, %v6703
        %6791 = vst.msk [vmem:[#allocation5 + $0x50] sm:$0xff] %vm6780, %v6705
        %6792 = vst.msk [vmem:[#allocation5 + $0x58] sm:$0xff] %vm6780, %v6707
        %6793 = vst.msk [vmem:[#allocation5 + $0x60] sm:$0xff] %vm6780, %v6709
        %6794 = vst.msk [vmem:[#allocation5 + $0x68] sm:$0xff] %vm6780, %v6711
        %6795 = vst.msk [vmem:[#allocation5 + $0x70] sm:$0xff] %vm6780, %v6713
        %6796 = vst.msk [vmem:[#allocation5 + $0x78] sm:$0xff] %vm6780, %v6715
        %6797 = vst.msk [vmem:[#allocation5 + $0x80] sm:$0xff] %vm6780, %v6717
        %6798 = vst.msk [vmem:[#allocation5 + $0x88] sm:$0xff] %vm6780, %v6719
        %6799 = vst.msk [vmem:[#allocation5 + $0x90] sm:$0xff] %vm6780, %v6721
        %6800 = vst.msk [vmem:[#allocation5 + $0x98] sm:$0xff] %vm6780, %v6723
        %6801 = vst.msk [vmem:[#allocation5 + $0xa0] sm:$0xff] %vm6780, %v6725
        %6802 = vst.msk [vmem:[#allocation5 + $0xa8] sm:$0xff] %vm6780, %v6727
        %6803 = vst.msk [vmem:[#allocation5 + $0xb0] sm:$0xff] %vm6780, %v6729
        %6804 = vst.msk [vmem:[#allocation5 + $0xb8] sm:$0xff] %vm6780, %v6731
        %6805 = vst.msk [vmem:[#allocation5 + $0xc0] sm:$0xff] %vm6780, %v6733
        %6806 = vst.msk [vmem:[#allocation5 + $0xc8] sm:$0xff] %vm6780, %v6735
        %6807 = vst.msk [vmem:[#allocation5 + $0xd0] sm:$0xff] %vm6780, %v6737
        %6808 = vst.msk [vmem:[#allocation5 + $0xd8] sm:$0xff] %vm6780, %v6739
        %6809 = vst.msk [vmem:[#allocation5 + $0xe0] sm:$0xff] %vm6780, %v6741
        %6810 = vst.msk [vmem:[#allocation5 + $0xe8] sm:$0xff] %vm6780, %v6743
        %6811 = vst.msk [vmem:[#allocation5 + $0xf0] sm:$0xff] %vm6780, %v6745
        %6812 = vst.msk [vmem:[#allocation5 + $0xf8] sm:$0xff] %vm6780, %v6747
        %v6813 = vld [vmem:[%s6040 + $0x4] sm:$0xff]
        %v6814 = vld [vmem:[%s6040 + $0xc] sm:$0xff]
        %v6815 = vld [vmem:[%s6040 + $0x1c] sm:$0xff]
        %v6816 = vld [vmem:[%s6040 + $0x24] sm:$0xff]
        %v6817 = vld [vmem:[%s6040 + $0x34] sm:$0xff]
        %v6818 = vld [vmem:[%s6040 + $0x3c] sm:$0xff]
        %v6819 = vld [vmem:[%s6040 + $0x4c] sm:$0xff]
        %v6820 = vld [vmem:[%s6040 + $0x54] sm:$0xff]
        %v6821 = vld [vmem:[%s6040 + $0x64] sm:$0xff]
        %v6822 = vld [vmem:[%s6040 + $0x6c] sm:$0xff]
        %v6823 = vld [vmem:[%s6040 + $0x7c] sm:$0xff]
        %v6824 = vld [vmem:[%s6040 + $0x84] sm:$0xff]
        %v6825 = vld [vmem:[%s6040 + $0x94] sm:$0xff]
        %v6826 = vld [vmem:[%s6040 + $0x9c] sm:$0xff]
        %v6827 = vld [vmem:[%s6040 + $0xac] sm:$0xff]
        %v6828 = vld [vmem:[%s6040 + $0xb4] sm:$0xff]
        %v6829 = vld [vmem:[%s6040 + $0xc4] sm:$0xff]
        %v6830 = vld [vmem:[%s6040 + $0xcc] sm:$0xff]
        %v6831 = vld [vmem:[%s6040 + $0xdc] sm:$0xff]
        %v6832 = vld [vmem:[%s6040 + $0xe4] sm:$0xff]
        %v6833 = vld [vmem:[%s6040 + $0xf4] sm:$0xff]
        %v6834 = vld [vmem:[%s6040 + $0xfc] sm:$0xff]
        %v6835 = vld [vmem:[%s6040 + $0x10c] sm:$0xff]
        %v6836 = vld [vmem:[%s6040 + $0x114] sm:$0xff]
        %v6837 = vld [vmem:[%s6040 + $0x124] sm:$0xff]
        %v6838 = vld [vmem:[%s6040 + $0x12c] sm:$0xff]
        %v6839 = vld [vmem:[%s6040 + $0x13c] sm:$0xff]
        %v6840 = vld [vmem:[%s6040 + $0x144] sm:$0xff]
        %v6841 = vld [vmem:[%s6040 + $0x154] sm:$0xff]
        %v6842 = vld [vmem:[%s6040 + $0x15c] sm:$0xff]
        %v6843 = vld [vmem:[%s6040 + $0x16c] sm:$0xff]
        %v6844 = vld [vmem:[%s6040 + $0x174] sm:$0xff]
        %6877 = vrot.lane.b32.xlu0 %v6813, 38
        %v6878 = vpop.permute.xlu0 %6877
        %6879 = vrot.lane.b32.xlu0 %v6814, 38
        %v6880 = vpop.permute.xlu0 %6879
        %6881 = vrot.lane.b32.xlu0 %v6815, 38
        %v6882 = vpop.permute.xlu0 %6881
        %6883 = vrot.lane.b32.xlu0 %v6816, 38
        %v6884 = vpop.permute.xlu0 %6883
        %6885 = vrot.lane.b32.xlu0 %v6817, 38
        %v6886 = vpop.permute.xlu0 %6885
        %6887 = vrot.lane.b32.xlu0 %v6818, 38
        %v6888 = vpop.permute.xlu0 %6887
        %6889 = vrot.lane.b32.xlu0 %v6819, 38
        %v6890 = vpop.permute.xlu0 %6889
        %6891 = vrot.lane.b32.xlu0 %v6820, 38
        %v6892 = vpop.permute.xlu0 %6891
        %6893 = vrot.lane.b32.xlu0 %v6821, 38
        %v6894 = vpop.permute.xlu0 %6893
        %6895 = vrot.lane.b32.xlu0 %v6822, 38
        %v6896 = vpop.permute.xlu0 %6895
        %6897 = vrot.lane.b32.xlu0 %v6823, 38
        %v6898 = vpop.permute.xlu0 %6897
        %6899 = vrot.lane.b32.xlu0 %v6824, 38
        %v6900 = vpop.permute.xlu0 %6899
        %6901 = vrot.lane.b32.xlu0 %v6825, 38
        %v6902 = vpop.permute.xlu0 %6901
        %6903 = vrot.lane.b32.xlu0 %v6826, 38
        %v6904 = vpop.permute.xlu0 %6903
        %6905 = vrot.lane.b32.xlu0 %v6827, 38
        %v6906 = vpop.permute.xlu0 %6905
        %6907 = vrot.lane.b32.xlu0 %v6828, 38
        %v6908 = vpop.permute.xlu0 %6907
        %6909 = vrot.lane.b32.xlu0 %v6829, 38
        %v6910 = vpop.permute.xlu0 %6909
        %6911 = vrot.lane.b32.xlu0 %v6830, 38
        %v6912 = vpop.permute.xlu0 %6911
        %6913 = vrot.lane.b32.xlu0 %v6831, 38
        %v6914 = vpop.permute.xlu0 %6913
        %6915 = vrot.lane.b32.xlu0 %v6832, 38
        %v6916 = vpop.permute.xlu0 %6915
        %6917 = vrot.lane.b32.xlu0 %v6833, 38
        %v6918 = vpop.permute.xlu0 %6917
        %6919 = vrot.lane.b32.xlu0 %v6834, 38
        %v6920 = vpop.permute.xlu0 %6919
        %6921 = vrot.lane.b32.xlu0 %v6835, 38
        %v6922 = vpop.permute.xlu0 %6921
        %6923 = vrot.lane.b32.xlu0 %v6836, 38
        %v6924 = vpop.permute.xlu0 %6923
        %6925 = vrot.lane.b32.xlu0 %v6837, 38
        %v6926 = vpop.permute.xlu0 %6925
        %6927 = vrot.lane.b32.xlu0 %v6838, 38
        %v6928 = vpop.permute.xlu0 %6927
        %6929 = vrot.lane.b32.xlu0 %v6839, 38
        %v6930 = vpop.permute.xlu0 %6929
        %6931 = vrot.lane.b32.xlu0 %v6840, 38
        %v6932 = vpop.permute.xlu0 %6931
        %6933 = vrot.lane.b32.xlu0 %v6841, 38
        %v6934 = vpop.permute.xlu0 %6933
        %6935 = vrot.lane.b32.xlu0 %v6842, 38
        %v6936 = vpop.permute.xlu0 %6935
        %6937 = vrot.lane.b32.xlu0 %v6843, 38
        %v6938 = vpop.permute.xlu0 %6937
        %6939 = vrot.lane.b32.xlu0 %v6844, 38
        %v6940 = vpop.permute.xlu0 %6939
        %vm6973 = vcmask 326960
        %6974 = vst.msk [vmem:[#allocation5] sm:$0xff] %vm6973, %v6878
        %6975 = vst.msk [vmem:[#allocation5 + $0x8] sm:$0xff] %vm6973, %v6880
        %6976 = vst.msk [vmem:[#allocation5 + $0x10] sm:$0xff] %vm6973, %v6882
        %6977 = vst.msk [vmem:[#allocation5 + $0x18] sm:$0xff] %vm6973, %v6884
        %6978 = vst.msk [vmem:[#allocation5 + $0x20] sm:$0xff] %vm6973, %v6886
        %6979 = vst.msk [vmem:[#allocation5 + $0x28] sm:$0xff] %vm6973, %v6888
        %6980 = vst.msk [vmem:[#allocation5 + $0x30] sm:$0xff] %vm6973, %v6890
        %6981 = vst.msk [vmem:[#allocation5 + $0x38] sm:$0xff] %vm6973, %v6892
        %6982 = vst.msk [vmem:[#allocation5 + $0x40] sm:$0xff] %vm6973, %v6894
        %6983 = vst.msk [vmem:[#allocation5 + $0x48] sm:$0xff] %vm6973, %v6896
        %6984 = vst.msk [vmem:[#allocation5 + $0x50] sm:$0xff] %vm6973, %v6898
        %6985 = vst.msk [vmem:[#allocation5 + $0x58] sm:$0xff] %vm6973, %v6900
        %6986 = vst.msk [vmem:[#allocation5 + $0x60] sm:$0xff] %vm6973, %v6902
        %6987 = vst.msk [vmem:[#allocation5 + $0x68] sm:$0xff] %vm6973, %v6904
        %6988 = vst.msk [vmem:[#allocation5 + $0x70] sm:$0xff] %vm6973, %v6906
        %6989 = vst.msk [vmem:[#allocation5 + $0x78] sm:$0xff] %vm6973, %v6908
        %6990 = vst.msk [vmem:[#allocation5 + $0x80] sm:$0xff] %vm6973, %v6910
        %6991 = vst.msk [vmem:[#allocation5 + $0x88] sm:$0xff] %vm6973, %v6912
        %6992 = vst.msk [vmem:[#allocation5 + $0x90] sm:$0xff] %vm6973, %v6914
        %6993 = vst.msk [vmem:[#allocation5 + $0x98] sm:$0xff] %vm6973, %v6916
        %6994 = vst.msk [vmem:[#allocation5 + $0xa0] sm:$0xff] %vm6973, %v6918
        %6995 = vst.msk [vmem:[#allocation5 + $0xa8] sm:$0xff] %vm6973, %v6920
        %6996 = vst.msk [vmem:[#allocation5 + $0xb0] sm:$0xff] %vm6973, %v6922
        %6997 = vst.msk [vmem:[#allocation5 + $0xb8] sm:$0xff] %vm6973, %v6924
        %6998 = vst.msk [vmem:[#allocation5 + $0xc0] sm:$0xff] %vm6973, %v6926
        %6999 = vst.msk [vmem:[#allocation5 + $0xc8] sm:$0xff] %vm6973, %v6928
        %7000 = vst.msk [vmem:[#allocation5 + $0xd0] sm:$0xff] %vm6973, %v6930
        %7001 = vst.msk [vmem:[#allocation5 + $0xd8] sm:$0xff] %vm6973, %v6932
        %7002 = vst.msk [vmem:[#allocation5 + $0xe0] sm:$0xff] %vm6973, %v6934
        %7003 = vst.msk [vmem:[#allocation5 + $0xe8] sm:$0xff] %vm6973, %v6936
        %7004 = vst.msk [vmem:[#allocation5 + $0xf0] sm:$0xff] %vm6973, %v6938
        %7005 = vst.msk [vmem:[#allocation5 + $0xf8] sm:$0xff] %vm6973, %v6940
        %s7006 = scalar_lea.vmem [#allocation4], 96
        %v7007 = vld [vmem:[%s7006] sm:$0xff]
        %v7008 = vld [vmem:[%s7006 + $0x8] sm:$0xff]
        %v7009 = vld [vmem:[%s7006 + $0x18] sm:$0xff]
        %v7010 = vld [vmem:[%s7006 + $0x20] sm:$0xff]
        %v7011 = vld [vmem:[%s7006 + $0x30] sm:$0xff]
        %v7012 = vld [vmem:[%s7006 + $0x38] sm:$0xff]
        %v7013 = vld [vmem:[%s7006 + $0x48] sm:$0xff]
        %v7014 = vld [vmem:[%s7006 + $0x50] sm:$0xff]
        %v7015 = vld [vmem:[%s7006 + $0x60] sm:$0xff]
        %v7016 = vld [vmem:[%s7006 + $0x68] sm:$0xff]
        %v7017 = vld [vmem:[%s7006 + $0x78] sm:$0xff]
        %v7018 = vld [vmem:[%s7006 + $0x80] sm:$0xff]
        %v7019 = vld [vmem:[%s7006 + $0x90] sm:$0xff]
        %v7020 = vld [vmem:[%s7006 + $0x98] sm:$0xff]
        %v7021 = vld [vmem:[%s7006 + $0xa8] sm:$0xff]
        %v7022 = vld [vmem:[%s7006 + $0xb0] sm:$0xff]
        %v7023 = vld [vmem:[%s7006 + $0xc0] sm:$0xff]
        %v7024 = vld [vmem:[%s7006 + $0xc8] sm:$0xff]
        %v7025 = vld [vmem:[%s7006 + $0xd8] sm:$0xff]
        %v7026 = vld [vmem:[%s7006 + $0xe0] sm:$0xff]
        %v7027 = vld [vmem:[%s7006 + $0xf0] sm:$0xff]
        %v7028 = vld [vmem:[%s7006 + $0xf8] sm:$0xff]
        %v7029 = vld [vmem:[%s7006 + $0x108] sm:$0xff]
        %v7030 = vld [vmem:[%s7006 + $0x110] sm:$0xff]
        %v7031 = vld [vmem:[%s7006 + $0x120] sm:$0xff]
        %v7032 = vld [vmem:[%s7006 + $0x128] sm:$0xff]
        %v7033 = vld [vmem:[%s7006 + $0x138] sm:$0xff]
        %v7034 = vld [vmem:[%s7006 + $0x140] sm:$0xff]
        %v7035 = vld [vmem:[%s7006 + $0x150] sm:$0xff]
        %v7036 = vld [vmem:[%s7006 + $0x158] sm:$0xff]
        %v7037 = vld [vmem:[%s7006 + $0x168] sm:$0xff]
        %v7038 = vld [vmem:[%s7006 + $0x170] sm:$0xff]
        %7071 = vrot.lane.b32.xlu0 %v7007, 40
        %v7072 = vpop.permute.xlu0 %7071
        %7073 = vrot.lane.b32.xlu0 %v7008, 40
        %v7074 = vpop.permute.xlu0 %7073
        %7075 = vrot.lane.b32.xlu0 %v7009, 40
        %v7076 = vpop.permute.xlu0 %7075
        %7077 = vrot.lane.b32.xlu0 %v7010, 40
        %v7078 = vpop.permute.xlu0 %7077
        %7079 = vrot.lane.b32.xlu0 %v7011, 40
        %v7080 = vpop.permute.xlu0 %7079
        %7081 = vrot.lane.b32.xlu0 %v7012, 40
        %v7082 = vpop.permute.xlu0 %7081
        %7083 = vrot.lane.b32.xlu0 %v7013, 40
        %v7084 = vpop.permute.xlu0 %7083
        %7085 = vrot.lane.b32.xlu0 %v7014, 40
        %v7086 = vpop.permute.xlu0 %7085
        %7087 = vrot.lane.b32.xlu0 %v7015, 40
        %v7088 = vpop.permute.xlu0 %7087
        %7089 = vrot.lane.b32.xlu0 %v7016, 40
        %v7090 = vpop.permute.xlu0 %7089
        %7091 = vrot.lane.b32.xlu0 %v7017, 40
        %v7092 = vpop.permute.xlu0 %7091
        %7093 = vrot.lane.b32.xlu0 %v7018, 40
        %v7094 = vpop.permute.xlu0 %7093
        %7095 = vrot.lane.b32.xlu0 %v7019, 40
        %v7096 = vpop.permute.xlu0 %7095
        %7097 = vrot.lane.b32.xlu0 %v7020, 40
        %v7098 = vpop.permute.xlu0 %7097
        %7099 = vrot.lane.b32.xlu0 %v7021, 40
        %v7100 = vpop.permute.xlu0 %7099
        %7101 = vrot.lane.b32.xlu0 %v7022, 40
        %v7102 = vpop.permute.xlu0 %7101
        %7103 = vrot.lane.b32.xlu0 %v7023, 40
        %v7104 = vpop.permute.xlu0 %7103
        %7105 = vrot.lane.b32.xlu0 %v7024, 40
        %v7106 = vpop.permute.xlu0 %7105
        %7107 = vrot.lane.b32.xlu0 %v7025, 40
        %v7108 = vpop.permute.xlu0 %7107
        %7109 = vrot.lane.b32.xlu0 %v7026, 40
        %v7110 = vpop.permute.xlu0 %7109
        %7111 = vrot.lane.b32.xlu0 %v7027, 40
        %v7112 = vpop.permute.xlu0 %7111
        %7113 = vrot.lane.b32.xlu0 %v7028, 40
        %v7114 = vpop.permute.xlu0 %7113
        %7115 = vrot.lane.b32.xlu0 %v7029, 40
        %v7116 = vpop.permute.xlu0 %7115
        %7117 = vrot.lane.b32.xlu0 %v7030, 40
        %v7118 = vpop.permute.xlu0 %7117
        %7119 = vrot.lane.b32.xlu0 %v7031, 40
        %v7120 = vpop.permute.xlu0 %7119
        %7121 = vrot.lane.b32.xlu0 %v7032, 40
        %v7122 = vpop.permute.xlu0 %7121
        %7123 = vrot.lane.b32.xlu0 %v7033, 40
        %v7124 = vpop.permute.xlu0 %7123
        %7125 = vrot.lane.b32.xlu0 %v7034, 40
        %v7126 = vpop.permute.xlu0 %7125
        %7127 = vrot.lane.b32.xlu0 %v7035, 40
        %v7128 = vpop.permute.xlu0 %7127
        %7129 = vrot.lane.b32.xlu0 %v7036, 40
        %v7130 = vpop.permute.xlu0 %7129
        %7131 = vrot.lane.b32.xlu0 %v7037, 40
        %v7132 = vpop.permute.xlu0 %7131
        %7133 = vrot.lane.b32.xlu0 %v7038, 40
        %v7134 = vpop.permute.xlu0 %7133
        %vm7167 = vcmask 343360
        %7168 = vst.msk [vmem:[#allocation5] sm:$0xff] %vm7167, %v7072
        %7169 = vst.msk [vmem:[#allocation5 + $0x8] sm:$0xff] %vm7167, %v7074
        %7170 = vst.msk [vmem:[#allocation5 + $0x10] sm:$0xff] %vm7167, %v7076
        %7171 = vst.msk [vmem:[#allocation5 + $0x18] sm:$0xff] %vm7167, %v7078
        %7172 = vst.msk [vmem:[#allocation5 + $0x20] sm:$0xff] %vm7167, %v7080
        %7173 = vst.msk [vmem:[#allocation5 + $0x28] sm:$0xff] %vm7167, %v7082
        %7174 = vst.msk [vmem:[#allocation5 + $0x30] sm:$0xff] %vm7167, %v7084
        %7175 = vst.msk [vmem:[#allocation5 + $0x38] sm:$0xff] %vm7167, %v7086
        %7176 = vst.msk [vmem:[#allocation5 + $0x40] sm:$0xff] %vm7167, %v7088
        %7177 = vst.msk [vmem:[#allocation5 + $0x48] sm:$0xff] %vm7167, %v7090
        %7178 = vst.msk [vmem:[#allocation5 + $0x50] sm:$0xff] %vm7167, %v7092
        %7179 = vst.msk [vmem:[#allocation5 + $0x58] sm:$0xff] %vm7167, %v7094
        %7180 = vst.msk [vmem:[#allocation5 + $0x60] sm:$0xff] %vm7167, %v7096
        %7181 = vst.msk [vmem:[#allocation5 + $0x68] sm:$0xff] %vm7167, %v7098
        %7182 = vst.msk [vmem:[#allocation5 + $0x70] sm:$0xff] %vm7167, %v7100
        %7183 = vst.msk [vmem:[#allocation5 + $0x78] sm:$0xff] %vm7167, %v7102
        %7184 = vst.msk [vmem:[#allocation5 + $0x80] sm:$0xff] %vm7167, %v7104
        %7185 = vst.msk [vmem:[#allocation5 + $0x88] sm:$0xff] %vm7167, %v7106
        %7186 = vst.msk [vmem:[#allocation5 + $0x90] sm:$0xff] %vm7167, %v7108
        %7187 = vst.msk [vmem:[#allocation5 + $0x98] sm:$0xff] %vm7167, %v7110
        %7188 = vst.msk [vmem:[#allocation5 + $0xa0] sm:$0xff] %vm7167, %v7112
        %7189 = vst.msk [vmem:[#allocation5 + $0xa8] sm:$0xff] %vm7167, %v7114
        %7190 = vst.msk [vmem:[#allocation5 + $0xb0] sm:$0xff] %vm7167, %v7116
        %7191 = vst.msk [vmem:[#allocation5 + $0xb8] sm:$0xff] %vm7167, %v7118
        %7192 = vst.msk [vmem:[#allocation5 + $0xc0] sm:$0xff] %vm7167, %v7120
        %7193 = vst.msk [vmem:[#allocation5 + $0xc8] sm:$0xff] %vm7167, %v7122
        %7194 = vst.msk [vmem:[#allocation5 + $0xd0] sm:$0xff] %vm7167, %v7124
        %7195 = vst.msk [vmem:[#allocation5 + $0xd8] sm:$0xff] %vm7167, %v7126
        %7196 = vst.msk [vmem:[#allocation5 + $0xe0] sm:$0xff] %vm7167, %v7128
        %7197 = vst.msk [vmem:[#allocation5 + $0xe8] sm:$0xff] %vm7167, %v7130
        %7198 = vst.msk [vmem:[#allocation5 + $0xf0] sm:$0xff] %vm7167, %v7132
        %7199 = vst.msk [vmem:[#allocation5 + $0xf8] sm:$0xff] %vm7167, %v7134
        %v7200 = vld [vmem:[%s7006 + $0x1] sm:$0xff]
        %v7201 = vld [vmem:[%s7006 + $0x9] sm:$0xff]
        %v7202 = vld [vmem:[%s7006 + $0x19] sm:$0xff]
        %v7203 = vld [vmem:[%s7006 + $0x21] sm:$0xff]
        %v7204 = vld [vmem:[%s7006 + $0x31] sm:$0xff]
        %v7205 = vld [vmem:[%s7006 + $0x39] sm:$0xff]
        %v7206 = vld [vmem:[%s7006 + $0x49] sm:$0xff]
        %v7207 = vld [vmem:[%s7006 + $0x51] sm:$0xff]
        %v7208 = vld [vmem:[%s7006 + $0x61] sm:$0xff]
        %v7209 = vld [vmem:[%s7006 + $0x69] sm:$0xff]
        %v7210 = vld [vmem:[%s7006 + $0x79] sm:$0xff]
        %v7211 = vld [vmem:[%s7006 + $0x81] sm:$0xff]
        %v7212 = vld [vmem:[%s7006 + $0x91] sm:$0xff]
        %v7213 = vld [vmem:[%s7006 + $0x99] sm:$0xff]
        %v7214 = vld [vmem:[%s7006 + $0xa9] sm:$0xff]
        %v7215 = vld [vmem:[%s7006 + $0xb1] sm:$0xff]
        %v7216 = vld [vmem:[%s7006 + $0xc1] sm:$0xff]
        %v7217 = vld [vmem:[%s7006 + $0xc9] sm:$0xff]
        %v7218 = vld [vmem:[%s7006 + $0xd9] sm:$0xff]
        %v7219 = vld [vmem:[%s7006 + $0xe1] sm:$0xff]
        %v7220 = vld [vmem:[%s7006 + $0xf1] sm:$0xff]
        %v7221 = vld [vmem:[%s7006 + $0xf9] sm:$0xff]
        %v7222 = vld [vmem:[%s7006 + $0x109] sm:$0xff]
        %v7223 = vld [vmem:[%s7006 + $0x111] sm:$0xff]
        %v7224 = vld [vmem:[%s7006 + $0x121] sm:$0xff]
        %v7225 = vld [vmem:[%s7006 + $0x129] sm:$0xff]
        %v7226 = vld [vmem:[%s7006 + $0x139] sm:$0xff]
        %v7227 = vld [vmem:[%s7006 + $0x141] sm:$0xff]
        %v7228 = vld [vmem:[%s7006 + $0x151] sm:$0xff]
        %v7229 = vld [vmem:[%s7006 + $0x159] sm:$0xff]
        %v7230 = vld [vmem:[%s7006 + $0x169] sm:$0xff]
        %v7231 = vld [vmem:[%s7006 + $0x171] sm:$0xff]
        %7264 = vrot.lane.b32.xlu0 %v7200, 42
        %v7265 = vpop.permute.xlu0 %7264
        %7266 = vrot.lane.b32.xlu0 %v7201, 42
        %v7267 = vpop.permute.xlu0 %7266
        %7268 = vrot.lane.b32.xlu0 %v7202, 42
        %v7269 = vpop.permute.xlu0 %7268
        %7270 = vrot.lane.b32.xlu0 %v7203, 42
        %v7271 = vpop.permute.xlu0 %7270
        %7272 = vrot.lane.b32.xlu0 %v7204, 42
        %v7273 = vpop.permute.xlu0 %7272
        %7274 = vrot.lane.b32.xlu0 %v7205, 42
        %v7275 = vpop.permute.xlu0 %7274
        %7276 = vrot.lane.b32.xlu0 %v7206, 42
        %v7277 = vpop.permute.xlu0 %7276
        %7278 = vrot.lane.b32.xlu0 %v7207, 42
        %v7279 = vpop.permute.xlu0 %7278
        %7280 = vrot.lane.b32.xlu0 %v7208, 42
        %v7281 = vpop.permute.xlu0 %7280
        %7282 = vrot.lane.b32.xlu0 %v7209, 42
        %v7283 = vpop.permute.xlu0 %7282
        %7284 = vrot.lane.b32.xlu0 %v7210, 42
        %v7285 = vpop.permute.xlu0 %7284
        %7286 = vrot.lane.b32.xlu0 %v7211, 42
        %v7287 = vpop.permute.xlu0 %7286
        %7288 = vrot.lane.b32.xlu0 %v7212, 42
        %v7289 = vpop.permute.xlu0 %7288
        %7290 = vrot.lane.b32.xlu0 %v7213, 42
        %v7291 = vpop.permute.xlu0 %7290
        %7292 = vrot.lane.b32.xlu0 %v7214, 42
        %v7293 = vpop.permute.xlu0 %7292
        %7294 = vrot.lane.b32.xlu0 %v7215, 42
        %v7295 = vpop.permute.xlu0 %7294
        %7296 = vrot.lane.b32.xlu0 %v7216, 42
        %v7297 = vpop.permute.xlu0 %7296
        %7298 = vrot.lane.b32.xlu0 %v7217, 42
        %v7299 = vpop.permute.xlu0 %7298
        %7300 = vrot.lane.b32.xlu0 %v7218, 42
        %v7301 = vpop.permute.xlu0 %7300
        %7302 = vrot.lane.b32.xlu0 %v7219, 42
        %v7303 = vpop.permute.xlu0 %7302
        %7304 = vrot.lane.b32.xlu0 %v7220, 42
        %v7305 = vpop.permute.xlu0 %7304
        %7306 = vrot.lane.b32.xlu0 %v7221, 42
        %v7307 = vpop.permute.xlu0 %7306
        %7308 = vrot.lane.b32.xlu0 %v7222, 42
        %v7309 = vpop.permute.xlu0 %7308
        %7310 = vrot.lane.b32.xlu0 %v7223, 42
        %v7311 = vpop.permute.xlu0 %7310
        %7312 = vrot.lane.b32.xlu0 %v7224, 42
        %v7313 = vpop.permute.xlu0 %7312
        %7314 = vrot.lane.b32.xlu0 %v7225, 42
        %v7315 = vpop.permute.xlu0 %7314
        %7316 = vrot.lane.b32.xlu0 %v7226, 42
        %v7317 = vpop.permute.xlu0 %7316
        %7318 = vrot.lane.b32.xlu0 %v7227, 42
        %v7319 = vpop.permute.xlu0 %7318
        %7320 = vrot.lane.b32.xlu0 %v7228, 42
        %v7321 = vpop.permute.xlu0 %7320
        %7322 = vrot.lane.b32.xlu0 %v7229, 42
        %v7323 = vpop.permute.xlu0 %7322
        %7324 = vrot.lane.b32.xlu0 %v7230, 42
        %v7325 = vpop.permute.xlu0 %7324
        %7326 = vrot.lane.b32.xlu0 %v7231, 42
        %v7327 = vpop.permute.xlu0 %7326
        %vm7360 = vcmask 359760
        %7361 = vst.msk [vmem:[#allocation5] sm:$0xff] %vm7360, %v7265
        %7362 = vst.msk [vmem:[#allocation5 + $0x8] sm:$0xff] %vm7360, %v7267
        %7363 = vst.msk [vmem:[#allocation5 + $0x10] sm:$0xff] %vm7360, %v7269
        %7364 = vst.msk [vmem:[#allocation5 + $0x18] sm:$0xff] %vm7360, %v7271
        %7365 = vst.msk [vmem:[#allocation5 + $0x20] sm:$0xff] %vm7360, %v7273
        %7366 = vst.msk [vmem:[#allocation5 + $0x28] sm:$0xff] %vm7360, %v7275
        %7367 = vst.msk [vmem:[#allocation5 + $0x30] sm:$0xff] %vm7360, %v7277
        %7368 = vst.msk [vmem:[#allocation5 + $0x38] sm:$0xff] %vm7360, %v7279
        %7369 = vst.msk [vmem:[#allocation5 + $0x40] sm:$0xff] %vm7360, %v7281
        %7370 = vst.msk [vmem:[#allocation5 + $0x48] sm:$0xff] %vm7360, %v7283
        %7371 = vst.msk [vmem:[#allocation5 + $0x50] sm:$0xff] %vm7360, %v7285
        %7372 = vst.msk [vmem:[#allocation5 + $0x58] sm:$0xff] %vm7360, %v7287
        %7373 = vst.msk [vmem:[#allocation5 + $0x60] sm:$0xff] %vm7360, %v7289
        %7374 = vst.msk [vmem:[#allocation5 + $0x68] sm:$0xff] %vm7360, %v7291
        %7375 = vst.msk [vmem:[#allocation5 + $0x70] sm:$0xff] %vm7360, %v7293
        %7376 = vst.msk [vmem:[#allocation5 + $0x78] sm:$0xff] %vm7360, %v7295
        %7377 = vst.msk [vmem:[#allocation5 + $0x80] sm:$0xff] %vm7360, %v7297
        %7378 = vst.msk [vmem:[#allocation5 + $0x88] sm:$0xff] %vm7360, %v7299
        %7379 = vst.msk [vmem:[#allocation5 + $0x90] sm:$0xff] %vm7360, %v7301
        %7380 = vst.msk [vmem:[#allocation5 + $0x98] sm:$0xff] %vm7360, %v7303
        %7381 = vst.msk [vmem:[#allocation5 + $0xa0] sm:$0xff] %vm7360, %v7305
        %7382 = vst.msk [vmem:[#allocation5 + $0xa8] sm:$0xff] %vm7360, %v7307
        %7383 = vst.msk [vmem:[#allocation5 + $0xb0] sm:$0xff] %vm7360, %v7309
        %7384 = vst.msk [vmem:[#allocation5 + $0xb8] sm:$0xff] %vm7360, %v7311
        %7385 = vst.msk [vmem:[#allocation5 + $0xc0] sm:$0xff] %vm7360, %v7313
        %7386 = vst.msk [vmem:[#allocation5 + $0xc8] sm:$0xff] %vm7360, %v7315
        %7387 = vst.msk [vmem:[#allocation5 + $0xd0] sm:$0xff] %vm7360, %v7317
        %7388 = vst.msk [vmem:[#allocation5 + $0xd8] sm:$0xff] %vm7360, %v7319
        %7389 = vst.msk [vmem:[#allocation5 + $0xe0] sm:$0xff] %vm7360, %v7321
        %7390 = vst.msk [vmem:[#allocation5 + $0xe8] sm:$0xff] %vm7360, %v7323
        %7391 = vst.msk [vmem:[#allocation5 + $0xf0] sm:$0xff] %vm7360, %v7325
        %7392 = vst.msk [vmem:[#allocation5 + $0xf8] sm:$0xff] %vm7360, %v7327
        %v7393 = vld [vmem:[%s7006 + $0x2] sm:$0xff]
        %v7394 = vld [vmem:[%s7006 + $0xa] sm:$0xff]
        %v7395 = vld [vmem:[%s7006 + $0x1a] sm:$0xff]
        %v7396 = vld [vmem:[%s7006 + $0x22] sm:$0xff]
        %v7397 = vld [vmem:[%s7006 + $0x32] sm:$0xff]
        %v7398 = vld [vmem:[%s7006 + $0x3a] sm:$0xff]
        %v7399 = vld [vmem:[%s7006 + $0x4a] sm:$0xff]
        %v7400 = vld [vmem:[%s7006 + $0x52] sm:$0xff]
        %v7401 = vld [vmem:[%s7006 + $0x62] sm:$0xff]
        %v7402 = vld [vmem:[%s7006 + $0x6a] sm:$0xff]
        %v7403 = vld [vmem:[%s7006 + $0x7a] sm:$0xff]
        %v7404 = vld [vmem:[%s7006 + $0x82] sm:$0xff]
        %v7405 = vld [vmem:[%s7006 + $0x92] sm:$0xff]
        %v7406 = vld [vmem:[%s7006 + $0x9a] sm:$0xff]
        %v7407 = vld [vmem:[%s7006 + $0xaa] sm:$0xff]
        %v7408 = vld [vmem:[%s7006 + $0xb2] sm:$0xff]
        %v7409 = vld [vmem:[%s7006 + $0xc2] sm:$0xff]
        %v7410 = vld [vmem:[%s7006 + $0xca] sm:$0xff]
        %v7411 = vld [vmem:[%s7006 + $0xda] sm:$0xff]
        %v7412 = vld [vmem:[%s7006 + $0xe2] sm:$0xff]
        %v7413 = vld [vmem:[%s7006 + $0xf2] sm:$0xff]
        %v7414 = vld [vmem:[%s7006 + $0xfa] sm:$0xff]
        %v7415 = vld [vmem:[%s7006 + $0x10a] sm:$0xff]
        %v7416 = vld [vmem:[%s7006 + $0x112] sm:$0xff]
        %v7417 = vld [vmem:[%s7006 + $0x122] sm:$0xff]
        %v7418 = vld [vmem:[%s7006 + $0x12a] sm:$0xff]
        %v7419 = vld [vmem:[%s7006 + $0x13a] sm:$0xff]
        %v7420 = vld [vmem:[%s7006 + $0x142] sm:$0xff]
        %v7421 = vld [vmem:[%s7006 + $0x152] sm:$0xff]
        %v7422 = vld [vmem:[%s7006 + $0x15a] sm:$0xff]
        %v7423 = vld [vmem:[%s7006 + $0x16a] sm:$0xff]
        %v7424 = vld [vmem:[%s7006 + $0x172] sm:$0xff]
        %7457 = vrot.lane.b32.xlu0 %v7393, 44
        %v7458 = vpop.permute.xlu0 %7457
        %7459 = vrot.lane.b32.xlu0 %v7394, 44
        %v7460 = vpop.permute.xlu0 %7459
        %7461 = vrot.lane.b32.xlu0 %v7395, 44
        %v7462 = vpop.permute.xlu0 %7461
        %7463 = vrot.lane.b32.xlu0 %v7396, 44
        %v7464 = vpop.permute.xlu0 %7463
        %7465 = vrot.lane.b32.xlu0 %v7397, 44
        %v7466 = vpop.permute.xlu0 %7465
        %7467 = vrot.lane.b32.xlu0 %v7398, 44
        %v7468 = vpop.permute.xlu0 %7467
        %7469 = vrot.lane.b32.xlu0 %v7399, 44
        %v7470 = vpop.permute.xlu0 %7469
        %7471 = vrot.lane.b32.xlu0 %v7400, 44
        %v7472 = vpop.permute.xlu0 %7471
        %7473 = vrot.lane.b32.xlu0 %v7401, 44
        %v7474 = vpop.permute.xlu0 %7473
        %7475 = vrot.lane.b32.xlu0 %v7402, 44
        %v7476 = vpop.permute.xlu0 %7475
        %7477 = vrot.lane.b32.xlu0 %v7403, 44
        %v7478 = vpop.permute.xlu0 %7477
        %7479 = vrot.lane.b32.xlu0 %v7404, 44
        %v7480 = vpop.permute.xlu0 %7479
        %7481 = vrot.lane.b32.xlu0 %v7405, 44
        %v7482 = vpop.permute.xlu0 %7481
        %7483 = vrot.lane.b32.xlu0 %v7406, 44
        %v7484 = vpop.permute.xlu0 %7483
        %7485 = vrot.lane.b32.xlu0 %v7407, 44
        %v7486 = vpop.permute.xlu0 %7485
        %7487 = vrot.lane.b32.xlu0 %v7408, 44
        %v7488 = vpop.permute.xlu0 %7487
        %7489 = vrot.lane.b32.xlu0 %v7409, 44
        %v7490 = vpop.permute.xlu0 %7489
        %7491 = vrot.lane.b32.xlu0 %v7410, 44
        %v7492 = vpop.permute.xlu0 %7491
        %7493 = vrot.lane.b32.xlu0 %v7411, 44
        %v7494 = vpop.permute.xlu0 %7493
        %7495 = vrot.lane.b32.xlu0 %v7412, 44
        %v7496 = vpop.permute.xlu0 %7495
        %7497 = vrot.lane.b32.xlu0 %v7413, 44
        %v7498 = vpop.permute.xlu0 %7497
        %7499 = vrot.lane.b32.xlu0 %v7414, 44
        %v7500 = vpop.permute.xlu0 %7499
        %7501 = vrot.lane.b32.xlu0 %v7415, 44
        %v7502 = vpop.permute.xlu0 %7501
        %7503 = vrot.lane.b32.xlu0 %v7416, 44
        %v7504 = vpop.permute.xlu0 %7503
        %7505 = vrot.lane.b32.xlu0 %v7417, 44
        %v7506 = vpop.permute.xlu0 %7505
        %7507 = vrot.lane.b32.xlu0 %v7418, 44
        %v7508 = vpop.permute.xlu0 %7507
        %7509 = vrot.lane.b32.xlu0 %v7419, 44
        %v7510 = vpop.permute.xlu0 %7509
        %7511 = vrot.lane.b32.xlu0 %v7420, 44
        %v7512 = vpop.permute.xlu0 %7511
        %7513 = vrot.lane.b32.xlu0 %v7421, 44
        %v7514 = vpop.permute.xlu0 %7513
        %7515 = vrot.lane.b32.xlu0 %v7422, 44
        %v7516 = vpop.permute.xlu0 %7515
        %7517 = vrot.lane.b32.xlu0 %v7423, 44
        %v7518 = vpop.permute.xlu0 %7517
        %7519 = vrot.lane.b32.xlu0 %v7424, 44
        %v7520 = vpop.permute.xlu0 %7519
        %vm7553 = vcmask 376160
        %7554 = vst.msk [vmem:[#allocation5] sm:$0xff] %vm7553, %v7458
        %7555 = vst.msk [vmem:[#allocation5 + $0x8] sm:$0xff] %vm7553, %v7460
        %7556 = vst.msk [vmem:[#allocation5 + $0x10] sm:$0xff] %vm7553, %v7462
        %7557 = vst.msk [vmem:[#allocation5 + $0x18] sm:$0xff] %vm7553, %v7464
        %7558 = vst.msk [vmem:[#allocation5 + $0x20] sm:$0xff] %vm7553, %v7466
        %7559 = vst.msk [vmem:[#allocation5 + $0x28] sm:$0xff] %vm7553, %v7468
        %7560 = vst.msk [vmem:[#allocation5 + $0x30] sm:$0xff] %vm7553, %v7470
        %7561 = vst.msk [vmem:[#allocation5 + $0x38] sm:$0xff] %vm7553, %v7472
        %7562 = vst.msk [vmem:[#allocation5 + $0x40] sm:$0xff] %vm7553, %v7474
        %7563 = vst.msk [vmem:[#allocation5 + $0x48] sm:$0xff] %vm7553, %v7476
        %7564 = vst.msk [vmem:[#allocation5 + $0x50] sm:$0xff] %vm7553, %v7478
        %7565 = vst.msk [vmem:[#allocation5 + $0x58] sm:$0xff] %vm7553, %v7480
        %7566 = vst.msk [vmem:[#allocation5 + $0x60] sm:$0xff] %vm7553, %v7482
        %7567 = vst.msk [vmem:[#allocation5 + $0x68] sm:$0xff] %vm7553, %v7484
        %7568 = vst.msk [vmem:[#allocation5 + $0x70] sm:$0xff] %vm7553, %v7486
        %7569 = vst.msk [vmem:[#allocation5 + $0x78] sm:$0xff] %vm7553, %v7488
        %7570 = vst.msk [vmem:[#allocation5 + $0x80] sm:$0xff] %vm7553, %v7490
        %7571 = vst.msk [vmem:[#allocation5 + $0x88] sm:$0xff] %vm7553, %v7492
        %7572 = vst.msk [vmem:[#allocation5 + $0x90] sm:$0xff] %vm7553, %v7494
        %7573 = vst.msk [vmem:[#allocation5 + $0x98] sm:$0xff] %vm7553, %v7496
        %7574 = vst.msk [vmem:[#allocation5 + $0xa0] sm:$0xff] %vm7553, %v7498
        %7575 = vst.msk [vmem:[#allocation5 + $0xa8] sm:$0xff] %vm7553, %v7500
        %7576 = vst.msk [vmem:[#allocation5 + $0xb0] sm:$0xff] %vm7553, %v7502
        %7577 = vst.msk [vmem:[#allocation5 + $0xb8] sm:$0xff] %vm7553, %v7504
        %7578 = vst.msk [vmem:[#allocation5 + $0xc0] sm:$0xff] %vm7553, %v7506
        %7579 = vst.msk [vmem:[#allocation5 + $0xc8] sm:$0xff] %vm7553, %v7508
        %7580 = vst.msk [vmem:[#allocation5 + $0xd0] sm:$0xff] %vm7553, %v7510
        %7581 = vst.msk [vmem:[#allocation5 + $0xd8] sm:$0xff] %vm7553, %v7512
        %7582 = vst.msk [vmem:[#allocation5 + $0xe0] sm:$0xff] %vm7553, %v7514
        %7583 = vst.msk [vmem:[#allocation5 + $0xe8] sm:$0xff] %vm7553, %v7516
        %7584 = vst.msk [vmem:[#allocation5 + $0xf0] sm:$0xff] %vm7553, %v7518
        %7585 = vst.msk [vmem:[#allocation5 + $0xf8] sm:$0xff] %vm7553, %v7520
        %v7586 = vld [vmem:[%s7006 + $0x3] sm:$0xff]
        %v7587 = vld [vmem:[%s7006 + $0xb] sm:$0xff]
        %v7588 = vld [vmem:[%s7006 + $0x1b] sm:$0xff]
        %v7589 = vld [vmem:[%s7006 + $0x23] sm:$0xff]
        %v7590 = vld [vmem:[%s7006 + $0x33] sm:$0xff]
        %v7591 = vld [vmem:[%s7006 + $0x3b] sm:$0xff]
        %v7592 = vld [vmem:[%s7006 + $0x4b] sm:$0xff]
        %v7593 = vld [vmem:[%s7006 + $0x53] sm:$0xff]
        %v7594 = vld [vmem:[%s7006 + $0x63] sm:$0xff]
        %v7595 = vld [vmem:[%s7006 + $0x6b] sm:$0xff]
        %v7596 = vld [vmem:[%s7006 + $0x7b] sm:$0xff]
        %v7597 = vld [vmem:[%s7006 + $0x83] sm:$0xff]
        %v7598 = vld [vmem:[%s7006 + $0x93] sm:$0xff]
        %v7599 = vld [vmem:[%s7006 + $0x9b] sm:$0xff]
        %v7600 = vld [vmem:[%s7006 + $0xab] sm:$0xff]
        %v7601 = vld [vmem:[%s7006 + $0xb3] sm:$0xff]
        %v7602 = vld [vmem:[%s7006 + $0xc3] sm:$0xff]
        %v7603 = vld [vmem:[%s7006 + $0xcb] sm:$0xff]
        %v7604 = vld [vmem:[%s7006 + $0xdb] sm:$0xff]
        %v7605 = vld [vmem:[%s7006 + $0xe3] sm:$0xff]
        %v7606 = vld [vmem:[%s7006 + $0xf3] sm:$0xff]
        %v7607 = vld [vmem:[%s7006 + $0xfb] sm:$0xff]
        %v7608 = vld [vmem:[%s7006 + $0x10b] sm:$0xff]
        %v7609 = vld [vmem:[%s7006 + $0x113] sm:$0xff]
        %v7610 = vld [vmem:[%s7006 + $0x123] sm:$0xff]
        %v7611 = vld [vmem:[%s7006 + $0x12b] sm:$0xff]
        %v7612 = vld [vmem:[%s7006 + $0x13b] sm:$0xff]
        %v7613 = vld [vmem:[%s7006 + $0x143] sm:$0xff]
        %v7614 = vld [vmem:[%s7006 + $0x153] sm:$0xff]
        %v7615 = vld [vmem:[%s7006 + $0x15b] sm:$0xff]
        %v7616 = vld [vmem:[%s7006 + $0x16b] sm:$0xff]
        %v7617 = vld [vmem:[%s7006 + $0x173] sm:$0xff]
        %7650 = vrot.lane.b32.xlu0 %v7586, 46
        %v7651 = vpop.permute.xlu0 %7650
        %7652 = vrot.lane.b32.xlu0 %v7587, 46
        %v7653 = vpop.permute.xlu0 %7652
        %7654 = vrot.lane.b32.xlu0 %v7588, 46
        %v7655 = vpop.permute.xlu0 %7654
        %7656 = vrot.lane.b32.xlu0 %v7589, 46
        %v7657 = vpop.permute.xlu0 %7656
        %7658 = vrot.lane.b32.xlu0 %v7590, 46
        %v7659 = vpop.permute.xlu0 %7658
        %7660 = vrot.lane.b32.xlu0 %v7591, 46
        %v7661 = vpop.permute.xlu0 %7660
        %7662 = vrot.lane.b32.xlu0 %v7592, 46
        %v7663 = vpop.permute.xlu0 %7662
        %7664 = vrot.lane.b32.xlu0 %v7593, 46
        %v7665 = vpop.permute.xlu0 %7664
        %7666 = vrot.lane.b32.xlu0 %v7594, 46
        %v7667 = vpop.permute.xlu0 %7666
        %7668 = vrot.lane.b32.xlu0 %v7595, 46
        %v7669 = vpop.permute.xlu0 %7668
        %7670 = vrot.lane.b32.xlu0 %v7596, 46
        %v7671 = vpop.permute.xlu0 %7670
        %7672 = vrot.lane.b32.xlu0 %v7597, 46
        %v7673 = vpop.permute.xlu0 %7672
        %7674 = vrot.lane.b32.xlu0 %v7598, 46
        %v7675 = vpop.permute.xlu0 %7674
        %7676 = vrot.lane.b32.xlu0 %v7599, 46
        %v7677 = vpop.permute.xlu0 %7676
        %7678 = vrot.lane.b32.xlu0 %v7600, 46
        %v7679 = vpop.permute.xlu0 %7678
        %7680 = vrot.lane.b32.xlu0 %v7601, 46
        %v7681 = vpop.permute.xlu0 %7680
        %7682 = vrot.lane.b32.xlu0 %v7602, 46
        %v7683 = vpop.permute.xlu0 %7682
        %7684 = vrot.lane.b32.xlu0 %v7603, 46
        %v7685 = vpop.permute.xlu0 %7684
        %7686 = vrot.lane.b32.xlu0 %v7604, 46
        %v7687 = vpop.permute.xlu0 %7686
        %7688 = vrot.lane.b32.xlu0 %v7605, 46
        %v7689 = vpop.permute.xlu0 %7688
        %7690 = vrot.lane.b32.xlu0 %v7606, 46
        %v7691 = vpop.permute.xlu0 %7690
        %7692 = vrot.lane.b32.xlu0 %v7607, 46
        %v7693 = vpop.permute.xlu0 %7692
        %7694 = vrot.lane.b32.xlu0 %v7608, 46
        %v7695 = vpop.permute.xlu0 %7694
        %7696 = vrot.lane.b32.xlu0 %v7609, 46
        %v7697 = vpop.permute.xlu0 %7696
        %7698 = vrot.lane.b32.xlu0 %v7610, 46
        %v7699 = vpop.permute.xlu0 %7698
        %7700 = vrot.lane.b32.xlu0 %v7611, 46
        %v7701 = vpop.permute.xlu0 %7700
        %7702 = vrot.lane.b32.xlu0 %v7612, 46
        %v7703 = vpop.permute.xlu0 %7702
        %7704 = vrot.lane.b32.xlu0 %v7613, 46
        %v7705 = vpop.permute.xlu0 %7704
        %7706 = vrot.lane.b32.xlu0 %v7614, 46
        %v7707 = vpop.permute.xlu0 %7706
        %7708 = vrot.lane.b32.xlu0 %v7615, 46
        %v7709 = vpop.permute.xlu0 %7708
        %7710 = vrot.lane.b32.xlu0 %v7616, 46
        %v7711 = vpop.permute.xlu0 %7710
        %7712 = vrot.lane.b32.xlu0 %v7617, 46
        %v7713 = vpop.permute.xlu0 %7712
        %vm7746 = vcmask 392560
        %7747 = vst.msk [vmem:[#allocation5] sm:$0xff] %vm7746, %v7651
        %7748 = vst.msk [vmem:[#allocation5 + $0x8] sm:$0xff] %vm7746, %v7653
        %7749 = vst.msk [vmem:[#allocation5 + $0x10] sm:$0xff] %vm7746, %v7655
        %7750 = vst.msk [vmem:[#allocation5 + $0x18] sm:$0xff] %vm7746, %v7657
        %7751 = vst.msk [vmem:[#allocation5 + $0x20] sm:$0xff] %vm7746, %v7659
        %7752 = vst.msk [vmem:[#allocation5 + $0x28] sm:$0xff] %vm7746, %v7661
        %7753 = vst.msk [vmem:[#allocation5 + $0x30] sm:$0xff] %vm7746, %v7663
        %7754 = vst.msk [vmem:[#allocation5 + $0x38] sm:$0xff] %vm7746, %v7665
        %7755 = vst.msk [vmem:[#allocation5 + $0x40] sm:$0xff] %vm7746, %v7667
        %7756 = vst.msk [vmem:[#allocation5 + $0x48] sm:$0xff] %vm7746, %v7669
        %7757 = vst.msk [vmem:[#allocation5 + $0x50] sm:$0xff] %vm7746, %v7671
        %7758 = vst.msk [vmem:[#allocation5 + $0x58] sm:$0xff] %vm7746, %v7673
        %7759 = vst.msk [vmem:[#allocation5 + $0x60] sm:$0xff] %vm7746, %v7675
        %7760 = vst.msk [vmem:[#allocation5 + $0x68] sm:$0xff] %vm7746, %v7677
        %7761 = vst.msk [vmem:[#allocation5 + $0x70] sm:$0xff] %vm7746, %v7679
        %7762 = vst.msk [vmem:[#allocation5 + $0x78] sm:$0xff] %vm7746, %v7681
        %7763 = vst.msk [vmem:[#allocation5 + $0x80] sm:$0xff] %vm7746, %v7683
        %7764 = vst.msk [vmem:[#allocation5 + $0x88] sm:$0xff] %vm7746, %v7685
        %7765 = vst.msk [vmem:[#allocation5 + $0x90] sm:$0xff] %vm7746, %v7687
        %7766 = vst.msk [vmem:[#allocation5 + $0x98] sm:$0xff] %vm7746, %v7689
        %7767 = vst.msk [vmem:[#allocation5 + $0xa0] sm:$0xff] %vm7746, %v7691
        %7768 = vst.msk [vmem:[#allocation5 + $0xa8] sm:$0xff] %vm7746, %v7693
        %7769 = vst.msk [vmem:[#allocation5 + $0xb0] sm:$0xff] %vm7746, %v7695
        %7770 = vst.msk [vmem:[#allocation5 + $0xb8] sm:$0xff] %vm7746, %v7697
        %7771 = vst.msk [vmem:[#allocation5 + $0xc0] sm:$0xff] %vm7746, %v7699
        %7772 = vst.msk [vmem:[#allocation5 + $0xc8] sm:$0xff] %vm7746, %v7701
        %7773 = vst.msk [vmem:[#allocation5 + $0xd0] sm:$0xff] %vm7746, %v7703
        %7774 = vst.msk [vmem:[#allocation5 + $0xd8] sm:$0xff] %vm7746, %v7705
        %7775 = vst.msk [vmem:[#allocation5 + $0xe0] sm:$0xff] %vm7746, %v7707
        %7776 = vst.msk [vmem:[#allocation5 + $0xe8] sm:$0xff] %vm7746, %v7709
        %7777 = vst.msk [vmem:[#allocation5 + $0xf0] sm:$0xff] %vm7746, %v7711
        %7778 = vst.msk [vmem:[#allocation5 + $0xf8] sm:$0xff] %vm7746, %v7713
        %v7779 = vld [vmem:[%s7006 + $0x4] sm:$0xff]
        %v7780 = vld [vmem:[%s7006 + $0xc] sm:$0xff]
        %v7781 = vld [vmem:[%s7006 + $0x1c] sm:$0xff]
        %v7782 = vld [vmem:[%s7006 + $0x24] sm:$0xff]
        %v7783 = vld [vmem:[%s7006 + $0x34] sm:$0xff]
        %v7784 = vld [vmem:[%s7006 + $0x3c] sm:$0xff]
        %v7785 = vld [vmem:[%s7006 + $0x4c] sm:$0xff]
        %v7786 = vld [vmem:[%s7006 + $0x54] sm:$0xff]
        %v7787 = vld [vmem:[%s7006 + $0x64] sm:$0xff]
        %v7788 = vld [vmem:[%s7006 + $0x6c] sm:$0xff]
        %v7789 = vld [vmem:[%s7006 + $0x7c] sm:$0xff]
        %v7790 = vld [vmem:[%s7006 + $0x84] sm:$0xff]
        %v7791 = vld [vmem:[%s7006 + $0x94] sm:$0xff]
        %v7792 = vld [vmem:[%s7006 + $0x9c] sm:$0xff]
        %v7793 = vld [vmem:[%s7006 + $0xac] sm:$0xff]
        %v7794 = vld [vmem:[%s7006 + $0xb4] sm:$0xff]
        %v7795 = vld [vmem:[%s7006 + $0xc4] sm:$0xff]
        %v7796 = vld [vmem:[%s7006 + $0xcc] sm:$0xff]
        %v7797 = vld [vmem:[%s7006 + $0xdc] sm:$0xff]
        %v7798 = vld [vmem:[%s7006 + $0xe4] sm:$0xff]
        %v7799 = vld [vmem:[%s7006 + $0xf4] sm:$0xff]
        %v7800 = vld [vmem:[%s7006 + $0xfc] sm:$0xff]
        %v7801 = vld [vmem:[%s7006 + $0x10c] sm:$0xff]
        %v7802 = vld [vmem:[%s7006 + $0x114] sm:$0xff]
        %v7803 = vld [vmem:[%s7006 + $0x124] sm:$0xff]
        %v7804 = vld [vmem:[%s7006 + $0x12c] sm:$0xff]
        %v7805 = vld [vmem:[%s7006 + $0x13c] sm:$0xff]
        %v7806 = vld [vmem:[%s7006 + $0x144] sm:$0xff]
        %v7807 = vld [vmem:[%s7006 + $0x154] sm:$0xff]
        %v7808 = vld [vmem:[%s7006 + $0x15c] sm:$0xff]
        %v7809 = vld [vmem:[%s7006 + $0x16c] sm:$0xff]
        %v7810 = vld [vmem:[%s7006 + $0x174] sm:$0xff]
        %7843 = vrot.lane.b32.xlu0 %v7779, 48
        %v7844 = vpop.permute.xlu0 %7843
        %7845 = vrot.lane.b32.xlu0 %v7780, 48
        %v7846 = vpop.permute.xlu0 %7845
        %7847 = vrot.lane.b32.xlu0 %v7781, 48
        %v7848 = vpop.permute.xlu0 %7847
        %7849 = vrot.lane.b32.xlu0 %v7782, 48
        %v7850 = vpop.permute.xlu0 %7849
        %7851 = vrot.lane.b32.xlu0 %v7783, 48
        %v7852 = vpop.permute.xlu0 %7851
        %7853 = vrot.lane.b32.xlu0 %v7784, 48
        %v7854 = vpop.permute.xlu0 %7853
        %7855 = vrot.lane.b32.xlu0 %v7785, 48
        %v7856 = vpop.permute.xlu0 %7855
        %7857 = vrot.lane.b32.xlu0 %v7786, 48
        %v7858 = vpop.permute.xlu0 %7857
        %7859 = vrot.lane.b32.xlu0 %v7787, 48
        %v7860 = vpop.permute.xlu0 %7859
        %7861 = vrot.lane.b32.xlu0 %v7788, 48
        %v7862 = vpop.permute.xlu0 %7861
        %7863 = vrot.lane.b32.xlu0 %v7789, 48
        %v7864 = vpop.permute.xlu0 %7863
        %7865 = vrot.lane.b32.xlu0 %v7790, 48
        %v7866 = vpop.permute.xlu0 %7865
        %7867 = vrot.lane.b32.xlu0 %v7791, 48
        %v7868 = vpop.permute.xlu0 %7867
        %7869 = vrot.lane.b32.xlu0 %v7792, 48
        %v7870 = vpop.permute.xlu0 %7869
        %7871 = vrot.lane.b32.xlu0 %v7793, 48
        %v7872 = vpop.permute.xlu0 %7871
        %7873 = vrot.lane.b32.xlu0 %v7794, 48
        %v7874 = vpop.permute.xlu0 %7873
        %7875 = vrot.lane.b32.xlu0 %v7795, 48
        %v7876 = vpop.permute.xlu0 %7875
        %7877 = vrot.lane.b32.xlu0 %v7796, 48
        %v7878 = vpop.permute.xlu0 %7877
        %7879 = vrot.lane.b32.xlu0 %v7797, 48
        %v7880 = vpop.permute.xlu0 %7879
        %7881 = vrot.lane.b32.xlu0 %v7798, 48
        %v7882 = vpop.permute.xlu0 %7881
        %7883 = vrot.lane.b32.xlu0 %v7799, 48
        %v7884 = vpop.permute.xlu0 %7883
        %7885 = vrot.lane.b32.xlu0 %v7800, 48
        %v7886 = vpop.permute.xlu0 %7885
        %7887 = vrot.lane.b32.xlu0 %v7801, 48
        %v7888 = vpop.permute.xlu0 %7887
        %7889 = vrot.lane.b32.xlu0 %v7802, 48
        %v7890 = vpop.permute.xlu0 %7889
        %7891 = vrot.lane.b32.xlu0 %v7803, 48
        %v7892 = vpop.permute.xlu0 %7891
        %7893 = vrot.lane.b32.xlu0 %v7804, 48
        %v7894 = vpop.permute.xlu0 %7893
        %7895 = vrot.lane.b32.xlu0 %v7805, 48
        %v7896 = vpop.permute.xlu0 %7895
        %7897 = vrot.lane.b32.xlu0 %v7806, 48
        %v7898 = vpop.permute.xlu0 %7897
        %7899 = vrot.lane.b32.xlu0 %v7807, 48
        %v7900 = vpop.permute.xlu0 %7899
        %7901 = vrot.lane.b32.xlu0 %v7808, 48
        %v7902 = vpop.permute.xlu0 %7901
        %7903 = vrot.lane.b32.xlu0 %v7809, 48
        %v7904 = vpop.permute.xlu0 %7903
        %7905 = vrot.lane.b32.xlu0 %v7810, 48
        %v7906 = vpop.permute.xlu0 %7905
        %vm7939 = vcmask 408960
        %7940 = vst.msk [vmem:[#allocation5] sm:$0xff] %vm7939, %v7844
        %7941 = vst.msk [vmem:[#allocation5 + $0x8] sm:$0xff] %vm7939, %v7846
        %7942 = vst.msk [vmem:[#allocation5 + $0x10] sm:$0xff] %vm7939, %v7848
        %7943 = vst.msk [vmem:[#allocation5 + $0x18] sm:$0xff] %vm7939, %v7850
        %7944 = vst.msk [vmem:[#allocation5 + $0x20] sm:$0xff] %vm7939, %v7852
        %7945 = vst.msk [vmem:[#allocation5 + $0x28] sm:$0xff] %vm7939, %v7854
        %7946 = vst.msk [vmem:[#allocation5 + $0x30] sm:$0xff] %vm7939, %v7856
        %7947 = vst.msk [vmem:[#allocation5 + $0x38] sm:$0xff] %vm7939, %v7858
        %7948 = vst.msk [vmem:[#allocation5 + $0x40] sm:$0xff] %vm7939, %v7860
        %7949 = vst.msk [vmem:[#allocation5 + $0x48] sm:$0xff] %vm7939, %v7862
        %7950 = vst.msk [vmem:[#allocation5 + $0x50] sm:$0xff] %vm7939, %v7864
        %7951 = vst.msk [vmem:[#allocation5 + $0x58] sm:$0xff] %vm7939, %v7866
        %7952 = vst.msk [vmem:[#allocation5 + $0x60] sm:$0xff] %vm7939, %v7868
        %7953 = vst.msk [vmem:[#allocation5 + $0x68] sm:$0xff] %vm7939, %v7870
        %7954 = vst.msk [vmem:[#allocation5 + $0x70] sm:$0xff] %vm7939, %v7872
        %7955 = vst.msk [vmem:[#allocation5 + $0x78] sm:$0xff] %vm7939, %v7874
        %7956 = vst.msk [vmem:[#allocation5 + $0x80] sm:$0xff] %vm7939, %v7876
        %7957 = vst.msk [vmem:[#allocation5 + $0x88] sm:$0xff] %vm7939, %v7878
        %7958 = vst.msk [vmem:[#allocation5 + $0x90] sm:$0xff] %vm7939, %v7880
        %7959 = vst.msk [vmem:[#allocation5 + $0x98] sm:$0xff] %vm7939, %v7882
        %7960 = vst.msk [vmem:[#allocation5 + $0xa0] sm:$0xff] %vm7939, %v7884
        %7961 = vst.msk [vmem:[#allocation5 + $0xa8] sm:$0xff] %vm7939, %v7886
        %7962 = vst.msk [vmem:[#allocation5 + $0xb0] sm:$0xff] %vm7939, %v7888
        %7963 = vst.msk [vmem:[#allocation5 + $0xb8] sm:$0xff] %vm7939, %v7890
        %7964 = vst.msk [vmem:[#allocation5 + $0xc0] sm:$0xff] %vm7939, %v7892
        %7965 = vst.msk [vmem:[#allocation5 + $0xc8] sm:$0xff] %vm7939, %v7894
        %7966 = vst.msk [vmem:[#allocation5 + $0xd0] sm:$0xff] %vm7939, %v7896
        %7967 = vst.msk [vmem:[#allocation5 + $0xd8] sm:$0xff] %vm7939, %v7898
        %7968 = vst.msk [vmem:[#allocation5 + $0xe0] sm:$0xff] %vm7939, %v7900
        %7969 = vst.msk [vmem:[#allocation5 + $0xe8] sm:$0xff] %vm7939, %v7902
        %7970 = vst.msk [vmem:[#allocation5 + $0xf0] sm:$0xff] %vm7939, %v7904
        %7971 = vst.msk [vmem:[#allocation5 + $0xf8] sm:$0xff] %vm7939, %v7906
        %v7972 = vld [vmem:[#allocation5] sm:$0xff]
        %v7973 = vld [vmem:[#allocation5 + $0x8] sm:$0xff]
        %v7974 = vld [vmem:[#allocation5 + $0x10] sm:$0xff]
        %v7975 = vld [vmem:[#allocation5 + $0x18] sm:$0xff]
        %v7976 = vld [vmem:[#allocation5 + $0x20] sm:$0xff]
        %v7977 = vld [vmem:[#allocation5 + $0x28] sm:$0xff]
        %v7978 = vld [vmem:[#allocation5 + $0x30] sm:$0xff]
        %v7979 = vld [vmem:[#allocation5 + $0x38] sm:$0xff]
        %v7980 = vld [vmem:[#allocation5 + $0x40] sm:$0xff]
        %v7981 = vld [vmem:[#allocation5 + $0x48] sm:$0xff]
        %v7982 = vld [vmem:[#allocation5 + $0x50] sm:$0xff]
        %v7983 = vld [vmem:[#allocation5 + $0x58] sm:$0xff]
        %v7984 = vld [vmem:[#allocation5 + $0x60] sm:$0xff]
        %v7985 = vld [vmem:[#allocation5 + $0x68] sm:$0xff]
        %v7986 = vld [vmem:[#allocation5 + $0x70] sm:$0xff]
        %v7987 = vld [vmem:[#allocation5 + $0x78] sm:$0xff]
        %v7988 = vld [vmem:[#allocation5 + $0x80] sm:$0xff]
        %v7989 = vld [vmem:[#allocation5 + $0x88] sm:$0xff]
        %v7990 = vld [vmem:[#allocation5 + $0x90] sm:$0xff]
        %v7991 = vld [vmem:[#allocation5 + $0x98] sm:$0xff]
        %v7992 = vld [vmem:[#allocation5 + $0xa0] sm:$0xff]
        %v7993 = vld [vmem:[#allocation5 + $0xa8] sm:$0xff]
        %v7994 = vld [vmem:[#allocation5 + $0xb0] sm:$0xff]
        %v7995 = vld [vmem:[#allocation5 + $0xb8] sm:$0xff]
        %v7996 = vld [vmem:[#allocation5 + $0xc0] sm:$0xff]
        %v7997 = vld [vmem:[#allocation5 + $0xc8] sm:$0xff]
        %v7998 = vld [vmem:[#allocation5 + $0xd0] sm:$0xff]
        %v7999 = vld [vmem:[#allocation5 + $0xd8] sm:$0xff]
        %v8000 = vld [vmem:[#allocation5 + $0xe0] sm:$0xff]
        %v8001 = vld [vmem:[#allocation5 + $0xe8] sm:$0xff]
        %v8002 = vld [vmem:[#allocation5 + $0xf0] sm:$0xff]
        %v8003 = vld [vmem:[#allocation5 + $0xf8] sm:$0xff]
        %v8004 = vld [vmem:[%s5] sm:$0xff]
        %v8005 = vld [vmem:[%s5 + $0x8] sm:$0xff]
        %v8006 = vld [vmem:[%s5 + $0x10] sm:$0xff]
        %v8007 = vld [vmem:[%s5 + $0x18] sm:$0xff]
        %v8008 = vld [vmem:[%s5 + $0x20] sm:$0xff]
        %v8009 = vld [vmem:[%s5 + $0x28] sm:$0xff]
        %v8010 = vld [vmem:[%s5 + $0x30] sm:$0x3]
        %v8011 = vld [vmem:[%s6] sm:$0x1]
        %v8013 = vlaneseq
        %v8014 = vshrl.u32 %v8013, 7
        %v8015 = vsub.s32 0, %v8014
        %v8016 = vrot.slane %v8011, %v8015
        %vm8018 = vcmask 408576
        %v8020 = vsel %vm8018, %v7972, 0
        %v8023 = vsel %vm8018, %v7973, 0
        %v8026 = vsel %vm8018, %v7974, 0
        %v8029 = vsel %vm8018, %v7975, 0
        %v8032 = vsel %vm8018, %v7976, 0
        %v8035 = vsel %vm8018, %v7977, 0
        %v8038 = vsel %vm8018, %v7978, 0
        %v8041 = vsel %vm8018, %v7979, 0
        %v8044 = vsel %vm8018, %v7980, 0
        %v8047 = vsel %vm8018, %v7981, 0
        %v8050 = vsel %vm8018, %v7982, 0
        %v8053 = vsel %vm8018, %v7983, 0
        %v8056 = vsel %vm8018, %v7984, 0
        %v8059 = vsel %vm8018, %v7985, 0
        %v8062 = vsel %vm8018, %v7986, 0
        %v8065 = vsel %vm8018, %v7987, 0
        %v8068 = vsel %vm8018, %v7988, 0
        %v8071 = vsel %vm8018, %v7989, 0
        %v8074 = vsel %vm8018, %v7990, 0
        %v8077 = vsel %vm8018, %v7991, 0
        %v8080 = vsel %vm8018, %v7992, 0
        %v8083 = vsel %vm8018, %v7993, 0
        %v8086 = vsel %vm8018, %v7994, 0
        %v8089 = vsel %vm8018, %v7995, 0
        %v8092 = vsel %vm8018, %v7996, 0
        %v8095 = vsel %vm8018, %v7997, 0
        %v8098 = vsel %vm8018, %v7998, 0
        %v8101 = vsel %vm8018, %v7999, 0
        %v8104 = vsel %vm8018, %v8000, 0
        %v8107 = vsel %vm8018, %v8001, 0
        %v8110 = vsel %vm8018, %v8002, 0
        %v8113 = vsel %vm8018, %v8003, 0
        %v8116 = vsel %vm2669, %v8010, 0
        %8118 = vmatprep.subr.mxu0 0.0
        %8119 = vmatpush1.msra.mxu0 %v8004
        %8120 = vmatprep.subr.mxu0 0.0
        %8121 = vmatpush1.msra.mxu0 %v8005
        %8122 = vmatprep.subr.mxu0 0.0
        %8123 = vmatpush1.msra.mxu0 %v8006
        %8124 = vmatprep.subr.mxu0 0.0
        %8125 = vmatpush1.msra.mxu0 %v8007
        %8126 = vmatprep.subr.mxu0 0.0
        %8127 = vmatpush1.msra.mxu0 %v8008
        %8128 = vmatprep.subr.mxu0 0.0
        %8129 = vmatpush1.msra.mxu0 %v8009
        %8130 = vmatprep.subr.mxu0 0.0
        %8131 = vmatpush1.msra.mxu0 %v8116
        %8132 = vmatprep.subr.mxu0 0.0
        %8133 = vmatpush1.msra.mxu0 0.0
        %8134 = vmatprep.subr.mxu0 0.0
        %8135 = vmatpush1.msra.mxu0 0.0
        %8136 = vmatprep.subr.mxu0 0.0
        %8137 = vmatpush1.msra.mxu0 0.0
        %8138 = vmatprep.subr.mxu0 0.0
        %8139 = vmatpush1.msra.mxu0 0.0
        %8140 = vmatprep.subr.mxu0 0.0
        %8141 = vmatpush1.msra.mxu0 0.0
        %8142 = vmatprep.subr.mxu0 0.0
        %8143 = vmatpush1.msra.mxu0 0.0
        %8144 = vmatprep.subr.mxu0 0.0
        %8145 = vmatpush1.msra.mxu0 0.0
        %8146 = vmatprep.subr.mxu0 0.0
        %8147 = vmatpush1.msra.mxu0 0.0
        %8148 = vmatprep.subr.mxu0 0.0
        %8149 = vmatpush1.msra.mxu0 0.0
        %8150 = vmatprep.subr.mxu0 0.0
        %8151 = vmatpush1.msra.mxu0 0.0
        %8152 = vmatprep.subr.mxu0 0.0
        %8153 = vmatpush1.msra.mxu0 0.0
        %8154 = vmatprep.subr.mxu0 0.0
        %8155 = vmatpush1.msra.mxu0 0.0
        %8156 = vmatprep.subr.mxu0 0.0
        %8157 = vmatpush1.msra.mxu0 0.0
        %8158 = vmatprep.subr.mxu0 0.0
        %8159 = vmatpush1.msra.mxu0 0.0
        %8160 = vmatprep.subr.mxu0 0.0
        %8161 = vmatpush1.msra.mxu0 0.0
        %8162 = vmatprep.subr.mxu0 0.0
        %8163 = vmatpush1.msra.mxu0 0.0
        %8164 = vmatprep.subr.mxu0 0.0
        %8165 = vmatpush1.msra.mxu0 0.0
        %8166 = vmatprep.subr.mxu0 0.0
        %8167 = vmatpush1.msra.mxu0 0.0
        %8168 = vmatprep.subr.mxu0 0.0
        %8169 = vmatpush1.msra.mxu0 0.0
        %8170 = vmatprep.subr.mxu0 0.0
        %8171 = vmatpush1.msra.mxu0 0.0
        %8172 = vmatprep.subr.mxu0 0.0
        %8173 = vmatpush1.msra.mxu0 0.0
        %8174 = vmatprep.subr.mxu0 0.0
        %8175 = vmatpush1.msra.mxu0 0.0
        %8176 = vmatprep.subr.mxu0 0.0
        %8177 = vmatpush1.msra.mxu0 0.0
        %8178 = vmatprep.subr.mxu0 0.0
        %8179 = vmatpush1.msra.mxu0 0.0
        %8180 = vmatprep.subr.mxu0 0.0
        %8181 = vmatpush1.msra.mxu0 0.0
        %8182 = vmatprep.mubr.f32.mxu0 0.0
        %8183 = vmatmul.mubr.f32.gmra.mrb[0].mxu0 %v8020
        %v8184 = vpop.f32.mrb[0].mxu0
        %v8185 = vadd.f32 %v8016, %v8184
        %v8186 = vpop.f32.mrb[0].mxu0
        %8187 = vmatprep.mubr.f32.mxu0 0.0
        %8188 = vmatmul.mubr.f32.gmra.mrb[0].mxu0 %v8023
        %v8189 = vpop.f32.mrb[0].mxu0
        %v8190 = vadd.f32 %v8016, %v8189
        %v8191 = vpop.f32.mrb[0].mxu0
        %8192 = vmatprep.mubr.f32.mxu0 0.0
        %8193 = vmatmul.mubr.f32.gmra.mrb[0].mxu0 %v8026
        %v8194 = vpop.f32.mrb[0].mxu0
        %v8195 = vadd.f32 %v8016, %v8194
        %v8196 = vpop.f32.mrb[0].mxu0
        %8197 = vmatprep.mubr.f32.mxu0 0.0
        %8198 = vmatmul.mubr.f32.gmra.mrb[0].mxu0 %v8029
        %v8199 = vpop.f32.mrb[0].mxu0
        %v8200 = vadd.f32 %v8016, %v8199
        %v8201 = vpop.f32.mrb[0].mxu0
        %8202 = vmatprep.mubr.f32.mxu0 0.0
        %8203 = vmatmul.mubr.f32.gmra.mrb[0].mxu0 %v8032
        %v8204 = vpop.f32.mrb[0].mxu0
        %v8205 = vadd.f32 %v8016, %v8204
        %v8206 = vpop.f32.mrb[0].mxu0
        %8207 = vmatprep.mubr.f32.mxu0 0.0
        %8208 = vmatmul.mubr.f32.gmra.mrb[0].mxu0 %v8035
        %v8209 = vpop.f32.mrb[0].mxu0
        %v8210 = vadd.f32 %v8016, %v8209
        %v8211 = vpop.f32.mrb[0].mxu0
        %8212 = vmatprep.mubr.f32.mxu0 0.0
        %8213 = vmatmul.mubr.f32.gmra.mrb[0].mxu0 %v8038
        %v8214 = vpop.f32.mrb[0].mxu0
        %v8215 = vadd.f32 %v8016, %v8214
        %v8216 = vpop.f32.mrb[0].mxu0
        %8217 = vmatprep.mubr.f32.mxu0 0.0
        %8218 = vmatmul.mubr.f32.gmra.mrb[0].mxu0 %v8041
        %v8219 = vpop.f32.mrb[0].mxu0
        %v8220 = vadd.f32 %v8016, %v8219
        %v8221 = vpop.f32.mrb[0].mxu0
        %8222 = vmatprep.mubr.f32.mxu0 0.0
        %8223 = vmatmul.mubr.f32.gmra.mrb[0].mxu0 %v8044
        %v8224 = vpop.f32.mrb[0].mxu0
        %v8225 = vadd.f32 %v8016, %v8224
        %v8226 = vpop.f32.mrb[0].mxu0
        %8227 = vmatprep.mubr.f32.mxu0 0.0
        %8228 = vmatmul.mubr.f32.gmra.mrb[0].mxu0 %v8047
        %v8229 = vpop.f32.mrb[0].mxu0
        %v8230 = vadd.f32 %v8016, %v8229
        %v8231 = vpop.f32.mrb[0].mxu0
        %8232 = vmatprep.mubr.f32.mxu0 0.0
        %8233 = vmatmul.mubr.f32.gmra.mrb[0].mxu0 %v8050
        %v8234 = vpop.f32.mrb[0].mxu0
        %v8235 = vadd.f32 %v8016, %v8234
        %v8236 = vpop.f32.mrb[0].mxu0
        %8237 = vmatprep.mubr.f32.mxu0 0.0
        %8238 = vmatmul.mubr.f32.gmra.mrb[0].mxu0 %v8053
        %v8239 = vpop.f32.mrb[0].mxu0
        %v8240 = vadd.f32 %v8016, %v8239
        %v8241 = vpop.f32.mrb[0].mxu0
        %8242 = vmatprep.mubr.f32.mxu0 0.0
        %8243 = vmatmul.mubr.f32.gmra.mrb[0].mxu0 %v8056
        %v8244 = vpop.f32.mrb[0].mxu0
        %v8245 = vadd.f32 %v8016, %v8244
        %v8246 = vpop.f32.mrb[0].mxu0
        %8247 = vmatprep.mubr.f32.mxu0 0.0
        %8248 = vmatmul.mubr.f32.gmra.mrb[0].mxu0 %v8059
        %v8249 = vpop.f32.mrb[0].mxu0
        %v8250 = vadd.f32 %v8016, %v8249
        %v8251 = vpop.f32.mrb[0].mxu0
        %8252 = vmatprep.mubr.f32.mxu0 0.0
        %8253 = vmatmul.mubr.f32.gmra.mrb[0].mxu0 %v8062
        %v8254 = vpop.f32.mrb[0].mxu0
        %v8255 = vadd.f32 %v8016, %v8254
        %v8256 = vpop.f32.mrb[0].mxu0
        %8257 = vmatprep.mubr.f32.mxu0 0.0
        %8258 = vmatmul.mubr.f32.gmra.mrb[0].mxu0 %v8065
        %v8259 = vpop.f32.mrb[0].mxu0
        %v8260 = vadd.f32 %v8016, %v8259
        %v8261 = vpop.f32.mrb[0].mxu0
        %8262 = vmatprep.mubr.f32.mxu0 0.0
        %8263 = vmatmul.mubr.f32.gmra.mrb[0].mxu0 %v8068
        %v8264 = vpop.f32.mrb[0].mxu0
        %v8265 = vadd.f32 %v8016, %v8264
        %v8266 = vpop.f32.mrb[0].mxu0
        %8267 = vmatprep.mubr.f32.mxu0 0.0
        %8268 = vmatmul.mubr.f32.gmra.mrb[0].mxu0 %v8071
        %v8269 = vpop.f32.mrb[0].mxu0
        %v8270 = vadd.f32 %v8016, %v8269
        %v8271 = vpop.f32.mrb[0].mxu0
        %8272 = vmatprep.mubr.f32.mxu0 0.0
        %8273 = vmatmul.mubr.f32.gmra.mrb[0].mxu0 %v8074
        %v8274 = vpop.f32.mrb[0].mxu0
        %v8275 = vadd.f32 %v8016, %v8274
        %v8276 = vpop.f32.mrb[0].mxu0
        %8277 = vmatprep.mubr.f32.mxu0 0.0
        %8278 = vmatmul.mubr.f32.gmra.mrb[0].mxu0 %v8077
        %v8279 = vpop.f32.mrb[0].mxu0
        %v8280 = vadd.f32 %v8016, %v8279
        %v8281 = vpop.f32.mrb[0].mxu0
        %8282 = vmatprep.mubr.f32.mxu0 0.0
        %8283 = vmatmul.mubr.f32.gmra.mrb[0].mxu0 %v8080
        %v8284 = vpop.f32.mrb[0].mxu0
        %v8285 = vadd.f32 %v8016, %v8284
        %v8286 = vpop.f32.mrb[0].mxu0
        %8287 = vmatprep.mubr.f32.mxu0 0.0
        %8288 = vmatmul.mubr.f32.gmra.mrb[0].mxu0 %v8083
        %v8289 = vpop.f32.mrb[0].mxu0
        %v8290 = vadd.f32 %v8016, %v8289
        %v8291 = vpop.f32.mrb[0].mxu0
        %8292 = vmatprep.mubr.f32.mxu0 0.0
        %8293 = vmatmul.mubr.f32.gmra.mrb[0].mxu0 %v8086
        %v8294 = vpop.f32.mrb[0].mxu0
        %v8295 = vadd.f32 %v8016, %v8294
        %v8296 = vpop.f32.mrb[0].mxu0
        %8297 = vmatprep.mubr.f32.mxu0 0.0
        %8298 = vmatmul.mubr.f32.gmra.mrb[0].mxu0 %v8089
        %v8299 = vpop.f32.mrb[0].mxu0
        %v8300 = vadd.f32 %v8016, %v8299
        %v8301 = vpop.f32.mrb[0].mxu0
        %8302 = vmatprep.mubr.f32.mxu0 0.0
        %8303 = vmatmul.mubr.f32.gmra.mrb[0].mxu0 %v8092
        %v8304 = vpop.f32.mrb[0].mxu0
        %v8305 = vadd.f32 %v8016, %v8304
        %v8306 = vpop.f32.mrb[0].mxu0
        %8307 = vmatprep.mubr.f32.mxu0 0.0
        %8308 = vmatmul.mubr.f32.gmra.mrb[0].mxu0 %v8095
        %v8309 = vpop.f32.mrb[0].mxu0
        %v8310 = vadd.f32 %v8016, %v8309
        %v8311 = vpop.f32.mrb[0].mxu0
        %8312 = vmatprep.mubr.f32.mxu0 0.0
        %8313 = vmatmul.mubr.f32.gmra.mrb[0].mxu0 %v8098
        %v8314 = vpop.f32.mrb[0].mxu0
        %v8315 = vadd.f32 %v8016, %v8314
        %v8316 = vpop.f32.mrb[0].mxu0
        %8317 = vmatprep.mubr.f32.mxu0 0.0
        %8318 = vmatmul.mubr.f32.gmra.mrb[0].mxu0 %v8101
        %v8319 = vpop.f32.mrb[0].mxu0
        %v8320 = vadd.f32 %v8016, %v8319
        %v8321 = vpop.f32.mrb[0].mxu0
        %8322 = vmatprep.mubr.f32.mxu0 0.0
        %8323 = vmatmul.mubr.f32.gmra.mrb[0].mxu0 %v8104
        %v8324 = vpop.f32.mrb[0].mxu0
        %v8325 = vadd.f32 %v8016, %v8324
        %v8326 = vpop.f32.mrb[0].mxu0
        %8327 = vmatprep.mubr.f32.mxu0 0.0
        %8328 = vmatmul.mubr.f32.gmra.mrb[0].mxu0 %v8107
        %v8329 = vpop.f32.mrb[0].mxu0
        %v8330 = vadd.f32 %v8016, %v8329
        %v8331 = vpop.f32.mrb[0].mxu0
        %8332 = vmatprep.mubr.f32.mxu0 0.0
        %8333 = vmatmul.mubr.f32.gmra.mrb[0].mxu0 %v8110
        %v8334 = vpop.f32.mrb[0].mxu0
        %v8335 = vadd.f32 %v8016, %v8334
        %v8336 = vpop.f32.mrb[0].mxu0
        %8337 = vmatprep.mubr.f32.mxu0 0.0
        %8338 = vmatmul.mubr.f32.gmra.mrb[0].mxu0 %v8113
        %v8339 = vpop.f32.mrb[0].mxu0
        %v8340 = vadd.f32 %v8016, %v8339
        %v8341 = vpop.f32.mrb[0].mxu0
        %8342 = vdwg.mxu0
        %v8343 = vmax.f32 %v8185, 0.0
        %v8344 = vmax.f32 %v8190, 0.0
        %v8345 = vmax.f32 %v8195, 0.0
        %v8346 = vmax.f32 %v8200, 0.0
        %v8347 = vmax.f32 %v8205, 0.0
        %v8348 = vmax.f32 %v8210, 0.0
        %v8349 = vmax.f32 %v8215, 0.0
        %v8350 = vmax.f32 %v8220, 0.0
        %v8351 = vmax.f32 %v8225, 0.0
        %v8352 = vmax.f32 %v8230, 0.0
        %v8353 = vmax.f32 %v8235, 0.0
        %v8354 = vmax.f32 %v8240, 0.0
        %v8355 = vmax.f32 %v8245, 0.0
        %v8356 = vmax.f32 %v8250, 0.0
        %v8357 = vmax.f32 %v8255, 0.0
        %v8358 = vmax.f32 %v8260, 0.0
        %v8359 = vmax.f32 %v8265, 0.0
        %v8360 = vmax.f32 %v8270, 0.0
        %v8361 = vmax.f32 %v8275, 0.0
        %v8362 = vmax.f32 %v8280, 0.0
        %v8363 = vmax.f32 %v8285, 0.0
        %v8364 = vmax.f32 %v8290, 0.0
        %v8365 = vmax.f32 %v8295, 0.0
        %v8366 = vmax.f32 %v8300, 0.0
        %v8367 = vmax.f32 %v8305, 0.0
        %v8368 = vmax.f32 %v8310, 0.0
        %v8369 = vmax.f32 %v8315, 0.0
        %v8370 = vmax.f32 %v8320, 0.0
        %v8371 = vmax.f32 %v8325, 0.0
        %v8372 = vmax.f32 %v8330, 0.0
        %v8373 = vmax.f32 %v8335, 0.0
        %v8374 = vmax.f32 %v8340, 0.0
        %8407 = vrot.lane.b32.xlu0 %v8343, 8
        %v8408 = vpop.permute.xlu0 %8407
        %8409 = vrot.lane.b32.xlu0 %v8344, 8
        %v8410 = vpop.permute.xlu0 %8409
        %8411 = vrot.lane.b32.xlu0 %v8345, 8
        %v8412 = vpop.permute.xlu0 %8411
        %8413 = vrot.lane.b32.xlu0 %v8346, 8
        %v8414 = vpop.permute.xlu0 %8413
        %8415 = vrot.lane.b32.xlu0 %v8347, 8
        %v8416 = vpop.permute.xlu0 %8415
        %8417 = vrot.lane.b32.xlu0 %v8348, 8
        %v8418 = vpop.permute.xlu0 %8417
        %8419 = vrot.lane.b32.xlu0 %v8349, 8
        %v8420 = vpop.permute.xlu0 %8419
        %8421 = vrot.lane.b32.xlu0 %v8350, 8
        %v8422 = vpop.permute.xlu0 %8421
        %8423 = vrot.lane.b32.xlu0 %v8351, 8
        %v8424 = vpop.permute.xlu0 %8423
        %8425 = vrot.lane.b32.xlu0 %v8352, 8
        %v8426 = vpop.permute.xlu0 %8425
        %8427 = vrot.lane.b32.xlu0 %v8353, 8
        %v8428 = vpop.permute.xlu0 %8427
        %8429 = vrot.lane.b32.xlu0 %v8354, 8
        %v8430 = vpop.permute.xlu0 %8429
        %8431 = vrot.lane.b32.xlu0 %v8355, 8
        %v8432 = vpop.permute.xlu0 %8431
        %8433 = vrot.lane.b32.xlu0 %v8356, 8
        %v8434 = vpop.permute.xlu0 %8433
        %8435 = vrot.lane.b32.xlu0 %v8357, 8
        %v8436 = vpop.permute.xlu0 %8435
        %8437 = vrot.lane.b32.xlu0 %v8358, 8
        %v8438 = vpop.permute.xlu0 %8437
        %8439 = vrot.lane.b32.xlu0 %v8359, 8
        %v8440 = vpop.permute.xlu0 %8439
        %8441 = vrot.lane.b32.xlu0 %v8360, 8
        %v8442 = vpop.permute.xlu0 %8441
        %8443 = vrot.lane.b32.xlu0 %v8361, 8
        %v8444 = vpop.permute.xlu0 %8443
        %8445 = vrot.lane.b32.xlu0 %v8362, 8
        %v8446 = vpop.permute.xlu0 %8445
        %8447 = vrot.lane.b32.xlu0 %v8363, 8
        %v8448 = vpop.permute.xlu0 %8447
        %8449 = vrot.lane.b32.xlu0 %v8364, 8
        %v8450 = vpop.permute.xlu0 %8449
        %8451 = vrot.lane.b32.xlu0 %v8365, 8
        %v8452 = vpop.permute.xlu0 %8451
        %8453 = vrot.lane.b32.xlu0 %v8366, 8
        %v8454 = vpop.permute.xlu0 %8453
        %8455 = vrot.lane.b32.xlu0 %v8367, 8
        %v8456 = vpop.permute.xlu0 %8455
        %8457 = vrot.lane.b32.xlu0 %v8368, 8
        %v8458 = vpop.permute.xlu0 %8457
        %8459 = vrot.lane.b32.xlu0 %v8369, 8
        %v8460 = vpop.permute.xlu0 %8459
        %8461 = vrot.lane.b32.xlu0 %v8370, 8
        %v8462 = vpop.permute.xlu0 %8461
        %8463 = vrot.lane.b32.xlu0 %v8371, 8
        %v8464 = vpop.permute.xlu0 %8463
        %8465 = vrot.lane.b32.xlu0 %v8372, 8
        %v8466 = vpop.permute.xlu0 %8465
        %8467 = vrot.lane.b32.xlu0 %v8373, 8
        %v8468 = vpop.permute.xlu0 %8467
        %8469 = vrot.lane.b32.xlu0 %v8374, 8
        %v8470 = vpop.permute.xlu0 %8469
        %vm8503 = vcmask 97344
        %8504 = vst.msk [vmem:[%s271] sm:$0xff] %vm8503, %v8408
        %8505 = vst.msk [vmem:[%s271 + $0x8] sm:$0xff] %vm8503, %v8410
        %8506 = vst.msk [vmem:[%s271 + $0x10] sm:$0xff] %vm8503, %v8412
        %8507 = vst.msk [vmem:[%s271 + $0x18] sm:$0xff] %vm8503, %v8414
        %8508 = vst.msk [vmem:[%s271 + $0x20] sm:$0xff] %vm8503, %v8416
        %8509 = vst.msk [vmem:[%s271 + $0x28] sm:$0xff] %vm8503, %v8418
        %8510 = vst.msk [vmem:[%s271 + $0x30] sm:$0xff] %vm8503, %v8420
        %8511 = vst.msk [vmem:[%s271 + $0x38] sm:$0xff] %vm8503, %v8422
        %8512 = vst.msk [vmem:[%s271 + $0x40] sm:$0xff] %vm8503, %v8424
        %8513 = vst.msk [vmem:[%s271 + $0x48] sm:$0xff] %vm8503, %v8426
        %8514 = vst.msk [vmem:[%s271 + $0x50] sm:$0xff] %vm8503, %v8428
        %8515 = vst.msk [vmem:[%s271 + $0x58] sm:$0xff] %vm8503, %v8430
        %8516 = vst.msk [vmem:[%s271 + $0x60] sm:$0xff] %vm8503, %v8432
        %8517 = vst.msk [vmem:[%s271 + $0x68] sm:$0xff] %vm8503, %v8434
        %8518 = vst.msk [vmem:[%s271 + $0x70] sm:$0xff] %vm8503, %v8436
        %8519 = vst.msk [vmem:[%s271 + $0x78] sm:$0xff] %vm8503, %v8438
        %8520 = vst.msk [vmem:[%s271 + $0x80] sm:$0xff] %vm8503, %v8440
        %8521 = vst.msk [vmem:[%s271 + $0x88] sm:$0xff] %vm8503, %v8442
        %8522 = vst.msk [vmem:[%s271 + $0x90] sm:$0xff] %vm8503, %v8444
        %8523 = vst.msk [vmem:[%s271 + $0x98] sm:$0xff] %vm8503, %v8446
        %8524 = vst.msk [vmem:[%s271 + $0xa0] sm:$0xff] %vm8503, %v8448
        %8525 = vst.msk [vmem:[%s271 + $0xa8] sm:$0xff] %vm8503, %v8450
        %8526 = vst.msk [vmem:[%s271 + $0xb0] sm:$0xff] %vm8503, %v8452
        %8527 = vst.msk [vmem:[%s271 + $0xb8] sm:$0xff] %vm8503, %v8454
        %8528 = vst.msk [vmem:[%s271 + $0xc0] sm:$0xff] %vm8503, %v8456
        %8529 = vst.msk [vmem:[%s271 + $0xc8] sm:$0xff] %vm8503, %v8458
        %8530 = vst.msk [vmem:[%s271 + $0xd0] sm:$0xff] %vm8503, %v8460
        %8531 = vst.msk [vmem:[%s271 + $0xd8] sm:$0xff] %vm8503, %v8462
        %8532 = vst.msk [vmem:[%s271 + $0xe0] sm:$0xff] %vm8503, %v8464
        %8533 = vst.msk [vmem:[%s271 + $0xe8] sm:$0xff] %vm8503, %v8466
        %8534 = vst.msk [vmem:[%s271 + $0xf0] sm:$0xff] %vm8503, %v8468
        %8535 = vst.msk [vmem:[%s271 + $0xf8] sm:$0xff] %vm8503, %v8470
        %8536 = vst.msk [vmem:[#allocation6] sm:$0xff] %vm317, -inf
        %8537 = vst.msk [vmem:[#allocation6 + $0x8] sm:$0xff] %vm317, -inf
        %vm8538 = vcmask 58368
        %8539 = vst.msk [vmem:[#allocation6 + $0x10] sm:$0x3] %vm8538, -inf
        %8540 = vst.msk [vmem:[#allocation6 + $0x18] sm:$0xff] %vm317, -inf
        %8541 = vst.msk [vmem:[#allocation6 + $0x20] sm:$0xff] %vm317, -inf
        %8542 = vst.msk [vmem:[#allocation6 + $0x28] sm:$0x3] %vm8538, -inf
        %8543 = vst.msk [vmem:[#allocation6 + $0x30] sm:$0xff] %vm317, -inf
        %8544 = vst.msk [vmem:[#allocation6 + $0x38] sm:$0xff] %vm317, -inf
        %8545 = vst.msk [vmem:[#allocation6 + $0x40] sm:$0x3] %vm8538, -inf
        %8546 = vst.msk [vmem:[#allocation6 + $0x48] sm:$0xff] %vm317, -inf
        %8547 = vst.msk [vmem:[#allocation6 + $0x50] sm:$0xff] %vm317, -inf
        %8548 = vst.msk [vmem:[#allocation6 + $0x58] sm:$0x3] %vm8538, -inf
        %8549 = vst.msk [vmem:[#allocation6 + $0x60] sm:$0xff] %vm317, -inf
        %8550 = vst.msk [vmem:[#allocation6 + $0x68] sm:$0xff] %vm317, -inf
        %8551 = vst.msk [vmem:[#allocation6 + $0x70] sm:$0x3] %vm8538, -inf
        %8552 = vst.msk [vmem:[#allocation6 + $0x78] sm:$0xff] %vm317, -inf
        %8553 = vst.msk [vmem:[#allocation6 + $0x80] sm:$0xff] %vm317, -inf
        %8554 = vst.msk [vmem:[#allocation6 + $0x88] sm:$0x3] %vm8538, -inf
        %8555 = vst.msk [vmem:[#allocation6 + $0x90] sm:$0xff] %vm317, -inf
        %8556 = vst.msk [vmem:[#allocation6 + $0x98] sm:$0xff] %vm317, -inf
        %8557 = vst.msk [vmem:[#allocation6 + $0xa0] sm:$0x3] %vm8538, -inf
        %8558 = vst.msk [vmem:[#allocation6 + $0xa8] sm:$0xff] %vm317, -inf
        %8559 = vst.msk [vmem:[#allocation6 + $0xb0] sm:$0xff] %vm317, -inf
        %8560 = vst.msk [vmem:[#allocation6 + $0xb8] sm:$0x3] %vm8538, -inf
        %8561 = vst.msk [vmem:[#allocation6 + $0xc0] sm:$0xff] %vm317, -inf
        %8562 = vst.msk [vmem:[#allocation6 + $0xc8] sm:$0xff] %vm317, -inf
        %8563 = vst.msk [vmem:[#allocation6 + $0xd0] sm:$0x3] %vm8538, -inf
        %8564 = vst.msk [vmem:[#allocation6 + $0xd8] sm:$0xff] %vm317, -inf
        %8565 = vst.msk [vmem:[#allocation6 + $0xe0] sm:$0xff] %vm317, -inf
        %8566 = vst.msk [vmem:[#allocation6 + $0xe8] sm:$0x3] %vm8538, -inf
        %8567 = vst.msk [vmem:[#allocation6 + $0xf0] sm:$0xff] %vm317, -inf
        %8568 = vst.msk [vmem:[#allocation6 + $0xf8] sm:$0xff] %vm317, -inf
        %8569 = vst.msk [vmem:[#allocation6 + $0x100] sm:$0x3] %vm8538, -inf
        %8570 = vst.msk [vmem:[#allocation6 + $0x108] sm:$0xff] %vm317, -inf
        %8571 = vst.msk [vmem:[#allocation6 + $0x110] sm:$0xff] %vm317, -inf
        %8572 = vst.msk [vmem:[#allocation6 + $0x118] sm:$0x3] %vm8538, -inf
        %8573 = vst.msk [vmem:[#allocation6 + $0x120] sm:$0xff] %vm317, -inf
        %8574 = vst.msk [vmem:[#allocation6 + $0x128] sm:$0xff] %vm317, -inf
        %8575 = vst.msk [vmem:[#allocation6 + $0x130] sm:$0x3] %vm8538, -inf
        %8576 = vst.msk [vmem:[#allocation6 + $0x138] sm:$0xff] %vm317, -inf
        %8577 = vst.msk [vmem:[#allocation6 + $0x140] sm:$0xff] %vm317, -inf
        %8578 = vst.msk [vmem:[#allocation6 + $0x148] sm:$0x3] %vm8538, -inf
        %8579 = vst.msk [vmem:[#allocation6 + $0x150] sm:$0xff] %vm317, -inf
        %8580 = vst.msk [vmem:[#allocation6 + $0x158] sm:$0xff] %vm317, -inf
        %8581 = vst.msk [vmem:[#allocation6 + $0x160] sm:$0x3] %vm8538, -inf
        %8582 = vst.msk [vmem:[#allocation6 + $0x168] sm:$0xff] %vm317, -inf
        %8583 = vst.msk [vmem:[#allocation6 + $0x170] sm:$0xff] %vm317, -inf
        %8584 = vst.msk [vmem:[#allocation6 + $0x178] sm:$0x3] %vm8538, -inf
        %8585 = vst.msk [vmem:[#allocation6 + $0x180] sm:$0xff] %vm317, -inf
        %8586 = vst.msk [vmem:[#allocation6 + $0x188] sm:$0xff] %vm317, -inf
        %8587 = vst.msk [vmem:[#allocation6 + $0x190] sm:$0x3] %vm8538, -inf
        %8588 = vst.msk [vmem:[#allocation6 + $0x198] sm:$0xff] %vm317, -inf
        %8589 = vst.msk [vmem:[#allocation6 + $0x1a0] sm:$0xff] %vm317, -inf
        %8590 = vst.msk [vmem:[#allocation6 + $0x1a8] sm:$0x3] %vm8538, -inf
        %s8591 = scalar_lea.vmem [#allocation6], 24
        %8592 = vst.msk [vmem:[%s8591 + $0x1] sm:$0xff] %vm317, %v277
        %8593 = vst.msk [vmem:[%s8591 + $0x9] sm:$0xff] %vm317, %v278
        %8594 = vst.msk [vmem:[%s8591 + $0x19] sm:$0xff] %vm317, %v279
        %8595 = vst.msk [vmem:[%s8591 + $0x21] sm:$0xff] %vm317, %v280
        %8596 = vst.msk [vmem:[%s8591 + $0x31] sm:$0xff] %vm317, %v281
        %8597 = vst.msk [vmem:[%s8591 + $0x39] sm:$0xff] %vm317, %v282
        %8598 = vst.msk [vmem:[%s8591 + $0x49] sm:$0xff] %vm317, %v283
        %8599 = vst.msk [vmem:[%s8591 + $0x51] sm:$0xff] %vm317, %v284
        %8600 = vst.msk [vmem:[%s8591 + $0x61] sm:$0xff] %vm317, %v285
        %8601 = vst.msk [vmem:[%s8591 + $0x69] sm:$0xff] %vm317, %v286
        %8602 = vst.msk [vmem:[%s8591 + $0x79] sm:$0xff] %vm317, %v287
        %8603 = vst.msk [vmem:[%s8591 + $0x81] sm:$0xff] %vm317, %v288
        %8604 = vst.msk [vmem:[%s8591 + $0x91] sm:$0xff] %vm317, %v289
        %8605 = vst.msk [vmem:[%s8591 + $0x99] sm:$0xff] %vm317, %v290
        %8606 = vst.msk [vmem:[%s8591 + $0xa9] sm:$0xff] %vm317, %v291
        %8607 = vst.msk [vmem:[%s8591 + $0xb1] sm:$0xff] %vm317, %v292
        %8608 = vst.msk [vmem:[%s8591 + $0xc1] sm:$0xff] %vm317, %v293
        %8609 = vst.msk [vmem:[%s8591 + $0xc9] sm:$0xff] %vm317, %v294
        %8610 = vst.msk [vmem:[%s8591 + $0xd9] sm:$0xff] %vm317, %v295
        %8611 = vst.msk [vmem:[%s8591 + $0xe1] sm:$0xff] %vm317, %v296
        %8612 = vst.msk [vmem:[%s8591 + $0xf1] sm:$0xff] %vm317, %v297
        %8613 = vst.msk [vmem:[%s8591 + $0xf9] sm:$0xff] %vm317, %v298
        %8614 = vst.msk [vmem:[%s8591 + $0x109] sm:$0xff] %vm317, %v299
        %8615 = vst.msk [vmem:[%s8591 + $0x111] sm:$0xff] %vm317, %v300
        %8616 = vst.msk [vmem:[%s8591 + $0x121] sm:$0xff] %vm317, %v301
        %8617 = vst.msk [vmem:[%s8591 + $0x129] sm:$0xff] %vm317, %v302
        %8618 = vst.msk [vmem:[%s8591 + $0x139] sm:$0xff] %vm317, %v303
        %8619 = vst.msk [vmem:[%s8591 + $0x141] sm:$0xff] %vm317, %v304
        %8620 = vst.msk [vmem:[%s8591 + $0x151] sm:$0xff] %vm317, %v305
        %8621 = vst.msk [vmem:[%s8591 + $0x159] sm:$0xff] %vm317, %v306
        %8622 = vst.msk [vmem:[%s8591 + $0x169] sm:$0xff] %vm317, %v307
        %8623 = vst.msk [vmem:[%s8591 + $0x171] sm:$0xff] %vm317, %v308
        %v8624 = vld [vmem:[#allocation6] sm:$0xff]
        %v8625 = vld [vmem:[#allocation6 + $0x8] sm:$0xff]
        %v8626 = vld [vmem:[#allocation6 + $0x18] sm:$0xff]
        %v8627 = vld [vmem:[#allocation6 + $0x20] sm:$0xff]
        %v8628 = vld [vmem:[#allocation6 + $0x30] sm:$0xff]
        %v8629 = vld [vmem:[#allocation6 + $0x38] sm:$0xff]
        %v8630 = vld [vmem:[#allocation6 + $0x48] sm:$0xff]
        %v8631 = vld [vmem:[#allocation6 + $0x50] sm:$0xff]
        %v8632 = vld [vmem:[#allocation6 + $0x60] sm:$0xff]
        %v8633 = vld [vmem:[#allocation6 + $0x68] sm:$0xff]
        %v8634 = vld [vmem:[#allocation6 + $0x78] sm:$0xff]
        %v8635 = vld [vmem:[#allocation6 + $0x80] sm:$0xff]
        %v8636 = vld [vmem:[#allocation6 + $0x90] sm:$0xff]
        %v8637 = vld [vmem:[#allocation6 + $0x98] sm:$0xff]
        %v8638 = vld [vmem:[#allocation6 + $0xa8] sm:$0xff]
        %v8639 = vld [vmem:[#allocation6 + $0xb0] sm:$0xff]
        %v8640 = vld [vmem:[#allocation6 + $0xc0] sm:$0xff]
        %v8641 = vld [vmem:[#allocation6 + $0xc8] sm:$0xff]
        %v8642 = vld [vmem:[#allocation6 + $0xd8] sm:$0xff]
        %v8643 = vld [vmem:[#allocation6 + $0xe0] sm:$0xff]
        %v8644 = vld [vmem:[#allocation6 + $0xf0] sm:$0xff]
        %v8645 = vld [vmem:[#allocation6 + $0xf8] sm:$0xff]
        %v8646 = vld [vmem:[#allocation6 + $0x108] sm:$0xff]
        %v8647 = vld [vmem:[#allocation6 + $0x110] sm:$0xff]
        %v8648 = vld [vmem:[#allocation6 + $0x120] sm:$0xff]
        %v8649 = vld [vmem:[#allocation6 + $0x128] sm:$0xff]
        %v8650 = vld [vmem:[#allocation6 + $0x138] sm:$0xff]
        %v8651 = vld [vmem:[#allocation6 + $0x140] sm:$0xff]
        %v8652 = vld [vmem:[#allocation6 + $0x150] sm:$0xff]
        %v8653 = vld [vmem:[#allocation6 + $0x158] sm:$0xff]
        %v8654 = vld [vmem:[#allocation6 + $0x168] sm:$0xff]
        %v8655 = vld [vmem:[#allocation6 + $0x170] sm:$0xff]
        %v8656 = vmax.f32 %v277, %v8624
        %v8657 = vmax.f32 %v278, %v8625
        %v8658 = vmax.f32 %v279, %v8626
        %v8659 = vmax.f32 %v280, %v8627
        %v8660 = vmax.f32 %v281, %v8628
        %v8661 = vmax.f32 %v282, %v8629
        %v8662 = vmax.f32 %v283, %v8630
        %v8663 = vmax.f32 %v284, %v8631
        %v8664 = vmax.f32 %v285, %v8632
        %v8665 = vmax.f32 %v286, %v8633
        %v8666 = vmax.f32 %v287, %v8634
        %v8667 = vmax.f32 %v288, %v8635
        %v8668 = vmax.f32 %v289, %v8636
        %v8669 = vmax.f32 %v290, %v8637
        %v8670 = vmax.f32 %v291, %v8638
        %v8671 = vmax.f32 %v292, %v8639
        %v8672 = vmax.f32 %v293, %v8640
        %v8673 = vmax.f32 %v294, %v8641
        %v8674 = vmax.f32 %v295, %v8642
        %v8675 = vmax.f32 %v296, %v8643
        %v8676 = vmax.f32 %v297, %v8644
        %v8677 = vmax.f32 %v298, %v8645
        %v8678 = vmax.f32 %v299, %v8646
        %v8679 = vmax.f32 %v300, %v8647
        %v8680 = vmax.f32 %v301, %v8648
        %v8681 = vmax.f32 %v302, %v8649
        %v8682 = vmax.f32 %v303, %v8650
        %v8683 = vmax.f32 %v304, %v8651
        %v8684 = vmax.f32 %v305, %v8652
        %v8685 = vmax.f32 %v306, %v8653
        %v8686 = vmax.f32 %v307, %v8654
        %v8687 = vmax.f32 %v308, %v8655
        %v8688 = vld [vmem:[#allocation6 + $0x1] sm:$0xff]
        %v8689 = vld [vmem:[#allocation6 + $0x9] sm:$0xff]
        %v8690 = vld [vmem:[#allocation6 + $0x19] sm:$0xff]
        %v8691 = vld [vmem:[#allocation6 + $0x21] sm:$0xff]
        %v8692 = vld [vmem:[#allocation6 + $0x31] sm:$0xff]
        %v8693 = vld [vmem:[#allocation6 + $0x39] sm:$0xff]
        %v8694 = vld [vmem:[#allocation6 + $0x49] sm:$0xff]
        %v8695 = vld [vmem:[#allocation6 + $0x51] sm:$0xff]
        %v8696 = vld [vmem:[#allocation6 + $0x61] sm:$0xff]
        %v8697 = vld [vmem:[#allocation6 + $0x69] sm:$0xff]
        %v8698 = vld [vmem:[#allocation6 + $0x79] sm:$0xff]
        %v8699 = vld [vmem:[#allocation6 + $0x81] sm:$0xff]
        %v8700 = vld [vmem:[#allocation6 + $0x91] sm:$0xff]
        %v8701 = vld [vmem:[#allocation6 + $0x99] sm:$0xff]
        %v8702 = vld [vmem:[#allocation6 + $0xa9] sm:$0xff]
        %v8703 = vld [vmem:[#allocation6 + $0xb1] sm:$0xff]
        %v8704 = vld [vmem:[#allocation6 + $0xc1] sm:$0xff]
        %v8705 = vld [vmem:[#allocation6 + $0xc9] sm:$0xff]
        %v8706 = vld [vmem:[#allocation6 + $0xd9] sm:$0xff]
        %v8707 = vld [vmem:[#allocation6 + $0xe1] sm:$0xff]
        %v8708 = vld [vmem:[#allocation6 + $0xf1] sm:$0xff]
        %v8709 = vld [vmem:[#allocation6 + $0xf9] sm:$0xff]
        %v8710 = vld [vmem:[#allocation6 + $0x109] sm:$0xff]
        %v8711 = vld [vmem:[#allocation6 + $0x111] sm:$0xff]
        %v8712 = vld [vmem:[#allocation6 + $0x121] sm:$0xff]
        %v8713 = vld [vmem:[#allocation6 + $0x129] sm:$0xff]
        %v8714 = vld [vmem:[#allocation6 + $0x139] sm:$0xff]
        %v8715 = vld [vmem:[#allocation6 + $0x141] sm:$0xff]
        %v8716 = vld [vmem:[#allocation6 + $0x151] sm:$0xff]
        %v8717 = vld [vmem:[#allocation6 + $0x159] sm:$0xff]
        %v8718 = vld [vmem:[#allocation6 + $0x169] sm:$0xff]
        %v8719 = vld [vmem:[#allocation6 + $0x171] sm:$0xff]
        %v8720 = vmax.f32 %v8656, %v8688
        %v8721 = vmax.f32 %v8657, %v8689
        %v8722 = vmax.f32 %v8658, %v8690
        %v8723 = vmax.f32 %v8659, %v8691
        %v8724 = vmax.f32 %v8660, %v8692
        %v8725 = vmax.f32 %v8661, %v8693
        %v8726 = vmax.f32 %v8662, %v8694
        %v8727 = vmax.f32 %v8663, %v8695
        %v8728 = vmax.f32 %v8664, %v8696
        %v8729 = vmax.f32 %v8665, %v8697
        %v8730 = vmax.f32 %v8666, %v8698
        %v8731 = vmax.f32 %v8667, %v8699
        %v8732 = vmax.f32 %v8668, %v8700
        %v8733 = vmax.f32 %v8669, %v8701
        %v8734 = vmax.f32 %v8670, %v8702
        %v8735 = vmax.f32 %v8671, %v8703
        %v8736 = vmax.f32 %v8672, %v8704
        %v8737 = vmax.f32 %v8673, %v8705
        %v8738 = vmax.f32 %v8674, %v8706
        %v8739 = vmax.f32 %v8675, %v8707
        %v8740 = vmax.f32 %v8676, %v8708
        %v8741 = vmax.f32 %v8677, %v8709
        %v8742 = vmax.f32 %v8678, %v8710
        %v8743 = vmax.f32 %v8679, %v8711
        %v8744 = vmax.f32 %v8680, %v8712
        %v8745 = vmax.f32 %v8681, %v8713
        %v8746 = vmax.f32 %v8682, %v8714
        %v8747 = vmax.f32 %v8683, %v8715
        %v8748 = vmax.f32 %v8684, %v8716
        %v8749 = vmax.f32 %v8685, %v8717
        %v8750 = vmax.f32 %v8686, %v8718
        %v8751 = vmax.f32 %v8687, %v8719
        %v8752 = vld [vmem:[#allocation6 + $0x2] sm:$0xff]
        %v8753 = vld [vmem:[#allocation6 + $0xa] sm:$0xff]
        %v8754 = vld [vmem:[#allocation6 + $0x1a] sm:$0xff]
        %v8755 = vld [vmem:[#allocation6 + $0x22] sm:$0xff]
        %v8756 = vld [vmem:[#allocation6 + $0x32] sm:$0xff]
        %v8757 = vld [vmem:[#allocation6 + $0x3a] sm:$0xff]
        %v8758 = vld [vmem:[#allocation6 + $0x4a] sm:$0xff]
        %v8759 = vld [vmem:[#allocation6 + $0x52] sm:$0xff]
        %v8760 = vld [vmem:[#allocation6 + $0x62] sm:$0xff]
        %v8761 = vld [vmem:[#allocation6 + $0x6a] sm:$0xff]
        %v8762 = vld [vmem:[#allocation6 + $0x7a] sm:$0xff]
        %v8763 = vld [vmem:[#allocation6 + $0x82] sm:$0xff]
        %v8764 = vld [vmem:[#allocation6 + $0x92] sm:$0xff]
        %v8765 = vld [vmem:[#allocation6 + $0x9a] sm:$0xff]
        %v8766 = vld [vmem:[#allocation6 + $0xaa] sm:$0xff]
        %v8767 = vld [vmem:[#allocation6 + $0xb2] sm:$0xff]
        %v8768 = vld [vmem:[#allocation6 + $0xc2] sm:$0xff]
        %v8769 = vld [vmem:[#allocation6 + $0xca] sm:$0xff]
        %v8770 = vld [vmem:[#allocation6 + $0xda] sm:$0xff]
        %v8771 = vld [vmem:[#allocation6 + $0xe2] sm:$0xff]
        %v8772 = vld [vmem:[#allocation6 + $0xf2] sm:$0xff]
        %v8773 = vld [vmem:[#allocation6 + $0xfa] sm:$0xff]
        %v8774 = vld [vmem:[#allocation6 + $0x10a] sm:$0xff]
        %v8775 = vld [vmem:[#allocation6 + $0x112] sm:$0xff]
        %v8776 = vld [vmem:[#allocation6 + $0x122] sm:$0xff]
        %v8777 = vld [vmem:[#allocation6 + $0x12a] sm:$0xff]
        %v8778 = vld [vmem:[#allocation6 + $0x13a] sm:$0xff]
        %v8779 = vld [vmem:[#allocation6 + $0x142] sm:$0xff]
        %v8780 = vld [vmem:[#allocation6 + $0x152] sm:$0xff]
        %v8781 = vld [vmem:[#allocation6 + $0x15a] sm:$0xff]
        %v8782 = vld [vmem:[#allocation6 + $0x16a] sm:$0xff]
        %v8783 = vld [vmem:[#allocation6 + $0x172] sm:$0xff]
        %v8784 = vmax.f32 %v8720, %v8752
        %v8785 = vmax.f32 %v8721, %v8753
        %v8786 = vmax.f32 %v8722, %v8754
        %v8787 = vmax.f32 %v8723, %v8755
        %v8788 = vmax.f32 %v8724, %v8756
        %v8789 = vmax.f32 %v8725, %v8757
        %v8790 = vmax.f32 %v8726, %v8758
        %v8791 = vmax.f32 %v8727, %v8759
        %v8792 = vmax.f32 %v8728, %v8760
        %v8793 = vmax.f32 %v8729, %v8761
        %v8794 = vmax.f32 %v8730, %v8762
        %v8795 = vmax.f32 %v8731, %v8763
        %v8796 = vmax.f32 %v8732, %v8764
        %v8797 = vmax.f32 %v8733, %v8765
        %v8798 = vmax.f32 %v8734, %v8766
        %v8799 = vmax.f32 %v8735, %v8767
        %v8800 = vmax.f32 %v8736, %v8768
        %v8801 = vmax.f32 %v8737, %v8769
        %v8802 = vmax.f32 %v8738, %v8770
        %v8803 = vmax.f32 %v8739, %v8771
        %v8804 = vmax.f32 %v8740, %v8772
        %v8805 = vmax.f32 %v8741, %v8773
        %v8806 = vmax.f32 %v8742, %v8774
        %v8807 = vmax.f32 %v8743, %v8775
        %v8808 = vmax.f32 %v8744, %v8776
        %v8809 = vmax.f32 %v8745, %v8777
        %v8810 = vmax.f32 %v8746, %v8778
        %v8811 = vmax.f32 %v8747, %v8779
        %v8812 = vmax.f32 %v8748, %v8780
        %v8813 = vmax.f32 %v8749, %v8781
        %v8814 = vmax.f32 %v8750, %v8782
        %v8815 = vmax.f32 %v8751, %v8783
        %v8816 = vld [vmem:[%s8591] sm:$0xff]
        %v8817 = vld [vmem:[%s8591 + $0x8] sm:$0xff]
        %v8818 = vld [vmem:[%s8591 + $0x18] sm:$0xff]
        %v8819 = vld [vmem:[%s8591 + $0x20] sm:$0xff]
        %v8820 = vld [vmem:[%s8591 + $0x30] sm:$0xff]
        %v8821 = vld [vmem:[%s8591 + $0x38] sm:$0xff]
        %v8822 = vld [vmem:[%s8591 + $0x48] sm:$0xff]
        %v8823 = vld [vmem:[%s8591 + $0x50] sm:$0xff]
        %v8824 = vld [vmem:[%s8591 + $0x60] sm:$0xff]
        %v8825 = vld [vmem:[%s8591 + $0x68] sm:$0xff]
        %v8826 = vld [vmem:[%s8591 + $0x78] sm:$0xff]
        %v8827 = vld [vmem:[%s8591 + $0x80] sm:$0xff]
        %v8828 = vld [vmem:[%s8591 + $0x90] sm:$0xff]
        %v8829 = vld [vmem:[%s8591 + $0x98] sm:$0xff]
        %v8830 = vld [vmem:[%s8591 + $0xa8] sm:$0xff]
        %v8831 = vld [vmem:[%s8591 + $0xb0] sm:$0xff]
        %v8832 = vld [vmem:[%s8591 + $0xc0] sm:$0xff]
        %v8833 = vld [vmem:[%s8591 + $0xc8] sm:$0xff]
        %v8834 = vld [vmem:[%s8591 + $0xd8] sm:$0xff]
        %v8835 = vld [vmem:[%s8591 + $0xe0] sm:$0xff]
        %v8836 = vld [vmem:[%s8591 + $0xf0] sm:$0xff]
        %v8837 = vld [vmem:[%s8591 + $0xf8] sm:$0xff]
        %v8838 = vld [vmem:[%s8591 + $0x108] sm:$0xff]
        %v8839 = vld [vmem:[%s8591 + $0x110] sm:$0xff]
        %v8840 = vld [vmem:[%s8591 + $0x120] sm:$0xff]
        %v8841 = vld [vmem:[%s8591 + $0x128] sm:$0xff]
        %v8842 = vld [vmem:[%s8591 + $0x138] sm:$0xff]
        %v8843 = vld [vmem:[%s8591 + $0x140] sm:$0xff]
        %v8844 = vld [vmem:[%s8591 + $0x150] sm:$0xff]
        %v8845 = vld [vmem:[%s8591 + $0x158] sm:$0xff]
        %v8846 = vld [vmem:[%s8591 + $0x168] sm:$0xff]
        %v8847 = vld [vmem:[%s8591 + $0x170] sm:$0xff]
        %v8848 = vmax.f32 %v8784, %v8816
        %v8849 = vmax.f32 %v8785, %v8817
        %v8850 = vmax.f32 %v8786, %v8818
        %v8851 = vmax.f32 %v8787, %v8819
        %v8852 = vmax.f32 %v8788, %v8820
        %v8853 = vmax.f32 %v8789, %v8821
        %v8854 = vmax.f32 %v8790, %v8822
        %v8855 = vmax.f32 %v8791, %v8823
        %v8856 = vmax.f32 %v8792, %v8824
        %v8857 = vmax.f32 %v8793, %v8825
        %v8858 = vmax.f32 %v8794, %v8826
        %v8859 = vmax.f32 %v8795, %v8827
        %v8860 = vmax.f32 %v8796, %v8828
        %v8861 = vmax.f32 %v8797, %v8829
        %v8862 = vmax.f32 %v8798, %v8830
        %v8863 = vmax.f32 %v8799, %v8831
        %v8864 = vmax.f32 %v8800, %v8832
        %v8865 = vmax.f32 %v8801, %v8833
        %v8866 = vmax.f32 %v8802, %v8834
        %v8867 = vmax.f32 %v8803, %v8835
        %v8868 = vmax.f32 %v8804, %v8836
        %v8869 = vmax.f32 %v8805, %v8837
        %v8870 = vmax.f32 %v8806, %v8838
        %v8871 = vmax.f32 %v8807, %v8839
        %v8872 = vmax.f32 %v8808, %v8840
        %v8873 = vmax.f32 %v8809, %v8841
        %v8874 = vmax.f32 %v8810, %v8842
        %v8875 = vmax.f32 %v8811, %v8843
        %v8876 = vmax.f32 %v8812, %v8844
        %v8877 = vmax.f32 %v8813, %v8845
        %v8878 = vmax.f32 %v8814, %v8846
        %v8879 = vmax.f32 %v8815, %v8847
        %v8880 = vld [vmem:[%s8591 + $0x2] sm:$0xff]
        %v8881 = vld [vmem:[%s8591 + $0xa] sm:$0xff]
        %v8882 = vld [vmem:[%s8591 + $0x1a] sm:$0xff]
        %v8883 = vld [vmem:[%s8591 + $0x22] sm:$0xff]
        %v8884 = vld [vmem:[%s8591 + $0x32] sm:$0xff]
        %v8885 = vld [vmem:[%s8591 + $0x3a] sm:$0xff]
        %v8886 = vld [vmem:[%s8591 + $0x4a] sm:$0xff]
        %v8887 = vld [vmem:[%s8591 + $0x52] sm:$0xff]
        %v8888 = vld [vmem:[%s8591 + $0x62] sm:$0xff]
        %v8889 = vld [vmem:[%s8591 + $0x6a] sm:$0xff]
        %v8890 = vld [vmem:[%s8591 + $0x7a] sm:$0xff]
        %v8891 = vld [vmem:[%s8591 + $0x82] sm:$0xff]
        %v8892 = vld [vmem:[%s8591 + $0x92] sm:$0xff]
        %v8893 = vld [vmem:[%s8591 + $0x9a] sm:$0xff]
        %v8894 = vld [vmem:[%s8591 + $0xaa] sm:$0xff]
        %v8895 = vld [vmem:[%s8591 + $0xb2] sm:$0xff]
        %v8896 = vld [vmem:[%s8591 + $0xc2] sm:$0xff]
        %v8897 = vld [vmem:[%s8591 + $0xca] sm:$0xff]
        %v8898 = vld [vmem:[%s8591 + $0xda] sm:$0xff]
        %v8899 = vld [vmem:[%s8591 + $0xe2] sm:$0xff]
        %v8900 = vld [vmem:[%s8591 + $0xf2] sm:$0xff]
        %v8901 = vld [vmem:[%s8591 + $0xfa] sm:$0xff]
        %v8902 = vld [vmem:[%s8591 + $0x10a] sm:$0xff]
        %v8903 = vld [vmem:[%s8591 + $0x112] sm:$0xff]
        %v8904 = vld [vmem:[%s8591 + $0x122] sm:$0xff]
        %v8905 = vld [vmem:[%s8591 + $0x12a] sm:$0xff]
        %v8906 = vld [vmem:[%s8591 + $0x13a] sm:$0xff]
        %v8907 = vld [vmem:[%s8591 + $0x142] sm:$0xff]
        %v8908 = vld [vmem:[%s8591 + $0x152] sm:$0xff]
        %v8909 = vld [vmem:[%s8591 + $0x15a] sm:$0xff]
        %v8910 = vld [vmem:[%s8591 + $0x16a] sm:$0xff]
        %v8911 = vld [vmem:[%s8591 + $0x172] sm:$0xff]
        %v8912 = vmax.f32 %v8848, %v8880
        %v8913 = vmax.f32 %v8849, %v8881
        %v8914 = vmax.f32 %v8850, %v8882
        %v8915 = vmax.f32 %v8851, %v8883
        %v8916 = vmax.f32 %v8852, %v8884
        %v8917 = vmax.f32 %v8853, %v8885
        %v8918 = vmax.f32 %v8854, %v8886
        %v8919 = vmax.f32 %v8855, %v8887
        %v8920 = vmax.f32 %v8856, %v8888
        %v8921 = vmax.f32 %v8857, %v8889
        %v8922 = vmax.f32 %v8858, %v8890
        %v8923 = vmax.f32 %v8859, %v8891
        %v8924 = vmax.f32 %v8860, %v8892
        %v8925 = vmax.f32 %v8861, %v8893
        %v8926 = vmax.f32 %v8862, %v8894
        %v8927 = vmax.f32 %v8863, %v8895
        %v8928 = vmax.f32 %v8864, %v8896
        %v8929 = vmax.f32 %v8865, %v8897
        %v8930 = vmax.f32 %v8866, %v8898
        %v8931 = vmax.f32 %v8867, %v8899
        %v8932 = vmax.f32 %v8868, %v8900
        %v8933 = vmax.f32 %v8869, %v8901
        %v8934 = vmax.f32 %v8870, %v8902
        %v8935 = vmax.f32 %v8871, %v8903
        %v8936 = vmax.f32 %v8872, %v8904
        %v8937 = vmax.f32 %v8873, %v8905
        %v8938 = vmax.f32 %v8874, %v8906
        %v8939 = vmax.f32 %v8875, %v8907
        %v8940 = vmax.f32 %v8876, %v8908
        %v8941 = vmax.f32 %v8877, %v8909
        %v8942 = vmax.f32 %v8878, %v8910
        %v8943 = vmax.f32 %v8879, %v8911
        %s8944 = scalar_lea.vmem [#allocation6], 48
        %v8945 = vld [vmem:[%s8944] sm:$0xff]
        %v8946 = vld [vmem:[%s8944 + $0x8] sm:$0xff]
        %v8947 = vld [vmem:[%s8944 + $0x18] sm:$0xff]
        %v8948 = vld [vmem:[%s8944 + $0x20] sm:$0xff]
        %v8949 = vld [vmem:[%s8944 + $0x30] sm:$0xff]
        %v8950 = vld [vmem:[%s8944 + $0x38] sm:$0xff]
        %v8951 = vld [vmem:[%s8944 + $0x48] sm:$0xff]
        %v8952 = vld [vmem:[%s8944 + $0x50] sm:$0xff]
        %v8953 = vld [vmem:[%s8944 + $0x60] sm:$0xff]
        %v8954 = vld [vmem:[%s8944 + $0x68] sm:$0xff]
        %v8955 = vld [vmem:[%s8944 + $0x78] sm:$0xff]
        %v8956 = vld [vmem:[%s8944 + $0x80] sm:$0xff]
        %v8957 = vld [vmem:[%s8944 + $0x90] sm:$0xff]
        %v8958 = vld [vmem:[%s8944 + $0x98] sm:$0xff]
        %v8959 = vld [vmem:[%s8944 + $0xa8] sm:$0xff]
        %v8960 = vld [vmem:[%s8944 + $0xb0] sm:$0xff]
        %v8961 = vld [vmem:[%s8944 + $0xc0] sm:$0xff]
        %v8962 = vld [vmem:[%s8944 + $0xc8] sm:$0xff]
        %v8963 = vld [vmem:[%s8944 + $0xd8] sm:$0xff]
        %v8964 = vld [vmem:[%s8944 + $0xe0] sm:$0xff]
        %v8965 = vld [vmem:[%s8944 + $0xf0] sm:$0xff]
        %v8966 = vld [vmem:[%s8944 + $0xf8] sm:$0xff]
        %v8967 = vld [vmem:[%s8944 + $0x108] sm:$0xff]
        %v8968 = vld [vmem:[%s8944 + $0x110] sm:$0xff]
        %v8969 = vld [vmem:[%s8944 + $0x120] sm:$0xff]
        %v8970 = vld [vmem:[%s8944 + $0x128] sm:$0xff]
        %v8971 = vld [vmem:[%s8944 + $0x138] sm:$0xff]
        %v8972 = vld [vmem:[%s8944 + $0x140] sm:$0xff]
        %v8973 = vld [vmem:[%s8944 + $0x150] sm:$0xff]
        %v8974 = vld [vmem:[%s8944 + $0x158] sm:$0xff]
        %v8975 = vld [vmem:[%s8944 + $0x168] sm:$0xff]
        %v8976 = vld [vmem:[%s8944 + $0x170] sm:$0xff]
        %v8977 = vmax.f32 %v8912, %v8945
        %v8978 = vmax.f32 %v8913, %v8946
        %v8979 = vmax.f32 %v8914, %v8947
        %v8980 = vmax.f32 %v8915, %v8948
        %v8981 = vmax.f32 %v8916, %v8949
        %v8982 = vmax.f32 %v8917, %v8950
        %v8983 = vmax.f32 %v8918, %v8951
        %v8984 = vmax.f32 %v8919, %v8952
        %v8985 = vmax.f32 %v8920, %v8953
        %v8986 = vmax.f32 %v8921, %v8954
        %v8987 = vmax.f32 %v8922, %v8955
        %v8988 = vmax.f32 %v8923, %v8956
        %v8989 = vmax.f32 %v8924, %v8957
        %v8990 = vmax.f32 %v8925, %v8958
        %v8991 = vmax.f32 %v8926, %v8959
        %v8992 = vmax.f32 %v8927, %v8960
        %v8993 = vmax.f32 %v8928, %v8961
        %v8994 = vmax.f32 %v8929, %v8962
        %v8995 = vmax.f32 %v8930, %v8963
        %v8996 = vmax.f32 %v8931, %v8964
        %v8997 = vmax.f32 %v8932, %v8965
        %v8998 = vmax.f32 %v8933, %v8966
        %v8999 = vmax.f32 %v8934, %v8967
        %v9000 = vmax.f32 %v8935, %v8968
        %v9001 = vmax.f32 %v8936, %v8969
        %v9002 = vmax.f32 %v8937, %v8970
        %v9003 = vmax.f32 %v8938, %v8971
        %v9004 = vmax.f32 %v8939, %v8972
        %v9005 = vmax.f32 %v8940, %v8973
        %v9006 = vmax.f32 %v8941, %v8974
        %v9007 = vmax.f32 %v8942, %v8975
        %v9008 = vmax.f32 %v8943, %v8976
        %v9009 = vld [vmem:[%s8944 + $0x1] sm:$0xff]
        %v9010 = vld [vmem:[%s8944 + $0x9] sm:$0xff]
        %v9011 = vld [vmem:[%s8944 + $0x19] sm:$0xff]
        %v9012 = vld [vmem:[%s8944 + $0x21] sm:$0xff]
        %v9013 = vld [vmem:[%s8944 + $0x31] sm:$0xff]
        %v9014 = vld [vmem:[%s8944 + $0x39] sm:$0xff]
        %v9015 = vld [vmem:[%s8944 + $0x49] sm:$0xff]
        %v9016 = vld [vmem:[%s8944 + $0x51] sm:$0xff]
        %v9017 = vld [vmem:[%s8944 + $0x61] sm:$0xff]
        %v9018 = vld [vmem:[%s8944 + $0x69] sm:$0xff]
        %v9019 = vld [vmem:[%s8944 + $0x79] sm:$0xff]
        %v9020 = vld [vmem:[%s8944 + $0x81] sm:$0xff]
        %v9021 = vld [vmem:[%s8944 + $0x91] sm:$0xff]
        %v9022 = vld [vmem:[%s8944 + $0x99] sm:$0xff]
        %v9023 = vld [vmem:[%s8944 + $0xa9] sm:$0xff]
        %v9024 = vld [vmem:[%s8944 + $0xb1] sm:$0xff]
        %v9025 = vld [vmem:[%s8944 + $0xc1] sm:$0xff]
        %v9026 = vld [vmem:[%s8944 + $0xc9] sm:$0xff]
        %v9027 = vld [vmem:[%s8944 + $0xd9] sm:$0xff]
        %v9028 = vld [vmem:[%s8944 + $0xe1] sm:$0xff]
        %v9029 = vld [vmem:[%s8944 + $0xf1] sm:$0xff]
        %v9030 = vld [vmem:[%s8944 + $0xf9] sm:$0xff]
        %v9031 = vld [vmem:[%s8944 + $0x109] sm:$0xff]
        %v9032 = vld [vmem:[%s8944 + $0x111] sm:$0xff]
        %v9033 = vld [vmem:[%s8944 + $0x121] sm:$0xff]
        %v9034 = vld [vmem:[%s8944 + $0x129] sm:$0xff]
        %v9035 = vld [vmem:[%s8944 + $0x139] sm:$0xff]
        %v9036 = vld [vmem:[%s8944 + $0x141] sm:$0xff]
        %v9037 = vld [vmem:[%s8944 + $0x151] sm:$0xff]
        %v9038 = vld [vmem:[%s8944 + $0x159] sm:$0xff]
        %v9039 = vld [vmem:[%s8944 + $0x169] sm:$0xff]
        %v9040 = vld [vmem:[%s8944 + $0x171] sm:$0xff]
        %v9041 = vmax.f32 %v8977, %v9009
        %v9042 = vmax.f32 %v8978, %v9010
        %v9043 = vmax.f32 %v8979, %v9011
        %v9044 = vmax.f32 %v8980, %v9012
        %v9045 = vmax.f32 %v8981, %v9013
        %v9046 = vmax.f32 %v8982, %v9014
        %v9047 = vmax.f32 %v8983, %v9015
        %v9048 = vmax.f32 %v8984, %v9016
        %v9049 = vmax.f32 %v8985, %v9017
        %v9050 = vmax.f32 %v8986, %v9018
        %v9051 = vmax.f32 %v8987, %v9019
        %v9052 = vmax.f32 %v8988, %v9020
        %v9053 = vmax.f32 %v8989, %v9021
        %v9054 = vmax.f32 %v8990, %v9022
        %v9055 = vmax.f32 %v8991, %v9023
        %v9056 = vmax.f32 %v8992, %v9024
        %v9057 = vmax.f32 %v8993, %v9025
        %v9058 = vmax.f32 %v8994, %v9026
        %v9059 = vmax.f32 %v8995, %v9027
        %v9060 = vmax.f32 %v8996, %v9028
        %v9061 = vmax.f32 %v8997, %v9029
        %v9062 = vmax.f32 %v8998, %v9030
        %v9063 = vmax.f32 %v8999, %v9031
        %v9064 = vmax.f32 %v9000, %v9032
        %v9065 = vmax.f32 %v9001, %v9033
        %v9066 = vmax.f32 %v9002, %v9034
        %v9067 = vmax.f32 %v9003, %v9035
        %v9068 = vmax.f32 %v9004, %v9036
        %v9069 = vmax.f32 %v9005, %v9037
        %v9070 = vmax.f32 %v9006, %v9038
        %v9071 = vmax.f32 %v9007, %v9039
        %v9072 = vmax.f32 %v9008, %v9040
        %v9073 = vld [vmem:[%s8944 + $0x2] sm:$0xff]
        %v9074 = vld [vmem:[%s8944 + $0xa] sm:$0xff]
        %v9075 = vld [vmem:[%s8944 + $0x1a] sm:$0xff]
        %v9076 = vld [vmem:[%s8944 + $0x22] sm:$0xff]
        %v9077 = vld [vmem:[%s8944 + $0x32] sm:$0xff]
        %v9078 = vld [vmem:[%s8944 + $0x3a] sm:$0xff]
        %v9079 = vld [vmem:[%s8944 + $0x4a] sm:$0xff]
        %v9080 = vld [vmem:[%s8944 + $0x52] sm:$0xff]
        %v9081 = vld [vmem:[%s8944 + $0x62] sm:$0xff]
        %v9082 = vld [vmem:[%s8944 + $0x6a] sm:$0xff]
        %v9083 = vld [vmem:[%s8944 + $0x7a] sm:$0xff]
        %v9084 = vld [vmem:[%s8944 + $0x82] sm:$0xff]
        %v9085 = vld [vmem:[%s8944 + $0x92] sm:$0xff]
        %v9086 = vld [vmem:[%s8944 + $0x9a] sm:$0xff]
        %v9087 = vld [vmem:[%s8944 + $0xaa] sm:$0xff]
        %v9088 = vld [vmem:[%s8944 + $0xb2] sm:$0xff]
        %v9089 = vld [vmem:[%s8944 + $0xc2] sm:$0xff]
        %v9090 = vld [vmem:[%s8944 + $0xca] sm:$0xff]
        %v9091 = vld [vmem:[%s8944 + $0xda] sm:$0xff]
        %v9092 = vld [vmem:[%s8944 + $0xe2] sm:$0xff]
        %v9093 = vld [vmem:[%s8944 + $0xf2] sm:$0xff]
        %v9094 = vld [vmem:[%s8944 + $0xfa] sm:$0xff]
        %v9095 = vld [vmem:[%s8944 + $0x10a] sm:$0xff]
        %v9096 = vld [vmem:[%s8944 + $0x112] sm:$0xff]
        %v9097 = vld [vmem:[%s8944 + $0x122] sm:$0xff]
        %v9098 = vld [vmem:[%s8944 + $0x12a] sm:$0xff]
        %v9099 = vld [vmem:[%s8944 + $0x13a] sm:$0xff]
        %v9100 = vld [vmem:[%s8944 + $0x142] sm:$0xff]
        %v9101 = vld [vmem:[%s8944 + $0x152] sm:$0xff]
        %v9102 = vld [vmem:[%s8944 + $0x15a] sm:$0xff]
        %v9103 = vld [vmem:[%s8944 + $0x16a] sm:$0xff]
        %v9104 = vld [vmem:[%s8944 + $0x172] sm:$0xff]
        %v9105 = vmax.f32 %v9041, %v9073
        %v9106 = vmax.f32 %v9042, %v9074
        %v9107 = vmax.f32 %v9043, %v9075
        %v9108 = vmax.f32 %v9044, %v9076
        %v9109 = vmax.f32 %v9045, %v9077
        %v9110 = vmax.f32 %v9046, %v9078
        %v9111 = vmax.f32 %v9047, %v9079
        %v9112 = vmax.f32 %v9048, %v9080
        %v9113 = vmax.f32 %v9049, %v9081
        %v9114 = vmax.f32 %v9050, %v9082
        %v9115 = vmax.f32 %v9051, %v9083
        %v9116 = vmax.f32 %v9052, %v9084
        %v9117 = vmax.f32 %v9053, %v9085
        %v9118 = vmax.f32 %v9054, %v9086
        %v9119 = vmax.f32 %v9055, %v9087
        %v9120 = vmax.f32 %v9056, %v9088
        %v9121 = vmax.f32 %v9057, %v9089
        %v9122 = vmax.f32 %v9058, %v9090
        %v9123 = vmax.f32 %v9059, %v9091
        %v9124 = vmax.f32 %v9060, %v9092
        %v9125 = vmax.f32 %v9061, %v9093
        %v9126 = vmax.f32 %v9062, %v9094
        %v9127 = vmax.f32 %v9063, %v9095
        %v9128 = vmax.f32 %v9064, %v9096
        %v9129 = vmax.f32 %v9065, %v9097
        %v9130 = vmax.f32 %v9066, %v9098
        %v9131 = vmax.f32 %v9067, %v9099
        %v9132 = vmax.f32 %v9068, %v9100
        %v9133 = vmax.f32 %v9069, %v9101
        %v9134 = vmax.f32 %v9070, %v9102
        %v9135 = vmax.f32 %v9071, %v9103
        %v9136 = vmax.f32 %v9072, %v9104
        %v9137 = vld [vmem:[%s1] sm:$0xff]
        %v9138 = vld [vmem:[%s2] sm:$0x1]
        %v9140 = vlaneseq
        %v9141 = vshrl.u32 %v9140, 7
        %v9142 = vsub.s32 0, %v9141
        %v9143 = vrot.slane %v9138, %v9142
        %v9146 = vsel %vm317, %v9105, 0
        %v9149 = vsel %vm317, %v9106, 0
        %v9152 = vsel %vm317, %v9107, 0
        %v9155 = vsel %vm317, %v9108, 0
        %v9158 = vsel %vm317, %v9109, 0
        %v9161 = vsel %vm317, %v9110, 0
        %v9164 = vsel %vm317, %v9111, 0
        %v9167 = vsel %vm317, %v9112, 0
        %v9170 = vsel %vm317, %v9113, 0
        %v9173 = vsel %vm317, %v9114, 0
        %v9176 = vsel %vm317, %v9115, 0
        %v9179 = vsel %vm317, %v9116, 0
        %v9182 = vsel %vm317, %v9117, 0
        %v9185 = vsel %vm317, %v9118, 0
        %v9188 = vsel %vm317, %v9119, 0
        %v9191 = vsel %vm317, %v9120, 0
        %v9194 = vsel %vm317, %v9121, 0
        %v9197 = vsel %vm317, %v9122, 0
        %v9200 = vsel %vm317, %v9123, 0
        %v9203 = vsel %vm317, %v9124, 0
        %v9206 = vsel %vm317, %v9125, 0
        %v9209 = vsel %vm317, %v9126, 0
        %v9212 = vsel %vm317, %v9127, 0
        %v9215 = vsel %vm317, %v9128, 0
        %v9218 = vsel %vm317, %v9129, 0
        %v9221 = vsel %vm317, %v9130, 0
        %v9224 = vsel %vm317, %v9131, 0
        %v9227 = vsel %vm317, %v9132, 0
        %v9230 = vsel %vm317, %v9133, 0
        %v9233 = vsel %vm317, %v9134, 0
        %v9236 = vsel %vm317, %v9135, 0
        %v9239 = vsel %vm317, %v9136, 0
        %9241 = vmatprep.subr.mxu0 0.0
        %9242 = vmatpush1.msra.mxu0 %v9137
        %9243 = vmatprep.subr.mxu0 0.0
        %9244 = vmatpush1.msra.mxu0 0.0
        %9245 = vmatprep.subr.mxu0 0.0
        %9246 = vmatpush1.msra.mxu0 0.0
        %9247 = vmatprep.subr.mxu0 0.0
        %9248 = vmatpush1.msra.mxu0 0.0
        %9249 = vmatprep.subr.mxu0 0.0
        %9250 = vmatpush1.msra.mxu0 0.0
        %9251 = vmatprep.subr.mxu0 0.0
        %9252 = vmatpush1.msra.mxu0 0.0
        %9253 = vmatprep.subr.mxu0 0.0
        %9254 = vmatpush1.msra.mxu0 0.0
        %9255 = vmatprep.subr.mxu0 0.0
        %9256 = vmatpush1.msra.mxu0 0.0
        %9257 = vmatprep.subr.mxu0 0.0
        %9258 = vmatpush1.msra.mxu0 0.0
        %9259 = vmatprep.subr.mxu0 0.0
        %9260 = vmatpush1.msra.mxu0 0.0
        %9261 = vmatprep.subr.mxu0 0.0
        %9262 = vmatpush1.msra.mxu0 0.0
        %9263 = vmatprep.subr.mxu0 0.0
        %9264 = vmatpush1.msra.mxu0 0.0
        %9265 = vmatprep.subr.mxu0 0.0
        %9266 = vmatpush1.msra.mxu0 0.0
        %9267 = vmatprep.subr.mxu0 0.0
        %9268 = vmatpush1.msra.mxu0 0.0
        %9269 = vmatprep.subr.mxu0 0.0
        %9270 = vmatpush1.msra.mxu0 0.0
        %9271 = vmatprep.subr.mxu0 0.0
        %9272 = vmatpush1.msra.mxu0 0.0
        %9273 = vmatprep.subr.mxu0 0.0
        %9274 = vmatpush1.msra.mxu0 0.0
        %9275 = vmatprep.subr.mxu0 0.0
        %9276 = vmatpush1.msra.mxu0 0.0
        %9277 = vmatprep.subr.mxu0 0.0
        %9278 = vmatpush1.msra.mxu0 0.0
        %9279 = vmatprep.subr.mxu0 0.0
        %9280 = vmatpush1.msra.mxu0 0.0
        %9281 = vmatprep.subr.mxu0 0.0
        %9282 = vmatpush1.msra.mxu0 0.0
        %9283 = vmatprep.subr.mxu0 0.0
        %9284 = vmatpush1.msra.mxu0 0.0
        %9285 = vmatprep.subr.mxu0 0.0
        %9286 = vmatpush1.msra.mxu0 0.0
        %9287 = vmatprep.subr.mxu0 0.0
        %9288 = vmatpush1.msra.mxu0 0.0
        %9289 = vmatprep.subr.mxu0 0.0
        %9290 = vmatpush1.msra.mxu0 0.0
        %9291 = vmatprep.subr.mxu0 0.0
        %9292 = vmatpush1.msra.mxu0 0.0
        %9293 = vmatprep.subr.mxu0 0.0
        %9294 = vmatpush1.msra.mxu0 0.0
        %9295 = vmatprep.subr.mxu0 0.0
        %9296 = vmatpush1.msra.mxu0 0.0
        %9297 = vmatprep.subr.mxu0 0.0
        %9298 = vmatpush1.msra.mxu0 0.0
        %9299 = vmatprep.subr.mxu0 0.0
        %9300 = vmatpush1.msra.mxu0 0.0
        %9301 = vmatprep.subr.mxu0 0.0
        %9302 = vmatpush1.msra.mxu0 0.0
        %9303 = vmatprep.subr.mxu0 0.0
        %9304 = vmatpush1.msra.mxu0 0.0
        %9305 = vmatprep.mubr.f32.mxu0 0.0
        %9306 = vmatmul.mubr.f32.gmra.mrb[0].mxu0 %v9146
        %v9307 = vpop.f32.mrb[0].mxu0
        %v9308 = vadd.f32 %v9143, %v9307
        %v9309 = vpop.f32.mrb[0].mxu0
        %9310 = vmatprep.mubr.f32.mxu0 0.0
        %9311 = vmatmul.mubr.f32.gmra.mrb[0].mxu0 %v9149
        %v9312 = vpop.f32.mrb[0].mxu0
        %v9313 = vadd.f32 %v9143, %v9312
        %v9314 = vpop.f32.mrb[0].mxu0
        %9315 = vmatprep.mubr.f32.mxu0 0.0
        %9316 = vmatmul.mubr.f32.gmra.mrb[0].mxu0 %v9152
        %v9317 = vpop.f32.mrb[0].mxu0
        %v9318 = vadd.f32 %v9143, %v9317
        %v9319 = vpop.f32.mrb[0].mxu0
        %9320 = vmatprep.mubr.f32.mxu0 0.0
        %9321 = vmatmul.mubr.f32.gmra.mrb[0].mxu0 %v9155
        %v9322 = vpop.f32.mrb[0].mxu0
        %v9323 = vadd.f32 %v9143, %v9322
        %v9324 = vpop.f32.mrb[0].mxu0
        %9325 = vmatprep.mubr.f32.mxu0 0.0
        %9326 = vmatmul.mubr.f32.gmra.mrb[0].mxu0 %v9158
        %v9327 = vpop.f32.mrb[0].mxu0
        %v9328 = vadd.f32 %v9143, %v9327
        %v9329 = vpop.f32.mrb[0].mxu0
        %9330 = vmatprep.mubr.f32.mxu0 0.0
        %9331 = vmatmul.mubr.f32.gmra.mrb[0].mxu0 %v9161
        %v9332 = vpop.f32.mrb[0].mxu0
        %v9333 = vadd.f32 %v9143, %v9332
        %v9334 = vpop.f32.mrb[0].mxu0
        %9335 = vmatprep.mubr.f32.mxu0 0.0
        %9336 = vmatmul.mubr.f32.gmra.mrb[0].mxu0 %v9164
        %v9337 = vpop.f32.mrb[0].mxu0
        %v9338 = vadd.f32 %v9143, %v9337
        %v9339 = vpop.f32.mrb[0].mxu0
        %9340 = vmatprep.mubr.f32.mxu0 0.0
        %9341 = vmatmul.mubr.f32.gmra.mrb[0].mxu0 %v9167
        %v9342 = vpop.f32.mrb[0].mxu0
        %v9343 = vadd.f32 %v9143, %v9342
        %v9344 = vpop.f32.mrb[0].mxu0
        %9345 = vmatprep.mubr.f32.mxu0 0.0
        %9346 = vmatmul.mubr.f32.gmra.mrb[0].mxu0 %v9170
        %v9347 = vpop.f32.mrb[0].mxu0
        %v9348 = vadd.f32 %v9143, %v9347
        %v9349 = vpop.f32.mrb[0].mxu0
        %9350 = vmatprep.mubr.f32.mxu0 0.0
        %9351 = vmatmul.mubr.f32.gmra.mrb[0].mxu0 %v9173
        %v9352 = vpop.f32.mrb[0].mxu0
        %v9353 = vadd.f32 %v9143, %v9352
        %v9354 = vpop.f32.mrb[0].mxu0
        %9355 = vmatprep.mubr.f32.mxu0 0.0
        %9356 = vmatmul.mubr.f32.gmra.mrb[0].mxu0 %v9176
        %v9357 = vpop.f32.mrb[0].mxu0
        %v9358 = vadd.f32 %v9143, %v9357
        %v9359 = vpop.f32.mrb[0].mxu0
        %9360 = vmatprep.mubr.f32.mxu0 0.0
        %9361 = vmatmul.mubr.f32.gmra.mrb[0].mxu0 %v9179
        %v9362 = vpop.f32.mrb[0].mxu0
        %v9363 = vadd.f32 %v9143, %v9362
        %v9364 = vpop.f32.mrb[0].mxu0
        %9365 = vmatprep.mubr.f32.mxu0 0.0
        %9366 = vmatmul.mubr.f32.gmra.mrb[0].mxu0 %v9182
        %v9367 = vpop.f32.mrb[0].mxu0
        %v9368 = vadd.f32 %v9143, %v9367
        %v9369 = vpop.f32.mrb[0].mxu0
        %9370 = vmatprep.mubr.f32.mxu0 0.0
        %9371 = vmatmul.mubr.f32.gmra.mrb[0].mxu0 %v9185
        %v9372 = vpop.f32.mrb[0].mxu0
        %v9373 = vadd.f32 %v9143, %v9372
        %v9374 = vpop.f32.mrb[0].mxu0
        %9375 = vmatprep.mubr.f32.mxu0 0.0
        %9376 = vmatmul.mubr.f32.gmra.mrb[0].mxu0 %v9188
        %v9377 = vpop.f32.mrb[0].mxu0
        %v9378 = vadd.f32 %v9143, %v9377
        %v9379 = vpop.f32.mrb[0].mxu0
        %9380 = vmatprep.mubr.f32.mxu0 0.0
        %9381 = vmatmul.mubr.f32.gmra.mrb[0].mxu0 %v9191
        %v9382 = vpop.f32.mrb[0].mxu0
        %v9383 = vadd.f32 %v9143, %v9382
        %v9384 = vpop.f32.mrb[0].mxu0
        %9385 = vmatprep.mubr.f32.mxu0 0.0
        %9386 = vmatmul.mubr.f32.gmra.mrb[0].mxu0 %v9194
        %v9387 = vpop.f32.mrb[0].mxu0
        %v9388 = vadd.f32 %v9143, %v9387
        %v9389 = vpop.f32.mrb[0].mxu0
        %9390 = vmatprep.mubr.f32.mxu0 0.0
        %9391 = vmatmul.mubr.f32.gmra.mrb[0].mxu0 %v9197
        %v9392 = vpop.f32.mrb[0].mxu0
        %v9393 = vadd.f32 %v9143, %v9392
        %v9394 = vpop.f32.mrb[0].mxu0
        %9395 = vmatprep.mubr.f32.mxu0 0.0
        %9396 = vmatmul.mubr.f32.gmra.mrb[0].mxu0 %v9200
        %v9397 = vpop.f32.mrb[0].mxu0
        %v9398 = vadd.f32 %v9143, %v9397
        %v9399 = vpop.f32.mrb[0].mxu0
        %9400 = vmatprep.mubr.f32.mxu0 0.0
        %9401 = vmatmul.mubr.f32.gmra.mrb[0].mxu0 %v9203
        %v9402 = vpop.f32.mrb[0].mxu0
        %v9403 = vadd.f32 %v9143, %v9402
        %v9404 = vpop.f32.mrb[0].mxu0
        %9405 = vmatprep.mubr.f32.mxu0 0.0
        %9406 = vmatmul.mubr.f32.gmra.mrb[0].mxu0 %v9206
        %v9407 = vpop.f32.mrb[0].mxu0
        %v9408 = vadd.f32 %v9143, %v9407
        %v9409 = vpop.f32.mrb[0].mxu0
        %9410 = vmatprep.mubr.f32.mxu0 0.0
        %9411 = vmatmul.mubr.f32.gmra.mrb[0].mxu0 %v9209
        %v9412 = vpop.f32.mrb[0].mxu0
        %v9413 = vadd.f32 %v9143, %v9412
        %v9414 = vpop.f32.mrb[0].mxu0
        %9415 = vmatprep.mubr.f32.mxu0 0.0
        %9416 = vmatmul.mubr.f32.gmra.mrb[0].mxu0 %v9212
        %v9417 = vpop.f32.mrb[0].mxu0
        %v9418 = vadd.f32 %v9143, %v9417
        %v9419 = vpop.f32.mrb[0].mxu0
        %9420 = vmatprep.mubr.f32.mxu0 0.0
        %9421 = vmatmul.mubr.f32.gmra.mrb[0].mxu0 %v9215
        %v9422 = vpop.f32.mrb[0].mxu0
        %v9423 = vadd.f32 %v9143, %v9422
        %v9424 = vpop.f32.mrb[0].mxu0
        %9425 = vmatprep.mubr.f32.mxu0 0.0
        %9426 = vmatmul.mubr.f32.gmra.mrb[0].mxu0 %v9218
        %v9427 = vpop.f32.mrb[0].mxu0
        %v9428 = vadd.f32 %v9143, %v9427
        %v9429 = vpop.f32.mrb[0].mxu0
        %9430 = vmatprep.mubr.f32.mxu0 0.0
        %9431 = vmatmul.mubr.f32.gmra.mrb[0].mxu0 %v9221
        %v9432 = vpop.f32.mrb[0].mxu0
        %v9433 = vadd.f32 %v9143, %v9432
        %v9434 = vpop.f32.mrb[0].mxu0
        %9435 = vmatprep.mubr.f32.mxu0 0.0
        %9436 = vmatmul.mubr.f32.gmra.mrb[0].mxu0 %v9224
        %v9437 = vpop.f32.mrb[0].mxu0
        %v9438 = vadd.f32 %v9143, %v9437
        %v9439 = vpop.f32.mrb[0].mxu0
        %9440 = vmatprep.mubr.f32.mxu0 0.0
        %9441 = vmatmul.mubr.f32.gmra.mrb[0].mxu0 %v9227
        %v9442 = vpop.f32.mrb[0].mxu0
        %v9443 = vadd.f32 %v9143, %v9442
        %v9444 = vpop.f32.mrb[0].mxu0
        %9445 = vmatprep.mubr.f32.mxu0 0.0
        %9446 = vmatmul.mubr.f32.gmra.mrb[0].mxu0 %v9230
        %v9447 = vpop.f32.mrb[0].mxu0
        %v9448 = vadd.f32 %v9143, %v9447
        %v9449 = vpop.f32.mrb[0].mxu0
        %9450 = vmatprep.mubr.f32.mxu0 0.0
        %9451 = vmatmul.mubr.f32.gmra.mrb[0].mxu0 %v9233
        %v9452 = vpop.f32.mrb[0].mxu0
        %v9453 = vadd.f32 %v9143, %v9452
        %v9454 = vpop.f32.mrb[0].mxu0
        %9455 = vmatprep.mubr.f32.mxu0 0.0
        %9456 = vmatmul.mubr.f32.gmra.mrb[0].mxu0 %v9236
        %v9457 = vpop.f32.mrb[0].mxu0
        %v9458 = vadd.f32 %v9143, %v9457
        %v9459 = vpop.f32.mrb[0].mxu0
        %9460 = vmatprep.mubr.f32.mxu0 0.0
        %9461 = vmatmul.mubr.f32.gmra.mrb[0].mxu0 %v9239
        %v9462 = vpop.f32.mrb[0].mxu0
        %v9463 = vadd.f32 %v9143, %v9462
        %v9464 = vpop.f32.mrb[0].mxu0
        %9465 = vdwg.mxu0
        %v9466 = vmax.f32 %v9308, 0.0
        %v9467 = vmax.f32 %v9313, 0.0
        %v9468 = vmax.f32 %v9318, 0.0
        %v9469 = vmax.f32 %v9323, 0.0
        %v9470 = vmax.f32 %v9328, 0.0
        %v9471 = vmax.f32 %v9333, 0.0
        %v9472 = vmax.f32 %v9338, 0.0
        %v9473 = vmax.f32 %v9343, 0.0
        %v9474 = vmax.f32 %v9348, 0.0
        %v9475 = vmax.f32 %v9353, 0.0
        %v9476 = vmax.f32 %v9358, 0.0
        %v9477 = vmax.f32 %v9363, 0.0
        %v9478 = vmax.f32 %v9368, 0.0
        %v9479 = vmax.f32 %v9373, 0.0
        %v9480 = vmax.f32 %v9378, 0.0
        %v9481 = vmax.f32 %v9383, 0.0
        %v9482 = vmax.f32 %v9388, 0.0
        %v9483 = vmax.f32 %v9393, 0.0
        %v9484 = vmax.f32 %v9398, 0.0
        %v9485 = vmax.f32 %v9403, 0.0
        %v9486 = vmax.f32 %v9408, 0.0
        %v9487 = vmax.f32 %v9413, 0.0
        %v9488 = vmax.f32 %v9418, 0.0
        %v9489 = vmax.f32 %v9423, 0.0
        %v9490 = vmax.f32 %v9428, 0.0
        %v9491 = vmax.f32 %v9433, 0.0
        %v9492 = vmax.f32 %v9438, 0.0
        %v9493 = vmax.f32 %v9443, 0.0
        %v9494 = vmax.f32 %v9448, 0.0
        %v9495 = vmax.f32 %v9453, 0.0
        %v9496 = vmax.f32 %v9458, 0.0
        %v9497 = vmax.f32 %v9463, 0.0
        %9530 = vrot.lane.b32.xlu0 %v9466, 12
        %v9531 = vpop.permute.xlu0 %9530
        %9532 = vrot.lane.b32.xlu0 %v9467, 12
        %v9533 = vpop.permute.xlu0 %9532
        %9534 = vrot.lane.b32.xlu0 %v9468, 12
        %v9535 = vpop.permute.xlu0 %9534
        %9536 = vrot.lane.b32.xlu0 %v9469, 12
        %v9537 = vpop.permute.xlu0 %9536
        %9538 = vrot.lane.b32.xlu0 %v9470, 12
        %v9539 = vpop.permute.xlu0 %9538
        %9540 = vrot.lane.b32.xlu0 %v9471, 12
        %v9541 = vpop.permute.xlu0 %9540
        %9542 = vrot.lane.b32.xlu0 %v9472, 12
        %v9543 = vpop.permute.xlu0 %9542
        %9544 = vrot.lane.b32.xlu0 %v9473, 12
        %v9545 = vpop.permute.xlu0 %9544
        %9546 = vrot.lane.b32.xlu0 %v9474, 12
        %v9547 = vpop.permute.xlu0 %9546
        %9548 = vrot.lane.b32.xlu0 %v9475, 12
        %v9549 = vpop.permute.xlu0 %9548
        %9550 = vrot.lane.b32.xlu0 %v9476, 12
        %v9551 = vpop.permute.xlu0 %9550
        %9552 = vrot.lane.b32.xlu0 %v9477, 12
        %v9553 = vpop.permute.xlu0 %9552
        %9554 = vrot.lane.b32.xlu0 %v9478, 12
        %v9555 = vpop.permute.xlu0 %9554
        %9556 = vrot.lane.b32.xlu0 %v9479, 12
        %v9557 = vpop.permute.xlu0 %9556
        %9558 = vrot.lane.b32.xlu0 %v9480, 12
        %v9559 = vpop.permute.xlu0 %9558
        %9560 = vrot.lane.b32.xlu0 %v9481, 12
        %v9561 = vpop.permute.xlu0 %9560
        %9562 = vrot.lane.b32.xlu0 %v9482, 12
        %v9563 = vpop.permute.xlu0 %9562
        %9564 = vrot.lane.b32.xlu0 %v9483, 12
        %v9565 = vpop.permute.xlu0 %9564
        %9566 = vrot.lane.b32.xlu0 %v9484, 12
        %v9567 = vpop.permute.xlu0 %9566
        %9568 = vrot.lane.b32.xlu0 %v9485, 12
        %v9569 = vpop.permute.xlu0 %9568
        %9570 = vrot.lane.b32.xlu0 %v9486, 12
        %v9571 = vpop.permute.xlu0 %9570
        %9572 = vrot.lane.b32.xlu0 %v9487, 12
        %v9573 = vpop.permute.xlu0 %9572
        %9574 = vrot.lane.b32.xlu0 %v9488, 12
        %v9575 = vpop.permute.xlu0 %9574
        %9576 = vrot.lane.b32.xlu0 %v9489, 12
        %v9577 = vpop.permute.xlu0 %9576
        %9578 = vrot.lane.b32.xlu0 %v9490, 12
        %v9579 = vpop.permute.xlu0 %9578
        %9580 = vrot.lane.b32.xlu0 %v9491, 12
        %v9581 = vpop.permute.xlu0 %9580
        %9582 = vrot.lane.b32.xlu0 %v9492, 12
        %v9583 = vpop.permute.xlu0 %9582
        %9584 = vrot.lane.b32.xlu0 %v9493, 12
        %v9585 = vpop.permute.xlu0 %9584
        %9586 = vrot.lane.b32.xlu0 %v9494, 12
        %v9587 = vpop.permute.xlu0 %9586
        %9588 = vrot.lane.b32.xlu0 %v9495, 12
        %v9589 = vpop.permute.xlu0 %9588
        %9590 = vrot.lane.b32.xlu0 %v9496, 12
        %v9591 = vpop.permute.xlu0 %9590
        %9592 = vrot.lane.b32.xlu0 %v9497, 12
        %v9593 = vpop.permute.xlu0 %9592
        %vm9626 = vcmask 130144
        %9627 = vst.msk [vmem:[%s271] sm:$0xff] %vm9626, %v9531
        %9628 = vst.msk [vmem:[%s271 + $0x8] sm:$0xff] %vm9626, %v9533
        %9629 = vst.msk [vmem:[%s271 + $0x10] sm:$0xff] %vm9626, %v9535
        %9630 = vst.msk [vmem:[%s271 + $0x18] sm:$0xff] %vm9626, %v9537
        %9631 = vst.msk [vmem:[%s271 + $0x20] sm:$0xff] %vm9626, %v9539
        %9632 = vst.msk [vmem:[%s271 + $0x28] sm:$0xff] %vm9626, %v9541
        %9633 = vst.msk [vmem:[%s271 + $0x30] sm:$0xff] %vm9626, %v9543
        %9634 = vst.msk [vmem:[%s271 + $0x38] sm:$0xff] %vm9626, %v9545
        %9635 = vst.msk [vmem:[%s271 + $0x40] sm:$0xff] %vm9626, %v9547
        %9636 = vst.msk [vmem:[%s271 + $0x48] sm:$0xff] %vm9626, %v9549
        %9637 = vst.msk [vmem:[%s271 + $0x50] sm:$0xff] %vm9626, %v9551
        %9638 = vst.msk [vmem:[%s271 + $0x58] sm:$0xff] %vm9626, %v9553
        %9639 = vst.msk [vmem:[%s271 + $0x60] sm:$0xff] %vm9626, %v9555
        %9640 = vst.msk [vmem:[%s271 + $0x68] sm:$0xff] %vm9626, %v9557
        %9641 = vst.msk [vmem:[%s271 + $0x70] sm:$0xff] %vm9626, %v9559
        %9642 = vst.msk [vmem:[%s271 + $0x78] sm:$0xff] %vm9626, %v9561
        %9643 = vst.msk [vmem:[%s271 + $0x80] sm:$0xff] %vm9626, %v9563
        %9644 = vst.msk [vmem:[%s271 + $0x88] sm:$0xff] %vm9626, %v9565
        %9645 = vst.msk [vmem:[%s271 + $0x90] sm:$0xff] %vm9626, %v9567
        %9646 = vst.msk [vmem:[%s271 + $0x98] sm:$0xff] %vm9626, %v9569
        %9647 = vst.msk [vmem:[%s271 + $0xa0] sm:$0xff] %vm9626, %v9571
        %9648 = vst.msk [vmem:[%s271 + $0xa8] sm:$0xff] %vm9626, %v9573
        %9649 = vst.msk [vmem:[%s271 + $0xb0] sm:$0xff] %vm9626, %v9575
        %9650 = vst.msk [vmem:[%s271 + $0xb8] sm:$0xff] %vm9626, %v9577
        %9651 = vst.msk [vmem:[%s271 + $0xc0] sm:$0xff] %vm9626, %v9579
        %9652 = vst.msk [vmem:[%s271 + $0xc8] sm:$0xff] %vm9626, %v9581
        %9653 = vst.msk [vmem:[%s271 + $0xd0] sm:$0xff] %vm9626, %v9583
        %9654 = vst.msk [vmem:[%s271 + $0xd8] sm:$0xff] %vm9626, %v9585
        %9655 = vst.msk [vmem:[%s271 + $0xe0] sm:$0xff] %vm9626, %v9587
        %9656 = vst.msk [vmem:[%s271 + $0xe8] sm:$0xff] %vm9626, %v9589
        %9657 = vst.msk [vmem:[%s271 + $0xf0] sm:$0xff] %vm9626, %v9591
        %9658 = vst.msk [vmem:[%s271 + $0xf8] sm:$0xff] %vm9626, %v9593
        %s9659 = sand.u32 %s181, 1
        %s9660 = scalar_lea.sflag [#allocation8], %s9659
        %s9661 = sand.u32 %s181, 1
        %s9662 = smul.addr %s9661, 256
        %s9663 = scalar_lea.vmem [#allocation7], %s9662
        // Predicated region
        $region49: #{tpu_custom_call.1} parent=47 // pred_check
          %p9664 = pneg %p191
        $region50: #{tpu_custom_call.1} parent=47 // pred_check_branch
          %9666 = sbr.rel (%p9664) target = $region52
        $region51: #{tpu_custom_call.1} parent=47 // pred_region
          %s9668 = ssub.s32 4096, 4096
          %9669 = vsyncadd %s9660, %s9668
          %s9670 = smul.addr %s21, 32
          %s9671 = smul.addr %s9670, 128
          %s9672 = scalar_lea.hbm %s7, %s9671
          %s9673 = sshll.u32 %s9663, 4
          %s9674 = int_to_ptr.vmem [resolvable:$true] %s9673
          %9679 = dma.vmem_to_hbm [thread:$0]  %s9674, 4096, %s9672, %s9660, 128, 128, 8
        $region52: #{tpu_custom_call.1} parent=47 // pred_fallthru
          _
      $region48: #{tpu_custom_call.1} parent=5 // pred_fallthru
        _
      %p9680 = scmp.le.s32.totalorder 2, %s16
      // Predicated region
      $region53: #{tpu_custom_call.1} parent=5 // pred_check
        %p9681 = pneg %p9680
      $region54: #{tpu_custom_call.1} parent=5 // pred_check_branch
        %9683 = sbr.rel (%p9681) target = $region56
      $region55: #{tpu_custom_call.1} parent=5 // pred_region
        %s9684 = ssub.s32 %s16, 2
        // Predicated region
        $region57: #{tpu_custom_call.1} parent=55 // pred_check
          %p9685 = pneg %p197
        $region58: #{tpu_custom_call.1} parent=55 // pred_check_branch
          %9687 = sbr.rel (%p9685) target = $region60
        $region59: #{tpu_custom_call.1} parent=55 // pred_region
          %s9688 = sand.u32 %s182, 1
          %s9689 = scalar_lea.sflag [#allocation8], %s9688
          %s9690 = sand.u32 %s182, 1
          %s9691 = smul.addr %s9690, 256
          %s9692 = scalar_lea.vmem [#allocation7], %s9691
          %9693 = dma.done %s9689, 4096
        $region60: #{tpu_custom_call.1} parent=55 // pred_fallthru
          _
      $region56: #{tpu_custom_call.1} parent=5 // pred_fallthru
        _
    $region6: #{tpu_custom_call.1} parent=1 // loop_footer
      %s20 = sadd.s32 1, %s16
    $region7: #{tpu_custom_call.1} parent=1 // loop_footer_branch
      %15 = sbr.rel target = $region3
    $region8: #{tpu_custom_call.1} parent=1 // loop_exit
      _
    %9694 = vsyncpa [#allocation8], 1
    %s9695 = scalar_lea.sflag [#allocation8], 1
    %9696 = vsyncpa %s9695, 1

</llo_original>
